<compile_context>
chip_gen: v7x
topology: tpu7x:2x2x1
jax: 0.10.0
libtpu: 0.0.40
codegen_flags: <defaults>
</compile_context>

<pallas_src>
import functools

import jax
import jax.numpy as jnp
from jax.experimental import pallas as pl
from jax.experimental.pallas import tpu as pltpu

EXPANSION = 4
BN_EPS = 1e-4
VMEM_LIMIT = 32 * 1024 * 1024  # safe on v5e/v6e/v7x scoped-VMEM budgets


# ------------------------------ tiling helpers ------------------------------

def _round_up(x, m):
    return ((x + m - 1) // m) * m


def _tiling(dim, max_tile, align):
    """Return (padded_dim, tile): padded_dim % tile == 0, tile aligned, and
    tile <= max_tile whenever dim > max_tile (single full tile otherwise)."""
    if dim <= max_tile:
        p = _round_up(dim, align)
        return p, p
    q = _round_up(dim, align) // align
    best = 1
    d = 1
    while d * d <= q:
        if q % d == 0:
            for cand in (d, q // d):
                if align * cand <= max_tile and cand > best:
                    best = cand
        d += 1
    return align * q, align * best


def _pad2(x, rpad, cpad):
    if rpad == 0 and cpad == 0:
        return x
    return jnp.pad(x, ((0, rpad), (0, cpad)))


# ------------------------------ Pallas kernels -------------------------------

def _mm_kernel(a_ref, b_ref, scale_ref, bias_ref, o_ref, acc_ref, *, relu):
    """o = act((a @ b) * scale + bias); K-accumulated in an f32 scratch."""
    @pl.when(pl.program_id(2) == 0)
    def _():
        acc_ref[...] = jnp.zeros_like(acc_ref)

    acc_ref[...] += jnp.dot(a_ref[...], b_ref[...],
                            preferred_element_type=jnp.float32)

    @pl.when(pl.program_id(2) == pl.num_programs(2) - 1)
    def _():
        out = acc_ref[...] * scale_ref[...] + bias_ref[...]
        if relu:
            out = jnp.maximum(out, 0.0)
        o_ref[...] = out.astype(o_ref.dtype)


def _mm_res_kernel(a_ref, b_ref, scale_ref, bias_ref, res_ref, o_ref, acc_ref,
                   *, relu):
    """o = act((a @ b) * scale + bias + residual); fused bottleneck tail."""
    @pl.when(pl.program_id(2) == 0)
    def _():
        acc_ref[...] = jnp.zeros_like(acc_ref)

    acc_ref[...] += jnp.dot(a_ref[...], b_ref[...],
                            preferred_element_type=jnp.float32)

    @pl.when(pl.program_id(2) == pl.num_programs(2) - 1)
    def _():
        out = acc_ref[...] * scale_ref[...] + bias_ref[...] + res_ref[...]
        if relu:
            out = jnp.maximum(out, 0.0)
        o_ref[...] = out.astype(o_ref.dtype)


def _max9_kernel(*refs):
    """Running max over 9 tap refs (each (tm, C)) -> output ref."""
    o_ref = refs[-1]
    m = refs[0][...]
    for r in refs[1:-1]:
        m = jnp.maximum(m, r[...])
    o_ref[...] = m


# ------------------------------ matmul wrapper -------------------------------

def matmul_affine(a, b, scale, bias, relu, residual=None):
    """act((a @ b) * scale + bias [+ residual]); a/b run in bf16 on the MXU,
    epilogue in f32.  All dims zero-padded to (8,128)-aligned tiles."""
    M, K = a.shape
    N = b.shape[1]

    Mp, tm = _tiling(M, 512, 8)
    Np, tn = _tiling(N, 256, 128)
    Kp, tk = _tiling(K, 512, 128)

    a_p = _pad2(a.astype(jnp.bfloat16), Mp - M, Kp - K)
    b_p = _pad2(b.astype(jnp.bfloat16), Kp - K, Np - N)
    scale_p = _pad2(scale.reshape(1, N).astype(jnp.float32), 0, Np - N)
    bias_p = _pad2(bias.reshape(1, N).astype(jnp.float32), 0, Np - N)

    in_specs = [
        pl.BlockSpec((tm, tk), lambda i, j, k: (i, k)),
        pl.BlockSpec((tk, tn), lambda i, j, k: (k, j)),
        pl.BlockSpec((1, tn), lambda i, j, k: (0, j)),
        pl.BlockSpec((1, tn), lambda i, j, k: (0, j)),
    ]
    args = [a_p, b_p, scale_p, bias_p]

    if residual is not None:
        res_p = _pad2(residual.astype(jnp.float32), Mp - M, Np - N)
        in_specs.append(pl.BlockSpec((tm, tn), lambda i, j, k: (i, j)))
        args.append(res_p)
        kernel = functools.partial(_mm_res_kernel, relu=relu)
    else:
        kernel = functools.partial(_mm_kernel, relu=relu)

    out = pl.pallas_call(
        kernel,
        out_shape=jax.ShapeDtypeStruct((Mp, Np), jnp.float32),
        grid_spec=pltpu.PrefetchScalarGridSpec(
            num_scalar_prefetch=0,
            grid=(Mp // tm, Np // tn, Kp // tk),
            in_specs=in_specs,
            out_specs=pl.BlockSpec((tm, tn), lambda i, j, k: (i, j)),
            scratch_shapes=[pltpu.VMEM((tm, tn), jnp.float32)],
        ),
        compiler_params=pltpu.CompilerParams(
            dimension_semantics=("parallel", "parallel", "arbitrary"),
            vmem_limit_bytes=VMEM_LIMIT,
        ),
    )(*args)
    return out[:M, :N]


# -------------------------------- glue helpers -------------------------------

def _im2col(x, kh, kw, stride, pad):
    """x: NHWC (f32) -> bf16 (N*Ho*Wo, kh*kw*C) patches, K ordered (kh,kw,C).
    For 1x1 convolutions this is just a reshape (no materialization)."""
    x = x.astype(jnp.bfloat16)
    if pad:
        x = jnp.pad(x, ((0, 0), (pad, pad), (pad, pad), (0, 0)))
    n, h, w, c = x.shape
    ho = (h - kh) // stride + 1
    wo = (w - kw) // stride + 1
    if kh == 1 and kw == 1 and stride == 1:
        return x.reshape(n * ho * wo, c), n, ho, wo
    cols = []
    for i in range(kh):
        for j in range(kw):
            cols.append(x[:, i:i + stride * ho:stride, j:j + stride * wo:stride, :])
    cols = jnp.stack(cols, axis=3)  # (N, Ho, Wo, kh*kw, C)
    return cols.reshape(n * ho * wo, kh * kw * c), n, ho, wo


def conv_bn_act(x, conv, bn, stride, pad, relu, residual=None):
    """Conv2d (PyTorch layout (Cout,Cin,kh,kw), bias) + BN + optional residual
    add + optional ReLU, all fused into one tiled matmul epilogue."""
    w, b = conv
    cout, cin, kh, kw = w.shape
    cols, n, ho, wo = _im2col(x, kh, kw, stride, pad)
    wk = jnp.transpose(w, (2, 3, 1, 0)).reshape(kh * kw * cin, cout)
    gamma, beta, mean, var = bn
    scale = gamma / jnp.sqrt(var + BN_EPS)
    bias = scale * (b - mean) + beta
    res = None if residual is None else residual.reshape(n * ho * wo, cout)
    out = matmul_affine(cols, wk, scale, bias, relu, residual=res)
    return out.reshape(n, ho, wo, cout)


def maxpool3x3s2(x):
    """nn.MaxPool2d(kernel_size=3, stride=2), no padding, NHWC; running max
    over the 9 taps inside a row-tiled Pallas kernel."""
    n, h, w, c = x.shape
    ho = (h - 3) // 2 + 1
    wo = (w - 3) // 2 + 1
    M = n * ho * wo
    taps = [x[:, i:i + 2 * ho:2, j:j + 2 * wo:2, :].reshape(M, c)
            for i in range(3) for j in range(3)]
    Mp, tm = _tiling(M, 1024, 8)
    taps = [_pad2(t, Mp - M, 0) for t in taps]
    out = pl.pallas_call(
        _max9_kernel,
        out_shape=jax.ShapeDtypeStruct((Mp, c), jnp.float32),
        grid_spec=pltpu.PrefetchScalarGridSpec(
            num_scalar_prefetch=0,
            grid=(Mp // tm,),
            in_specs=[pl.BlockSpec((tm, c), lambda i: (i, 0))] * 9,
            out_specs=pl.BlockSpec((tm, c), lambda i: (i, 0)),
        ),
        compiler_params=pltpu.CompilerParams(
            dimension_semantics=("parallel",),
            vmem_limit_bytes=VMEM_LIMIT,
        ),
    )(*taps)
    return out[:M].reshape(n, ho, wo, c)


# --------------------------- parameter construction --------------------------

def _init_conv(key, cout, cin, k):
    k1, k2 = jax.random.split(key)
    w = jax.random.normal(k1, (cout, cin, k, k), jnp.float32) * 0.05
    b = jax.random.normal(k2, (cout,), jnp.float32) * 0.05
    return w, b


def _init_bn(key, c):
    k1, k2, k3, k4 = jax.random.split(key, 4)
    gamma = 1.0 + 0.1 * jax.random.normal(k1, (c,), jnp.float32)
    beta = 0.1 * jax.random.normal(k2, (c,), jnp.float32)
    mean = 0.1 * jax.random.normal(k3, (c,), jnp.float32)
    var = jax.random.uniform(k4, (c,), jnp.float32, minval=0.5, maxval=1.5)
    return gamma, beta, mean, var


def _init_block(key, in_ch, out_ch, stride):
    ch = out_ch // EXPANSION
    keys = jax.random.split(key, 8)
    p = {
        "stride": stride,
        "conv1": _init_conv(keys[0], ch, in_ch, 1), "bn1": _init_bn(keys[1], ch),
        "conv2": _init_conv(keys[2], ch, ch, 3), "bn2": _init_bn(keys[3], ch),
        "conv3": _init_conv(keys[4], out_ch, ch, 1), "bn3": _init_bn(keys[5], out_ch),
    }
    if stride != 1 or in_ch != out_ch:
        p["down_conv"] = _init_conv(keys[6], out_ch, in_ch, 1)
        p["down_bn"] = _init_bn(keys[7], out_ch)
    return p


def init_resnet_params(key, layer_nums, in_channels, out_channels, strides,
                       num_classes):
    keys = jax.random.split(key, 8)
    params = {
        "conv1": _init_conv(keys[0], 64, 3, 7),   # _conv7x7(3, 64, stride=2), padding=1
        "bn1": _init_bn(keys[1], 64),
        "stages": [],
    }
    for s in range(4):
        stage = []
        skeys = jax.random.split(keys[2 + s], max(layer_nums[s], 1))
        stage.append(_init_block(skeys[0], in_channels[s], out_channels[s], strides[s]))
        for i in range(1, layer_nums[s]):
            stage.append(_init_block(skeys[i], out_channels[s], out_channels[s], 1))
        params["stages"].append(stage)
    k1, k2 = jax.random.split(keys[6])
    params["fc"] = (
        jax.random.normal(k1, (num_classes, out_channels[3]), jnp.float32) * 0.05,
        jax.random.normal(k2, (num_classes,), jnp.float32) * 0.05,
    )
    return params


# -------------------------------- forward pass -------------------------------

def bottleneck_forward(x, p):
    stride = p["stride"]
    out = conv_bn_act(x, p["conv1"], p["bn1"], stride=1, pad=0, relu=True)
    out = conv_bn_act(out, p["conv2"], p["bn2"], stride=stride, pad=1, relu=True)
    if "down_conv" in p:
        identity = conv_bn_act(x, p["down_conv"], p["down_bn"],
                               stride=stride, pad=0, relu=False)
    else:
        identity = x
    # conv3 + bn3 + residual add + ReLU fused into one matmul epilogue.
    return conv_bn_act(out, p["conv3"], p["bn3"], stride=1, pad=0, relu=True,
                       residual=identity)


def resnet_forward(params, x_nchw):
    x = jnp.transpose(x_nchw, (0, 2, 3, 1)).astype(jnp.float32)  # NCHW -> NHWC
    # conv1 (7x7, stride 2, padding=1 as in _conv7x7) + bn1 + relu
    x = conv_bn_act(x, params["conv1"], params["bn1"], stride=2, pad=1, relu=True)
    # maxpool 3x3 stride 2
    x = maxpool3x3s2(x)
    # layer1..layer4
    for stage in params["stages"]:
        for blk in stage:
            x = bottleneck_forward(x, blk)
    # global mean over spatial dims (2,3) in NCHW == (1,2) in NHWC, then flatten
    pooled = jnp.mean(x, axis=(1, 2))  # tiny reduction, kept as glue
    wfc, bfc = params["fc"]
    num_classes = wfc.shape[0]
    logits = matmul_affine(pooled, wfc.T,
                           jnp.ones((num_classes,), jnp.float32), bfc,
                           relu=False)
    return logits


# ------------------------------------ main ------------------------------------

if __name__ == "__main__":
    key = jax.random.PRNGKey(0)
    pkey, xkey = jax.random.split(key)

    layer_nums = [1, 1, 1, 1]
    in_channels = [64, 64, 128, 256]
    out_channels = [64, 128, 256, 512]
    strides = [1, 2, 2, 2]
    num_classes = 10

    params = init_resnet_params(pkey, layer_nums, in_channels, out_channels,
                                strides, num_classes)

    x = jax.random.normal(xkey, (2, 3, 32, 32), jnp.float32)  # NCHW like PyTorch

    fwd = jax.jit(lambda xx: resnet_forward(params, xx))
    out = jax.block_until_ready(fwd(x))

    assert out.shape == (2, num_classes), out.shape
    assert jnp.all(jnp.isfinite(out))
    print("KERNEL_OK")
</pallas_src>

<mosaic_0001>
module attributes {stable_mosaic.version = 11 : i64} {
  func.func @_mm_kernel(%arg0: i32, %arg1: i32, %arg2: i32, %arg3: memref<392x256xbf16, #tpu.memory_space<vmem>>, %arg4: memref<256x128xbf16, #tpu.memory_space<vmem>>, %arg5: memref<1x128xf32, #tpu.memory_space<vmem>>, %arg6: memref<1x128xf32, #tpu.memory_space<vmem>>, %arg7: memref<392x128xf32, #tpu.memory_space<vmem>>, %arg8: memref<392x128xf32, #tpu.memory_space<vmem>>) attributes {dimension_semantics = [#tpu.dimension_semantics<parallel>, #tpu.dimension_semantics<parallel>, #tpu.dimension_semantics<arbitrary>], iteration_bounds = array<i64: 1, 1, 1>, scalar_prefetch = 0 : i64, scratch_operands = 1 : i64, tpu.core_type = #tpu.core_type<tc>, window_params = [{transform_indices = @transform_0, window_bounds = array<i64: 392, 256>}, {transform_indices = @transform_1, window_bounds = array<i64: 256, 128>}, {transform_indices = @transform_2, window_bounds = array<i64: 1, 128>}, {transform_indices = @transform_3, window_bounds = array<i64: 1, 128>}, {transform_indices = @transform_4, window_bounds = array<i64: 392, 128>}]} {
    %c0_i32 = arith.constant 0 : i32
    %0 = arith.cmpi eq, %arg2, %c0_i32 : i32
    %1 = arith.extui %0 : i1 to i32
    %c0_i32_0 = arith.constant 0 : i32
    %2 = arith.cmpi ne, %1, %c0_i32_0 : i32
    scf.if %2 {
      %cst_10 = arith.constant 0.000000e+00 : f32
      %12 = vector.broadcast %cst_10 : f32 to vector<392x128xf32>
      %c0_11 = arith.constant 0 : index
      %c0_12 = arith.constant 0 : index
      %13 = vector.load %arg8[%c0_11, %c0_12] : memref<392x128xf32, #tpu.memory_space<vmem>>, vector<392x128xf32>
      tpu.vector_store %arg8[%c0_11, %c0_12], %12 {strides = array<i32>} : memref<392x128xf32, #tpu.memory_space<vmem>>, vector<392x128xf32>,
    } else {
    }
    %c0 = arith.constant 0 : index
    %c0_1 = arith.constant 0 : index
    %3 = vector.load %arg8[%c0, %c0_1] : memref<392x128xf32, #tpu.memory_space<vmem>>, vector<392x128xf32>
    %c0_2 = arith.constant 0 : index
    %c0_3 = arith.constant 0 : index
    %4 = vector.load %arg3[%c0_2, %c0_3] : memref<392x256xbf16, #tpu.memory_space<vmem>>, vector<392x256xbf16>
    %c0_4 = arith.constant 0 : index
    %c0_5 = arith.constant 0 : index
    %5 = vector.load %arg4[%c0_4, %c0_5] : memref<256x128xbf16, #tpu.memory_space<vmem>>, vector<256x128xbf16>
    %cst = arith.constant dense<0.000000e+00> : vector<392x128xf32>
    %6 = tpu.matmul %4, %5, %cst {dimension_numbers = #tpu.dot_dimension_numbers<[1], [0], [0], [1], [0, 0, 1, 1], [], []>} : vector<392x256xbf16>, vector<256x128xbf16>, vector<392x128xf32> -> vector<392x128xf32>
    %7 = arith.addf %3, %6 : vector<392x128xf32>
    %c0_6 = arith.constant 0 : index
    %c0_7 = arith.constant 0 : index
    %8 = vector.load %arg8[%c0_6, %c0_7] : memref<392x128xf32, #tpu.memory_space<vmem>>, vector<392x128xf32>
    tpu.vector_store %arg8[%c0_6, %c0_7], %7 {strides = array<i32>} : memref<392x128xf32, #tpu.memory_space<vmem>>, vector<392x128xf32>,
    %c0_i32_8 = arith.constant 0 : i32
    %9 = arith.cmpi eq, %arg2, %c0_i32_8 : i32
    %10 = arith.extui %9 : i1 to i32
    %c0_i32_9 = arith.constant 0 : i32
    %11 = arith.cmpi ne, %10, %c0_i32_9 : i32
    scf.if %11 {
      %c0_10 = arith.constant 0 : index
      %c0_11 = arith.constant 0 : index
      %12 = vector.load %arg8[%c0_10, %c0_11] : memref<392x128xf32, #tpu.memory_space<vmem>>, vector<392x128xf32>
      %c0_12 = arith.constant 0 : index
      %c0_13 = arith.constant 0 : index
      %13 = vector.load %arg5[%c0_12, %c0_13] : memref<1x128xf32, #tpu.memory_space<vmem>>, vector<1x128xf32>
      %14 = vector.broadcast %13 : vector<1x128xf32> to vector<392x128xf32>
      %15 = arith.mulf %12, %14 : vector<392x128xf32>
      %c0_14 = arith.constant 0 : index
      %c0_15 = arith.constant 0 : index
      %16 = vector.load %arg6[%c0_14, %c0_15] : memref<1x128xf32, #tpu.memory_space<vmem>>, vector<1x128xf32>
      %17 = vector.broadcast %16 : vector<1x128xf32> to vector<392x128xf32>
      %18 = arith.addf %15, %17 : vector<392x128xf32>
      %cst_16 = arith.constant 0.000000e+00 : f32
      %19 = vector.broadcast %cst_16 : f32 to vector<392x128xf32>
      %20 = arith.maximumf %18, %19 : vector<392x128xf32>
      %c0_17 = arith.constant 0 : index
      %c0_18 = arith.constant 0 : index
      %21 = vector.load %arg7[%c0_17, %c0_18] : memref<392x128xf32, #tpu.memory_space<vmem>>, vector<392x128xf32>
      tpu.vector_store %arg7[%c0_17, %c0_18], %20 {strides = array<i32>} : memref<392x128xf32, #tpu.memory_space<vmem>>, vector<392x128xf32>,
    } else {
    }
    return
  }
  func.func @transform_0(%arg0: i32, %arg1: i32, %arg2: i32) -> (i32, i32) {
    %c0_i32 = arith.constant 0 : i32
    return %arg0, %arg2 : i32, i32
  }
  func.func @transform_1(%arg0: i32, %arg1: i32, %arg2: i32) -> (i32, i32) {
    %c0_i32 = arith.constant 0 : i32
    return %arg2, %arg1 : i32, i32
  }
  func.func @transform_2(%arg0: i32, %arg1: i32, %arg2: i32) -> (i32, i32) {
    %c0_i32 = arith.constant 0 : i32
    %c0_i32_0 = arith.constant 0 : i32
    return %c0_i32, %arg1 : i32, i32
  }
  func.func @transform_3(%arg0: i32, %arg1: i32, %arg2: i32) -> (i32, i32) {
    %c0_i32 = arith.constant 0 : i32
    %c0_i32_0 = arith.constant 0 : i32
    return %c0_i32, %arg1 : i32, i32
  }
  func.func @transform_4(%arg0: i32, %arg1: i32, %arg2: i32) -> (i32, i32) {
    %c0_i32 = arith.constant 0 : i32
    return %arg0, %arg1 : i32, i32
  }
}

module attributes {stable_mosaic.version = 11 : i64} {
  func.func @_max9_kernel(%arg0: i32, %arg1: memref<72x64xf32, #tpu.memory_space<vmem>>, %arg2: memref<72x64xf32, #tpu.memory_space<vmem>>, %arg3: memref<72x64xf32, #tpu.memory_space<vmem>>, %arg4: memref<72x64xf32, #tpu.memory_space<vmem>>, %arg5: memref<72x64xf32, #tpu.memory_space<vmem>>, %arg6: memref<72x64xf32, #tpu.memory_space<vmem>>, %arg7: memref<72x64xf32, #tpu.memory_space<vmem>>, %arg8: memref<72x64xf32, #tpu.memory_space<vmem>>, %arg9: memref<72x64xf32, #tpu.memory_space<vmem>>, %arg10: memref<72x64xf32, #tpu.memory_space<vmem>>) attributes {dimension_semantics = [#tpu.dimension_semantics<parallel>], iteration_bounds = array<i64: 1>, scalar_prefetch = 0 : i64, scratch_operands = 0 : i64, tpu.core_type = #tpu.core_type<tc>, window_params = [{transform_indices = @transform_0, window_bounds = array<i64: 72, 64>}, {transform_indices = @transform_1, window_bounds = array<i64: 72, 64>}, {transform_indices = @transform_2, window_bounds = array<i64: 72, 64>}, {transform_indices = @transform_3, window_bounds = array<i64: 72, 64>}, {transform_indices = @transform_4, window_bounds = array<i64: 72, 64>}, {transform_indices = @transform_5, window_bounds = array<i64: 72, 64>}, {transform_indices = @transform_6, window_bounds = array<i64: 72, 64>}, {transform_indices = @transform_7, window_bounds = array<i64: 72, 64>}, {transform_indices = @transform_8, window_bounds = array<i64: 72, 64>}, {transform_indices = @transform_9, window_bounds = array<i64: 72, 64>}]} {
    %c0 = arith.constant 0 : index
    %c0_0 = arith.constant 0 : index
    %0 = vector.load %arg1[%c0, %c0_0] : memref<72x64xf32, #tpu.memory_space<vmem>>, vector<72x64xf32>
    %c0_1 = arith.constant 0 : index
    %c0_2 = arith.constant 0 : index
    %1 = vector.load %arg2[%c0_1, %c0_2] : memref<72x64xf32, #tpu.memory_space<vmem>>, vector<72x64xf32>
    %2 = arith.maximumf %0, %1 : vector<72x64xf32>
    %c0_3 = arith.constant 0 : index
    %c0_4 = arith.constant 0 : index
    %3 = vector.load %arg3[%c0_3, %c0_4] : memref<72x64xf32, #tpu.memory_space<vmem>>, vector<72x64xf32>
    %4 = arith.maximumf %2, %3 : vector<72x64xf32>
    %c0_5 = arith.constant 0 : index
    %c0_6 = arith.constant 0 : index
    %5 = vector.load %arg4[%c0_5, %c0_6] : memref<72x64xf32, #tpu.memory_space<vmem>>, vector<72x64xf32>
    %6 = arith.maximumf %4, %5 : vector<72x64xf32>
    %c0_7 = arith.constant 0 : index
    %c0_8 = arith.constant 0 : index
    %7 = vector.load %arg5[%c0_7, %c0_8] : memref<72x64xf32, #tpu.memory_space<vmem>>, vector<72x64xf32>
    %8 = arith.maximumf %6, %7 : vector<72x64xf32>
    %c0_9 = arith.constant 0 : index
    %c0_10 = arith.constant 0 : index
    %9 = vector.load %arg6[%c0_9, %c0_10] : memref<72x64xf32, #tpu.memory_space<vmem>>, vector<72x64xf32>
    %10 = arith.maximumf %8, %9 : vector<72x64xf32>
    %c0_11 = arith.constant 0 : index
    %c0_12 = arith.constant 0 : index
    %11 = vector.load %arg7[%c0_11, %c0_12] : memref<72x64xf32, #tpu.memory_space<vmem>>, vector<72x64xf32>
    %12 = arith.maximumf %10, %11 : vector<72x64xf32>
    %c0_13 = arith.constant 0 : index
    %c0_14 = arith.constant 0 : index
    %13 = vector.load %arg8[%c0_13, %c0_14] : memref<72x64xf32, #tpu.memory_space<vmem>>, vector<72x64xf32>
    %14 = arith.maximumf %12, %13 : vector<72x64xf32>
    %c0_15 = arith.constant 0 : index
    %c0_16 = arith.constant 0 : index
    %15 = vector.load %arg9[%c0_15, %c0_16] : memref<72x64xf32, #tpu.memory_space<vmem>>, vector<72x64xf32>
    %16 = arith.maximumf %14, %15 : vector<72x64xf32>
    %c0_17 = arith.constant 0 : index
    %c0_18 = arith.constant 0 : index
    %17 = vector.load %arg10[%c0_17, %c0_18] : memref<72x64xf32, #tpu.memory_space<vmem>>, vector<72x64xf32>
    tpu.vector_store %arg10[%c0_17, %c0_18], %16 {strides = array<i32>} : memref<72x64xf32, #tpu.memory_space<vmem>>, vector<72x64xf32>,
    return
  }
  func.func @transform_0(%arg0: i32) -> (i32, i32) {
    %c0_i32 = arith.constant 0 : i32
    %c0_i32_0 = arith.constant 0 : i32
    return %arg0, %c0_i32 : i32, i32
  }
  func.func @transform_1(%arg0: i32) -> (i32, i32) {
    %c0_i32 = arith.constant 0 : i32
    %c0_i32_0 = arith.constant 0 : i32
    return %arg0, %c0_i32 : i32, i32
  }
  func.func @transform_2(%arg0: i32) -> (i32, i32) {
    %c0_i32 = arith.constant 0 : i32
    %c0_i32_0 = arith.constant 0 : i32
    return %arg0, %c0_i32 : i32, i32
  }
  func.func @transform_3(%arg0: i32) -> (i32, i32) {
    %c0_i32 = arith.constant 0 : i32
    %c0_i32_0 = arith.constant 0 : i32
    return %arg0, %c0_i32 : i32, i32
  }
  func.func @transform_4(%arg0: i32) -> (i32, i32) {
    %c0_i32 = arith.constant 0 : i32
    %c0_i32_0 = arith.constant 0 : i32
    return %arg0, %c0_i32 : i32, i32
  }
  func.func @transform_5(%arg0: i32) -> (i32, i32) {
    %c0_i32 = arith.constant 0 : i32
    %c0_i32_0 = arith.constant 0 : i32
    return %arg0, %c0_i32 : i32, i32
  }
  func.func @transform_6(%arg0: i32) -> (i32, i32) {
    %c0_i32 = arith.constant 0 : i32
    %c0_i32_0 = arith.constant 0 : i32
    return %arg0, %c0_i32 : i32, i32
  }
  func.func @transform_7(%arg0: i32) -> (i32, i32) {
    %c0_i32 = arith.constant 0 : i32
    %c0_i32_0 = arith.constant 0 : i32
    return %arg0, %c0_i32 : i32, i32
  }
  func.func @transform_8(%arg0: i32) -> (i32, i32) {
    %c0_i32 = arith.constant 0 : i32
    %c0_i32_0 = arith.constant 0 : i32
    return %arg0, %c0_i32 : i32, i32
  }
  func.func @transform_9(%arg0: i32) -> (i32, i32) {
    %c0_i32 = arith.constant 0 : i32
    %c0_i32_0 = arith.constant 0 : i32
    return %arg0, %c0_i32 : i32, i32
  }
}

module attributes {stable_mosaic.version = 11 : i64} {
  func.func @_mm_kernel(%arg0: i32, %arg1: i32, %arg2: i32, %arg3: memref<72x128xbf16, #tpu.memory_space<vmem>>, %arg4: memref<128x128xbf16, #tpu.memory_space<vmem>>, %arg5: memref<1x128xf32, #tpu.memory_space<vmem>>, %arg6: memref<1x128xf32, #tpu.memory_space<vmem>>, %arg7: memref<72x128xf32, #tpu.memory_space<vmem>>, %arg8: memref<72x128xf32, #tpu.memory_space<vmem>>) attributes {dimension_semantics = [#tpu.dimension_semantics<parallel>, #tpu.dimension_semantics<parallel>, #tpu.dimension_semantics<arbitrary>], iteration_bounds = array<i64: 1, 1, 1>, scalar_prefetch = 0 : i64, scratch_operands = 1 : i64, tpu.core_type = #tpu.core_type<tc>, window_params = [{transform_indices = @transform_0, window_bounds = array<i64: 72, 128>}, {transform_indices = @transform_1, window_bounds = array<i64: 128, 128>}, {transform_indices = @transform_2, window_bounds = array<i64: 1, 128>}, {transform_indices = @transform_3, window_bounds = array<i64: 1, 128>}, {transform_indices = @transform_4, window_bounds = array<i64: 72, 128>}]} {
    %c0_i32 = arith.constant 0 : i32
    %0 = arith.cmpi eq, %arg2, %c0_i32 : i32
    %1 = arith.extui %0 : i1 to i32
    %c0_i32_0 = arith.constant 0 : i32
    %2 = arith.cmpi ne, %1, %c0_i32_0 : i32
    scf.if %2 {
      %cst_10 = arith.constant 0.000000e+00 : f32
      %12 = vector.broadcast %cst_10 : f32 to vector<72x128xf32>
      %c0_11 = arith.constant 0 : index
      %c0_12 = arith.constant 0 : index
      %13 = vector.load %arg8[%c0_11, %c0_12] : memref<72x128xf32, #tpu.memory_space<vmem>>, vector<72x128xf32>
      tpu.vector_store %arg8[%c0_11, %c0_12], %12 {strides = array<i32>} : memref<72x128xf32, #tpu.memory_space<vmem>>, vector<72x128xf32>,
    } else {
    }
    %c0 = arith.constant 0 : index
    %c0_1 = arith.constant 0 : index
    %3 = vector.load %arg8[%c0, %c0_1] : memref<72x128xf32, #tpu.memory_space<vmem>>, vector<72x128xf32>
    %c0_2 = arith.constant 0 : index
    %c0_3 = arith.constant 0 : index
    %4 = vector.load %arg3[%c0_2, %c0_3] : memref<72x128xbf16, #tpu.memory_space<vmem>>, vector<72x128xbf16>
    %c0_4 = arith.constant 0 : index
    %c0_5 = arith.constant 0 : index
    %5 = vector.load %arg4[%c0_4, %c0_5] : memref<128x128xbf16, #tpu.memory_space<vmem>>, vector<128x128xbf16>
    %cst = arith.constant dense<0.000000e+00> : vector<72x128xf32>
    %6 = tpu.matmul %4, %5, %cst {dimension_numbers = #tpu.dot_dimension_numbers<[1], [0], [0], [1], [0, 0, 1, 1], [], []>} : vector<72x128xbf16>, vector<128x128xbf16>, vector<72x128xf32> -> vector<72x128xf32>
    %7 = arith.addf %3, %6 : vector<72x128xf32>
    %c0_6 = arith.constant 0 : index
    %c0_7 = arith.constant 0 : index
    %8 = vector.load %arg8[%c0_6, %c0_7] : memref<72x128xf32, #tpu.memory_space<vmem>>, vector<72x128xf32>
    tpu.vector_store %arg8[%c0_6, %c0_7], %7 {strides = array<i32>} : memref<72x128xf32, #tpu.memory_space<vmem>>, vector<72x128xf32>,
    %c0_i32_8 = arith.constant 0 : i32
    %9 = arith.cmpi eq, %arg2, %c0_i32_8 : i32
    %10 = arith.extui %9 : i1 to i32
    %c0_i32_9 = arith.constant 0 : i32
    %11 = arith.cmpi ne, %10, %c0_i32_9 : i32
    scf.if %11 {
      %c0_10 = arith.constant 0 : index
      %c0_11 = arith.constant 0 : index
      %12 = vector.load %arg8[%c0_10, %c0_11] : memref<72x128xf32, #tpu.memory_space<vmem>>, vector<72x128xf32>
      %c0_12 = arith.constant 0 : index
      %c0_13 = arith.constant 0 : index
      %13 = vector.load %arg5[%c0_12, %c0_13] : memref<1x128xf32, #tpu.memory_space<vmem>>, vector<1x128xf32>
      %14 = vector.broadcast %13 : vector<1x128xf32> to vector<72x128xf32>
      %15 = arith.mulf %12, %14 : vector<72x128xf32>
      %c0_14 = arith.constant 0 : index
      %c0_15 = arith.constant 0 : index
      %16 = vector.load %arg6[%c0_14, %c0_15] : memref<1x128xf32, #tpu.memory_space<vmem>>, vector<1x128xf32>
      %17 = vector.broadcast %16 : vector<1x128xf32> to vector<72x128xf32>
      %18 = arith.addf %15, %17 : vector<72x128xf32>
      %cst_16 = arith.constant 0.000000e+00 : f32
      %19 = vector.broadcast %cst_16 : f32 to vector<72x128xf32>
      %20 = arith.maximumf %18, %19 : vector<72x128xf32>
      %c0_17 = arith.constant 0 : index
      %c0_18 = arith.constant 0 : index
      %21 = vector.load %arg7[%c0_17, %c0_18] : memref<72x128xf32, #tpu.memory_space<vmem>>, vector<72x128xf32>
      tpu.vector_store %arg7[%c0_17, %c0_18], %20 {strides = array<i32>} : memref<72x128xf32, #tpu.memory_space<vmem>>, vector<72x128xf32>,
    } else {
    }
    return
  }
  func.func @transform_0(%arg0: i32, %arg1: i32, %arg2: i32) -> (i32, i32) {
    %c0_i32 = arith.constant 0 : i32
    return %arg0, %arg2 : i32, i32
  }
  func.func @transform_1(%arg0: i32, %arg1: i32, %arg2: i32) -> (i32, i32) {
    %c0_i32 = arith.constant 0 : i32
    return %arg2, %arg1 : i32, i32
  }
  func.func @transform_2(%arg0: i32, %arg1: i32, %arg2: i32) -> (i32, i32) {
    %c0_i32 = arith.constant 0 : i32
    %c0_i32_0 = arith.constant 0 : i32
    return %c0_i32, %arg1 : i32, i32
  }
  func.func @transform_3(%arg0: i32, %arg1: i32, %arg2: i32) -> (i32, i32) {
    %c0_i32 = arith.constant 0 : i32
    %c0_i32_0 = arith.constant 0 : i32
    return %c0_i32, %arg1 : i32, i32
  }
  func.func @transform_4(%arg0: i32, %arg1: i32, %arg2: i32) -> (i32, i32) {
    %c0_i32 = arith.constant 0 : i32
    return %arg0, %arg1 : i32, i32
  }
}

module attributes {stable_mosaic.version = 11 : i64} {
  func.func @_mm_kernel(%arg0: i32, %arg1: i32, %arg2: i32, %arg3: memref<72x256xbf16, #tpu.memory_space<vmem>>, %arg4: memref<256x128xbf16, #tpu.memory_space<vmem>>, %arg5: memref<1x128xf32, #tpu.memory_space<vmem>>, %arg6: memref<1x128xf32, #tpu.memory_space<vmem>>, %arg7: memref<72x128xf32, #tpu.memory_space<vmem>>, %arg8: memref<72x128xf32, #tpu.memory_space<vmem>>) attributes {dimension_semantics = [#tpu.dimension_semantics<parallel>, #tpu.dimension_semantics<parallel>, #tpu.dimension_semantics<arbitrary>], iteration_bounds = array<i64: 1, 1, 1>, scalar_prefetch = 0 : i64, scratch_operands = 1 : i64, tpu.core_type = #tpu.core_type<tc>, window_params = [{transform_indices = @transform_0, window_bounds = array<i64: 72, 256>}, {transform_indices = @transform_1, window_bounds = array<i64: 256, 128>}, {transform_indices = @transform_2, window_bounds = array<i64: 1, 128>}, {transform_indices = @transform_3, window_bounds = array<i64: 1, 128>}, {transform_indices = @transform_4, window_bounds = array<i64: 72, 128>}]} {
    %c0_i32 = arith.constant 0 : i32
    %0 = arith.cmpi eq, %arg2, %c0_i32 : i32
    %1 = arith.extui %0 : i1 to i32
    %c0_i32_0 = arith.constant 0 : i32
    %2 = arith.cmpi ne, %1, %c0_i32_0 : i32
    scf.if %2 {
      %cst_10 = arith.constant 0.000000e+00 : f32
      %12 = vector.broadcast %cst_10 : f32 to vector<72x128xf32>
      %c0_11 = arith.constant 0 : index
      %c0_12 = arith.constant 0 : index
      %13 = vector.load %arg8[%c0_11, %c0_12] : memref<72x128xf32, #tpu.memory_space<vmem>>, vector<72x128xf32>
      tpu.vector_store %arg8[%c0_11, %c0_12], %12 {strides = array<i32>} : memref<72x128xf32, #tpu.memory_space<vmem>>, vector<72x128xf32>,
    } else {
    }
    %c0 = arith.constant 0 : index
    %c0_1 = arith.constant 0 : index
    %3 = vector.load %arg8[%c0, %c0_1] : memref<72x128xf32, #tpu.memory_space<vmem>>, vector<72x128xf32>
    %c0_2 = arith.constant 0 : index
    %c0_3 = arith.constant 0 : index
    %4 = vector.load %arg3[%c0_2, %c0_3] : memref<72x256xbf16, #tpu.memory_space<vmem>>, vector<72x256xbf16>
    %c0_4 = arith.constant 0 : index
    %c0_5 = arith.constant 0 : index
    %5 = vector.load %arg4[%c0_4, %c0_5] : memref<256x128xbf16, #tpu.memory_space<vmem>>, vector<256x128xbf16>
    %cst = arith.constant dense<0.000000e+00> : vector<72x128xf32>
    %6 = tpu.matmul %4, %5, %cst {dimension_numbers = #tpu.dot_dimension_numbers<[1], [0], [0], [1], [0, 0, 1, 1], [], []>} : vector<72x256xbf16>, vector<256x128xbf16>, vector<72x128xf32> -> vector<72x128xf32>
    %7 = arith.addf %3, %6 : vector<72x128xf32>
    %c0_6 = arith.constant 0 : index
    %c0_7 = arith.constant 0 : index
    %8 = vector.load %arg8[%c0_6, %c0_7] : memref<72x128xf32, #tpu.memory_space<vmem>>, vector<72x128xf32>
    tpu.vector_store %arg8[%c0_6, %c0_7], %7 {strides = array<i32>} : memref<72x128xf32, #tpu.memory_space<vmem>>, vector<72x128xf32>,
    %c0_i32_8 = arith.constant 0 : i32
    %9 = arith.cmpi eq, %arg2, %c0_i32_8 : i32
    %10 = arith.extui %9 : i1 to i32
    %c0_i32_9 = arith.constant 0 : i32
    %11 = arith.cmpi ne, %10, %c0_i32_9 : i32
    scf.if %11 {
      %c0_10 = arith.constant 0 : index
      %c0_11 = arith.constant 0 : index
      %12 = vector.load %arg8[%c0_10, %c0_11] : memref<72x128xf32, #tpu.memory_space<vmem>>, vector<72x128xf32>
      %c0_12 = arith.constant 0 : index
      %c0_13 = arith.constant 0 : index
      %13 = vector.load %arg5[%c0_12, %c0_13] : memref<1x128xf32, #tpu.memory_space<vmem>>, vector<1x128xf32>
      %14 = vector.broadcast %13 : vector<1x128xf32> to vector<72x128xf32>
      %15 = arith.mulf %12, %14 : vector<72x128xf32>
      %c0_14 = arith.constant 0 : index
      %c0_15 = arith.constant 0 : index
      %16 = vector.load %arg6[%c0_14, %c0_15] : memref<1x128xf32, #tpu.memory_space<vmem>>, vector<1x128xf32>
      %17 = vector.broadcast %16 : vector<1x128xf32> to vector<72x128xf32>
      %18 = arith.addf %15, %17 : vector<72x128xf32>
      %cst_16 = arith.constant 0.000000e+00 : f32
      %19 = vector.broadcast %cst_16 : f32 to vector<72x128xf32>
      %20 = arith.maximumf %18, %19 : vector<72x128xf32>
      %c0_17 = arith.constant 0 : index
      %c0_18 = arith.constant 0 : index
      %21 = vector.load %arg7[%c0_17, %c0_18] : memref<72x128xf32, #tpu.memory_space<vmem>>, vector<72x128xf32>
      tpu.vector_store %arg7[%c0_17, %c0_18], %20 {strides = array<i32>} : memref<72x128xf32, #tpu.memory_space<vmem>>, vector<72x128xf32>,
    } else {
    }
    return
  }
  func.func @transform_0(%arg0: i32, %arg1: i32, %arg2: i32) -> (i32, i32) {
    %c0_i32 = arith.constant 0 : i32
    return %arg0, %arg2 : i32, i32
  }
  func.func @transform_1(%arg0: i32, %arg1: i32, %arg2: i32) -> (i32, i32) {
    %c0_i32 = arith.constant 0 : i32
    return %arg2, %arg1 : i32, i32
  }
  func.func @transform_2(%arg0: i32, %arg1: i32, %arg2: i32) -> (i32, i32) {
    %c0_i32 = arith.constant 0 : i32
    %c0_i32_0 = arith.constant 0 : i32
    return %c0_i32, %arg1 : i32, i32
  }
  func.func @transform_3(%arg0: i32, %arg1: i32, %arg2: i32) -> (i32, i32) {
    %c0_i32 = arith.constant 0 : i32
    %c0_i32_0 = arith.constant 0 : i32
    return %c0_i32, %arg1 : i32, i32
  }
  func.func @transform_4(%arg0: i32, %arg1: i32, %arg2: i32) -> (i32, i32) {
    %c0_i32 = arith.constant 0 : i32
    return %arg0, %arg1 : i32, i32
  }
}

module attributes {stable_mosaic.version = 11 : i64} {
  func.func @_mm_res_kernel(%arg0: i32, %arg1: i32, %arg2: i32, %arg3: memref<72x128xbf16, #tpu.memory_space<vmem>>, %arg4: memref<128x128xbf16, #tpu.memory_space<vmem>>, %arg5: memref<1x128xf32, #tpu.memory_space<vmem>>, %arg6: memref<1x128xf32, #tpu.memory_space<vmem>>, %arg7: memref<72x128xf32, #tpu.memory_space<vmem>>, %arg8: memref<72x128xf32, #tpu.memory_space<vmem>>, %arg9: memref<72x128xf32, #tpu.memory_space<vmem>>) attributes {dimension_semantics = [#tpu.dimension_semantics<parallel>, #tpu.dimension_semantics<parallel>, #tpu.dimension_semantics<arbitrary>], iteration_bounds = array<i64: 1, 1, 1>, scalar_prefetch = 0 : i64, scratch_operands = 1 : i64, tpu.core_type = #tpu.core_type<tc>, window_params = [{transform_indices = @transform_0, window_bounds = array<i64: 72, 128>}, {transform_indices = @transform_1, window_bounds = array<i64: 128, 128>}, {transform_indices = @transform_2, window_bounds = array<i64: 1, 128>}, {transform_indices = @transform_3, window_bounds = array<i64: 1, 128>}, {transform_indices = @transform_4, window_bounds = array<i64: 72, 128>}, {transform_indices = @transform_5, window_bounds = array<i64: 72, 128>}]} {
    %c0_i32 = arith.constant 0 : i32
    %0 = arith.cmpi eq, %arg2, %c0_i32 : i32
    %1 = arith.extui %0 : i1 to i32
    %c0_i32_0 = arith.constant 0 : i32
    %2 = arith.cmpi ne, %1, %c0_i32_0 : i32
    scf.if %2 {
      %cst_10 = arith.constant 0.000000e+00 : f32
      %12 = vector.broadcast %cst_10 : f32 to vector<72x128xf32>
      %c0_11 = arith.constant 0 : index
      %c0_12 = arith.constant 0 : index
      %13 = vector.load %arg9[%c0_11, %c0_12] : memref<72x128xf32, #tpu.memory_space<vmem>>, vector<72x128xf32>
      tpu.vector_store %arg9[%c0_11, %c0_12], %12 {strides = array<i32>} : memref<72x128xf32, #tpu.memory_space<vmem>>, vector<72x128xf32>,
    } else {
    }
    %c0 = arith.constant 0 : index
    %c0_1 = arith.constant 0 : index
    %3 = vector.load %arg9[%c0, %c0_1] : memref<72x128xf32, #tpu.memory_space<vmem>>, vector<72x128xf32>
    %c0_2 = arith.constant 0 : index
    %c0_3 = arith.constant 0 : index
    %4 = vector.load %arg3[%c0_2, %c0_3] : memref<72x128xbf16, #tpu.memory_space<vmem>>, vector<72x128xbf16>
    %c0_4 = arith.constant 0 : index
    %c0_5 = arith.constant 0 : index
    %5 = vector.load %arg4[%c0_4, %c0_5] : memref<128x128xbf16, #tpu.memory_space<vmem>>, vector<128x128xbf16>
    %cst = arith.constant dense<0.000000e+00> : vector<72x128xf32>
    %6 = tpu.matmul %4, %5, %cst {dimension_numbers = #tpu.dot_dimension_numbers<[1], [0], [0], [1], [0, 0, 1, 1], [], []>} : vector<72x128xbf16>, vector<128x128xbf16>, vector<72x128xf32> -> vector<72x128xf32>
    %7 = arith.addf %3, %6 : vector<72x128xf32>
    %c0_6 = arith.constant 0 : index
    %c0_7 = arith.constant 0 : index
    %8 = vector.load %arg9[%c0_6, %c0_7] : memref<72x128xf32, #tpu.memory_space<vmem>>, vector<72x128xf32>
    tpu.vector_store %arg9[%c0_6, %c0_7], %7 {strides = array<i32>} : memref<72x128xf32, #tpu.memory_space<vmem>>, vector<72x128xf32>,
    %c0_i32_8 = arith.constant 0 : i32
    %9 = arith.cmpi eq, %arg2, %c0_i32_8 : i32
    %10 = arith.extui %9 : i1 to i32
    %c0_i32_9 = arith.constant 0 : i32
    %11 = arith.cmpi ne, %10, %c0_i32_9 : i32
    scf.if %11 {
      %c0_10 = arith.constant 0 : index
      %c0_11 = arith.constant 0 : index
      %12 = vector.load %arg9[%c0_10, %c0_11] : memref<72x128xf32, #tpu.memory_space<vmem>>, vector<72x128xf32>
      %c0_12 = arith.constant 0 : index
      %c0_13 = arith.constant 0 : index
      %13 = vector.load %arg5[%c0_12, %c0_13] : memref<1x128xf32, #tpu.memory_space<vmem>>, vector<1x128xf32>
      %14 = vector.broadcast %13 : vector<1x128xf32> to vector<72x128xf32>
      %15 = arith.mulf %12, %14 : vector<72x128xf32>
      %c0_14 = arith.constant 0 : index
      %c0_15 = arith.constant 0 : index
      %16 = vector.load %arg6[%c0_14, %c0_15] : memref<1x128xf32, #tpu.memory_space<vmem>>, vector<1x128xf32>
      %17 = vector.broadcast %16 : vector<1x128xf32> to vector<72x128xf32>
      %18 = arith.addf %15, %17 : vector<72x128xf32>
      %c0_16 = arith.constant 0 : index
      %c0_17 = arith.constant 0 : index
      %19 = vector.load %arg7[%c0_16, %c0_17] : memref<72x128xf32, #tpu.memory_space<vmem>>, vector<72x128xf32>
      %20 = arith.addf %18, %19 : vector<72x128xf32>
      %cst_18 = arith.constant 0.000000e+00 : f32
      %21 = vector.broadcast %cst_18 : f32 to vector<72x128xf32>
      %22 = arith.maximumf %20, %21 : vector<72x128xf32>
      %c0_19 = arith.constant 0 : index
      %c0_20 = arith.constant 0 : index
      %23 = vector.load %arg8[%c0_19, %c0_20] : memref<72x128xf32, #tpu.memory_space<vmem>>, vector<72x128xf32>
      tpu.vector_store %arg8[%c0_19, %c0_20], %22 {strides = array<i32>} : memref<72x128xf32, #tpu.memory_space<vmem>>, vector<72x128xf32>,
    } else {
    }
    return
  }
  func.func @transform_0(%arg0: i32, %arg1: i32, %arg2: i32) -> (i32, i32) {
    %c0_i32 = arith.constant 0 : i32
    return %arg0, %arg2 : i32, i32
  }
  func.func @transform_1(%arg0: i32, %arg1: i32, %arg2: i32) -> (i32, i32) {
    %c0_i32 = arith.constant 0 : i32
    return %arg2, %arg1 : i32, i32
  }
  func.func @transform_2(%arg0: i32, %arg1: i32, %arg2: i32) -> (i32, i32) {
    %c0_i32 = arith.constant 0 : i32
    %c0_i32_0 = arith.constant 0 : i32
    return %c0_i32, %arg1 : i32, i32
  }
  func.func @transform_3(%arg0: i32, %arg1: i32, %arg2: i32) -> (i32, i32) {
    %c0_i32 = arith.constant 0 : i32
    %c0_i32_0 = arith.constant 0 : i32
    return %c0_i32, %arg1 : i32, i32
  }
  func.func @transform_4(%arg0: i32, %arg1: i32, %arg2: i32) -> (i32, i32) {
    %c0_i32 = arith.constant 0 : i32
    return %arg0, %arg1 : i32, i32
  }
  func.func @transform_5(%arg0: i32, %arg1: i32, %arg2: i32) -> (i32, i32) {
    %c0_i32 = arith.constant 0 : i32
    return %arg0, %arg1 : i32, i32
  }
}

module attributes {stable_mosaic.version = 11 : i64} {
  func.func @_mm_kernel(%arg0: i32, %arg1: i32, %arg2: i32, %arg3: memref<24x384xbf16, #tpu.memory_space<vmem>>, %arg4: memref<384x128xbf16, #tpu.memory_space<vmem>>, %arg5: memref<1x128xf32, #tpu.memory_space<vmem>>, %arg6: memref<1x128xf32, #tpu.memory_space<vmem>>, %arg7: memref<24x128xf32, #tpu.memory_space<vmem>>, %arg8: memref<24x128xf32, #tpu.memory_space<vmem>>) attributes {dimension_semantics = [#tpu.dimension_semantics<parallel>, #tpu.dimension_semantics<parallel>, #tpu.dimension_semantics<arbitrary>], iteration_bounds = array<i64: 1, 1, 1>, scalar_prefetch = 0 : i64, scratch_operands = 1 : i64, tpu.core_type = #tpu.core_type<tc>, window_params = [{transform_indices = @transform_0, window_bounds = array<i64: 24, 384>}, {transform_indices = @transform_1, window_bounds = array<i64: 384, 128>}, {transform_indices = @transform_2, window_bounds = array<i64: 1, 128>}, {transform_indices = @transform_3, window_bounds = array<i64: 1, 128>}, {transform_indices = @transform_4, window_bounds = array<i64: 24, 128>}]} {
    %c0_i32 = arith.constant 0 : i32
    %0 = arith.cmpi eq, %arg2, %c0_i32 : i32
    %1 = arith.extui %0 : i1 to i32
    %c0_i32_0 = arith.constant 0 : i32
    %2 = arith.cmpi ne, %1, %c0_i32_0 : i32
    scf.if %2 {
      %cst_10 = arith.constant 0.000000e+00 : f32
      %12 = vector.broadcast %cst_10 : f32 to vector<24x128xf32>
      %c0_11 = arith.constant 0 : index
      %c0_12 = arith.constant 0 : index
      %13 = vector.load %arg8[%c0_11, %c0_12] : memref<24x128xf32, #tpu.memory_space<vmem>>, vector<24x128xf32>
      tpu.vector_store %arg8[%c0_11, %c0_12], %12 {strides = array<i32>} : memref<24x128xf32, #tpu.memory_space<vmem>>, vector<24x128xf32>,
    } else {
    }
    %c0 = arith.constant 0 : index
    %c0_1 = arith.constant 0 : index
    %3 = vector.load %arg8[%c0, %c0_1] : memref<24x128xf32, #tpu.memory_space<vmem>>, vector<24x128xf32>
    %c0_2 = arith.constant 0 : index
    %c0_3 = arith.constant 0 : index
    %4 = vector.load %arg3[%c0_2, %c0_3] : memref<24x384xbf16, #tpu.memory_space<vmem>>, vector<24x384xbf16>
    %c0_4 = arith.constant 0 : index
    %c0_5 = arith.constant 0 : index
    %5 = vector.load %arg4[%c0_4, %c0_5] : memref<384x128xbf16, #tpu.memory_space<vmem>>, vector<384x128xbf16>
    %cst = arith.constant dense<0.000000e+00> : vector<24x128xf32>
    %6 = tpu.matmul %4, %5, %cst {dimension_numbers = #tpu.dot_dimension_numbers<[1], [0], [0], [1], [0, 0, 1, 1], [], []>} : vector<24x384xbf16>, vector<384x128xbf16>, vector<24x128xf32> -> vector<24x128xf32>
    %7 = arith.addf %3, %6 : vector<24x128xf32>
    %c0_6 = arith.constant 0 : index
    %c0_7 = arith.constant 0 : index
    %8 = vector.load %arg8[%c0_6, %c0_7] : memref<24x128xf32, #tpu.memory_space<vmem>>, vector<24x128xf32>
    tpu.vector_store %arg8[%c0_6, %c0_7], %7 {strides = array<i32>} : memref<24x128xf32, #tpu.memory_space<vmem>>, vector<24x128xf32>,
    %c0_i32_8 = arith.constant 0 : i32
    %9 = arith.cmpi eq, %arg2, %c0_i32_8 : i32
    %10 = arith.extui %9 : i1 to i32
    %c0_i32_9 = arith.constant 0 : i32
    %11 = arith.cmpi ne, %10, %c0_i32_9 : i32
    scf.if %11 {
      %c0_10 = arith.constant 0 : index
      %c0_11 = arith.constant 0 : index
      %12 = vector.load %arg8[%c0_10, %c0_11] : memref<24x128xf32, #tpu.memory_space<vmem>>, vector<24x128xf32>
      %c0_12 = arith.constant 0 : index
      %c0_13 = arith.constant 0 : index
      %13 = vector.load %arg5[%c0_12, %c0_13] : memref<1x128xf32, #tpu.memory_space<vmem>>, vector<1x128xf32>
      %14 = vector.broadcast %13 : vector<1x128xf32> to vector<24x128xf32>
      %15 = arith.mulf %12, %14 : vector<24x128xf32>
      %c0_14 = arith.constant 0 : index
      %c0_15 = arith.constant 0 : index
      %16 = vector.load %arg6[%c0_14, %c0_15] : memref<1x128xf32, #tpu.memory_space<vmem>>, vector<1x128xf32>
      %17 = vector.broadcast %16 : vector<1x128xf32> to vector<24x128xf32>
      %18 = arith.addf %15, %17 : vector<24x128xf32>
      %cst_16 = arith.constant 0.000000e+00 : f32
      %19 = vector.broadcast %cst_16 : f32 to vector<24x128xf32>
      %20 = arith.maximumf %18, %19 : vector<24x128xf32>
      %c0_17 = arith.constant 0 : index
      %c0_18 = arith.constant 0 : index
      %21 = vector.load %arg7[%c0_17, %c0_18] : memref<24x128xf32, #tpu.memory_space<vmem>>, vector<24x128xf32>
      tpu.vector_store %arg7[%c0_17, %c0_18], %20 {strides = array<i32>} : memref<24x128xf32, #tpu.memory_space<vmem>>, vector<24x128xf32>,
    } else {
    }
    return
  }
  func.func @transform_0(%arg0: i32, %arg1: i32, %arg2: i32) -> (i32, i32) {
    %c0_i32 = arith.constant 0 : i32
    return %arg0, %arg2 : i32, i32
  }
  func.func @transform_1(%arg0: i32, %arg1: i32, %arg2: i32) -> (i32, i32) {
    %c0_i32 = arith.constant 0 : i32
    return %arg2, %arg1 : i32, i32
  }
  func.func @transform_2(%arg0: i32, %arg1: i32, %arg2: i32) -> (i32, i32) {
    %c0_i32 = arith.constant 0 : i32
    %c0_i32_0 = arith.constant 0 : i32
    return %c0_i32, %arg1 : i32, i32
  }
  func.func @transform_3(%arg0: i32, %arg1: i32, %arg2: i32) -> (i32, i32) {
    %c0_i32 = arith.constant 0 : i32
    %c0_i32_0 = arith.constant 0 : i32
    return %c0_i32, %arg1 : i32, i32
  }
  func.func @transform_4(%arg0: i32, %arg1: i32, %arg2: i32) -> (i32, i32) {
    %c0_i32 = arith.constant 0 : i32
    return %arg0, %arg1 : i32, i32
  }
}

module attributes {stable_mosaic.version = 11 : i64} {
  func.func @_mm_kernel(%arg0: i32, %arg1: i32, %arg2: i32, %arg3: memref<24x128xbf16, #tpu.memory_space<vmem>>, %arg4: memref<128x128xbf16, #tpu.memory_space<vmem>>, %arg5: memref<1x128xf32, #tpu.memory_space<vmem>>, %arg6: memref<1x128xf32, #tpu.memory_space<vmem>>, %arg7: memref<24x128xf32, #tpu.memory_space<vmem>>, %arg8: memref<24x128xf32, #tpu.memory_space<vmem>>) attributes {dimension_semantics = [#tpu.dimension_semantics<parallel>, #tpu.dimension_semantics<parallel>, #tpu.dimension_semantics<arbitrary>], iteration_bounds = array<i64: 1, 1, 1>, scalar_prefetch = 0 : i64, scratch_operands = 1 : i64, tpu.core_type = #tpu.core_type<tc>, window_params = [{transform_indices = @transform_0, window_bounds = array<i64: 24, 128>}, {transform_indices = @transform_1, window_bounds = array<i64: 128, 128>}, {transform_indices = @transform_2, window_bounds = array<i64: 1, 128>}, {transform_indices = @transform_3, window_bounds = array<i64: 1, 128>}, {transform_indices = @transform_4, window_bounds = array<i64: 24, 128>}]} {
    %c0_i32 = arith.constant 0 : i32
    %0 = arith.cmpi eq, %arg2, %c0_i32 : i32
    %1 = arith.extui %0 : i1 to i32
    %c0_i32_0 = arith.constant 0 : i32
    %2 = arith.cmpi ne, %1, %c0_i32_0 : i32
    scf.if %2 {
      %cst_10 = arith.constant 0.000000e+00 : f32
      %12 = vector.broadcast %cst_10 : f32 to vector<24x128xf32>
      %c0_11 = arith.constant 0 : index
      %c0_12 = arith.constant 0 : index
      %13 = vector.load %arg8[%c0_11, %c0_12] : memref<24x128xf32, #tpu.memory_space<vmem>>, vector<24x128xf32>
      tpu.vector_store %arg8[%c0_11, %c0_12], %12 {strides = array<i32>} : memref<24x128xf32, #tpu.memory_space<vmem>>, vector<24x128xf32>,
    } else {
    }
    %c0 = arith.constant 0 : index
    %c0_1 = arith.constant 0 : index
    %3 = vector.load %arg8[%c0, %c0_1] : memref<24x128xf32, #tpu.memory_space<vmem>>, vector<24x128xf32>
    %c0_2 = arith.constant 0 : index
    %c0_3 = arith.constant 0 : index
    %4 = vector.load %arg3[%c0_2, %c0_3] : memref<24x128xbf16, #tpu.memory_space<vmem>>, vector<24x128xbf16>
    %c0_4 = arith.constant 0 : index
    %c0_5 = arith.constant 0 : index
    %5 = vector.load %arg4[%c0_4, %c0_5] : memref<128x128xbf16, #tpu.memory_space<vmem>>, vector<128x128xbf16>
    %cst = arith.constant dense<0.000000e+00> : vector<24x128xf32>
    %6 = tpu.matmul %4, %5, %cst {dimension_numbers = #tpu.dot_dimension_numbers<[1], [0], [0], [1], [0, 0, 1, 1], [], []>} : vector<24x128xbf16>, vector<128x128xbf16>, vector<24x128xf32> -> vector<24x128xf32>
    %7 = arith.addf %3, %6 : vector<24x128xf32>
    %c0_6 = arith.constant 0 : index
    %c0_7 = arith.constant 0 : index
    %8 = vector.load %arg8[%c0_6, %c0_7] : memref<24x128xf32, #tpu.memory_space<vmem>>, vector<24x128xf32>
    tpu.vector_store %arg8[%c0_6, %c0_7], %7 {strides = array<i32>} : memref<24x128xf32, #tpu.memory_space<vmem>>, vector<24x128xf32>,
    %c0_i32_8 = arith.constant 0 : i32
    %9 = arith.cmpi eq, %arg2, %c0_i32_8 : i32
    %10 = arith.extui %9 : i1 to i32
    %c0_i32_9 = arith.constant 0 : i32
    %11 = arith.cmpi ne, %10, %c0_i32_9 : i32
    scf.if %11 {
      %c0_10 = arith.constant 0 : index
      %c0_11 = arith.constant 0 : index
      %12 = vector.load %arg8[%c0_10, %c0_11] : memref<24x128xf32, #tpu.memory_space<vmem>>, vector<24x128xf32>
      %c0_12 = arith.constant 0 : index
      %c0_13 = arith.constant 0 : index
      %13 = vector.load %arg5[%c0_12, %c0_13] : memref<1x128xf32, #tpu.memory_space<vmem>>, vector<1x128xf32>
      %14 = vector.broadcast %13 : vector<1x128xf32> to vector<24x128xf32>
      %15 = arith.mulf %12, %14 : vector<24x128xf32>
      %c0_14 = arith.constant 0 : index
      %c0_15 = arith.constant 0 : index
      %16 = vector.load %arg6[%c0_14, %c0_15] : memref<1x128xf32, #tpu.memory_space<vmem>>, vector<1x128xf32>
      %17 = vector.broadcast %16 : vector<1x128xf32> to vector<24x128xf32>
      %18 = arith.addf %15, %17 : vector<24x128xf32>
      %c0_16 = arith.constant 0 : index
      %c0_17 = arith.constant 0 : index
      %19 = vector.load %arg7[%c0_16, %c0_17] : memref<24x128xf32, #tpu.memory_space<vmem>>, vector<24x128xf32>
      tpu.vector_store %arg7[%c0_16, %c0_17], %18 {strides = array<i32>} : memref<24x128xf32, #tpu.memory_space<vmem>>, vector<24x128xf32>,
    } else {
    }
    return
  }
  func.func @transform_0(%arg0: i32, %arg1: i32, %arg2: i32) -> (i32, i32) {
    %c0_i32 = arith.constant 0 : i32
    return %arg0, %arg2 : i32, i32
  }
  func.func @transform_1(%arg0: i32, %arg1: i32, %arg2: i32) -> (i32, i32) {
    %c0_i32 = arith.constant 0 : i32
    return %arg2, %arg1 : i32, i32
  }
  func.func @transform_2(%arg0: i32, %arg1: i32, %arg2: i32) -> (i32, i32) {
    %c0_i32 = arith.constant 0 : i32
    %c0_i32_0 = arith.constant 0 : i32
    return %c0_i32, %arg1 : i32, i32
  }
  func.func @transform_3(%arg0: i32, %arg1: i32, %arg2: i32) -> (i32, i32) {
    %c0_i32 = arith.constant 0 : i32
    %c0_i32_0 = arith.constant 0 : i32
    return %c0_i32, %arg1 : i32, i32
  }
  func.func @transform_4(%arg0: i32, %arg1: i32, %arg2: i32) -> (i32, i32) {
    %c0_i32 = arith.constant 0 : i32
    return %arg0, %arg1 : i32, i32
  }
}

module attributes {stable_mosaic.version = 11 : i64} {
  func.func @_mm_res_kernel(%arg0: i32, %arg1: i32, %arg2: i32, %arg3: memref<24x128xbf16, #tpu.memory_space<vmem>>, %arg4: memref<128x128xbf16, #tpu.memory_space<vmem>>, %arg5: memref<1x128xf32, #tpu.memory_space<vmem>>, %arg6: memref<1x128xf32, #tpu.memory_space<vmem>>, %arg7: memref<24x128xf32, #tpu.memory_space<vmem>>, %arg8: memref<24x128xf32, #tpu.memory_space<vmem>>, %arg9: memref<24x128xf32, #tpu.memory_space<vmem>>) attributes {dimension_semantics = [#tpu.dimension_semantics<parallel>, #tpu.dimension_semantics<parallel>, #tpu.dimension_semantics<arbitrary>], iteration_bounds = array<i64: 1, 1, 1>, scalar_prefetch = 0 : i64, scratch_operands = 1 : i64, tpu.core_type = #tpu.core_type<tc>, window_params = [{transform_indices = @transform_0, window_bounds = array<i64: 24, 128>}, {transform_indices = @transform_1, window_bounds = array<i64: 128, 128>}, {transform_indices = @transform_2, window_bounds = array<i64: 1, 128>}, {transform_indices = @transform_3, window_bounds = array<i64: 1, 128>}, {transform_indices = @transform_4, window_bounds = array<i64: 24, 128>}, {transform_indices = @transform_5, window_bounds = array<i64: 24, 128>}]} {
    %c0_i32 = arith.constant 0 : i32
    %0 = arith.cmpi eq, %arg2, %c0_i32 : i32
    %1 = arith.extui %0 : i1 to i32
    %c0_i32_0 = arith.constant 0 : i32
    %2 = arith.cmpi ne, %1, %c0_i32_0 : i32
    scf.if %2 {
      %cst_10 = arith.constant 0.000000e+00 : f32
      %12 = vector.broadcast %cst_10 : f32 to vector<24x128xf32>
      %c0_11 = arith.constant 0 : index
      %c0_12 = arith.constant 0 : index
      %13 = vector.load %arg9[%c0_11, %c0_12] : memref<24x128xf32, #tpu.memory_space<vmem>>, vector<24x128xf32>
      tpu.vector_store %arg9[%c0_11, %c0_12], %12 {strides = array<i32>} : memref<24x128xf32, #tpu.memory_space<vmem>>, vector<24x128xf32>,
    } else {
    }
    %c0 = arith.constant 0 : index
    %c0_1 = arith.constant 0 : index
    %3 = vector.load %arg9[%c0, %c0_1] : memref<24x128xf32, #tpu.memory_space<vmem>>, vector<24x128xf32>
    %c0_2 = arith.constant 0 : index
    %c0_3 = arith.constant 0 : index
    %4 = vector.load %arg3[%c0_2, %c0_3] : memref<24x128xbf16, #tpu.memory_space<vmem>>, vector<24x128xbf16>
    %c0_4 = arith.constant 0 : index
    %c0_5 = arith.constant 0 : index
    %5 = vector.load %arg4[%c0_4, %c0_5] : memref<128x128xbf16, #tpu.memory_space<vmem>>, vector<128x128xbf16>
    %cst = arith.constant dense<0.000000e+00> : vector<24x128xf32>
    %6 = tpu.matmul %4, %5, %cst {dimension_numbers = #tpu.dot_dimension_numbers<[1], [0], [0], [1], [0, 0, 1, 1], [], []>} : vector<24x128xbf16>, vector<128x128xbf16>, vector<24x128xf32> -> vector<24x128xf32>
    %7 = arith.addf %3, %6 : vector<24x128xf32>
    %c0_6 = arith.constant 0 : index
    %c0_7 = arith.constant 0 : index
    %8 = vector.load %arg9[%c0_6, %c0_7] : memref<24x128xf32, #tpu.memory_space<vmem>>, vector<24x128xf32>
    tpu.vector_store %arg9[%c0_6, %c0_7], %7 {strides = array<i32>} : memref<24x128xf32, #tpu.memory_space<vmem>>, vector<24x128xf32>,
    %c0_i32_8 = arith.constant 0 : i32
    %9 = arith.cmpi eq, %arg2, %c0_i32_8 : i32
    %10 = arith.extui %9 : i1 to i32
    %c0_i32_9 = arith.constant 0 : i32
    %11 = arith.cmpi ne, %10, %c0_i32_9 : i32
    scf.if %11 {
      %c0_10 = arith.constant 0 : index
      %c0_11 = arith.constant 0 : index
      %12 = vector.load %arg9[%c0_10, %c0_11] : memref<24x128xf32, #tpu.memory_space<vmem>>, vector<24x128xf32>
      %c0_12 = arith.constant 0 : index
      %c0_13 = arith.constant 0 : index
      %13 = vector.load %arg5[%c0_12, %c0_13] : memref<1x128xf32, #tpu.memory_space<vmem>>, vector<1x128xf32>
      %14 = vector.broadcast %13 : vector<1x128xf32> to vector<24x128xf32>
      %15 = arith.mulf %12, %14 : vector<24x128xf32>
      %c0_14 = arith.constant 0 : index
      %c0_15 = arith.constant 0 : index
      %16 = vector.load %arg6[%c0_14, %c0_15] : memref<1x128xf32, #tpu.memory_space<vmem>>, vector<1x128xf32>
      %17 = vector.broadcast %16 : vector<1x128xf32> to vector<24x128xf32>
      %18 = arith.addf %15, %17 : vector<24x128xf32>
      %c0_16 = arith.constant 0 : index
      %c0_17 = arith.constant 0 : index
      %19 = vector.load %arg7[%c0_16, %c0_17] : memref<24x128xf32, #tpu.memory_space<vmem>>, vector<24x128xf32>
      %20 = arith.addf %18, %19 : vector<24x128xf32>
      %cst_18 = arith.constant 0.000000e+00 : f32
      %21 = vector.broadcast %cst_18 : f32 to vector<24x128xf32>
      %22 = arith.maximumf %20, %21 : vector<24x128xf32>
      %c0_19 = arith.constant 0 : index
      %c0_20 = arith.constant 0 : index
      %23 = vector.load %arg8[%c0_19, %c0_20] : memref<24x128xf32, #tpu.memory_space<vmem>>, vector<24x128xf32>
      tpu.vector_store %arg8[%c0_19, %c0_20], %22 {strides = array<i32>} : memref<24x128xf32, #tpu.memory_space<vmem>>, vector<24x128xf32>,
    } else {
    }
    return
  }
  func.func @transform_0(%arg0: i32, %arg1: i32, %arg2: i32) -> (i32, i32) {
    %c0_i32 = arith.constant 0 : i32
    return %arg0, %arg2 : i32, i32
  }
  func.func @transform_1(%arg0: i32, %arg1: i32, %arg2: i32) -> (i32, i32) {
    %c0_i32 = arith.constant 0 : i32
    return %arg2, %arg1 : i32, i32
  }
  func.func @transform_2(%arg0: i32, %arg1: i32, %arg2: i32) -> (i32, i32) {
    %c0_i32 = arith.constant 0 : i32
    %c0_i32_0 = arith.constant 0 : i32
    return %c0_i32, %arg1 : i32, i32
  }
  func.func @transform_3(%arg0: i32, %arg1: i32, %arg2: i32) -> (i32, i32) {
    %c0_i32 = arith.constant 0 : i32
    %c0_i32_0 = arith.constant 0 : i32
    return %c0_i32, %arg1 : i32, i32
  }
  func.func @transform_4(%arg0: i32, %arg1: i32, %arg2: i32) -> (i32, i32) {
    %c0_i32 = arith.constant 0 : i32
    return %arg0, %arg1 : i32, i32
  }
  func.func @transform_5(%arg0: i32, %arg1: i32, %arg2: i32) -> (i32, i32) {
    %c0_i32 = arith.constant 0 : i32
    return %arg0, %arg1 : i32, i32
  }
}

module attributes {stable_mosaic.version = 11 : i64} {
  func.func @_mm_kernel(%arg0: i32, %arg1: i32, %arg2: i32, %arg3: memref<24x128xbf16, #tpu.memory_space<vmem>>, %arg4: memref<128x128xbf16, #tpu.memory_space<vmem>>, %arg5: memref<1x128xf32, #tpu.memory_space<vmem>>, %arg6: memref<1x128xf32, #tpu.memory_space<vmem>>, %arg7: memref<24x128xf32, #tpu.memory_space<vmem>>, %arg8: memref<24x128xf32, #tpu.memory_space<vmem>>) attributes {dimension_semantics = [#tpu.dimension_semantics<parallel>, #tpu.dimension_semantics<parallel>, #tpu.dimension_semantics<arbitrary>], iteration_bounds = array<i64: 1, 1, 1>, scalar_prefetch = 0 : i64, scratch_operands = 1 : i64, tpu.core_type = #tpu.core_type<tc>, window_params = [{transform_indices = @transform_0, window_bounds = array<i64: 24, 128>}, {transform_indices = @transform_1, window_bounds = array<i64: 128, 128>}, {transform_indices = @transform_2, window_bounds = array<i64: 1, 128>}, {transform_indices = @transform_3, window_bounds = array<i64: 1, 128>}, {transform_indices = @transform_4, window_bounds = array<i64: 24, 128>}]} {
    %c0_i32 = arith.constant 0 : i32
    %0 = arith.cmpi eq, %arg2, %c0_i32 : i32
    %1 = arith.extui %0 : i1 to i32
    %c0_i32_0 = arith.constant 0 : i32
    %2 = arith.cmpi ne, %1, %c0_i32_0 : i32
    scf.if %2 {
      %cst_10 = arith.constant 0.000000e+00 : f32
      %12 = vector.broadcast %cst_10 : f32 to vector<24x128xf32>
      %c0_11 = arith.constant 0 : index
      %c0_12 = arith.constant 0 : index
      %13 = vector.load %arg8[%c0_11, %c0_12] : memref<24x128xf32, #tpu.memory_space<vmem>>, vector<24x128xf32>
      tpu.vector_store %arg8[%c0_11, %c0_12], %12 {strides = array<i32>} : memref<24x128xf32, #tpu.memory_space<vmem>>, vector<24x128xf32>,
    } else {
    }
    %c0 = arith.constant 0 : index
    %c0_1 = arith.constant 0 : index
    %3 = vector.load %arg8[%c0, %c0_1] : memref<24x128xf32, #tpu.memory_space<vmem>>, vector<24x128xf32>
    %c0_2 = arith.constant 0 : index
    %c0_3 = arith.constant 0 : index
    %4 = vector.load %arg3[%c0_2, %c0_3] : memref<24x128xbf16, #tpu.memory_space<vmem>>, vector<24x128xbf16>
    %c0_4 = arith.constant 0 : index
    %c0_5 = arith.constant 0 : index
    %5 = vector.load %arg4[%c0_4, %c0_5] : memref<128x128xbf16, #tpu.memory_space<vmem>>, vector<128x128xbf16>
    %cst = arith.constant dense<0.000000e+00> : vector<24x128xf32>
    %6 = tpu.matmul %4, %5, %cst {dimension_numbers = #tpu.dot_dimension_numbers<[1], [0], [0], [1], [0, 0, 1, 1], [], []>} : vector<24x128xbf16>, vector<128x128xbf16>, vector<24x128xf32> -> vector<24x128xf32>
    %7 = arith.addf %3, %6 : vector<24x128xf32>
    %c0_6 = arith.constant 0 : index
    %c0_7 = arith.constant 0 : index
    %8 = vector.load %arg8[%c0_6, %c0_7] : memref<24x128xf32, #tpu.memory_space<vmem>>, vector<24x128xf32>
    tpu.vector_store %arg8[%c0_6, %c0_7], %7 {strides = array<i32>} : memref<24x128xf32, #tpu.memory_space<vmem>>, vector<24x128xf32>,
    %c0_i32_8 = arith.constant 0 : i32
    %9 = arith.cmpi eq, %arg2, %c0_i32_8 : i32
    %10 = arith.extui %9 : i1 to i32
    %c0_i32_9 = arith.constant 0 : i32
    %11 = arith.cmpi ne, %10, %c0_i32_9 : i32
    scf.if %11 {
      %c0_10 = arith.constant 0 : index
      %c0_11 = arith.constant 0 : index
      %12 = vector.load %arg8[%c0_10, %c0_11] : memref<24x128xf32, #tpu.memory_space<vmem>>, vector<24x128xf32>
      %c0_12 = arith.constant 0 : index
      %c0_13 = arith.constant 0 : index
      %13 = vector.load %arg5[%c0_12, %c0_13] : memref<1x128xf32, #tpu.memory_space<vmem>>, vector<1x128xf32>
      %14 = vector.broadcast %13 : vector<1x128xf32> to vector<24x128xf32>
      %15 = arith.mulf %12, %14 : vector<24x128xf32>
      %c0_14 = arith.constant 0 : index
      %c0_15 = arith.constant 0 : index
      %16 = vector.load %arg6[%c0_14, %c0_15] : memref<1x128xf32, #tpu.memory_space<vmem>>, vector<1x128xf32>
      %17 = vector.broadcast %16 : vector<1x128xf32> to vector<24x128xf32>
      %18 = arith.addf %15, %17 : vector<24x128xf32>
      %cst_16 = arith.constant 0.000000e+00 : f32
      %19 = vector.broadcast %cst_16 : f32 to vector<24x128xf32>
      %20 = arith.maximumf %18, %19 : vector<24x128xf32>
      %c0_17 = arith.constant 0 : index
      %c0_18 = arith.constant 0 : index
      %21 = vector.load %arg7[%c0_17, %c0_18] : memref<24x128xf32, #tpu.memory_space<vmem>>, vector<24x128xf32>
      tpu.vector_store %arg7[%c0_17, %c0_18], %20 {strides = array<i32>} : memref<24x128xf32, #tpu.memory_space<vmem>>, vector<24x128xf32>,
    } else {
    }
    return
  }
  func.func @transform_0(%arg0: i32, %arg1: i32, %arg2: i32) -> (i32, i32) {
    %c0_i32 = arith.constant 0 : i32
    return %arg0, %arg2 : i32, i32
  }
  func.func @transform_1(%arg0: i32, %arg1: i32, %arg2: i32) -> (i32, i32) {
    %c0_i32 = arith.constant 0 : i32
    return %arg2, %arg1 : i32, i32
  }
  func.func @transform_2(%arg0: i32, %arg1: i32, %arg2: i32) -> (i32, i32) {
    %c0_i32 = arith.constant 0 : i32
    %c0_i32_0 = arith.constant 0 : i32
    return %c0_i32, %arg1 : i32, i32
  }
  func.func @transform_3(%arg0: i32, %arg1: i32, %arg2: i32) -> (i32, i32) {
    %c0_i32 = arith.constant 0 : i32
    %c0_i32_0 = arith.constant 0 : i32
    return %c0_i32, %arg1 : i32, i32
  }
  func.func @transform_4(%arg0: i32, %arg1: i32, %arg2: i32) -> (i32, i32) {
    %c0_i32 = arith.constant 0 : i32
    return %arg0, %arg1 : i32, i32
  }
}

module attributes {stable_mosaic.version = 11 : i64} {
  func.func @_mm_kernel(%arg0: i32, %arg1: i32, %arg2: i32, %arg3: memref<8x128xbf16, #tpu.memory_space<vmem>>, %arg4: memref<128x128xbf16, #tpu.memory_space<vmem>>, %arg5: memref<1x128xf32, #tpu.memory_space<vmem>>, %arg6: memref<1x128xf32, #tpu.memory_space<vmem>>, %arg7: memref<8x128xf32, #tpu.memory_space<vmem>>, %arg8: memref<8x128xf32, #tpu.memory_space<vmem>>) attributes {dimension_semantics = [#tpu.dimension_semantics<parallel>, #tpu.dimension_semantics<parallel>, #tpu.dimension_semantics<arbitrary>], iteration_bounds = array<i64: 1, 1, 5>, scalar_prefetch = 0 : i64, scratch_operands = 1 : i64, tpu.core_type = #tpu.core_type<tc>, window_params = [{transform_indices = @transform_0, window_bounds = array<i64: 8, 128>}, {transform_indices = @transform_1, window_bounds = array<i64: 128, 128>}, {transform_indices = @transform_2, window_bounds = array<i64: 1, 128>}, {transform_indices = @transform_3, window_bounds = array<i64: 1, 128>}, {transform_indices = @transform_4, window_bounds = array<i64: 8, 128>}]} {
    %c0_i32 = arith.constant 0 : i32
    %0 = arith.cmpi eq, %arg2, %c0_i32 : i32
    %1 = arith.extui %0 : i1 to i32
    %c0_i32_0 = arith.constant 0 : i32
    %2 = arith.cmpi ne, %1, %c0_i32_0 : i32
    scf.if %2 {
      %cst_9 = arith.constant 0.000000e+00 : f32
      %12 = vector.broadcast %cst_9 : f32 to vector<8x128xf32>
      %c0_10 = arith.constant 0 : index
      %c0_11 = arith.constant 0 : index
      %13 = vector.load %arg8[%c0_10, %c0_11] : memref<8x128xf32, #tpu.memory_space<vmem>>, vector<8x128xf32>
      tpu.vector_store %arg8[%c0_10, %c0_11], %12 {strides = array<i32>} : memref<8x128xf32, #tpu.memory_space<vmem>>, vector<8x128xf32>,
    } else {
    }
    %c0 = arith.constant 0 : index
    %c0_1 = arith.constant 0 : index
    %3 = vector.load %arg8[%c0, %c0_1] : memref<8x128xf32, #tpu.memory_space<vmem>>, vector<8x128xf32>
    %c0_2 = arith.constant 0 : index
    %c0_3 = arith.constant 0 : index
    %4 = vector.load %arg3[%c0_2, %c0_3] : memref<8x128xbf16, #tpu.memory_space<vmem>>, vector<8x128xbf16>
    %c0_4 = arith.constant 0 : index
    %c0_5 = arith.constant 0 : index
    %5 = vector.load %arg4[%c0_4, %c0_5] : memref<128x128xbf16, #tpu.memory_space<vmem>>, vector<128x128xbf16>
    %cst = arith.constant dense<0.000000e+00> : vector<8x128xf32>
    %6 = tpu.matmul %4, %5, %cst {dimension_numbers = #tpu.dot_dimension_numbers<[1], [0], [0], [1], [0, 0, 1, 1], [], []>} : vector<8x128xbf16>, vector<128x128xbf16>, vector<8x128xf32> -> vector<8x128xf32>
    %7 = arith.addf %3, %6 : vector<8x128xf32>
    %c0_6 = arith.constant 0 : index
    %c0_7 = arith.constant 0 : index
    %8 = vector.load %arg8[%c0_6, %c0_7] : memref<8x128xf32, #tpu.memory_space<vmem>>, vector<8x128xf32>
    tpu.vector_store %arg8[%c0_6, %c0_7], %7 {strides = array<i32>} : memref<8x128xf32, #tpu.memory_space<vmem>>, vector<8x128xf32>,
    %c4_i32 = arith.constant 4 : i32
    %9 = arith.cmpi eq, %arg2, %c4_i32 : i32
    %10 = arith.extui %9 : i1 to i32
    %c0_i32_8 = arith.constant 0 : i32
    %11 = arith.cmpi ne, %10, %c0_i32_8 : i32
    scf.if %11 {
      %c0_9 = arith.constant 0 : index
      %c0_10 = arith.constant 0 : index
      %12 = vector.load %arg8[%c0_9, %c0_10] : memref<8x128xf32, #tpu.memory_space<vmem>>, vector<8x128xf32>
      %c0_11 = arith.constant 0 : index
      %c0_12 = arith.constant 0 : index
      %13 = vector.load %arg5[%c0_11, %c0_12] : memref<1x128xf32, #tpu.memory_space<vmem>>, vector<1x128xf32>
      %14 = vector.broadcast %13 : vector<1x128xf32> to vector<8x128xf32>
      %15 = arith.mulf %12, %14 : vector<8x128xf32>
      %c0_13 = arith.constant 0 : index
      %c0_14 = arith.constant 0 : index
      %16 = vector.load %arg6[%c0_13, %c0_14] : memref<1x128xf32, #tpu.memory_space<vmem>>, vector<1x128xf32>
      %17 = vector.broadcast %16 : vector<1x128xf32> to vector<8x128xf32>
      %18 = arith.addf %15, %17 : vector<8x128xf32>
      %cst_15 = arith.constant 0.000000e+00 : f32
      %19 = vector.broadcast %cst_15 : f32 to vector<8x128xf32>
      %20 = arith.maximumf %18, %19 : vector<8x128xf32>
      %c0_16 = arith.constant 0 : index
      %c0_17 = arith.constant 0 : index
      %21 = vector.load %arg7[%c0_16, %c0_17] : memref<8x128xf32, #tpu.memory_space<vmem>>, vector<8x128xf32>
      tpu.vector_store %arg7[%c0_16, %c0_17], %20 {strides = array<i32>} : memref<8x128xf32, #tpu.memory_space<vmem>>, vector<8x128xf32>,
    } else {
    }
    return
  }
  func.func @transform_0(%arg0: i32, %arg1: i32, %arg2: i32) -> (i32, i32) {
    %c0_i32 = arith.constant 0 : i32
    return %arg0, %arg2 : i32, i32
  }
  func.func @transform_1(%arg0: i32, %arg1: i32, %arg2: i32) -> (i32, i32) {
    %c0_i32 = arith.constant 0 : i32
    return %arg2, %arg1 : i32, i32
  }
  func.func @transform_2(%arg0: i32, %arg1: i32, %arg2: i32) -> (i32, i32) {
    %c0_i32 = arith.constant 0 : i32
    %c0_i32_0 = arith.constant 0 : i32
    return %c0_i32, %arg1 : i32, i32
  }
  func.func @transform_3(%arg0: i32, %arg1: i32, %arg2: i32) -> (i32, i32) {
    %c0_i32 = arith.constant 0 : i32
    %c0_i32_0 = arith.constant 0 : i32
    return %c0_i32, %arg1 : i32, i32
  }
  func.func @transform_4(%arg0: i32, %arg1: i32, %arg2: i32) -> (i32, i32) {
    %c0_i32 = arith.constant 0 : i32
    return %arg0, %arg1 : i32, i32
  }
}

module attributes {stable_mosaic.version = 11 : i64} {
  func.func @_mm_kernel(%arg0: i32, %arg1: i32, %arg2: i32, %arg3: memref<8x128xbf16, #tpu.memory_space<vmem>>, %arg4: memref<128x256xbf16, #tpu.memory_space<vmem>>, %arg5: memref<1x256xf32, #tpu.memory_space<vmem>>, %arg6: memref<1x256xf32, #tpu.memory_space<vmem>>, %arg7: memref<8x256xf32, #tpu.memory_space<vmem>>, %arg8: memref<8x256xf32, #tpu.memory_space<vmem>>) attributes {dimension_semantics = [#tpu.dimension_semantics<parallel>, #tpu.dimension_semantics<parallel>, #tpu.dimension_semantics<arbitrary>], iteration_bounds = array<i64: 1, 1, 1>, scalar_prefetch = 0 : i64, scratch_operands = 1 : i64, tpu.core_type = #tpu.core_type<tc>, window_params = [{transform_indices = @transform_0, window_bounds = array<i64: 8, 128>}, {transform_indices = @transform_1, window_bounds = array<i64: 128, 256>}, {transform_indices = @transform_2, window_bounds = array<i64: 1, 256>}, {transform_indices = @transform_3, window_bounds = array<i64: 1, 256>}, {transform_indices = @transform_4, window_bounds = array<i64: 8, 256>}]} {
    %c0_i32 = arith.constant 0 : i32
    %0 = arith.cmpi eq, %arg2, %c0_i32 : i32
    %1 = arith.extui %0 : i1 to i32
    %c0_i32_0 = arith.constant 0 : i32
    %2 = arith.cmpi ne, %1, %c0_i32_0 : i32
    scf.if %2 {
      %cst_10 = arith.constant 0.000000e+00 : f32
      %12 = vector.broadcast %cst_10 : f32 to vector<8x256xf32>
      %c0_11 = arith.constant 0 : index
      %c0_12 = arith.constant 0 : index
      %13 = vector.load %arg8[%c0_11, %c0_12] : memref<8x256xf32, #tpu.memory_space<vmem>>, vector<8x256xf32>
      tpu.vector_store %arg8[%c0_11, %c0_12], %12 {strides = array<i32>} : memref<8x256xf32, #tpu.memory_space<vmem>>, vector<8x256xf32>,
    } else {
    }
    %c0 = arith.constant 0 : index
    %c0_1 = arith.constant 0 : index
    %3 = vector.load %arg8[%c0, %c0_1] : memref<8x256xf32, #tpu.memory_space<vmem>>, vector<8x256xf32>
    %c0_2 = arith.constant 0 : index
    %c0_3 = arith.constant 0 : index
    %4 = vector.load %arg3[%c0_2, %c0_3] : memref<8x128xbf16, #tpu.memory_space<vmem>>, vector<8x128xbf16>
    %c0_4 = arith.constant 0 : index
    %c0_5 = arith.constant 0 : index
    %5 = vector.load %arg4[%c0_4, %c0_5] : memref<128x256xbf16, #tpu.memory_space<vmem>>, vector<128x256xbf16>
    %cst = arith.constant dense<0.000000e+00> : vector<8x256xf32>
    %6 = tpu.matmul %4, %5, %cst {dimension_numbers = #tpu.dot_dimension_numbers<[1], [0], [0], [1], [0, 0, 1, 1], [], []>} : vector<8x128xbf16>, vector<128x256xbf16>, vector<8x256xf32> -> vector<8x256xf32>
    %7 = arith.addf %3, %6 : vector<8x256xf32>
    %c0_6 = arith.constant 0 : index
    %c0_7 = arith.constant 0 : index
    %8 = vector.load %arg8[%c0_6, %c0_7] : memref<8x256xf32, #tpu.memory_space<vmem>>, vector<8x256xf32>
    tpu.vector_store %arg8[%c0_6, %c0_7], %7 {strides = array<i32>} : memref<8x256xf32, #tpu.memory_space<vmem>>, vector<8x256xf32>,
    %c0_i32_8 = arith.constant 0 : i32
    %9 = arith.cmpi eq, %arg2, %c0_i32_8 : i32
    %10 = arith.extui %9 : i1 to i32
    %c0_i32_9 = arith.constant 0 : i32
    %11 = arith.cmpi ne, %10, %c0_i32_9 : i32
    scf.if %11 {
      %c0_10 = arith.constant 0 : index
      %c0_11 = arith.constant 0 : index
      %12 = vector.load %arg8[%c0_10, %c0_11] : memref<8x256xf32, #tpu.memory_space<vmem>>, vector<8x256xf32>
      %c0_12 = arith.constant 0 : index
      %c0_13 = arith.constant 0 : index
      %13 = vector.load %arg5[%c0_12, %c0_13] : memref<1x256xf32, #tpu.memory_space<vmem>>, vector<1x256xf32>
      %14 = vector.broadcast %13 : vector<1x256xf32> to vector<8x256xf32>
      %15 = arith.mulf %12, %14 : vector<8x256xf32>
      %c0_14 = arith.constant 0 : index
      %c0_15 = arith.constant 0 : index
      %16 = vector.load %arg6[%c0_14, %c0_15] : memref<1x256xf32, #tpu.memory_space<vmem>>, vector<1x256xf32>
      %17 = vector.broadcast %16 : vector<1x256xf32> to vector<8x256xf32>
      %18 = arith.addf %15, %17 : vector<8x256xf32>
      %c0_16 = arith.constant 0 : index
      %c0_17 = arith.constant 0 : index
      %19 = vector.load %arg7[%c0_16, %c0_17] : memref<8x256xf32, #tpu.memory_space<vmem>>, vector<8x256xf32>
      tpu.vector_store %arg7[%c0_16, %c0_17], %18 {strides = array<i32>} : memref<8x256xf32, #tpu.memory_space<vmem>>, vector<8x256xf32>,
    } else {
    }
    return
  }
  func.func @transform_0(%arg0: i32, %arg1: i32, %arg2: i32) -> (i32, i32) {
    %c0_i32 = arith.constant 0 : i32
    return %arg0, %arg2 : i32, i32
  }
  func.func @transform_1(%arg0: i32, %arg1: i32, %arg2: i32) -> (i32, i32) {
    %c0_i32 = arith.constant 0 : i32
    return %arg2, %arg1 : i32, i32
  }
  func.func @transform_2(%arg0: i32, %arg1: i32, %arg2: i32) -> (i32, i32) {
    %c0_i32 = arith.constant 0 : i32
    %c0_i32_0 = arith.constant 0 : i32
    return %c0_i32, %arg1 : i32, i32
  }
  func.func @transform_3(%arg0: i32, %arg1: i32, %arg2: i32) -> (i32, i32) {
    %c0_i32 = arith.constant 0 : i32
    %c0_i32_0 = arith.constant 0 : i32
    return %c0_i32, %arg1 : i32, i32
  }
  func.func @transform_4(%arg0: i32, %arg1: i32, %arg2: i32) -> (i32, i32) {
    %c0_i32 = arith.constant 0 : i32
    return %arg0, %arg1 : i32, i32
  }
}

module attributes {stable_mosaic.version = 11 : i64} {
  func.func @_mm_res_kernel(%arg0: i32, %arg1: i32, %arg2: i32, %arg3: memref<8x128xbf16, #tpu.memory_space<vmem>>, %arg4: memref<128x256xbf16, #tpu.memory_space<vmem>>, %arg5: memref<1x256xf32, #tpu.memory_space<vmem>>, %arg6: memref<1x256xf32, #tpu.memory_space<vmem>>, %arg7: memref<8x256xf32, #tpu.memory_space<vmem>>, %arg8: memref<8x256xf32, #tpu.memory_space<vmem>>, %arg9: memref<8x256xf32, #tpu.memory_space<vmem>>) attributes {dimension_semantics = [#tpu.dimension_semantics<parallel>, #tpu.dimension_semantics<parallel>, #tpu.dimension_semantics<arbitrary>], iteration_bounds = array<i64: 1, 1, 1>, scalar_prefetch = 0 : i64, scratch_operands = 1 : i64, tpu.core_type = #tpu.core_type<tc>, window_params = [{transform_indices = @transform_0, window_bounds = array<i64: 8, 128>}, {transform_indices = @transform_1, window_bounds = array<i64: 128, 256>}, {transform_indices = @transform_2, window_bounds = array<i64: 1, 256>}, {transform_indices = @transform_3, window_bounds = array<i64: 1, 256>}, {transform_indices = @transform_4, window_bounds = array<i64: 8, 256>}, {transform_indices = @transform_5, window_bounds = array<i64: 8, 256>}]} {
    %c0_i32 = arith.constant 0 : i32
    %0 = arith.cmpi eq, %arg2, %c0_i32 : i32
    %1 = arith.extui %0 : i1 to i32
    %c0_i32_0 = arith.constant 0 : i32
    %2 = arith.cmpi ne, %1, %c0_i32_0 : i32
    scf.if %2 {
      %cst_10 = arith.constant 0.000000e+00 : f32
      %12 = vector.broadcast %cst_10 : f32 to vector<8x256xf32>
      %c0_11 = arith.constant 0 : index
      %c0_12 = arith.constant 0 : index
      %13 = vector.load %arg9[%c0_11, %c0_12] : memref<8x256xf32, #tpu.memory_space<vmem>>, vector<8x256xf32>
      tpu.vector_store %arg9[%c0_11, %c0_12], %12 {strides = array<i32>} : memref<8x256xf32, #tpu.memory_space<vmem>>, vector<8x256xf32>,
    } else {
    }
    %c0 = arith.constant 0 : index
    %c0_1 = arith.constant 0 : index
    %3 = vector.load %arg9[%c0, %c0_1] : memref<8x256xf32, #tpu.memory_space<vmem>>, vector<8x256xf32>
    %c0_2 = arith.constant 0 : index
    %c0_3 = arith.constant 0 : index
    %4 = vector.load %arg3[%c0_2, %c0_3] : memref<8x128xbf16, #tpu.memory_space<vmem>>, vector<8x128xbf16>
    %c0_4 = arith.constant 0 : index
    %c0_5 = arith.constant 0 : index
    %5 = vector.load %arg4[%c0_4, %c0_5] : memref<128x256xbf16, #tpu.memory_space<vmem>>, vector<128x256xbf16>
    %cst = arith.constant dense<0.000000e+00> : vector<8x256xf32>
    %6 = tpu.matmul %4, %5, %cst {dimension_numbers = #tpu.dot_dimension_numbers<[1], [0], [0], [1], [0, 0, 1, 1], [], []>} : vector<8x128xbf16>, vector<128x256xbf16>, vector<8x256xf32> -> vector<8x256xf32>
    %7 = arith.addf %3, %6 : vector<8x256xf32>
    %c0_6 = arith.constant 0 : index
    %c0_7 = arith.constant 0 : index
    %8 = vector.load %arg9[%c0_6, %c0_7] : memref<8x256xf32, #tpu.memory_space<vmem>>, vector<8x256xf32>
    tpu.vector_store %arg9[%c0_6, %c0_7], %7 {strides = array<i32>} : memref<8x256xf32, #tpu.memory_space<vmem>>, vector<8x256xf32>,
    %c0_i32_8 = arith.constant 0 : i32
    %9 = arith.cmpi eq, %arg2, %c0_i32_8 : i32
    %10 = arith.extui %9 : i1 to i32
    %c0_i32_9 = arith.constant 0 : i32
    %11 = arith.cmpi ne, %10, %c0_i32_9 : i32
    scf.if %11 {
      %c0_10 = arith.constant 0 : index
      %c0_11 = arith.constant 0 : index
      %12 = vector.load %arg9[%c0_10, %c0_11] : memref<8x256xf32, #tpu.memory_space<vmem>>, vector<8x256xf32>
      %c0_12 = arith.constant 0 : index
      %c0_13 = arith.constant 0 : index
      %13 = vector.load %arg5[%c0_12, %c0_13] : memref<1x256xf32, #tpu.memory_space<vmem>>, vector<1x256xf32>
      %14 = vector.broadcast %13 : vector<1x256xf32> to vector<8x256xf32>
      %15 = arith.mulf %12, %14 : vector<8x256xf32>
      %c0_14 = arith.constant 0 : index
      %c0_15 = arith.constant 0 : index
      %16 = vector.load %arg6[%c0_14, %c0_15] : memref<1x256xf32, #tpu.memory_space<vmem>>, vector<1x256xf32>
      %17 = vector.broadcast %16 : vector<1x256xf32> to vector<8x256xf32>
      %18 = arith.addf %15, %17 : vector<8x256xf32>
      %c0_16 = arith.constant 0 : index
      %c0_17 = arith.constant 0 : index
      %19 = vector.load %arg7[%c0_16, %c0_17] : memref<8x256xf32, #tpu.memory_space<vmem>>, vector<8x256xf32>
      %20 = arith.addf %18, %19 : vector<8x256xf32>
      %cst_18 = arith.constant 0.000000e+00 : f32
      %21 = vector.broadcast %cst_18 : f32 to vector<8x256xf32>
      %22 = arith.maximumf %20, %21 : vector<8x256xf32>
      %c0_19 = arith.constant 0 : index
      %c0_20 = arith.constant 0 : index
      %23 = vector.load %arg8[%c0_19, %c0_20] : memref<8x256xf32, #tpu.memory_space<vmem>>, vector<8x256xf32>
      tpu.vector_store %arg8[%c0_19, %c0_20], %22 {strides = array<i32>} : memref<8x256xf32, #tpu.memory_space<vmem>>, vector<8x256xf32>,
    } else {
    }
    return
  }
  func.func @transform_0(%arg0: i32, %arg1: i32, %arg2: i32) -> (i32, i32) {
    %c0_i32 = arith.constant 0 : i32
    return %arg0, %arg2 : i32, i32
  }
  func.func @transform_1(%arg0: i32, %arg1: i32, %arg2: i32) -> (i32, i32) {
    %c0_i32 = arith.constant 0 : i32
    return %arg2, %arg1 : i32, i32
  }
  func.func @transform_2(%arg0: i32, %arg1: i32, %arg2: i32) -> (i32, i32) {
    %c0_i32 = arith.constant 0 : i32
    %c0_i32_0 = arith.constant 0 : i32
    return %c0_i32, %arg1 : i32, i32
  }
  func.func @transform_3(%arg0: i32, %arg1: i32, %arg2: i32) -> (i32, i32) {
    %c0_i32 = arith.constant 0 : i32
    %c0_i32_0 = arith.constant 0 : i32
    return %c0_i32, %arg1 : i32, i32
  }
  func.func @transform_4(%arg0: i32, %arg1: i32, %arg2: i32) -> (i32, i32) {
    %c0_i32 = arith.constant 0 : i32
    return %arg0, %arg1 : i32, i32
  }
  func.func @transform_5(%arg0: i32, %arg1: i32, %arg2: i32) -> (i32, i32) {
    %c0_i32 = arith.constant 0 : i32
    return %arg0, %arg1 : i32, i32
  }
}

module attributes {stable_mosaic.version = 11 : i64} {
  func.func @_mm_kernel(%arg0: i32, %arg1: i32, %arg2: i32, %arg3: memref<8x256xbf16, #tpu.memory_space<vmem>>, %arg4: memref<256x256xbf16, #tpu.memory_space<vmem>>, %arg5: memref<1x256xf32, #tpu.memory_space<vmem>>, %arg6: memref<1x256xf32, #tpu.memory_space<vmem>>, %arg7: memref<8x256xf32, #tpu.memory_space<vmem>>, %arg8: memref<8x256xf32, #tpu.memory_space<vmem>>) attributes {dimension_semantics = [#tpu.dimension_semantics<parallel>, #tpu.dimension_semantics<parallel>, #tpu.dimension_semantics<arbitrary>], iteration_bounds = array<i64: 1, 2, 1>, scalar_prefetch = 0 : i64, scratch_operands = 1 : i64, tpu.core_type = #tpu.core_type<tc>, window_params = [{transform_indices = @transform_0, window_bounds = array<i64: 8, 256>}, {transform_indices = @transform_1, window_bounds = array<i64: 256, 256>}, {transform_indices = @transform_2, window_bounds = array<i64: 1, 256>}, {transform_indices = @transform_3, window_bounds = array<i64: 1, 256>}, {transform_indices = @transform_4, window_bounds = array<i64: 8, 256>}]} {
    %c0_i32 = arith.constant 0 : i32
    %0 = arith.cmpi eq, %arg2, %c0_i32 : i32
    %1 = arith.extui %0 : i1 to i32
    %c0_i32_0 = arith.constant 0 : i32
    %2 = arith.cmpi ne, %1, %c0_i32_0 : i32
    scf.if %2 {
      %cst_10 = arith.constant 0.000000e+00 : f32
      %12 = vector.broadcast %cst_10 : f32 to vector<8x256xf32>
      %c0_11 = arith.constant 0 : index
      %c0_12 = arith.constant 0 : index
      %13 = vector.load %arg8[%c0_11, %c0_12] : memref<8x256xf32, #tpu.memory_space<vmem>>, vector<8x256xf32>
      tpu.vector_store %arg8[%c0_11, %c0_12], %12 {strides = array<i32>} : memref<8x256xf32, #tpu.memory_space<vmem>>, vector<8x256xf32>,
    } else {
    }
    %c0 = arith.constant 0 : index
    %c0_1 = arith.constant 0 : index
    %3 = vector.load %arg8[%c0, %c0_1] : memref<8x256xf32, #tpu.memory_space<vmem>>, vector<8x256xf32>
    %c0_2 = arith.constant 0 : index
    %c0_3 = arith.constant 0 : index
    %4 = vector.load %arg3[%c0_2, %c0_3] : memref<8x256xbf16, #tpu.memory_space<vmem>>, vector<8x256xbf16>
    %c0_4 = arith.constant 0 : index
    %c0_5 = arith.constant 0 : index
    %5 = vector.load %arg4[%c0_4, %c0_5] : memref<256x256xbf16, #tpu.memory_space<vmem>>, vector<256x256xbf16>
    %cst = arith.constant dense<0.000000e+00> : vector<8x256xf32>
    %6 = tpu.matmul %4, %5, %cst {dimension_numbers = #tpu.dot_dimension_numbers<[1], [0], [0], [1], [0, 0, 1, 1], [], []>} : vector<8x256xbf16>, vector<256x256xbf16>, vector<8x256xf32> -> vector<8x256xf32>
    %7 = arith.addf %3, %6 : vector<8x256xf32>
    %c0_6 = arith.constant 0 : index
    %c0_7 = arith.constant 0 : index
    %8 = vector.load %arg8[%c0_6, %c0_7] : memref<8x256xf32, #tpu.memory_space<vmem>>, vector<8x256xf32>
    tpu.vector_store %arg8[%c0_6, %c0_7], %7 {strides = array<i32>} : memref<8x256xf32, #tpu.memory_space<vmem>>, vector<8x256xf32>,
    %c0_i32_8 = arith.constant 0 : i32
    %9 = arith.cmpi eq, %arg2, %c0_i32_8 : i32
    %10 = arith.extui %9 : i1 to i32
    %c0_i32_9 = arith.constant 0 : i32
    %11 = arith.cmpi ne, %10, %c0_i32_9 : i32
    scf.if %11 {
      %c0_10 = arith.constant 0 : index
      %c0_11 = arith.constant 0 : index
      %12 = vector.load %arg8[%c0_10, %c0_11] : memref<8x256xf32, #tpu.memory_space<vmem>>, vector<8x256xf32>
      %c0_12 = arith.constant 0 : index
      %c0_13 = arith.constant 0 : index
      %13 = vector.load %arg5[%c0_12, %c0_13] : memref<1x256xf32, #tpu.memory_space<vmem>>, vector<1x256xf32>
      %14 = vector.broadcast %13 : vector<1x256xf32> to vector<8x256xf32>
      %15 = arith.mulf %12, %14 : vector<8x256xf32>
      %c0_14 = arith.constant 0 : index
      %c0_15 = arith.constant 0 : index
      %16 = vector.load %arg6[%c0_14, %c0_15] : memref<1x256xf32, #tpu.memory_space<vmem>>, vector<1x256xf32>
      %17 = vector.broadcast %16 : vector<1x256xf32> to vector<8x256xf32>
      %18 = arith.addf %15, %17 : vector<8x256xf32>
      %c0_16 = arith.constant 0 : index
      %c0_17 = arith.constant 0 : index
      %19 = vector.load %arg7[%c0_16, %c0_17] : memref<8x256xf32, #tpu.memory_space<vmem>>, vector<8x256xf32>
      tpu.vector_store %arg7[%c0_16, %c0_17], %18 {strides = array<i32>} : memref<8x256xf32, #tpu.memory_space<vmem>>, vector<8x256xf32>,
    } else {
    }
    return
  }
  func.func @transform_0(%arg0: i32, %arg1: i32, %arg2: i32) -> (i32, i32) {
    %c0_i32 = arith.constant 0 : i32
    return %arg0, %arg2 : i32, i32
  }
  func.func @transform_1(%arg0: i32, %arg1: i32, %arg2: i32) -> (i32, i32) {
    %c0_i32 = arith.constant 0 : i32
    return %arg2, %arg1 : i32, i32
  }
  func.func @transform_2(%arg0: i32, %arg1: i32, %arg2: i32) -> (i32, i32) {
    %c0_i32 = arith.constant 0 : i32
    %c0_i32_0 = arith.constant 0 : i32
    return %c0_i32, %arg1 : i32, i32
  }
  func.func @transform_3(%arg0: i32, %arg1: i32, %arg2: i32) -> (i32, i32) {
    %c0_i32 = arith.constant 0 : i32
    %c0_i32_0 = arith.constant 0 : i32
    return %c0_i32, %arg1 : i32, i32
  }
  func.func @transform_4(%arg0: i32, %arg1: i32, %arg2: i32) -> (i32, i32) {
    %c0_i32 = arith.constant 0 : i32
    return %arg0, %arg1 : i32, i32
  }
}

module attributes {stable_mosaic.version = 11 : i64} {
  func.func @_mm_kernel(%arg0: i32, %arg1: i32, %arg2: i32, %arg3: memref<8x256xbf16, #tpu.memory_space<vmem>>, %arg4: memref<256x128xbf16, #tpu.memory_space<vmem>>, %arg5: memref<1x128xf32, #tpu.memory_space<vmem>>, %arg6: memref<1x128xf32, #tpu.memory_space<vmem>>, %arg7: memref<8x128xf32, #tpu.memory_space<vmem>>, %arg8: memref<8x128xf32, #tpu.memory_space<vmem>>) attributes {dimension_semantics = [#tpu.dimension_semantics<parallel>, #tpu.dimension_semantics<parallel>, #tpu.dimension_semantics<arbitrary>], iteration_bounds = array<i64: 1, 1, 1>, scalar_prefetch = 0 : i64, scratch_operands = 1 : i64, tpu.core_type = #tpu.core_type<tc>, window_params = [{transform_indices = @transform_0, window_bounds = array<i64: 8, 256>}, {transform_indices = @transform_1, window_bounds = array<i64: 256, 128>}, {transform_indices = @transform_2, window_bounds = array<i64: 1, 128>}, {transform_indices = @transform_3, window_bounds = array<i64: 1, 128>}, {transform_indices = @transform_4, window_bounds = array<i64: 8, 128>}]} {
    %c0_i32 = arith.constant 0 : i32
    %0 = arith.cmpi eq, %arg2, %c0_i32 : i32
    %1 = arith.extui %0 : i1 to i32
    %c0_i32_0 = arith.constant 0 : i32
    %2 = arith.cmpi ne, %1, %c0_i32_0 : i32
    scf.if %2 {
      %cst_10 = arith.constant 0.000000e+00 : f32
      %12 = vector.broadcast %cst_10 : f32 to vector<8x128xf32>
      %c0_11 = arith.constant 0 : index
      %c0_12 = arith.constant 0 : index
      %13 = vector.load %arg8[%c0_11, %c0_12] : memref<8x128xf32, #tpu.memory_space<vmem>>, vector<8x128xf32>
      tpu.vector_store %arg8[%c0_11, %c0_12], %12 {strides = array<i32>} : memref<8x128xf32, #tpu.memory_space<vmem>>, vector<8x128xf32>,
    } else {
    }
    %c0 = arith.constant 0 : index
    %c0_1 = arith.constant 0 : index
    %3 = vector.load %arg8[%c0, %c0_1] : memref<8x128xf32, #tpu.memory_space<vmem>>, vector<8x128xf32>
    %c0_2 = arith.constant 0 : index
    %c0_3 = arith.constant 0 : index
    %4 = vector.load %arg3[%c0_2, %c0_3] : memref<8x256xbf16, #tpu.memory_space<vmem>>, vector<8x256xbf16>
    %c0_4 = arith.constant 0 : index
    %c0_5 = arith.constant 0 : index
    %5 = vector.load %arg4[%c0_4, %c0_5] : memref<256x128xbf16, #tpu.memory_space<vmem>>, vector<256x128xbf16>
    %cst = arith.constant dense<0.000000e+00> : vector<8x128xf32>
    %6 = tpu.matmul %4, %5, %cst {dimension_numbers = #tpu.dot_dimension_numbers<[1], [0], [0], [1], [0, 0, 1, 1], [], []>} : vector<8x256xbf16>, vector<256x128xbf16>, vector<8x128xf32> -> vector<8x128xf32>
    %7 = arith.addf %3, %6 : vector<8x128xf32>
    %c0_6 = arith.constant 0 : index
    %c0_7 = arith.constant 0 : index
    %8 = vector.load %arg8[%c0_6, %c0_7] : memref<8x128xf32, #tpu.memory_space<vmem>>, vector<8x128xf32>
    tpu.vector_store %arg8[%c0_6, %c0_7], %7 {strides = array<i32>} : memref<8x128xf32, #tpu.memory_space<vmem>>, vector<8x128xf32>,
    %c0_i32_8 = arith.constant 0 : i32
    %9 = arith.cmpi eq, %arg2, %c0_i32_8 : i32
    %10 = arith.extui %9 : i1 to i32
    %c0_i32_9 = arith.constant 0 : i32
    %11 = arith.cmpi ne, %10, %c0_i32_9 : i32
    scf.if %11 {
      %c0_10 = arith.constant 0 : index
      %c0_11 = arith.constant 0 : index
      %12 = vector.load %arg8[%c0_10, %c0_11] : memref<8x128xf32, #tpu.memory_space<vmem>>, vector<8x128xf32>
      %c0_12 = arith.constant 0 : index
      %c0_13 = arith.constant 0 : index
      %13 = vector.load %arg5[%c0_12, %c0_13] : memref<1x128xf32, #tpu.memory_space<vmem>>, vector<1x128xf32>
      %14 = vector.broadcast %13 : vector<1x128xf32> to vector<8x128xf32>
      %15 = arith.mulf %12, %14 : vector<8x128xf32>
      %c0_14 = arith.constant 0 : index
      %c0_15 = arith.constant 0 : index
      %16 = vector.load %arg6[%c0_14, %c0_15] : memref<1x128xf32, #tpu.memory_space<vmem>>, vector<1x128xf32>
      %17 = vector.broadcast %16 : vector<1x128xf32> to vector<8x128xf32>
      %18 = arith.addf %15, %17 : vector<8x128xf32>
      %cst_16 = arith.constant 0.000000e+00 : f32
      %19 = vector.broadcast %cst_16 : f32 to vector<8x128xf32>
      %20 = arith.maximumf %18, %19 : vector<8x128xf32>
      %c0_17 = arith.constant 0 : index
      %c0_18 = arith.constant 0 : index
      %21 = vector.load %arg7[%c0_17, %c0_18] : memref<8x128xf32, #tpu.memory_space<vmem>>, vector<8x128xf32>
      tpu.vector_store %arg7[%c0_17, %c0_18], %20 {strides = array<i32>} : memref<8x128xf32, #tpu.memory_space<vmem>>, vector<8x128xf32>,
    } else {
    }
    return
  }
  func.func @transform_0(%arg0: i32, %arg1: i32, %arg2: i32) -> (i32, i32) {
    %c0_i32 = arith.constant 0 : i32
    return %arg0, %arg2 : i32, i32
  }
  func.func @transform_1(%arg0: i32, %arg1: i32, %arg2: i32) -> (i32, i32) {
    %c0_i32 = arith.constant 0 : i32
    return %arg2, %arg1 : i32, i32
  }
  func.func @transform_2(%arg0: i32, %arg1: i32, %arg2: i32) -> (i32, i32) {
    %c0_i32 = arith.constant 0 : i32
    %c0_i32_0 = arith.constant 0 : i32
    return %c0_i32, %arg1 : i32, i32
  }
  func.func @transform_3(%arg0: i32, %arg1: i32, %arg2: i32) -> (i32, i32) {
    %c0_i32 = arith.constant 0 : i32
    %c0_i32_0 = arith.constant 0 : i32
    return %c0_i32, %arg1 : i32, i32
  }
  func.func @transform_4(%arg0: i32, %arg1: i32, %arg2: i32) -> (i32, i32) {
    %c0_i32 = arith.constant 0 : i32
    return %arg0, %arg1 : i32, i32
  }
}

module attributes {stable_mosaic.version = 11 : i64} {
  func.func @_mm_kernel(%arg0: i32, %arg1: i32, %arg2: i32, %arg3: memref<8x384xbf16, #tpu.memory_space<vmem>>, %arg4: memref<384x128xbf16, #tpu.memory_space<vmem>>, %arg5: memref<1x128xf32, #tpu.memory_space<vmem>>, %arg6: memref<1x128xf32, #tpu.memory_space<vmem>>, %arg7: memref<8x128xf32, #tpu.memory_space<vmem>>, %arg8: memref<8x128xf32, #tpu.memory_space<vmem>>) attributes {dimension_semantics = [#tpu.dimension_semantics<parallel>, #tpu.dimension_semantics<parallel>, #tpu.dimension_semantics<arbitrary>], iteration_bounds = array<i64: 1, 1, 3>, scalar_prefetch = 0 : i64, scratch_operands = 1 : i64, tpu.core_type = #tpu.core_type<tc>, window_params = [{transform_indices = @transform_0, window_bounds = array<i64: 8, 384>}, {transform_indices = @transform_1, window_bounds = array<i64: 384, 128>}, {transform_indices = @transform_2, window_bounds = array<i64: 1, 128>}, {transform_indices = @transform_3, window_bounds = array<i64: 1, 128>}, {transform_indices = @transform_4, window_bounds = array<i64: 8, 128>}]} {
    %c0_i32 = arith.constant 0 : i32
    %0 = arith.cmpi eq, %arg2, %c0_i32 : i32
    %1 = arith.extui %0 : i1 to i32
    %c0_i32_0 = arith.constant 0 : i32
    %2 = arith.cmpi ne, %1, %c0_i32_0 : i32
    scf.if %2 {
      %cst_9 = arith.constant 0.000000e+00 : f32
      %12 = vector.broadcast %cst_9 : f32 to vector<8x128xf32>
      %c0_10 = arith.constant 0 : index
      %c0_11 = arith.constant 0 : index
      %13 = vector.load %arg8[%c0_10, %c0_11] : memref<8x128xf32, #tpu.memory_space<vmem>>, vector<8x128xf32>
      tpu.vector_store %arg8[%c0_10, %c0_11], %12 {strides = array<i32>} : memref<8x128xf32, #tpu.memory_space<vmem>>, vector<8x128xf32>,
    } else {
    }
    %c0 = arith.constant 0 : index
    %c0_1 = arith.constant 0 : index
    %3 = vector.load %arg8[%c0, %c0_1] : memref<8x128xf32, #tpu.memory_space<vmem>>, vector<8x128xf32>
    %c0_2 = arith.constant 0 : index
    %c0_3 = arith.constant 0 : index
    %4 = vector.load %arg3[%c0_2, %c0_3] : memref<8x384xbf16, #tpu.memory_space<vmem>>, vector<8x384xbf16>
    %c0_4 = arith.constant 0 : index
    %c0_5 = arith.constant 0 : index
    %5 = vector.load %arg4[%c0_4, %c0_5] : memref<384x128xbf16, #tpu.memory_space<vmem>>, vector<384x128xbf16>
    %cst = arith.constant dense<0.000000e+00> : vector<8x128xf32>
    %6 = tpu.matmul %4, %5, %cst {dimension_numbers = #tpu.dot_dimension_numbers<[1], [0], [0], [1], [0, 0, 1, 1], [], []>} : vector<8x384xbf16>, vector<384x128xbf16>, vector<8x128xf32> -> vector<8x128xf32>
    %7 = arith.addf %3, %6 : vector<8x128xf32>
    %c0_6 = arith.constant 0 : index
    %c0_7 = arith.constant 0 : index
    %8 = vector.load %arg8[%c0_6, %c0_7] : memref<8x128xf32, #tpu.memory_space<vmem>>, vector<8x128xf32>
    tpu.vector_store %arg8[%c0_6, %c0_7], %7 {strides = array<i32>} : memref<8x128xf32, #tpu.memory_space<vmem>>, vector<8x128xf32>,
    %c2_i32 = arith.constant 2 : i32
    %9 = arith.cmpi eq, %arg2, %c2_i32 : i32
    %10 = arith.extui %9 : i1 to i32
    %c0_i32_8 = arith.constant 0 : i32
    %11 = arith.cmpi ne, %10, %c0_i32_8 : i32
    scf.if %11 {
      %c0_9 = arith.constant 0 : index
      %c0_10 = arith.constant 0 : index
      %12 = vector.load %arg8[%c0_9, %c0_10] : memref<8x128xf32, #tpu.memory_space<vmem>>, vector<8x128xf32>
      %c0_11 = arith.constant 0 : index
      %c0_12 = arith.constant 0 : index
      %13 = vector.load %arg5[%c0_11, %c0_12] : memref<1x128xf32, #tpu.memory_space<vmem>>, vector<1x128xf32>
      %14 = vector.broadcast %13 : vector<1x128xf32> to vector<8x128xf32>
      %15 = arith.mulf %12, %14 : vector<8x128xf32>
      %c0_13 = arith.constant 0 : index
      %c0_14 = arith.constant 0 : index
      %16 = vector.load %arg6[%c0_13, %c0_14] : memref<1x128xf32, #tpu.memory_space<vmem>>, vector<1x128xf32>
      %17 = vector.broadcast %16 : vector<1x128xf32> to vector<8x128xf32>
      %18 = arith.addf %15, %17 : vector<8x128xf32>
      %cst_15 = arith.constant 0.000000e+00 : f32
      %19 = vector.broadcast %cst_15 : f32 to vector<8x128xf32>
      %20 = arith.maximumf %18, %19 : vector<8x128xf32>
      %c0_16 = arith.constant 0 : index
      %c0_17 = arith.constant 0 : index
      %21 = vector.load %arg7[%c0_16, %c0_17] : memref<8x128xf32, #tpu.memory_space<vmem>>, vector<8x128xf32>
      tpu.vector_store %arg7[%c0_16, %c0_17], %20 {strides = array<i32>} : memref<8x128xf32, #tpu.memory_space<vmem>>, vector<8x128xf32>,
    } else {
    }
    return
  }
  func.func @transform_0(%arg0: i32, %arg1: i32, %arg2: i32) -> (i32, i32) {
    %c0_i32 = arith.constant 0 : i32
    return %arg0, %arg2 : i32, i32
  }
  func.func @transform_1(%arg0: i32, %arg1: i32, %arg2: i32) -> (i32, i32) {
    %c0_i32 = arith.constant 0 : i32
    return %arg2, %arg1 : i32, i32
  }
  func.func @transform_2(%arg0: i32, %arg1: i32, %arg2: i32) -> (i32, i32) {
    %c0_i32 = arith.constant 0 : i32
    %c0_i32_0 = arith.constant 0 : i32
    return %c0_i32, %arg1 : i32, i32
  }
  func.func @transform_3(%arg0: i32, %arg1: i32, %arg2: i32) -> (i32, i32) {
    %c0_i32 = arith.constant 0 : i32
    %c0_i32_0 = arith.constant 0 : i32
    return %c0_i32, %arg1 : i32, i32
  }
  func.func @transform_4(%arg0: i32, %arg1: i32, %arg2: i32) -> (i32, i32) {
    %c0_i32 = arith.constant 0 : i32
    return %arg0, %arg1 : i32, i32
  }
}

module attributes {stable_mosaic.version = 11 : i64} {
  func.func @_mm_res_kernel(%arg0: i32, %arg1: i32, %arg2: i32, %arg3: memref<8x128xbf16, #tpu.memory_space<vmem>>, %arg4: memref<128x256xbf16, #tpu.memory_space<vmem>>, %arg5: memref<1x256xf32, #tpu.memory_space<vmem>>, %arg6: memref<1x256xf32, #tpu.memory_space<vmem>>, %arg7: memref<8x256xf32, #tpu.memory_space<vmem>>, %arg8: memref<8x256xf32, #tpu.memory_space<vmem>>, %arg9: memref<8x256xf32, #tpu.memory_space<vmem>>) attributes {dimension_semantics = [#tpu.dimension_semantics<parallel>, #tpu.dimension_semantics<parallel>, #tpu.dimension_semantics<arbitrary>], iteration_bounds = array<i64: 1, 2, 1>, scalar_prefetch = 0 : i64, scratch_operands = 1 : i64, tpu.core_type = #tpu.core_type<tc>, window_params = [{transform_indices = @transform_0, window_bounds = array<i64: 8, 128>}, {transform_indices = @transform_1, window_bounds = array<i64: 128, 256>}, {transform_indices = @transform_2, window_bounds = array<i64: 1, 256>}, {transform_indices = @transform_3, window_bounds = array<i64: 1, 256>}, {transform_indices = @transform_4, window_bounds = array<i64: 8, 256>}, {transform_indices = @transform_5, window_bounds = array<i64: 8, 256>}]} {
    %c0_i32 = arith.constant 0 : i32
    %0 = arith.cmpi eq, %arg2, %c0_i32 : i32
    %1 = arith.extui %0 : i1 to i32
    %c0_i32_0 = arith.constant 0 : i32
    %2 = arith.cmpi ne, %1, %c0_i32_0 : i32
    scf.if %2 {
      %cst_10 = arith.constant 0.000000e+00 : f32
      %12 = vector.broadcast %cst_10 : f32 to vector<8x256xf32>
      %c0_11 = arith.constant 0 : index
      %c0_12 = arith.constant 0 : index
      %13 = vector.load %arg9[%c0_11, %c0_12] : memref<8x256xf32, #tpu.memory_space<vmem>>, vector<8x256xf32>
      tpu.vector_store %arg9[%c0_11, %c0_12], %12 {strides = array<i32>} : memref<8x256xf32, #tpu.memory_space<vmem>>, vector<8x256xf32>,
    } else {
    }
    %c0 = arith.constant 0 : index
    %c0_1 = arith.constant 0 : index
    %3 = vector.load %arg9[%c0, %c0_1] : memref<8x256xf32, #tpu.memory_space<vmem>>, vector<8x256xf32>
    %c0_2 = arith.constant 0 : index
    %c0_3 = arith.constant 0 : index
    %4 = vector.load %arg3[%c0_2, %c0_3] : memref<8x128xbf16, #tpu.memory_space<vmem>>, vector<8x128xbf16>
    %c0_4 = arith.constant 0 : index
    %c0_5 = arith.constant 0 : index
    %5 = vector.load %arg4[%c0_4, %c0_5] : memref<128x256xbf16, #tpu.memory_space<vmem>>, vector<128x256xbf16>
    %cst = arith.constant dense<0.000000e+00> : vector<8x256xf32>
    %6 = tpu.matmul %4, %5, %cst {dimension_numbers = #tpu.dot_dimension_numbers<[1], [0], [0], [1], [0, 0, 1, 1], [], []>} : vector<8x128xbf16>, vector<128x256xbf16>, vector<8x256xf32> -> vector<8x256xf32>
    %7 = arith.addf %3, %6 : vector<8x256xf32>
    %c0_6 = arith.constant 0 : index
    %c0_7 = arith.constant 0 : index
    %8 = vector.load %arg9[%c0_6, %c0_7] : memref<8x256xf32, #tpu.memory_space<vmem>>, vector<8x256xf32>
    tpu.vector_store %arg9[%c0_6, %c0_7], %7 {strides = array<i32>} : memref<8x256xf32, #tpu.memory_space<vmem>>, vector<8x256xf32>,
    %c0_i32_8 = arith.constant 0 : i32
    %9 = arith.cmpi eq, %arg2, %c0_i32_8 : i32
    %10 = arith.extui %9 : i1 to i32
    %c0_i32_9 = arith.constant 0 : i32
    %11 = arith.cmpi ne, %10, %c0_i32_9 : i32
    scf.if %11 {
      %c0_10 = arith.constant 0 : index
      %c0_11 = arith.constant 0 : index
      %12 = vector.load %arg9[%c0_10, %c0_11] : memref<8x256xf32, #tpu.memory_space<vmem>>, vector<8x256xf32>
      %c0_12 = arith.constant 0 : index
      %c0_13 = arith.constant 0 : index
      %13 = vector.load %arg5[%c0_12, %c0_13] : memref<1x256xf32, #tpu.memory_space<vmem>>, vector<1x256xf32>
      %14 = vector.broadcast %13 : vector<1x256xf32> to vector<8x256xf32>
      %15 = arith.mulf %12, %14 : vector<8x256xf32>
      %c0_14 = arith.constant 0 : index
      %c0_15 = arith.constant 0 : index
      %16 = vector.load %arg6[%c0_14, %c0_15] : memref<1x256xf32, #tpu.memory_space<vmem>>, vector<1x256xf32>
      %17 = vector.broadcast %16 : vector<1x256xf32> to vector<8x256xf32>
      %18 = arith.addf %15, %17 : vector<8x256xf32>
      %c0_16 = arith.constant 0 : index
      %c0_17 = arith.constant 0 : index
      %19 = vector.load %arg7[%c0_16, %c0_17] : memref<8x256xf32, #tpu.memory_space<vmem>>, vector<8x256xf32>
      %20 = arith.addf %18, %19 : vector<8x256xf32>
      %cst_18 = arith.constant 0.000000e+00 : f32
      %21 = vector.broadcast %cst_18 : f32 to vector<8x256xf32>
      %22 = arith.maximumf %20, %21 : vector<8x256xf32>
      %c0_19 = arith.constant 0 : index
      %c0_20 = arith.constant 0 : index
      %23 = vector.load %arg8[%c0_19, %c0_20] : memref<8x256xf32, #tpu.memory_space<vmem>>, vector<8x256xf32>
      tpu.vector_store %arg8[%c0_19, %c0_20], %22 {strides = array<i32>} : memref<8x256xf32, #tpu.memory_space<vmem>>, vector<8x256xf32>,
    } else {
    }
    return
  }
  func.func @transform_0(%arg0: i32, %arg1: i32, %arg2: i32) -> (i32, i32) {
    %c0_i32 = arith.constant 0 : i32
    return %arg0, %arg2 : i32, i32
  }
  func.func @transform_1(%arg0: i32, %arg1: i32, %arg2: i32) -> (i32, i32) {
    %c0_i32 = arith.constant 0 : i32
    return %arg2, %arg1 : i32, i32
  }
  func.func @transform_2(%arg0: i32, %arg1: i32, %arg2: i32) -> (i32, i32) {
    %c0_i32 = arith.constant 0 : i32
    %c0_i32_0 = arith.constant 0 : i32
    return %c0_i32, %arg1 : i32, i32
  }
  func.func @transform_3(%arg0: i32, %arg1: i32, %arg2: i32) -> (i32, i32) {
    %c0_i32 = arith.constant 0 : i32
    %c0_i32_0 = arith.constant 0 : i32
    return %c0_i32, %arg1 : i32, i32
  }
  func.func @transform_4(%arg0: i32, %arg1: i32, %arg2: i32) -> (i32, i32) {
    %c0_i32 = arith.constant 0 : i32
    return %arg0, %arg1 : i32, i32
  }
  func.func @transform_5(%arg0: i32, %arg1: i32, %arg2: i32) -> (i32, i32) {
    %c0_i32 = arith.constant 0 : i32
    return %arg0, %arg1 : i32, i32
  }
}

module attributes {stable_mosaic.version = 11 : i64} {
  func.func @_mm_kernel(%arg0: i32, %arg1: i32, %arg2: i32, %arg3: memref<8x512xbf16, #tpu.memory_space<vmem>>, %arg4: memref<512x128xbf16, #tpu.memory_space<vmem>>, %arg5: memref<1x128xf32, #tpu.memory_space<vmem>>, %arg6: memref<1x128xf32, #tpu.memory_space<vmem>>, %arg7: memref<8x128xf32, #tpu.memory_space<vmem>>, %arg8: memref<8x128xf32, #tpu.memory_space<vmem>>) attributes {dimension_semantics = [#tpu.dimension_semantics<parallel>, #tpu.dimension_semantics<parallel>, #tpu.dimension_semantics<arbitrary>], iteration_bounds = array<i64: 1, 1, 1>, scalar_prefetch = 0 : i64, scratch_operands = 1 : i64, tpu.core_type = #tpu.core_type<tc>, window_params = [{transform_indices = @transform_0, window_bounds = array<i64: 8, 512>}, {transform_indices = @transform_1, window_bounds = array<i64: 512, 128>}, {transform_indices = @transform_2, window_bounds = array<i64: 1, 128>}, {transform_indices = @transform_3, window_bounds = array<i64: 1, 128>}, {transform_indices = @transform_4, window_bounds = array<i64: 8, 128>}]} {
    %c0_i32 = arith.constant 0 : i32
    %0 = arith.cmpi eq, %arg2, %c0_i32 : i32
    %1 = arith.extui %0 : i1 to i32
    %c0_i32_0 = arith.constant 0 : i32
    %2 = arith.cmpi ne, %1, %c0_i32_0 : i32
    scf.if %2 {
      %cst_10 = arith.constant 0.000000e+00 : f32
      %12 = vector.broadcast %cst_10 : f32 to vector<8x128xf32>
      %c0_11 = arith.constant 0 : index
      %c0_12 = arith.constant 0 : index
      %13 = vector.load %arg8[%c0_11, %c0_12] : memref<8x128xf32, #tpu.memory_space<vmem>>, vector<8x128xf32>
      tpu.vector_store %arg8[%c0_11, %c0_12], %12 {strides = array<i32>} : memref<8x128xf32, #tpu.memory_space<vmem>>, vector<8x128xf32>,
    } else {
    }
    %c0 = arith.constant 0 : index
    %c0_1 = arith.constant 0 : index
    %3 = vector.load %arg8[%c0, %c0_1] : memref<8x128xf32, #tpu.memory_space<vmem>>, vector<8x128xf32>
    %c0_2 = arith.constant 0 : index
    %c0_3 = arith.constant 0 : index
    %4 = vector.load %arg3[%c0_2, %c0_3] : memref<8x512xbf16, #tpu.memory_space<vmem>>, vector<8x512xbf16>
    %c0_4 = arith.constant 0 : index
    %c0_5 = arith.constant 0 : index
    %5 = vector.load %arg4[%c0_4, %c0_5] : memref<512x128xbf16, #tpu.memory_space<vmem>>, vector<512x128xbf16>
    %cst = arith.constant dense<0.000000e+00> : vector<8x128xf32>
    %6 = tpu.matmul %4, %5, %cst {dimension_numbers = #tpu.dot_dimension_numbers<[1], [0], [0], [1], [0, 0, 1, 1], [], []>} : vector<8x512xbf16>, vector<512x128xbf16>, vector<8x128xf32> -> vector<8x128xf32>
    %7 = arith.addf %3, %6 : vector<8x128xf32>
    %c0_6 = arith.constant 0 : index
    %c0_7 = arith.constant 0 : index
    %8 = vector.load %arg8[%c0_6, %c0_7] : memref<8x128xf32, #tpu.memory_space<vmem>>, vector<8x128xf32>
    tpu.vector_store %arg8[%c0_6, %c0_7], %7 {strides = array<i32>} : memref<8x128xf32, #tpu.memory_space<vmem>>, vector<8x128xf32>,
    %c0_i32_8 = arith.constant 0 : i32
    %9 = arith.cmpi eq, %arg2, %c0_i32_8 : i32
    %10 = arith.extui %9 : i1 to i32
    %c0_i32_9 = arith.constant 0 : i32
    %11 = arith.cmpi ne, %10, %c0_i32_9 : i32
    scf.if %11 {
      %c0_10 = arith.constant 0 : index
      %c0_11 = arith.constant 0 : index
      %12 = vector.load %arg8[%c0_10, %c0_11] : memref<8x128xf32, #tpu.memory_space<vmem>>, vector<8x128xf32>
      %c0_12 = arith.constant 0 : index
      %c0_13 = arith.constant 0 : index
      %13 = vector.load %arg5[%c0_12, %c0_13] : memref<1x128xf32, #tpu.memory_space<vmem>>, vector<1x128xf32>
      %14 = vector.broadcast %13 : vector<1x128xf32> to vector<8x128xf32>
      %15 = arith.mulf %12, %14 : vector<8x128xf32>
      %c0_14 = arith.constant 0 : index
      %c0_15 = arith.constant 0 : index
      %16 = vector.load %arg6[%c0_14, %c0_15] : memref<1x128xf32, #tpu.memory_space<vmem>>, vector<1x128xf32>
      %17 = vector.broadcast %16 : vector<1x128xf32> to vector<8x128xf32>
      %18 = arith.addf %15, %17 : vector<8x128xf32>
      %c0_16 = arith.constant 0 : index
      %c0_17 = arith.constant 0 : index
      %19 = vector.load %arg7[%c0_16, %c0_17] : memref<8x128xf32, #tpu.memory_space<vmem>>, vector<8x128xf32>
      tpu.vector_store %arg7[%c0_16, %c0_17], %18 {strides = array<i32>} : memref<8x128xf32, #tpu.memory_space<vmem>>, vector<8x128xf32>,
    } else {
    }
    return
  }
  func.func @transform_0(%arg0: i32, %arg1: i32, %arg2: i32) -> (i32, i32) {
    %c0_i32 = arith.constant 0 : i32
    return %arg0, %arg2 : i32, i32
  }
  func.func @transform_1(%arg0: i32, %arg1: i32, %arg2: i32) -> (i32, i32) {
    %c0_i32 = arith.constant 0 : i32
    return %arg2, %arg1 : i32, i32
  }
  func.func @transform_2(%arg0: i32, %arg1: i32, %arg2: i32) -> (i32, i32) {
    %c0_i32 = arith.constant 0 : i32
    %c0_i32_0 = arith.constant 0 : i32
    return %c0_i32, %arg1 : i32, i32
  }
  func.func @transform_3(%arg0: i32, %arg1: i32, %arg2: i32) -> (i32, i32) {
    %c0_i32 = arith.constant 0 : i32
    %c0_i32_0 = arith.constant 0 : i32
    return %c0_i32, %arg1 : i32, i32
  }
  func.func @transform_4(%arg0: i32, %arg1: i32, %arg2: i32) -> (i32, i32) {
    %c0_i32 = arith.constant 0 : i32
    return %arg0, %arg1 : i32, i32
  }
}

</mosaic_0001>

<llo_original>
// kernel: _lambda_.18
$region0: #{_lambda_.18}
  #allocation0 [shape = 'u32[]', space=smem, size = 0x4, offset = 0x4, fixed_abs, tag = 'smem constant byte address 0x4 - core index']
  #allocation1 [shape = 'u32[144,128]{1,0:T(1,128)}', space=vmem, size = 0x12000, scoped, tag = 'internal scratch']
  #allocation2 [shape = 'f32[392,128]{1,0:T(8,128)}', space=vmem, size = 0x31000, scoped, tag = 'scratch operand']
  %s0 = inlined_call_operand.vmem [shape: bf16[392,256], index: 0, kind: input, shape index: {}]
  %s1 = inlined_call_operand.vmem [shape: bf16[256,128], index: 1, kind: input, shape index: {}]
  %s2 = inlined_call_operand.vmem [shape: f32[1,128], index: 2, kind: input, shape index: {}]
  %s3 = inlined_call_operand.vmem [shape: f32[1,128], index: 3, kind: input, shape index: {}]
  %s4 = inlined_call_operand.vmem [shape: f32[392,128], index: 4, kind: output, shape index: {}]
  %s5 = sld [smem:[#allocation0]]
  $region34: #{_lambda_.18} parent=0
    _
  %s7 = ssub.s32 1, %s5
  %s8 = scalar_select 0, %s7, %s5
  // Predicated region
  $region2: #{_lambda_.18} parent=0 // pred_check
    _
  $region3: #{_lambda_.18} parent=0 // pred_check_branch
    %10 = sbr.rel (0) target = $region5
  $region4: #{_lambda_.18} parent=0 // pred_region
    _
  $region5: #{_lambda_.18} parent=0 // pred_fallthru
    _
  // Predicated region
  $region6: #{_lambda_.18} parent=0 // pred_check
    _
  $region7: #{_lambda_.18} parent=0 // pred_check_branch
    %12 = sbr.rel (0) target = $region9
  $region8: #{_lambda_.18} parent=0 // pred_region
    _
  $region9: #{_lambda_.18} parent=0 // pred_fallthru
    _
  // Predicated region
  $region10: #{_lambda_.18} parent=0 // pred_check
    _
  $region11: #{_lambda_.18} parent=0 // pred_check_branch
    %14 = sbr.rel (0) target = $region13
  $region12: #{_lambda_.18} parent=0 // pred_region
    _
  $region13: #{_lambda_.18} parent=0 // pred_fallthru
    _
  // Predicated region
  $region14: #{_lambda_.18} parent=0 // pred_check
    _
  $region15: #{_lambda_.18} parent=0 // pred_check_branch
    %16 = sbr.rel (0) target = $region17
  $region16: #{_lambda_.18} parent=0 // pred_region
    _
  $region17: #{_lambda_.18} parent=0 // pred_fallthru
    _
  %p18 = scmp.eq.s32.totalorder 0, 0
  // Predicated region
  $region18: #{_lambda_.18} parent=0 // pred_check
    %p19 = pneg %p18
  $region19: #{_lambda_.18} parent=0 // pred_check_branch
    %21 = sbr.rel (%p19) target = $region21
  $region20: #{_lambda_.18} parent=0 // pred_region
    %22 = vst [vmem:[#allocation2] sm:$0xff] 0.0
    %23 = vst [vmem:[#allocation2 + $0x8] sm:$0xff] 0.0
    %24 = vst [vmem:[#allocation2 + $0x10] sm:$0xff] 0.0
    %25 = vst [vmem:[#allocation2 + $0x18] sm:$0xff] 0.0
    %26 = vst [vmem:[#allocation2 + $0x20] sm:$0xff] 0.0
    %27 = vst [vmem:[#allocation2 + $0x28] sm:$0xff] 0.0
    %28 = vst [vmem:[#allocation2 + $0x30] sm:$0xff] 0.0
    %29 = vst [vmem:[#allocation2 + $0x38] sm:$0xff] 0.0
    %30 = vst [vmem:[#allocation2 + $0x40] sm:$0xff] 0.0
    %31 = vst [vmem:[#allocation2 + $0x48] sm:$0xff] 0.0
    %32 = vst [vmem:[#allocation2 + $0x50] sm:$0xff] 0.0
    %33 = vst [vmem:[#allocation2 + $0x58] sm:$0xff] 0.0
    %34 = vst [vmem:[#allocation2 + $0x60] sm:$0xff] 0.0
    %35 = vst [vmem:[#allocation2 + $0x68] sm:$0xff] 0.0
    %36 = vst [vmem:[#allocation2 + $0x70] sm:$0xff] 0.0
    %37 = vst [vmem:[#allocation2 + $0x78] sm:$0xff] 0.0
    %38 = vst [vmem:[#allocation2 + $0x80] sm:$0xff] 0.0
    %39 = vst [vmem:[#allocation2 + $0x88] sm:$0xff] 0.0
    %40 = vst [vmem:[#allocation2 + $0x90] sm:$0xff] 0.0
    %41 = vst [vmem:[#allocation2 + $0x98] sm:$0xff] 0.0
    %42 = vst [vmem:[#allocation2 + $0xa0] sm:$0xff] 0.0
    %43 = vst [vmem:[#allocation2 + $0xa8] sm:$0xff] 0.0
    %44 = vst [vmem:[#allocation2 + $0xb0] sm:$0xff] 0.0
    %45 = vst [vmem:[#allocation2 + $0xb8] sm:$0xff] 0.0
    %46 = vst [vmem:[#allocation2 + $0xc0] sm:$0xff] 0.0
    %47 = vst [vmem:[#allocation2 + $0xc8] sm:$0xff] 0.0
    %48 = vst [vmem:[#allocation2 + $0xd0] sm:$0xff] 0.0
    %49 = vst [vmem:[#allocation2 + $0xd8] sm:$0xff] 0.0
    %50 = vst [vmem:[#allocation2 + $0xe0] sm:$0xff] 0.0
    %51 = vst [vmem:[#allocation2 + $0xe8] sm:$0xff] 0.0
    %52 = vst [vmem:[#allocation2 + $0xf0] sm:$0xff] 0.0
    %53 = vst [vmem:[#allocation2 + $0xf8] sm:$0xff] 0.0
    %54 = vst [vmem:[#allocation2 + $0x100] sm:$0xff] 0.0
    %55 = vst [vmem:[#allocation2 + $0x108] sm:$0xff] 0.0
    %56 = vst [vmem:[#allocation2 + $0x110] sm:$0xff] 0.0
    %57 = vst [vmem:[#allocation2 + $0x118] sm:$0xff] 0.0
    %58 = vst [vmem:[#allocation2 + $0x120] sm:$0xff] 0.0
    %59 = vst [vmem:[#allocation2 + $0x128] sm:$0xff] 0.0
    %60 = vst [vmem:[#allocation2 + $0x130] sm:$0xff] 0.0
    %61 = vst [vmem:[#allocation2 + $0x138] sm:$0xff] 0.0
    %62 = vst [vmem:[#allocation2 + $0x140] sm:$0xff] 0.0
    %63 = vst [vmem:[#allocation2 + $0x148] sm:$0xff] 0.0
    %64 = vst [vmem:[#allocation2 + $0x150] sm:$0xff] 0.0
    %65 = vst [vmem:[#allocation2 + $0x158] sm:$0xff] 0.0
    %66 = vst [vmem:[#allocation2 + $0x160] sm:$0xff] 0.0
    %67 = vst [vmem:[#allocation2 + $0x168] sm:$0xff] 0.0
    %68 = vst [vmem:[#allocation2 + $0x170] sm:$0xff] 0.0
    %69 = vst [vmem:[#allocation2 + $0x178] sm:$0xff] 0.0
    %70 = vst [vmem:[#allocation2 + $0x180] sm:$0xff] 0.0
  $region21: #{_lambda_.18} parent=0 // pred_fallthru
    _
  %v71 = vld [vmem:[#allocation2] sm:$0xff]
  %v72 = vld [vmem:[#allocation2 + $0x8] sm:$0xff]
  %v73 = vld [vmem:[#allocation2 + $0x10] sm:$0xff]
  %v74 = vld [vmem:[#allocation2 + $0x18] sm:$0xff]
  %v75 = vld [vmem:[#allocation2 + $0x20] sm:$0xff]
  %v76 = vld [vmem:[#allocation2 + $0x28] sm:$0xff]
  %v77 = vld [vmem:[#allocation2 + $0x30] sm:$0xff]
  %v78 = vld [vmem:[#allocation2 + $0x38] sm:$0xff]
  %v79 = vld [vmem:[#allocation2 + $0x40] sm:$0xff]
  %v80 = vld [vmem:[#allocation2 + $0x48] sm:$0xff]
  %v81 = vld [vmem:[#allocation2 + $0x50] sm:$0xff]
  %v82 = vld [vmem:[#allocation2 + $0x58] sm:$0xff]
  %v83 = vld [vmem:[#allocation2 + $0x60] sm:$0xff]
  %v84 = vld [vmem:[#allocation2 + $0x68] sm:$0xff]
  %v85 = vld [vmem:[#allocation2 + $0x70] sm:$0xff]
  %v86 = vld [vmem:[#allocation2 + $0x78] sm:$0xff]
  %v87 = vld [vmem:[#allocation2 + $0x80] sm:$0xff]
  %v88 = vld [vmem:[#allocation2 + $0x88] sm:$0xff]
  %v89 = vld [vmem:[#allocation2 + $0x90] sm:$0xff]
  %v90 = vld [vmem:[#allocation2 + $0x98] sm:$0xff]
  %v91 = vld [vmem:[#allocation2 + $0xa0] sm:$0xff]
  %v92 = vld [vmem:[#allocation2 + $0xa8] sm:$0xff]
  %v93 = vld [vmem:[#allocation2 + $0xb0] sm:$0xff]
  %v94 = vld [vmem:[#allocation2 + $0xb8] sm:$0xff]
  %v95 = vld [vmem:[#allocation2 + $0xc0] sm:$0xff]
  %v96 = vld [vmem:[#allocation2 + $0xc8] sm:$0xff]
  %v97 = vld [vmem:[#allocation2 + $0xd0] sm:$0xff]
  %v98 = vld [vmem:[#allocation2 + $0xd8] sm:$0xff]
  %v99 = vld [vmem:[#allocation2 + $0xe0] sm:$0xff]
  %v100 = vld [vmem:[#allocation2 + $0xe8] sm:$0xff]
  %v101 = vld [vmem:[#allocation2 + $0xf0] sm:$0xff]
  %v102 = vld [vmem:[#allocation2 + $0xf8] sm:$0xff]
  %v103 = vld [vmem:[#allocation2 + $0x100] sm:$0xff]
  %v104 = vld [vmem:[#allocation2 + $0x108] sm:$0xff]
  %v105 = vld [vmem:[#allocation2 + $0x110] sm:$0xff]
  %v106 = vld [vmem:[#allocation2 + $0x118] sm:$0xff]
  %v107 = vld [vmem:[#allocation2 + $0x120] sm:$0xff]
  %v108 = vld [vmem:[#allocation2 + $0x128] sm:$0xff]
  %v109 = vld [vmem:[#allocation2 + $0x130] sm:$0xff]
  %v110 = vld [vmem:[#allocation2 + $0x138] sm:$0xff]
  %v111 = vld [vmem:[#allocation2 + $0x140] sm:$0xff]
  %v112 = vld [vmem:[#allocation2 + $0x148] sm:$0xff]
  %v113 = vld [vmem:[#allocation2 + $0x150] sm:$0xff]
  %v114 = vld [vmem:[#allocation2 + $0x158] sm:$0xff]
  %v115 = vld [vmem:[#allocation2 + $0x160] sm:$0xff]
  %v116 = vld [vmem:[#allocation2 + $0x168] sm:$0xff]
  %v117 = vld [vmem:[#allocation2 + $0x170] sm:$0xff]
  %v118 = vld [vmem:[#allocation2 + $0x178] sm:$0xff]
  %v119 = vld [vmem:[#allocation2 + $0x180] sm:$0xff]
  %v120 = vld [vmem:[%s0] sm:$0xff]
  %v121 = vld [vmem:[%s0 + $0x8] sm:$0xff]
  %v122 = vld [vmem:[%s0 + $0x10] sm:$0xff]
  %v123 = vld [vmem:[%s0 + $0x18] sm:$0xff]
  %v124 = vld [vmem:[%s0 + $0x20] sm:$0xff]
  %v125 = vld [vmem:[%s0 + $0x28] sm:$0xff]
  %v126 = vld [vmem:[%s0 + $0x30] sm:$0xff]
  %v127 = vld [vmem:[%s0 + $0x38] sm:$0xff]
  %v128 = vld [vmem:[%s0 + $0x40] sm:$0xff]
  %v129 = vld [vmem:[%s0 + $0x48] sm:$0xff]
  %v130 = vld [vmem:[%s0 + $0x50] sm:$0xff]
  %v131 = vld [vmem:[%s0 + $0x58] sm:$0xff]
  %v132 = vld [vmem:[%s0 + $0x60] sm:$0xff]
  %v133 = vld [vmem:[%s0 + $0x68] sm:$0xff]
  %v134 = vld [vmem:[%s0 + $0x70] sm:$0xff]
  %v135 = vld [vmem:[%s0 + $0x78] sm:$0xff]
  %v136 = vld [vmem:[%s0 + $0x80] sm:$0xff]
  %v137 = vld [vmem:[%s0 + $0x88] sm:$0xff]
  %v138 = vld [vmem:[%s0 + $0x90] sm:$0xff]
  %v139 = vld [vmem:[%s0 + $0x98] sm:$0xff]
  %v140 = vld [vmem:[%s0 + $0xa0] sm:$0xff]
  %v141 = vld [vmem:[%s0 + $0xa8] sm:$0xff]
  %v142 = vld [vmem:[%s0 + $0xb0] sm:$0xff]
  %v143 = vld [vmem:[%s0 + $0xb8] sm:$0xff]
  %v144 = vld [vmem:[%s0 + $0xc0] sm:$0xff]
  %v145 = vld [vmem:[%s0 + $0xc8] sm:$0xff]
  %v146 = vld [vmem:[%s0 + $0xd0] sm:$0xff]
  %v147 = vld [vmem:[%s0 + $0xd8] sm:$0xff]
  %v148 = vld [vmem:[%s0 + $0xe0] sm:$0xff]
  %v149 = vld [vmem:[%s0 + $0xe8] sm:$0xff]
  %v150 = vld [vmem:[%s0 + $0xf0] sm:$0xff]
  %v151 = vld [vmem:[%s0 + $0xf8] sm:$0xff]
  %v152 = vld [vmem:[%s0 + $0x100] sm:$0xff]
  %v153 = vld [vmem:[%s0 + $0x108] sm:$0xff]
  %v154 = vld [vmem:[%s0 + $0x110] sm:$0xff]
  %v155 = vld [vmem:[%s0 + $0x118] sm:$0xff]
  %v156 = vld [vmem:[%s0 + $0x120] sm:$0xff]
  %v157 = vld [vmem:[%s0 + $0x128] sm:$0xff]
  %v158 = vld [vmem:[%s0 + $0x130] sm:$0xff]
  %v159 = vld [vmem:[%s0 + $0x138] sm:$0xff]
  %v160 = vld [vmem:[%s0 + $0x140] sm:$0xff]
  %v161 = vld [vmem:[%s0 + $0x148] sm:$0xff]
  %v162 = vld [vmem:[%s0 + $0x150] sm:$0xff]
  %v163 = vld [vmem:[%s0 + $0x158] sm:$0xff]
  %v164 = vld [vmem:[%s0 + $0x160] sm:$0xff]
  %v165 = vld [vmem:[%s0 + $0x168] sm:$0xff]
  %v166 = vld [vmem:[%s0 + $0x170] sm:$0xff]
  %v167 = vld [vmem:[%s0 + $0x178] sm:$0xff]
  %v168 = vld [vmem:[%s0 + $0x180] sm:$0xff]
  %v169 = vld [vmem:[%s1] sm:$0xf]
  %v170 = vld [vmem:[%s1 + $0x4] sm:$0xf]
  %v171 = vld [vmem:[%s1 + $0x8] sm:$0xf]
  %v172 = vld [vmem:[%s1 + $0xc] sm:$0xf]
  %v173 = vld [vmem:[%s1 + $0x10] sm:$0xf]
  %v174 = vld [vmem:[%s1 + $0x14] sm:$0xf]
  %v175 = vld [vmem:[%s1 + $0x18] sm:$0xf]
  %v176 = vld [vmem:[%s1 + $0x1c] sm:$0xf]
  %v177 = vld [vmem:[%s1 + $0x20] sm:$0xf]
  %v178 = vld [vmem:[%s1 + $0x24] sm:$0xf]
  %v179 = vld [vmem:[%s1 + $0x28] sm:$0xf]
  %v180 = vld [vmem:[%s1 + $0x2c] sm:$0xf]
  %v181 = vld [vmem:[%s1 + $0x30] sm:$0xf]
  %v182 = vld [vmem:[%s1 + $0x34] sm:$0xf]
  %v183 = vld [vmem:[%s1 + $0x38] sm:$0xf]
  %v184 = vld [vmem:[%s1 + $0x3c] sm:$0xf]
  %v185 = vld [vmem:[%s1 + $0x40] sm:$0xf]
  %v186 = vld [vmem:[%s1 + $0x44] sm:$0xf]
  %v187 = vld [vmem:[%s1 + $0x48] sm:$0xf]
  %v188 = vld [vmem:[%s1 + $0x4c] sm:$0xf]
  %v189 = vld [vmem:[%s1 + $0x50] sm:$0xf]
  %v190 = vld [vmem:[%s1 + $0x54] sm:$0xf]
  %v191 = vld [vmem:[%s1 + $0x58] sm:$0xf]
  %v192 = vld [vmem:[%s1 + $0x5c] sm:$0xf]
  %v193 = vld [vmem:[%s1 + $0x60] sm:$0xf]
  %v194 = vld [vmem:[%s1 + $0x64] sm:$0xf]
  %v195 = vld [vmem:[%s1 + $0x68] sm:$0xf]
  %v196 = vld [vmem:[%s1 + $0x6c] sm:$0xf]
  %v197 = vld [vmem:[%s1 + $0x70] sm:$0xf]
  %v198 = vld [vmem:[%s1 + $0x74] sm:$0xf]
  %v199 = vld [vmem:[%s1 + $0x78] sm:$0xf]
  %v200 = vld [vmem:[%s1 + $0x7c] sm:$0xf]
  %v250 = vunpack.c.l.b16 %v120
  %v251 = vunpack.c.h.b16 %v120
  %v252 = vunpack.c.l.b16 %v121
  %v253 = vunpack.c.h.b16 %v121
  %v254 = vunpack.c.l.b16 %v122
  %v255 = vunpack.c.h.b16 %v122
  %v256 = vunpack.c.l.b16 %v123
  %v257 = vunpack.c.h.b16 %v123
  %v258 = vunpack.c.l.b16 %v124
  %v259 = vunpack.c.h.b16 %v124
  %v260 = vunpack.c.l.b16 %v125
  %v261 = vunpack.c.h.b16 %v125
  %v262 = vunpack.c.l.b16 %v126
  %v263 = vunpack.c.h.b16 %v126
  %v264 = vunpack.c.l.b16 %v127
  %v265 = vunpack.c.h.b16 %v127
  %v266 = vunpack.c.l.b16 %v128
  %v267 = vunpack.c.h.b16 %v128
  %v268 = vunpack.c.l.b16 %v129
  %v269 = vunpack.c.h.b16 %v129
  %v270 = vunpack.c.l.b16 %v130
  %v271 = vunpack.c.h.b16 %v130
  %v272 = vunpack.c.l.b16 %v131
  %v273 = vunpack.c.h.b16 %v131
  %v274 = vunpack.c.l.b16 %v132
  %v275 = vunpack.c.h.b16 %v132
  %v276 = vunpack.c.l.b16 %v133
  %v277 = vunpack.c.h.b16 %v133
  %v278 = vunpack.c.l.b16 %v134
  %v279 = vunpack.c.h.b16 %v134
  %v280 = vunpack.c.l.b16 %v135
  %v281 = vunpack.c.h.b16 %v135
  %v282 = vunpack.c.l.b16 %v136
  %v283 = vunpack.c.h.b16 %v136
  %v284 = vunpack.c.l.b16 %v137
  %v285 = vunpack.c.h.b16 %v137
  %v286 = vunpack.c.l.b16 %v138
  %v287 = vunpack.c.h.b16 %v138
  %v288 = vunpack.c.l.b16 %v139
  %v289 = vunpack.c.h.b16 %v139
  %v290 = vunpack.c.l.b16 %v140
  %v291 = vunpack.c.h.b16 %v140
  %v292 = vunpack.c.l.b16 %v141
  %v293 = vunpack.c.h.b16 %v141
  %v294 = vunpack.c.l.b16 %v142
  %v295 = vunpack.c.h.b16 %v142
  %v296 = vunpack.c.l.b16 %v143
  %v297 = vunpack.c.h.b16 %v143
  %v298 = vunpack.c.l.b16 %v144
  %v299 = vunpack.c.h.b16 %v144
  %v300 = vunpack.c.l.b16 %v145
  %v301 = vunpack.c.h.b16 %v145
  %v302 = vunpack.c.l.b16 %v146
  %v303 = vunpack.c.h.b16 %v146
  %v304 = vunpack.c.l.b16 %v147
  %v305 = vunpack.c.h.b16 %v147
  %v306 = vunpack.c.l.b16 %v148
  %v307 = vunpack.c.h.b16 %v148
  %v308 = vunpack.c.l.b16 %v149
  %v309 = vunpack.c.h.b16 %v149
  %v310 = vunpack.c.l.b16 %v150
  %v311 = vunpack.c.h.b16 %v150
  %v312 = vunpack.c.l.b16 %v151
  %v313 = vunpack.c.h.b16 %v151
  %v314 = vunpack.c.l.b16 %v152
  %v315 = vunpack.c.h.b16 %v152
  %v316 = vunpack.c.l.b16 %v153
  %v317 = vunpack.c.h.b16 %v153
  %v318 = vunpack.c.l.b16 %v154
  %v319 = vunpack.c.h.b16 %v154
  %v320 = vunpack.c.l.b16 %v155
  %v321 = vunpack.c.h.b16 %v155
  %v322 = vunpack.c.l.b16 %v156
  %v323 = vunpack.c.h.b16 %v156
  %v324 = vunpack.c.l.b16 %v157
  %v325 = vunpack.c.h.b16 %v157
  %v326 = vunpack.c.l.b16 %v158
  %v327 = vunpack.c.h.b16 %v158
  %v328 = vunpack.c.l.b16 %v159
  %v329 = vunpack.c.h.b16 %v159
  %v330 = vunpack.c.l.b16 %v160
  %v331 = vunpack.c.h.b16 %v160
  %v332 = vunpack.c.l.b16 %v161
  %v333 = vunpack.c.h.b16 %v161
  %v334 = vunpack.c.l.b16 %v162
  %v335 = vunpack.c.h.b16 %v162
  %v336 = vunpack.c.l.b16 %v163
  %v337 = vunpack.c.h.b16 %v163
  %v338 = vunpack.c.l.b16 %v164
  %v339 = vunpack.c.h.b16 %v164
  %v340 = vunpack.c.l.b16 %v165
  %v341 = vunpack.c.h.b16 %v165
  %v342 = vunpack.c.l.b16 %v166
  %v343 = vunpack.c.h.b16 %v166
  %v344 = vunpack.c.l.b16 %v167
  %v345 = vunpack.c.h.b16 %v167
  %v346 = vunpack.c.l.b16 %v168
  %v347 = vunpack.c.h.b16 %v168
  %v348 = vpack.c.b16 %v252, %v250
  %v349 = vpack.c.b16 %v253, %v251
  %v350 = vpack.c.b16 %v256, %v254
  %v351 = vpack.c.b16 %v257, %v255
  %v352 = vpack.c.b16 %v260, %v258
  %v353 = vpack.c.b16 %v261, %v259
  %v354 = vpack.c.b16 %v264, %v262
  %v355 = vpack.c.b16 %v265, %v263
  %v356 = vpack.c.b16 %v268, %v266
  %v357 = vpack.c.b16 %v269, %v267
  %v358 = vpack.c.b16 %v272, %v270
  %v359 = vpack.c.b16 %v273, %v271
  %v360 = vpack.c.b16 %v276, %v274
  %v361 = vpack.c.b16 %v277, %v275
  %v362 = vpack.c.b16 %v280, %v278
  %v363 = vpack.c.b16 %v281, %v279
  %v364 = vpack.c.b16 %v284, %v282
  %v365 = vpack.c.b16 %v285, %v283
  %v366 = vpack.c.b16 %v288, %v286
  %v367 = vpack.c.b16 %v289, %v287
  %v368 = vpack.c.b16 %v292, %v290
  %v369 = vpack.c.b16 %v293, %v291
  %v370 = vpack.c.b16 %v296, %v294
  %v371 = vpack.c.b16 %v297, %v295
  %v372 = vpack.c.b16 %v300, %v298
  %v373 = vpack.c.b16 %v301, %v299
  %v374 = vpack.c.b16 %v304, %v302
  %v375 = vpack.c.b16 %v305, %v303
  %v376 = vpack.c.b16 %v308, %v306
  %v377 = vpack.c.b16 %v309, %v307
  %v378 = vpack.c.b16 %v312, %v310
  %v379 = vpack.c.b16 %v313, %v311
  %v380 = vpack.c.b16 %v316, %v314
  %v381 = vpack.c.b16 %v317, %v315
  %v382 = vpack.c.b16 %v320, %v318
  %v383 = vpack.c.b16 %v321, %v319
  %v384 = vpack.c.b16 %v324, %v322
  %v385 = vpack.c.b16 %v325, %v323
  %v386 = vpack.c.b16 %v328, %v326
  %v387 = vpack.c.b16 %v329, %v327
  %v388 = vpack.c.b16 %v332, %v330
  %v389 = vpack.c.b16 %v333, %v331
  %v390 = vpack.c.b16 %v336, %v334
  %v391 = vpack.c.b16 %v337, %v335
  %v392 = vpack.c.b16 %v340, %v338
  %v393 = vpack.c.b16 %v341, %v339
  %v394 = vpack.c.b16 %v344, %v342
  %v395 = vpack.c.b16 %v345, %v343
  %v396 = vpack.c.b16 %v346, %v346
  %v397 = vpack.c.b16 %v347, %v347
  %v480 = vunpack.c.l.b16 %v169
  %v481 = vunpack.c.l.b16 %v170
  %v482 = vunpack.c.l.b16 %v171
  %v483 = vunpack.c.l.b16 %v172
  %v484 = vunpack.c.l.b16 %v173
  %v485 = vunpack.c.l.b16 %v174
  %v486 = vunpack.c.l.b16 %v175
  %v487 = vunpack.c.l.b16 %v176
  %v488 = vunpack.c.l.b16 %v177
  %v489 = vunpack.c.l.b16 %v178
  %v490 = vunpack.c.l.b16 %v179
  %v491 = vunpack.c.l.b16 %v180
  %v492 = vunpack.c.l.b16 %v181
  %v493 = vunpack.c.l.b16 %v182
  %v494 = vunpack.c.l.b16 %v183
  %v495 = vunpack.c.l.b16 %v184
  %v496 = vunpack.c.l.b16 %v185
  %v497 = vunpack.c.l.b16 %v186
  %v498 = vunpack.c.l.b16 %v187
  %v499 = vunpack.c.l.b16 %v188
  %v500 = vunpack.c.l.b16 %v189
  %v501 = vunpack.c.l.b16 %v190
  %v502 = vunpack.c.l.b16 %v191
  %v503 = vunpack.c.l.b16 %v192
  %v504 = vunpack.c.l.b16 %v193
  %v505 = vunpack.c.l.b16 %v194
  %v506 = vunpack.c.l.b16 %v195
  %v507 = vunpack.c.l.b16 %v196
  %v508 = vunpack.c.l.b16 %v197
  %v509 = vunpack.c.l.b16 %v198
  %v510 = vunpack.c.l.b16 %v199
  %v511 = vunpack.c.l.b16 %v200
  %v512 = vpack.c.b16 %v481, %v480
  %v513 = vpack.c.b16 %v483, %v482
  %v514 = vpack.c.b16 %v485, %v484
  %v515 = vpack.c.b16 %v487, %v486
  %v516 = vpack.c.b16 %v489, %v488
  %v517 = vpack.c.b16 %v491, %v490
  %v518 = vpack.c.b16 %v493, %v492
  %v519 = vpack.c.b16 %v495, %v494
  %v520 = vpack.c.b16 %v497, %v496
  %v521 = vpack.c.b16 %v499, %v498
  %v522 = vpack.c.b16 %v501, %v500
  %v523 = vpack.c.b16 %v503, %v502
  %v524 = vpack.c.b16 %v505, %v504
  %v525 = vpack.c.b16 %v507, %v506
  %v526 = vpack.c.b16 %v509, %v508
  %v527 = vpack.c.b16 %v511, %v510
  %544 = vmatprep.subr.bf16.mxu0 0
  %545 = vmatpush1.bf16.msra.mxu0 %v512
  %546 = vmatprep.subr.bf16.mxu0 0
  %547 = vmatpush1.bf16.msra.mxu0 %v513
  %548 = vmatprep.subr.bf16.mxu0 0
  %549 = vmatpush1.bf16.msra.mxu0 %v514
  %550 = vmatprep.subr.bf16.mxu0 0
  %551 = vmatpush1.bf16.msra.mxu0 %v515
  %552 = vmatprep.subr.bf16.mxu0 0
  %553 = vmatpush1.bf16.msra.mxu0 %v516
  %554 = vmatprep.subr.bf16.mxu0 0
  %555 = vmatpush1.bf16.msra.mxu0 %v517
  %556 = vmatprep.subr.bf16.mxu0 0
  %557 = vmatpush1.bf16.msra.mxu0 %v518
  %558 = vmatprep.subr.bf16.mxu0 0
  %559 = vmatpush1.bf16.msra.mxu0 %v519
  %560 = vmatprep.subr.bf16.mxu0 0
  %561 = vmatpush1.bf16.msra.mxu0 %v520
  %562 = vmatprep.subr.bf16.mxu0 0
  %563 = vmatpush1.bf16.msra.mxu0 %v521
  %564 = vmatprep.subr.bf16.mxu0 0
  %565 = vmatpush1.bf16.msra.mxu0 %v522
  %566 = vmatprep.subr.bf16.mxu0 0
  %567 = vmatpush1.bf16.msra.mxu0 %v523
  %568 = vmatprep.subr.bf16.mxu0 0
  %569 = vmatpush1.bf16.msra.mxu0 %v524
  %570 = vmatprep.subr.bf16.mxu0 0
  %571 = vmatpush1.bf16.msra.mxu0 %v525
  %572 = vmatprep.subr.bf16.mxu0 0
  %573 = vmatpush1.bf16.msra.mxu0 %v526
  %574 = vmatprep.subr.bf16.mxu0 0
  %575 = vmatpush1.bf16.msra.mxu0 %v527
  %576 = vmatprep.mubr.bf16.mxu0 %v349
  %577 = vmatmul.mubr.bf16.gmra.mrb[0].mxu0 %v348
  %v578 = vpop.f32.mrb[0].mxu0
  %v579 = vadd.f32 0.0, %v578
  %v580 = vpop.f32.mrb[0].mxu0
  %v581 = vpop.f32.mrb[0].mxu0
  %v582 = vadd.f32 0.0, %v581
  %v583 = vpop.f32.mrb[0].mxu0
  %584 = vmatprep.mubr.bf16.mxu0 %v351
  %585 = vmatmul.mubr.bf16.gmra.mrb[0].mxu0 %v350
  %v586 = vpop.f32.mrb[0].mxu0
  %v587 = vadd.f32 0.0, %v586
  %v588 = vpop.f32.mrb[0].mxu0
  %v589 = vpop.f32.mrb[0].mxu0
  %v590 = vadd.f32 0.0, %v589
  %v591 = vpop.f32.mrb[0].mxu0
  %592 = vmatprep.mubr.bf16.mxu0 %v353
  %593 = vmatmul.mubr.bf16.gmra.mrb[0].mxu0 %v352
  %v594 = vpop.f32.mrb[0].mxu0
  %v595 = vadd.f32 0.0, %v594
  %v596 = vpop.f32.mrb[0].mxu0
  %v597 = vpop.f32.mrb[0].mxu0
  %v598 = vadd.f32 0.0, %v597
  %v599 = vpop.f32.mrb[0].mxu0
  %600 = vmatprep.mubr.bf16.mxu0 %v355
  %601 = vmatmul.mubr.bf16.gmra.mrb[0].mxu0 %v354
  %v602 = vpop.f32.mrb[0].mxu0
  %v603 = vadd.f32 0.0, %v602
  %v604 = vpop.f32.mrb[0].mxu0
  %v605 = vpop.f32.mrb[0].mxu0
  %v606 = vadd.f32 0.0, %v605
  %v607 = vpop.f32.mrb[0].mxu0
  %608 = vmatprep.mubr.bf16.mxu0 %v357
  %609 = vmatmul.mubr.bf16.gmra.mrb[0].mxu0 %v356
  %v610 = vpop.f32.mrb[0].mxu0
  %v611 = vadd.f32 0.0, %v610
  %v612 = vpop.f32.mrb[0].mxu0
  %v613 = vpop.f32.mrb[0].mxu0
  %v614 = vadd.f32 0.0, %v613
  %v615 = vpop.f32.mrb[0].mxu0
  %616 = vmatprep.mubr.bf16.mxu0 %v359
  %617 = vmatmul.mubr.bf16.gmra.mrb[0].mxu0 %v358
  %v618 = vpop.f32.mrb[0].mxu0
  %v619 = vadd.f32 0.0, %v618
  %v620 = vpop.f32.mrb[0].mxu0
  %v621 = vpop.f32.mrb[0].mxu0
  %v622 = vadd.f32 0.0, %v621
  %v623 = vpop.f32.mrb[0].mxu0
  %624 = vmatprep.mubr.bf16.mxu0 %v361
  %625 = vmatmul.mubr.bf16.gmra.mrb[0].mxu0 %v360
  %v626 = vpop.f32.mrb[0].mxu0
  %v627 = vadd.f32 0.0, %v626
  %v628 = vpop.f32.mrb[0].mxu0
  %v629 = vpop.f32.mrb[0].mxu0
  %v630 = vadd.f32 0.0, %v629
  %v631 = vpop.f32.mrb[0].mxu0
  %632 = vmatprep.mubr.bf16.mxu0 %v363
  %633 = vmatmul.mubr.bf16.gmra.mrb[0].mxu0 %v362
  %v634 = vpop.f32.mrb[0].mxu0
  %v635 = vadd.f32 0.0, %v634
  %v636 = vpop.f32.mrb[0].mxu0
  %v637 = vpop.f32.mrb[0].mxu0
  %v638 = vadd.f32 0.0, %v637
  %v639 = vpop.f32.mrb[0].mxu0
  %640 = vmatprep.mubr.bf16.mxu0 %v365
  %641 = vmatmul.mubr.bf16.gmra.mrb[0].mxu0 %v364
  %v642 = vpop.f32.mrb[0].mxu0
  %v643 = vadd.f32 0.0, %v642
  %v644 = vpop.f32.mrb[0].mxu0
  %v645 = vpop.f32.mrb[0].mxu0
  %v646 = vadd.f32 0.0, %v645
  %v647 = vpop.f32.mrb[0].mxu0
  %648 = vmatprep.mubr.bf16.mxu0 %v367
  %649 = vmatmul.mubr.bf16.gmra.mrb[0].mxu0 %v366
  %v650 = vpop.f32.mrb[0].mxu0
  %v651 = vadd.f32 0.0, %v650
  %v652 = vpop.f32.mrb[0].mxu0
  %v653 = vpop.f32.mrb[0].mxu0
  %v654 = vadd.f32 0.0, %v653
  %v655 = vpop.f32.mrb[0].mxu0
  %656 = vmatprep.mubr.bf16.mxu0 %v369
  %657 = vmatmul.mubr.bf16.gmra.mrb[0].mxu0 %v368
  %v658 = vpop.f32.mrb[0].mxu0
  %v659 = vadd.f32 0.0, %v658
  %v660 = vpop.f32.mrb[0].mxu0
  %v661 = vpop.f32.mrb[0].mxu0
  %v662 = vadd.f32 0.0, %v661
  %v663 = vpop.f32.mrb[0].mxu0
  %664 = vmatprep.mubr.bf16.mxu0 %v371
  %665 = vmatmul.mubr.bf16.gmra.mrb[0].mxu0 %v370
  %v666 = vpop.f32.mrb[0].mxu0
  %v667 = vadd.f32 0.0, %v666
  %v668 = vpop.f32.mrb[0].mxu0
  %v669 = vpop.f32.mrb[0].mxu0
  %v670 = vadd.f32 0.0, %v669
  %v671 = vpop.f32.mrb[0].mxu0
  %672 = vmatprep.mubr.bf16.mxu0 %v373
  %673 = vmatmul.mubr.bf16.gmra.mrb[0].mxu0 %v372
  %v674 = vpop.f32.mrb[0].mxu0
  %v675 = vadd.f32 0.0, %v674
  %v676 = vpop.f32.mrb[0].mxu0
  %v677 = vpop.f32.mrb[0].mxu0
  %v678 = vadd.f32 0.0, %v677
  %v679 = vpop.f32.mrb[0].mxu0
  %680 = vmatprep.mubr.bf16.mxu0 %v375
  %681 = vmatmul.mubr.bf16.gmra.mrb[0].mxu0 %v374
  %v682 = vpop.f32.mrb[0].mxu0
  %v683 = vadd.f32 0.0, %v682
  %v684 = vpop.f32.mrb[0].mxu0
  %v685 = vpop.f32.mrb[0].mxu0
  %v686 = vadd.f32 0.0, %v685
  %v687 = vpop.f32.mrb[0].mxu0
  %688 = vmatprep.mubr.bf16.mxu0 %v377
  %689 = vmatmul.mubr.bf16.gmra.mrb[0].mxu0 %v376
  %v690 = vpop.f32.mrb[0].mxu0
  %v691 = vadd.f32 0.0, %v690
  %v692 = vpop.f32.mrb[0].mxu0
  %v693 = vpop.f32.mrb[0].mxu0
  %v694 = vadd.f32 0.0, %v693
  %v695 = vpop.f32.mrb[0].mxu0
  %696 = vmatprep.mubr.bf16.mxu0 %v379
  %697 = vmatmul.mubr.bf16.gmra.mrb[0].mxu0 %v378
  %v698 = vpop.f32.mrb[0].mxu0
  %v699 = vadd.f32 0.0, %v698
  %v700 = vpop.f32.mrb[0].mxu0
  %v701 = vpop.f32.mrb[0].mxu0
  %v702 = vadd.f32 0.0, %v701
  %v703 = vpop.f32.mrb[0].mxu0
  %704 = vmatprep.mubr.bf16.mxu0 %v381
  %705 = vmatmul.mubr.bf16.gmra.mrb[0].mxu0 %v380
  %v706 = vpop.f32.mrb[0].mxu0
  %v707 = vadd.f32 0.0, %v706
  %v708 = vpop.f32.mrb[0].mxu0
  %v709 = vpop.f32.mrb[0].mxu0
  %v710 = vadd.f32 0.0, %v709
  %v711 = vpop.f32.mrb[0].mxu0
  %712 = vmatprep.mubr.bf16.mxu0 %v383
  %713 = vmatmul.mubr.bf16.gmra.mrb[0].mxu0 %v382
  %v714 = vpop.f32.mrb[0].mxu0
  %v715 = vadd.f32 0.0, %v714
  %v716 = vpop.f32.mrb[0].mxu0
  %v717 = vpop.f32.mrb[0].mxu0
  %v718 = vadd.f32 0.0, %v717
  %v719 = vpop.f32.mrb[0].mxu0
  %720 = vmatprep.mubr.bf16.mxu0 %v385
  %721 = vmatmul.mubr.bf16.gmra.mrb[0].mxu0 %v384
  %v722 = vpop.f32.mrb[0].mxu0
  %v723 = vadd.f32 0.0, %v722
  %v724 = vpop.f32.mrb[0].mxu0
  %v725 = vpop.f32.mrb[0].mxu0
  %v726 = vadd.f32 0.0, %v725
  %v727 = vpop.f32.mrb[0].mxu0
  %728 = vmatprep.mubr.bf16.mxu0 %v387
  %729 = vmatmul.mubr.bf16.gmra.mrb[0].mxu0 %v386
  %v730 = vpop.f32.mrb[0].mxu0
  %v731 = vadd.f32 0.0, %v730
  %v732 = vpop.f32.mrb[0].mxu0
  %v733 = vpop.f32.mrb[0].mxu0
  %v734 = vadd.f32 0.0, %v733
  %v735 = vpop.f32.mrb[0].mxu0
  %736 = vmatprep.mubr.bf16.mxu0 %v389
  %737 = vmatmul.mubr.bf16.gmra.mrb[0].mxu0 %v388
  %v738 = vpop.f32.mrb[0].mxu0
  %v739 = vadd.f32 0.0, %v738
  %v740 = vpop.f32.mrb[0].mxu0
  %v741 = vpop.f32.mrb[0].mxu0
  %v742 = vadd.f32 0.0, %v741
  %v743 = vpop.f32.mrb[0].mxu0
  %744 = vmatprep.mubr.bf16.mxu0 %v391
  %745 = vmatmul.mubr.bf16.gmra.mrb[0].mxu0 %v390
  %v746 = vpop.f32.mrb[0].mxu0
  %v747 = vadd.f32 0.0, %v746
  %v748 = vpop.f32.mrb[0].mxu0
  %v749 = vpop.f32.mrb[0].mxu0
  %v750 = vadd.f32 0.0, %v749
  %v751 = vpop.f32.mrb[0].mxu0
  %752 = vmatprep.mubr.bf16.mxu0 %v393
  %753 = vmatmul.mubr.bf16.gmra.mrb[0].mxu0 %v392
  %v754 = vpop.f32.mrb[0].mxu0
  %v755 = vadd.f32 0.0, %v754
  %v756 = vpop.f32.mrb[0].mxu0
  %v757 = vpop.f32.mrb[0].mxu0
  %v758 = vadd.f32 0.0, %v757
  %v759 = vpop.f32.mrb[0].mxu0
  %760 = vmatprep.mubr.bf16.mxu0 %v395
  %761 = vmatmul.mubr.bf16.gmra.mrb[0].mxu0 %v394
  %v762 = vpop.f32.mrb[0].mxu0
  %v763 = vadd.f32 0.0, %v762
  %v764 = vpop.f32.mrb[0].mxu0
  %v765 = vpop.f32.mrb[0].mxu0
  %v766 = vadd.f32 0.0, %v765
  %v767 = vpop.f32.mrb[0].mxu0
  %768 = vmatprep.mubr.bf16.mxu0 %v397
  %769 = vmatmul.mubr.bf16.gmra.mrb[0].mxu0 %v396
  %v770 = vpop.f32.mrb[0].mxu0
  %v771 = vadd.f32 0.0, %v770
  %v772 = vpop.f32.mrb[0].mxu0
  %v773 = vpop.f32.mrb[0].mxu0
  %v774 = vpop.f32.mrb[0].mxu0
  %775 = vdwg.mxu0
  %v776 = vadd.f32 %v71, %v579
  %v777 = vadd.f32 %v72, %v582
  %v778 = vadd.f32 %v73, %v587
  %v779 = vadd.f32 %v74, %v590
  %v780 = vadd.f32 %v75, %v595
  %v781 = vadd.f32 %v76, %v598
  %v782 = vadd.f32 %v77, %v603
  %v783 = vadd.f32 %v78, %v606
  %v784 = vadd.f32 %v79, %v611
  %v785 = vadd.f32 %v80, %v614
  %v786 = vadd.f32 %v81, %v619
  %v787 = vadd.f32 %v82, %v622
  %v788 = vadd.f32 %v83, %v627
  %v789 = vadd.f32 %v84, %v630
  %v790 = vadd.f32 %v85, %v635
  %v791 = vadd.f32 %v86, %v638
  %v792 = vadd.f32 %v87, %v643
  %v793 = vadd.f32 %v88, %v646
  %v794 = vadd.f32 %v89, %v651
  %v795 = vadd.f32 %v90, %v654
  %v796 = vadd.f32 %v91, %v659
  %v797 = vadd.f32 %v92, %v662
  %v798 = vadd.f32 %v93, %v667
  %v799 = vadd.f32 %v94, %v670
  %v800 = vadd.f32 %v95, %v675
  %v801 = vadd.f32 %v96, %v678
  %v802 = vadd.f32 %v97, %v683
  %v803 = vadd.f32 %v98, %v686
  %v804 = vadd.f32 %v99, %v691
  %v805 = vadd.f32 %v100, %v694
  %v806 = vadd.f32 %v101, %v699
  %v807 = vadd.f32 %v102, %v702
  %v808 = vadd.f32 %v103, %v707
  %v809 = vadd.f32 %v104, %v710
  %v810 = vadd.f32 %v105, %v715
  %v811 = vadd.f32 %v106, %v718
  %v812 = vadd.f32 %v107, %v723
  %v813 = vadd.f32 %v108, %v726
  %v814 = vadd.f32 %v109, %v731
  %v815 = vadd.f32 %v110, %v734
  %v816 = vadd.f32 %v111, %v739
  %v817 = vadd.f32 %v112, %v742
  %v818 = vadd.f32 %v113, %v747
  %v819 = vadd.f32 %v114, %v750
  %v820 = vadd.f32 %v115, %v755
  %v821 = vadd.f32 %v116, %v758
  %v822 = vadd.f32 %v117, %v763
  %v823 = vadd.f32 %v118, %v766
  %v824 = vadd.f32 %v119, %v771
  %825 = vst [vmem:[#allocation2] sm:$0xff] %v776
  %826 = vst [vmem:[#allocation2 + $0x8] sm:$0xff] %v777
  %827 = vst [vmem:[#allocation2 + $0x10] sm:$0xff] %v778
  %828 = vst [vmem:[#allocation2 + $0x18] sm:$0xff] %v779
  %829 = vst [vmem:[#allocation2 + $0x20] sm:$0xff] %v780
  %830 = vst [vmem:[#allocation2 + $0x28] sm:$0xff] %v781
  %831 = vst [vmem:[#allocation2 + $0x30] sm:$0xff] %v782
  %832 = vst [vmem:[#allocation2 + $0x38] sm:$0xff] %v783
  %833 = vst [vmem:[#allocation2 + $0x40] sm:$0xff] %v784
  %834 = vst [vmem:[#allocation2 + $0x48] sm:$0xff] %v785
  %835 = vst [vmem:[#allocation2 + $0x50] sm:$0xff] %v786
  %836 = vst [vmem:[#allocation2 + $0x58] sm:$0xff] %v787
  %837 = vst [vmem:[#allocation2 + $0x60] sm:$0xff] %v788
  %838 = vst [vmem:[#allocation2 + $0x68] sm:$0xff] %v789
  %839 = vst [vmem:[#allocation2 + $0x70] sm:$0xff] %v790
  %840 = vst [vmem:[#allocation2 + $0x78] sm:$0xff] %v791
  %841 = vst [vmem:[#allocation2 + $0x80] sm:$0xff] %v792
  %842 = vst [vmem:[#allocation2 + $0x88] sm:$0xff] %v793
  %843 = vst [vmem:[#allocation2 + $0x90] sm:$0xff] %v794
  %844 = vst [vmem:[#allocation2 + $0x98] sm:$0xff] %v795
  %845 = vst [vmem:[#allocation2 + $0xa0] sm:$0xff] %v796
  %846 = vst [vmem:[#allocation2 + $0xa8] sm:$0xff] %v797
  %847 = vst [vmem:[#allocation2 + $0xb0] sm:$0xff] %v798
  %848 = vst [vmem:[#allocation2 + $0xb8] sm:$0xff] %v799
  %849 = vst [vmem:[#allocation2 + $0xc0] sm:$0xff] %v800
  %850 = vst [vmem:[#allocation2 + $0xc8] sm:$0xff] %v801
  %851 = vst [vmem:[#allocation2 + $0xd0] sm:$0xff] %v802
  %852 = vst [vmem:[#allocation2 + $0xd8] sm:$0xff] %v803
  %853 = vst [vmem:[#allocation2 + $0xe0] sm:$0xff] %v804
  %854 = vst [vmem:[#allocation2 + $0xe8] sm:$0xff] %v805
  %855 = vst [vmem:[#allocation2 + $0xf0] sm:$0xff] %v806
  %856 = vst [vmem:[#allocation2 + $0xf8] sm:$0xff] %v807
  %857 = vst [vmem:[#allocation2 + $0x100] sm:$0xff] %v808
  %858 = vst [vmem:[#allocation2 + $0x108] sm:$0xff] %v809
  %859 = vst [vmem:[#allocation2 + $0x110] sm:$0xff] %v810
  %860 = vst [vmem:[#allocation2 + $0x118] sm:$0xff] %v811
  %861 = vst [vmem:[#allocation2 + $0x120] sm:$0xff] %v812
  %862 = vst [vmem:[#allocation2 + $0x128] sm:$0xff] %v813
  %863 = vst [vmem:[#allocation2 + $0x130] sm:$0xff] %v814
  %864 = vst [vmem:[#allocation2 + $0x138] sm:$0xff] %v815
  %865 = vst [vmem:[#allocation2 + $0x140] sm:$0xff] %v816
  %866 = vst [vmem:[#allocation2 + $0x148] sm:$0xff] %v817
  %867 = vst [vmem:[#allocation2 + $0x150] sm:$0xff] %v818
  %868 = vst [vmem:[#allocation2 + $0x158] sm:$0xff] %v819
  %869 = vst [vmem:[#allocation2 + $0x160] sm:$0xff] %v820
  %870 = vst [vmem:[#allocation2 + $0x168] sm:$0xff] %v821
  %871 = vst [vmem:[#allocation2 + $0x170] sm:$0xff] %v822
  %872 = vst [vmem:[#allocation2 + $0x178] sm:$0xff] %v823
  %873 = vst [vmem:[#allocation2 + $0x180] sm:$0xff] %v824
  // Predicated region
  $region22: #{_lambda_.18} parent=0 // pred_check
    %p874 = pneg %p18
  $region23: #{_lambda_.18} parent=0 // pred_check_branch
    %876 = sbr.rel (%p874) target = $region25
  $region24: #{_lambda_.18} parent=0 // pred_region
    %v877 = vld [vmem:[#allocation2] sm:$0xff]
    %v878 = vld [vmem:[#allocation2 + $0x8] sm:$0xff]
    %v879 = vld [vmem:[#allocation2 + $0x10] sm:$0xff]
    %v880 = vld [vmem:[#allocation2 + $0x18] sm:$0xff]
    %v881 = vld [vmem:[#allocation2 + $0x20] sm:$0xff]
    %v882 = vld [vmem:[#allocation2 + $0x28] sm:$0xff]
    %v883 = vld [vmem:[#allocation2 + $0x30] sm:$0xff]
    %v884 = vld [vmem:[#allocation2 + $0x38] sm:$0xff]
    %v885 = vld [vmem:[#allocation2 + $0x40] sm:$0xff]
    %v886 = vld [vmem:[#allocation2 + $0x48] sm:$0xff]
    %v887 = vld [vmem:[#allocation2 + $0x50] sm:$0xff]
    %v888 = vld [vmem:[#allocation2 + $0x58] sm:$0xff]
    %v889 = vld [vmem:[#allocation2 + $0x60] sm:$0xff]
    %v890 = vld [vmem:[#allocation2 + $0x68] sm:$0xff]
    %v891 = vld [vmem:[#allocation2 + $0x70] sm:$0xff]
    %v892 = vld [vmem:[#allocation2 + $0x78] sm:$0xff]
    %v893 = vld [vmem:[#allocation2 + $0x80] sm:$0xff]
    %v894 = vld [vmem:[#allocation2 + $0x88] sm:$0xff]
    %v895 = vld [vmem:[#allocation2 + $0x90] sm:$0xff]
    %v896 = vld [vmem:[#allocation2 + $0x98] sm:$0xff]
    %v897 = vld [vmem:[#allocation2 + $0xa0] sm:$0xff]
    %v898 = vld [vmem:[#allocation2 + $0xa8] sm:$0xff]
    %v899 = vld [vmem:[#allocation2 + $0xb0] sm:$0xff]
    %v900 = vld [vmem:[#allocation2 + $0xb8] sm:$0xff]
    %v901 = vld [vmem:[#allocation2 + $0xc0] sm:$0xff]
    %v902 = vld [vmem:[#allocation2 + $0xc8] sm:$0xff]
    %v903 = vld [vmem:[#allocation2 + $0xd0] sm:$0xff]
    %v904 = vld [vmem:[#allocation2 + $0xd8] sm:$0xff]
    %v905 = vld [vmem:[#allocation2 + $0xe0] sm:$0xff]
    %v906 = vld [vmem:[#allocation2 + $0xe8] sm:$0xff]
    %v907 = vld [vmem:[#allocation2 + $0xf0] sm:$0xff]
    %v908 = vld [vmem:[#allocation2 + $0xf8] sm:$0xff]
    %v909 = vld [vmem:[#allocation2 + $0x100] sm:$0xff]
    %v910 = vld [vmem:[#allocation2 + $0x108] sm:$0xff]
    %v911 = vld [vmem:[#allocation2 + $0x110] sm:$0xff]
    %v912 = vld [vmem:[#allocation2 + $0x118] sm:$0xff]
    %v913 = vld [vmem:[#allocation2 + $0x120] sm:$0xff]
    %v914 = vld [vmem:[#allocation2 + $0x128] sm:$0xff]
    %v915 = vld [vmem:[#allocation2 + $0x130] sm:$0xff]
    %v916 = vld [vmem:[#allocation2 + $0x138] sm:$0xff]
    %v917 = vld [vmem:[#allocation2 + $0x140] sm:$0xff]
    %v918 = vld [vmem:[#allocation2 + $0x148] sm:$0xff]
    %v919 = vld [vmem:[#allocation2 + $0x150] sm:$0xff]
    %v920 = vld [vmem:[#allocation2 + $0x158] sm:$0xff]
    %v921 = vld [vmem:[#allocation2 + $0x160] sm:$0xff]
    %v922 = vld [vmem:[#allocation2 + $0x168] sm:$0xff]
    %v923 = vld [vmem:[#allocation2 + $0x170] sm:$0xff]
    %v924 = vld [vmem:[#allocation2 + $0x178] sm:$0xff]
    %v925 = vld [vmem:[#allocation2 + $0x180] sm:$0xff]
    %v926 = vld [vmem:[%s2] sm:$0x1]
    %v928 = vlaneseq
    %v929 = vshrl.u32 %v928, 7
    %v930 = vsub.s32 0, %v929
    %v931 = vrot.slane %v926, %v930
    %v933 = vmul.f32 %v877, %v931
    %v934 = vmul.f32 %v878, %v931
    %v935 = vmul.f32 %v879, %v931
    %v936 = vmul.f32 %v880, %v931
    %v937 = vmul.f32 %v881, %v931
    %v938 = vmul.f32 %v882, %v931
    %v939 = vmul.f32 %v883, %v931
    %v940 = vmul.f32 %v884, %v931
    %v941 = vmul.f32 %v885, %v931
    %v942 = vmul.f32 %v886, %v931
    %v943 = vmul.f32 %v887, %v931
    %v944 = vmul.f32 %v888, %v931
    %v945 = vmul.f32 %v889, %v931
    %v946 = vmul.f32 %v890, %v931
    %v947 = vmul.f32 %v891, %v931
    %v948 = vmul.f32 %v892, %v931
    %v949 = vmul.f32 %v893, %v931
    %v950 = vmul.f32 %v894, %v931
    %v951 = vmul.f32 %v895, %v931
    %v952 = vmul.f32 %v896, %v931
    %v953 = vmul.f32 %v897, %v931
    %v954 = vmul.f32 %v898, %v931
    %v955 = vmul.f32 %v899, %v931
    %v956 = vmul.f32 %v900, %v931
    %v957 = vmul.f32 %v901, %v931
    %v958 = vmul.f32 %v902, %v931
    %v959 = vmul.f32 %v903, %v931
    %v960 = vmul.f32 %v904, %v931
    %v961 = vmul.f32 %v905, %v931
    %v962 = vmul.f32 %v906, %v931
    %v963 = vmul.f32 %v907, %v931
    %v964 = vmul.f32 %v908, %v931
    %v965 = vmul.f32 %v909, %v931
    %v966 = vmul.f32 %v910, %v931
    %v967 = vmul.f32 %v911, %v931
    %v968 = vmul.f32 %v912, %v931
    %v969 = vmul.f32 %v913, %v931
    %v970 = vmul.f32 %v914, %v931
    %v971 = vmul.f32 %v915, %v931
    %v972 = vmul.f32 %v916, %v931
    %v973 = vmul.f32 %v917, %v931
    %v974 = vmul.f32 %v918, %v931
    %v975 = vmul.f32 %v919, %v931
    %v976 = vmul.f32 %v920, %v931
    %v977 = vmul.f32 %v921, %v931
    %v978 = vmul.f32 %v922, %v931
    %v979 = vmul.f32 %v923, %v931
    %v980 = vmul.f32 %v924, %v931
    %v981 = vmul.f32 %v925, %v931
    %v982 = vld [vmem:[%s3] sm:$0x1]
    %v984 = vlaneseq
    %v985 = vshrl.u32 %v984, 7
    %v986 = vsub.s32 0, %v985
    %v987 = vrot.slane %v982, %v986
    %v989 = vadd.f32 %v933, %v987
    %v990 = vadd.f32 %v934, %v987
    %v991 = vadd.f32 %v935, %v987
    %v992 = vadd.f32 %v936, %v987
    %v993 = vadd.f32 %v937, %v987
    %v994 = vadd.f32 %v938, %v987
    %v995 = vadd.f32 %v939, %v987
    %v996 = vadd.f32 %v940, %v987
    %v997 = vadd.f32 %v941, %v987
    %v998 = vadd.f32 %v942, %v987
    %v999 = vadd.f32 %v943, %v987
    %v1000 = vadd.f32 %v944, %v987
    %v1001 = vadd.f32 %v945, %v987
    %v1002 = vadd.f32 %v946, %v987
    %v1003 = vadd.f32 %v947, %v987
    %v1004 = vadd.f32 %v948, %v987
    %v1005 = vadd.f32 %v949, %v987
    %v1006 = vadd.f32 %v950, %v987
    %v1007 = vadd.f32 %v951, %v987
    %v1008 = vadd.f32 %v952, %v987
    %v1009 = vadd.f32 %v953, %v987
    %v1010 = vadd.f32 %v954, %v987
    %v1011 = vadd.f32 %v955, %v987
    %v1012 = vadd.f32 %v956, %v987
    %v1013 = vadd.f32 %v957, %v987
    %v1014 = vadd.f32 %v958, %v987
    %v1015 = vadd.f32 %v959, %v987
    %v1016 = vadd.f32 %v960, %v987
    %v1017 = vadd.f32 %v961, %v987
    %v1018 = vadd.f32 %v962, %v987
    %v1019 = vadd.f32 %v963, %v987
    %v1020 = vadd.f32 %v964, %v987
    %v1021 = vadd.f32 %v965, %v987
    %v1022 = vadd.f32 %v966, %v987
    %v1023 = vadd.f32 %v967, %v987
    %v1024 = vadd.f32 %v968, %v987
    %v1025 = vadd.f32 %v969, %v987
    %v1026 = vadd.f32 %v970, %v987
    %v1027 = vadd.f32 %v971, %v987
    %v1028 = vadd.f32 %v972, %v987
    %v1029 = vadd.f32 %v973, %v987
    %v1030 = vadd.f32 %v974, %v987
    %v1031 = vadd.f32 %v975, %v987
    %v1032 = vadd.f32 %v976, %v987
    %v1033 = vadd.f32 %v977, %v987
    %v1034 = vadd.f32 %v978, %v987
    %v1035 = vadd.f32 %v979, %v987
    %v1036 = vadd.f32 %v980, %v987
    %v1037 = vadd.f32 %v981, %v987
    %v1038 = vmax.f32 %v989, 0.0
    %v1039 = vmax.f32 %v990, 0.0
    %v1040 = vmax.f32 %v991, 0.0
    %v1041 = vmax.f32 %v992, 0.0
    %v1042 = vmax.f32 %v993, 0.0
    %v1043 = vmax.f32 %v994, 0.0
    %v1044 = vmax.f32 %v995, 0.0
    %v1045 = vmax.f32 %v996, 0.0
    %v1046 = vmax.f32 %v997, 0.0
    %v1047 = vmax.f32 %v998, 0.0
    %v1048 = vmax.f32 %v999, 0.0
    %v1049 = vmax.f32 %v1000, 0.0
    %v1050 = vmax.f32 %v1001, 0.0
    %v1051 = vmax.f32 %v1002, 0.0
    %v1052 = vmax.f32 %v1003, 0.0
    %v1053 = vmax.f32 %v1004, 0.0
    %v1054 = vmax.f32 %v1005, 0.0
    %v1055 = vmax.f32 %v1006, 0.0
    %v1056 = vmax.f32 %v1007, 0.0
    %v1057 = vmax.f32 %v1008, 0.0
    %v1058 = vmax.f32 %v1009, 0.0
    %v1059 = vmax.f32 %v1010, 0.0
    %v1060 = vmax.f32 %v1011, 0.0
    %v1061 = vmax.f32 %v1012, 0.0
    %v1062 = vmax.f32 %v1013, 0.0
    %v1063 = vmax.f32 %v1014, 0.0
    %v1064 = vmax.f32 %v1015, 0.0
    %v1065 = vmax.f32 %v1016, 0.0
    %v1066 = vmax.f32 %v1017, 0.0
    %v1067 = vmax.f32 %v1018, 0.0
    %v1068 = vmax.f32 %v1019, 0.0
    %v1069 = vmax.f32 %v1020, 0.0
    %v1070 = vmax.f32 %v1021, 0.0
    %v1071 = vmax.f32 %v1022, 0.0
    %v1072 = vmax.f32 %v1023, 0.0
    %v1073 = vmax.f32 %v1024, 0.0
    %v1074 = vmax.f32 %v1025, 0.0
    %v1075 = vmax.f32 %v1026, 0.0
    %v1076 = vmax.f32 %v1027, 0.0
    %v1077 = vmax.f32 %v1028, 0.0
    %v1078 = vmax.f32 %v1029, 0.0
    %v1079 = vmax.f32 %v1030, 0.0
    %v1080 = vmax.f32 %v1031, 0.0
    %v1081 = vmax.f32 %v1032, 0.0
    %v1082 = vmax.f32 %v1033, 0.0
    %v1083 = vmax.f32 %v1034, 0.0
    %v1084 = vmax.f32 %v1035, 0.0
    %v1085 = vmax.f32 %v1036, 0.0
    %v1086 = vmax.f32 %v1037, 0.0
    %1087 = vst [vmem:[%s4] sm:$0xff] %v1038
    %1088 = vst [vmem:[%s4 + $0x8] sm:$0xff] %v1039
    %1089 = vst [vmem:[%s4 + $0x10] sm:$0xff] %v1040
    %1090 = vst [vmem:[%s4 + $0x18] sm:$0xff] %v1041
    %1091 = vst [vmem:[%s4 + $0x20] sm:$0xff] %v1042
    %1092 = vst [vmem:[%s4 + $0x28] sm:$0xff] %v1043
    %1093 = vst [vmem:[%s4 + $0x30] sm:$0xff] %v1044
    %1094 = vst [vmem:[%s4 + $0x38] sm:$0xff] %v1045
    %1095 = vst [vmem:[%s4 + $0x40] sm:$0xff] %v1046
    %1096 = vst [vmem:[%s4 + $0x48] sm:$0xff] %v1047
    %1097 = vst [vmem:[%s4 + $0x50] sm:$0xff] %v1048
    %1098 = vst [vmem:[%s4 + $0x58] sm:$0xff] %v1049
    %1099 = vst [vmem:[%s4 + $0x60] sm:$0xff] %v1050
    %1100 = vst [vmem:[%s4 + $0x68] sm:$0xff] %v1051
    %1101 = vst [vmem:[%s4 + $0x70] sm:$0xff] %v1052
    %1102 = vst [vmem:[%s4 + $0x78] sm:$0xff] %v1053
    %1103 = vst [vmem:[%s4 + $0x80] sm:$0xff] %v1054
    %1104 = vst [vmem:[%s4 + $0x88] sm:$0xff] %v1055
    %1105 = vst [vmem:[%s4 + $0x90] sm:$0xff] %v1056
    %1106 = vst [vmem:[%s4 + $0x98] sm:$0xff] %v1057
    %1107 = vst [vmem:[%s4 + $0xa0] sm:$0xff] %v1058
    %1108 = vst [vmem:[%s4 + $0xa8] sm:$0xff] %v1059
    %1109 = vst [vmem:[%s4 + $0xb0] sm:$0xff] %v1060
    %1110 = vst [vmem:[%s4 + $0xb8] sm:$0xff] %v1061
    %1111 = vst [vmem:[%s4 + $0xc0] sm:$0xff] %v1062
    %1112 = vst [vmem:[%s4 + $0xc8] sm:$0xff] %v1063
    %1113 = vst [vmem:[%s4 + $0xd0] sm:$0xff] %v1064
    %1114 = vst [vmem:[%s4 + $0xd8] sm:$0xff] %v1065
    %1115 = vst [vmem:[%s4 + $0xe0] sm:$0xff] %v1066
    %1116 = vst [vmem:[%s4 + $0xe8] sm:$0xff] %v1067
    %1117 = vst [vmem:[%s4 + $0xf0] sm:$0xff] %v1068
    %1118 = vst [vmem:[%s4 + $0xf8] sm:$0xff] %v1069
    %1119 = vst [vmem:[%s4 + $0x100] sm:$0xff] %v1070
    %1120 = vst [vmem:[%s4 + $0x108] sm:$0xff] %v1071
    %1121 = vst [vmem:[%s4 + $0x110] sm:$0xff] %v1072
    %1122 = vst [vmem:[%s4 + $0x118] sm:$0xff] %v1073
    %1123 = vst [vmem:[%s4 + $0x120] sm:$0xff] %v1074
    %1124 = vst [vmem:[%s4 + $0x128] sm:$0xff] %v1075
    %1125 = vst [vmem:[%s4 + $0x130] sm:$0xff] %v1076
    %1126 = vst [vmem:[%s4 + $0x138] sm:$0xff] %v1077
    %1127 = vst [vmem:[%s4 + $0x140] sm:$0xff] %v1078
    %1128 = vst [vmem:[%s4 + $0x148] sm:$0xff] %v1079
    %1129 = vst [vmem:[%s4 + $0x150] sm:$0xff] %v1080
    %1130 = vst [vmem:[%s4 + $0x158] sm:$0xff] %v1081
    %1131 = vst [vmem:[%s4 + $0x160] sm:$0xff] %v1082
    %1132 = vst [vmem:[%s4 + $0x168] sm:$0xff] %v1083
    %1133 = vst [vmem:[%s4 + $0x170] sm:$0xff] %v1084
    %1134 = vst [vmem:[%s4 + $0x178] sm:$0xff] %v1085
    %1135 = vst [vmem:[%s4 + $0x180] sm:$0xff] %v1086
  $region25: #{_lambda_.18} parent=0 // pred_fallthru
    _
  // Predicated region
  $region26: #{_lambda_.18} parent=0 // pred_check
    _
  $region27: #{_lambda_.18} parent=0 // pred_check_branch
    %1137 = sbr.rel (0) target = $region29
  $region28: #{_lambda_.18} parent=0 // pred_region
    _
  $region29: #{_lambda_.18} parent=0 // pred_fallthru
    _
  // Predicated region
  $region30: #{_lambda_.18} parent=0 // pred_check
    _
  $region31: #{_lambda_.18} parent=0 // pred_check_branch
    %1139 = sbr.rel (0) target = $region33
  $region32: #{_lambda_.18} parent=0 // pred_region
    _
  $region33: #{_lambda_.18} parent=0 // pred_fallthru
    _

// kernel: _lambda_.19
$region0: #{_lambda_.19}
  #allocation0 [shape = 'u32[]', space=smem, size = 0x4, offset = 0x4, fixed_abs, tag = 'smem constant byte address 0x4 - core index']
  #allocation1 [shape = 'u32[144,128]{1,0:T(1,128)}', space=vmem, size = 0x12000, scoped, tag = 'internal scratch']
  %s0 = inlined_call_operand.vmem [shape: f32[72,64], index: 0, kind: input, shape index: {}]
  %s1 = inlined_call_operand.vmem [shape: f32[72,64], index: 1, kind: input, shape index: {}]
  %s2 = inlined_call_operand.vmem [shape: f32[72,64], index: 2, kind: input, shape index: {}]
  %s3 = inlined_call_operand.vmem [shape: f32[72,64], index: 3, kind: input, shape index: {}]
  %s4 = inlined_call_operand.vmem [shape: f32[72,64], index: 4, kind: input, shape index: {}]
  %s5 = inlined_call_operand.vmem [shape: f32[72,64], index: 5, kind: input, shape index: {}]
  %s6 = inlined_call_operand.vmem [shape: f32[72,64], index: 6, kind: input, shape index: {}]
  %s7 = inlined_call_operand.vmem [shape: f32[72,64], index: 7, kind: input, shape index: {}]
  %s8 = inlined_call_operand.vmem [shape: f32[72,64], index: 8, kind: input, shape index: {}]
  %s9 = inlined_call_operand.vmem [shape: f32[72,64], index: 9, kind: output, shape index: {}]
  %s10 = sld [smem:[#allocation0]]
  $region46: #{_lambda_.19} parent=0
    _
  %s12 = ssub.s32 1, %s10
  %s13 = scalar_select 0, %s12, %s10
  // Predicated region
  $region2: #{_lambda_.19} parent=0 // pred_check
    _
  $region3: #{_lambda_.19} parent=0 // pred_check_branch
    %15 = sbr.rel (0) target = $region5
  $region4: #{_lambda_.19} parent=0 // pred_region
    _
  $region5: #{_lambda_.19} parent=0 // pred_fallthru
    _
  // Predicated region
  $region6: #{_lambda_.19} parent=0 // pred_check
    _
  $region7: #{_lambda_.19} parent=0 // pred_check_branch
    %17 = sbr.rel (0) target = $region9
  $region8: #{_lambda_.19} parent=0 // pred_region
    _
  $region9: #{_lambda_.19} parent=0 // pred_fallthru
    _
  // Predicated region
  $region10: #{_lambda_.19} parent=0 // pred_check
    _
  $region11: #{_lambda_.19} parent=0 // pred_check_branch
    %19 = sbr.rel (0) target = $region13
  $region12: #{_lambda_.19} parent=0 // pred_region
    _
  $region13: #{_lambda_.19} parent=0 // pred_fallthru
    _
  // Predicated region
  $region14: #{_lambda_.19} parent=0 // pred_check
    _
  $region15: #{_lambda_.19} parent=0 // pred_check_branch
    %21 = sbr.rel (0) target = $region17
  $region16: #{_lambda_.19} parent=0 // pred_region
    _
  $region17: #{_lambda_.19} parent=0 // pred_fallthru
    _
  // Predicated region
  $region18: #{_lambda_.19} parent=0 // pred_check
    _
  $region19: #{_lambda_.19} parent=0 // pred_check_branch
    %23 = sbr.rel (0) target = $region21
  $region20: #{_lambda_.19} parent=0 // pred_region
    _
  $region21: #{_lambda_.19} parent=0 // pred_fallthru
    _
  // Predicated region
  $region22: #{_lambda_.19} parent=0 // pred_check
    _
  $region23: #{_lambda_.19} parent=0 // pred_check_branch
    %25 = sbr.rel (0) target = $region25
  $region24: #{_lambda_.19} parent=0 // pred_region
    _
  $region25: #{_lambda_.19} parent=0 // pred_fallthru
    _
  // Predicated region
  $region26: #{_lambda_.19} parent=0 // pred_check
    _
  $region27: #{_lambda_.19} parent=0 // pred_check_branch
    %27 = sbr.rel (0) target = $region29
  $region28: #{_lambda_.19} parent=0 // pred_region
    _
  $region29: #{_lambda_.19} parent=0 // pred_fallthru
    _
  // Predicated region
  $region30: #{_lambda_.19} parent=0 // pred_check
    _
  $region31: #{_lambda_.19} parent=0 // pred_check_branch
    %29 = sbr.rel (0) target = $region33
  $region32: #{_lambda_.19} parent=0 // pred_region
    _
  $region33: #{_lambda_.19} parent=0 // pred_fallthru
    _
  // Predicated region
  $region34: #{_lambda_.19} parent=0 // pred_check
    _
  $region35: #{_lambda_.19} parent=0 // pred_check_branch
    %31 = sbr.rel (0) target = $region37
  $region36: #{_lambda_.19} parent=0 // pred_region
    _
  $region37: #{_lambda_.19} parent=0 // pred_fallthru
    _
  %v32 = vld [vmem:[%s0] sm:$0xff]
  %v33 = vld [vmem:[%s0 + $0x8] sm:$0xff]
  %v34 = vld [vmem:[%s0 + $0x10] sm:$0xff]
  %v35 = vld [vmem:[%s0 + $0x18] sm:$0xff]
  %v36 = vld [vmem:[%s0 + $0x20] sm:$0xff]
  %v37 = vld [vmem:[%s0 + $0x28] sm:$0xff]
  %v38 = vld [vmem:[%s0 + $0x30] sm:$0xff]
  %v39 = vld [vmem:[%s0 + $0x38] sm:$0xff]
  %v40 = vld [vmem:[%s0 + $0x40] sm:$0xff]
  %v41 = vld [vmem:[%s1] sm:$0xff]
  %v42 = vld [vmem:[%s1 + $0x8] sm:$0xff]
  %v43 = vld [vmem:[%s1 + $0x10] sm:$0xff]
  %v44 = vld [vmem:[%s1 + $0x18] sm:$0xff]
  %v45 = vld [vmem:[%s1 + $0x20] sm:$0xff]
  %v46 = vld [vmem:[%s1 + $0x28] sm:$0xff]
  %v47 = vld [vmem:[%s1 + $0x30] sm:$0xff]
  %v48 = vld [vmem:[%s1 + $0x38] sm:$0xff]
  %v49 = vld [vmem:[%s1 + $0x40] sm:$0xff]
  %v50 = vmax.f32 %v32, %v41
  %v51 = vmax.f32 %v33, %v42
  %v52 = vmax.f32 %v34, %v43
  %v53 = vmax.f32 %v35, %v44
  %v54 = vmax.f32 %v36, %v45
  %v55 = vmax.f32 %v37, %v46
  %v56 = vmax.f32 %v38, %v47
  %v57 = vmax.f32 %v39, %v48
  %v58 = vmax.f32 %v40, %v49
  %v59 = vld [vmem:[%s2] sm:$0xff]
  %v60 = vld [vmem:[%s2 + $0x8] sm:$0xff]
  %v61 = vld [vmem:[%s2 + $0x10] sm:$0xff]
  %v62 = vld [vmem:[%s2 + $0x18] sm:$0xff]
  %v63 = vld [vmem:[%s2 + $0x20] sm:$0xff]
  %v64 = vld [vmem:[%s2 + $0x28] sm:$0xff]
  %v65 = vld [vmem:[%s2 + $0x30] sm:$0xff]
  %v66 = vld [vmem:[%s2 + $0x38] sm:$0xff]
  %v67 = vld [vmem:[%s2 + $0x40] sm:$0xff]
  %v68 = vmax.f32 %v50, %v59
  %v69 = vmax.f32 %v51, %v60
  %v70 = vmax.f32 %v52, %v61
  %v71 = vmax.f32 %v53, %v62
  %v72 = vmax.f32 %v54, %v63
  %v73 = vmax.f32 %v55, %v64
  %v74 = vmax.f32 %v56, %v65
  %v75 = vmax.f32 %v57, %v66
  %v76 = vmax.f32 %v58, %v67
  %v77 = vld [vmem:[%s3] sm:$0xff]
  %v78 = vld [vmem:[%s3 + $0x8] sm:$0xff]
  %v79 = vld [vmem:[%s3 + $0x10] sm:$0xff]
  %v80 = vld [vmem:[%s3 + $0x18] sm:$0xff]
  %v81 = vld [vmem:[%s3 + $0x20] sm:$0xff]
  %v82 = vld [vmem:[%s3 + $0x28] sm:$0xff]
  %v83 = vld [vmem:[%s3 + $0x30] sm:$0xff]
  %v84 = vld [vmem:[%s3 + $0x38] sm:$0xff]
  %v85 = vld [vmem:[%s3 + $0x40] sm:$0xff]
  %v86 = vmax.f32 %v68, %v77
  %v87 = vmax.f32 %v69, %v78
  %v88 = vmax.f32 %v70, %v79
  %v89 = vmax.f32 %v71, %v80
  %v90 = vmax.f32 %v72, %v81
  %v91 = vmax.f32 %v73, %v82
  %v92 = vmax.f32 %v74, %v83
  %v93 = vmax.f32 %v75, %v84
  %v94 = vmax.f32 %v76, %v85
  %v95 = vld [vmem:[%s4] sm:$0xff]
  %v96 = vld [vmem:[%s4 + $0x8] sm:$0xff]
  %v97 = vld [vmem:[%s4 + $0x10] sm:$0xff]
  %v98 = vld [vmem:[%s4 + $0x18] sm:$0xff]
  %v99 = vld [vmem:[%s4 + $0x20] sm:$0xff]
  %v100 = vld [vmem:[%s4 + $0x28] sm:$0xff]
  %v101 = vld [vmem:[%s4 + $0x30] sm:$0xff]
  %v102 = vld [vmem:[%s4 + $0x38] sm:$0xff]
  %v103 = vld [vmem:[%s4 + $0x40] sm:$0xff]
  %v104 = vmax.f32 %v86, %v95
  %v105 = vmax.f32 %v87, %v96
  %v106 = vmax.f32 %v88, %v97
  %v107 = vmax.f32 %v89, %v98
  %v108 = vmax.f32 %v90, %v99
  %v109 = vmax.f32 %v91, %v100
  %v110 = vmax.f32 %v92, %v101
  %v111 = vmax.f32 %v93, %v102
  %v112 = vmax.f32 %v94, %v103
  %v113 = vld [vmem:[%s5] sm:$0xff]
  %v114 = vld [vmem:[%s5 + $0x8] sm:$0xff]
  %v115 = vld [vmem:[%s5 + $0x10] sm:$0xff]
  %v116 = vld [vmem:[%s5 + $0x18] sm:$0xff]
  %v117 = vld [vmem:[%s5 + $0x20] sm:$0xff]
  %v118 = vld [vmem:[%s5 + $0x28] sm:$0xff]
  %v119 = vld [vmem:[%s5 + $0x30] sm:$0xff]
  %v120 = vld [vmem:[%s5 + $0x38] sm:$0xff]
  %v121 = vld [vmem:[%s5 + $0x40] sm:$0xff]
  %v122 = vmax.f32 %v104, %v113
  %v123 = vmax.f32 %v105, %v114
  %v124 = vmax.f32 %v106, %v115
  %v125 = vmax.f32 %v107, %v116
  %v126 = vmax.f32 %v108, %v117
  %v127 = vmax.f32 %v109, %v118
  %v128 = vmax.f32 %v110, %v119
  %v129 = vmax.f32 %v111, %v120
  %v130 = vmax.f32 %v112, %v121
  %v131 = vld [vmem:[%s6] sm:$0xff]
  %v132 = vld [vmem:[%s6 + $0x8] sm:$0xff]
  %v133 = vld [vmem:[%s6 + $0x10] sm:$0xff]
  %v134 = vld [vmem:[%s6 + $0x18] sm:$0xff]
  %v135 = vld [vmem:[%s6 + $0x20] sm:$0xff]
  %v136 = vld [vmem:[%s6 + $0x28] sm:$0xff]
  %v137 = vld [vmem:[%s6 + $0x30] sm:$0xff]
  %v138 = vld [vmem:[%s6 + $0x38] sm:$0xff]
  %v139 = vld [vmem:[%s6 + $0x40] sm:$0xff]
  %v140 = vmax.f32 %v122, %v131
  %v141 = vmax.f32 %v123, %v132
  %v142 = vmax.f32 %v124, %v133
  %v143 = vmax.f32 %v125, %v134
  %v144 = vmax.f32 %v126, %v135
  %v145 = vmax.f32 %v127, %v136
  %v146 = vmax.f32 %v128, %v137
  %v147 = vmax.f32 %v129, %v138
  %v148 = vmax.f32 %v130, %v139
  %v149 = vld [vmem:[%s7] sm:$0xff]
  %v150 = vld [vmem:[%s7 + $0x8] sm:$0xff]
  %v151 = vld [vmem:[%s7 + $0x10] sm:$0xff]
  %v152 = vld [vmem:[%s7 + $0x18] sm:$0xff]
  %v153 = vld [vmem:[%s7 + $0x20] sm:$0xff]
  %v154 = vld [vmem:[%s7 + $0x28] sm:$0xff]
  %v155 = vld [vmem:[%s7 + $0x30] sm:$0xff]
  %v156 = vld [vmem:[%s7 + $0x38] sm:$0xff]
  %v157 = vld [vmem:[%s7 + $0x40] sm:$0xff]
  %v158 = vmax.f32 %v140, %v149
  %v159 = vmax.f32 %v141, %v150
  %v160 = vmax.f32 %v142, %v151
  %v161 = vmax.f32 %v143, %v152
  %v162 = vmax.f32 %v144, %v153
  %v163 = vmax.f32 %v145, %v154
  %v164 = vmax.f32 %v146, %v155
  %v165 = vmax.f32 %v147, %v156
  %v166 = vmax.f32 %v148, %v157
  %v167 = vld [vmem:[%s8] sm:$0xff]
  %v168 = vld [vmem:[%s8 + $0x8] sm:$0xff]
  %v169 = vld [vmem:[%s8 + $0x10] sm:$0xff]
  %v170 = vld [vmem:[%s8 + $0x18] sm:$0xff]
  %v171 = vld [vmem:[%s8 + $0x20] sm:$0xff]
  %v172 = vld [vmem:[%s8 + $0x28] sm:$0xff]
  %v173 = vld [vmem:[%s8 + $0x30] sm:$0xff]
  %v174 = vld [vmem:[%s8 + $0x38] sm:$0xff]
  %v175 = vld [vmem:[%s8 + $0x40] sm:$0xff]
  %v176 = vmax.f32 %v158, %v167
  %v177 = vmax.f32 %v159, %v168
  %v178 = vmax.f32 %v160, %v169
  %v179 = vmax.f32 %v161, %v170
  %v180 = vmax.f32 %v162, %v171
  %v181 = vmax.f32 %v163, %v172
  %v182 = vmax.f32 %v164, %v173
  %v183 = vmax.f32 %v165, %v174
  %v184 = vmax.f32 %v166, %v175
  %vm185 = vcmask 523264
  %186 = vst.msk [vmem:[%s9] sm:$0xff] %vm185, %v176
  %187 = vst.msk [vmem:[%s9 + $0x8] sm:$0xff] %vm185, %v177
  %188 = vst.msk [vmem:[%s9 + $0x10] sm:$0xff] %vm185, %v178
  %189 = vst.msk [vmem:[%s9 + $0x18] sm:$0xff] %vm185, %v179
  %190 = vst.msk [vmem:[%s9 + $0x20] sm:$0xff] %vm185, %v180
  %191 = vst.msk [vmem:[%s9 + $0x28] sm:$0xff] %vm185, %v181
  %192 = vst.msk [vmem:[%s9 + $0x30] sm:$0xff] %vm185, %v182
  %193 = vst.msk [vmem:[%s9 + $0x38] sm:$0xff] %vm185, %v183
  %194 = vst.msk [vmem:[%s9 + $0x40] sm:$0xff] %vm185, %v184
  // Predicated region
  $region38: #{_lambda_.19} parent=0 // pred_check
    _
  $region39: #{_lambda_.19} parent=0 // pred_check_branch
    %196 = sbr.rel (0) target = $region41
  $region40: #{_lambda_.19} parent=0 // pred_region
    _
  $region41: #{_lambda_.19} parent=0 // pred_fallthru
    _
  // Predicated region
  $region42: #{_lambda_.19} parent=0 // pred_check
    _
  $region43: #{_lambda_.19} parent=0 // pred_check_branch
    %198 = sbr.rel (0) target = $region45
  $region44: #{_lambda_.19} parent=0 // pred_region
    _
  $region45: #{_lambda_.19} parent=0 // pred_fallthru
    _

// kernel: _lambda_.20
$region0: #{_lambda_.20}
  #allocation0 [shape = 'u32[]', space=smem, size = 0x4, offset = 0x4, fixed_abs, tag = 'smem constant byte address 0x4 - core index']
  #allocation1 [shape = 'u32[144,128]{1,0:T(1,128)}', space=vmem, size = 0x12000, scoped, tag = 'internal scratch']
  #allocation2 [shape = 'f32[72,128]{1,0:T(8,128)}', space=vmem, size = 0x9000, scoped, tag = 'scratch operand']
  %s0 = inlined_call_operand.vmem [shape: bf16[72,128], index: 0, kind: input, shape index: {}]
  %s1 = inlined_call_operand.vmem [shape: bf16[128,128], index: 1, kind: input, shape index: {}]
  %s2 = inlined_call_operand.vmem [shape: f32[1,128], index: 2, kind: input, shape index: {}]
  %s3 = inlined_call_operand.vmem [shape: f32[1,128], index: 3, kind: input, shape index: {}]
  %s4 = inlined_call_operand.vmem [shape: f32[72,128], index: 4, kind: output, shape index: {}]
  %s5 = sld [smem:[#allocation0]]
  $region34: #{_lambda_.20} parent=0
    _
  %s7 = ssub.s32 1, %s5
  %s8 = scalar_select 0, %s7, %s5
  // Predicated region
  $region2: #{_lambda_.20} parent=0 // pred_check
    _
  $region3: #{_lambda_.20} parent=0 // pred_check_branch
    %10 = sbr.rel (0) target = $region5
  $region4: #{_lambda_.20} parent=0 // pred_region
    _
  $region5: #{_lambda_.20} parent=0 // pred_fallthru
    _
  // Predicated region
  $region6: #{_lambda_.20} parent=0 // pred_check
    _
  $region7: #{_lambda_.20} parent=0 // pred_check_branch
    %12 = sbr.rel (0) target = $region9
  $region8: #{_lambda_.20} parent=0 // pred_region
    _
  $region9: #{_lambda_.20} parent=0 // pred_fallthru
    _
  // Predicated region
  $region10: #{_lambda_.20} parent=0 // pred_check
    _
  $region11: #{_lambda_.20} parent=0 // pred_check_branch
    %14 = sbr.rel (0) target = $region13
  $region12: #{_lambda_.20} parent=0 // pred_region
    _
  $region13: #{_lambda_.20} parent=0 // pred_fallthru
    _
  // Predicated region
  $region14: #{_lambda_.20} parent=0 // pred_check
    _
  $region15: #{_lambda_.20} parent=0 // pred_check_branch
    %16 = sbr.rel (0) target = $region17
  $region16: #{_lambda_.20} parent=0 // pred_region
    _
  $region17: #{_lambda_.20} parent=0 // pred_fallthru
    _
  %p18 = scmp.eq.s32.totalorder 0, 0
  // Predicated region
  $region18: #{_lambda_.20} parent=0 // pred_check
    %p19 = pneg %p18
  $region19: #{_lambda_.20} parent=0 // pred_check_branch
    %21 = sbr.rel (%p19) target = $region21
  $region20: #{_lambda_.20} parent=0 // pred_region
    %22 = vst [vmem:[#allocation2] sm:$0xff] 0.0
    %23 = vst [vmem:[#allocation2 + $0x8] sm:$0xff] 0.0
    %24 = vst [vmem:[#allocation2 + $0x10] sm:$0xff] 0.0
    %25 = vst [vmem:[#allocation2 + $0x18] sm:$0xff] 0.0
    %26 = vst [vmem:[#allocation2 + $0x20] sm:$0xff] 0.0
    %27 = vst [vmem:[#allocation2 + $0x28] sm:$0xff] 0.0
    %28 = vst [vmem:[#allocation2 + $0x30] sm:$0xff] 0.0
    %29 = vst [vmem:[#allocation2 + $0x38] sm:$0xff] 0.0
    %30 = vst [vmem:[#allocation2 + $0x40] sm:$0xff] 0.0
  $region21: #{_lambda_.20} parent=0 // pred_fallthru
    _
  %v31 = vld [vmem:[#allocation2] sm:$0xff]
  %v32 = vld [vmem:[#allocation2 + $0x8] sm:$0xff]
  %v33 = vld [vmem:[#allocation2 + $0x10] sm:$0xff]
  %v34 = vld [vmem:[#allocation2 + $0x18] sm:$0xff]
  %v35 = vld [vmem:[#allocation2 + $0x20] sm:$0xff]
  %v36 = vld [vmem:[#allocation2 + $0x28] sm:$0xff]
  %v37 = vld [vmem:[#allocation2 + $0x30] sm:$0xff]
  %v38 = vld [vmem:[#allocation2 + $0x38] sm:$0xff]
  %v39 = vld [vmem:[#allocation2 + $0x40] sm:$0xff]
  %v40 = vld [vmem:[%s0] sm:$0xf]
  %v41 = vld [vmem:[%s0 + $0x4] sm:$0xf]
  %v42 = vld [vmem:[%s0 + $0x8] sm:$0xf]
  %v43 = vld [vmem:[%s0 + $0xc] sm:$0xf]
  %v44 = vld [vmem:[%s0 + $0x10] sm:$0xf]
  %v45 = vld [vmem:[%s0 + $0x14] sm:$0xf]
  %v46 = vld [vmem:[%s0 + $0x18] sm:$0xf]
  %v47 = vld [vmem:[%s0 + $0x1c] sm:$0xf]
  %v48 = vld [vmem:[%s0 + $0x20] sm:$0xf]
  %v49 = vld [vmem:[%s1] sm:$0xf]
  %v50 = vld [vmem:[%s1 + $0x4] sm:$0xf]
  %v51 = vld [vmem:[%s1 + $0x8] sm:$0xf]
  %v52 = vld [vmem:[%s1 + $0xc] sm:$0xf]
  %v53 = vld [vmem:[%s1 + $0x10] sm:$0xf]
  %v54 = vld [vmem:[%s1 + $0x14] sm:$0xf]
  %v55 = vld [vmem:[%s1 + $0x18] sm:$0xf]
  %v56 = vld [vmem:[%s1 + $0x1c] sm:$0xf]
  %v57 = vld [vmem:[%s1 + $0x20] sm:$0xf]
  %v58 = vld [vmem:[%s1 + $0x24] sm:$0xf]
  %v59 = vld [vmem:[%s1 + $0x28] sm:$0xf]
  %v60 = vld [vmem:[%s1 + $0x2c] sm:$0xf]
  %v61 = vld [vmem:[%s1 + $0x30] sm:$0xf]
  %v62 = vld [vmem:[%s1 + $0x34] sm:$0xf]
  %v63 = vld [vmem:[%s1 + $0x38] sm:$0xf]
  %v64 = vld [vmem:[%s1 + $0x3c] sm:$0xf]
  %v74 = vunpack.c.l.b16 %v40
  %v75 = vunpack.c.l.b16 %v41
  %v76 = vunpack.c.l.b16 %v42
  %v77 = vunpack.c.l.b16 %v43
  %v78 = vunpack.c.l.b16 %v44
  %v79 = vunpack.c.l.b16 %v45
  %v80 = vunpack.c.l.b16 %v46
  %v81 = vunpack.c.l.b16 %v47
  %v82 = vunpack.c.l.b16 %v48
  %v83 = vpack.c.b16 %v75, %v74
  %v84 = vpack.c.b16 %v77, %v76
  %v85 = vpack.c.b16 %v79, %v78
  %v86 = vpack.c.b16 %v81, %v80
  %v87 = vpack.c.b16 %v82, %v82
  %v109 = vunpack.c.l.b16 %v49
  %v110 = vunpack.c.l.b16 %v50
  %v111 = vunpack.c.l.b16 %v51
  %v112 = vunpack.c.l.b16 %v52
  %v113 = vunpack.c.l.b16 %v53
  %v114 = vunpack.c.l.b16 %v54
  %v115 = vunpack.c.l.b16 %v55
  %v116 = vunpack.c.l.b16 %v56
  %v117 = vunpack.c.l.b16 %v57
  %v118 = vunpack.c.l.b16 %v58
  %v119 = vunpack.c.l.b16 %v59
  %v120 = vunpack.c.l.b16 %v60
  %v121 = vunpack.c.l.b16 %v61
  %v122 = vunpack.c.l.b16 %v62
  %v123 = vunpack.c.l.b16 %v63
  %v124 = vunpack.c.l.b16 %v64
  %v125 = vpack.c.b16 %v110, %v109
  %v126 = vpack.c.b16 %v112, %v111
  %v127 = vpack.c.b16 %v114, %v113
  %v128 = vpack.c.b16 %v116, %v115
  %v129 = vpack.c.b16 %v118, %v117
  %v130 = vpack.c.b16 %v120, %v119
  %v131 = vpack.c.b16 %v122, %v121
  %v132 = vpack.c.b16 %v124, %v123
  %141 = vmatprep.subr.bf16.mxu0 0
  %142 = vmatpush1.bf16.msra.mxu0 %v125
  %143 = vmatprep.subr.bf16.mxu0 0
  %144 = vmatpush1.bf16.msra.mxu0 %v126
  %145 = vmatprep.subr.bf16.mxu0 0
  %146 = vmatpush1.bf16.msra.mxu0 %v127
  %147 = vmatprep.subr.bf16.mxu0 0
  %148 = vmatpush1.bf16.msra.mxu0 %v128
  %149 = vmatprep.subr.bf16.mxu0 0
  %150 = vmatpush1.bf16.msra.mxu0 %v129
  %151 = vmatprep.subr.bf16.mxu0 0
  %152 = vmatpush1.bf16.msra.mxu0 %v130
  %153 = vmatprep.subr.bf16.mxu0 0
  %154 = vmatpush1.bf16.msra.mxu0 %v131
  %155 = vmatprep.subr.bf16.mxu0 0
  %156 = vmatpush1.bf16.msra.mxu0 %v132
  %157 = vmatprep.subr.bf16.mxu0 0
  %158 = vmatpush1.bf16.msra.mxu0 0
  %159 = vmatprep.subr.bf16.mxu0 0
  %160 = vmatpush1.bf16.msra.mxu0 0
  %161 = vmatprep.subr.bf16.mxu0 0
  %162 = vmatpush1.bf16.msra.mxu0 0
  %163 = vmatprep.subr.bf16.mxu0 0
  %164 = vmatpush1.bf16.msra.mxu0 0
  %165 = vmatprep.subr.bf16.mxu0 0
  %166 = vmatpush1.bf16.msra.mxu0 0
  %167 = vmatprep.subr.bf16.mxu0 0
  %168 = vmatpush1.bf16.msra.mxu0 0
  %169 = vmatprep.subr.bf16.mxu0 0
  %170 = vmatpush1.bf16.msra.mxu0 0
  %171 = vmatprep.subr.bf16.mxu0 0
  %172 = vmatpush1.bf16.msra.mxu0 0
  %173 = vmatprep.mubr.bf16.mxu0 0
  %174 = vmatmul.mubr.bf16.gmra.mrb[0].mxu0 %v83
  %v175 = vpop.f32.mrb[0].mxu0
  %v176 = vadd.f32 0.0, %v175
  %v177 = vpop.f32.mrb[0].mxu0
  %v178 = vpop.f32.mrb[0].mxu0
  %v179 = vadd.f32 0.0, %v178
  %v180 = vpop.f32.mrb[0].mxu0
  %181 = vmatprep.mubr.bf16.mxu0 0
  %182 = vmatmul.mubr.bf16.gmra.mrb[0].mxu0 %v84
  %v183 = vpop.f32.mrb[0].mxu0
  %v184 = vadd.f32 0.0, %v183
  %v185 = vpop.f32.mrb[0].mxu0
  %v186 = vpop.f32.mrb[0].mxu0
  %v187 = vadd.f32 0.0, %v186
  %v188 = vpop.f32.mrb[0].mxu0
  %189 = vmatprep.mubr.bf16.mxu0 0
  %190 = vmatmul.mubr.bf16.gmra.mrb[0].mxu0 %v85
  %v191 = vpop.f32.mrb[0].mxu0
  %v192 = vadd.f32 0.0, %v191
  %v193 = vpop.f32.mrb[0].mxu0
  %v194 = vpop.f32.mrb[0].mxu0
  %v195 = vadd.f32 0.0, %v194
  %v196 = vpop.f32.mrb[0].mxu0
  %197 = vmatprep.mubr.bf16.mxu0 0
  %198 = vmatmul.mubr.bf16.gmra.mrb[0].mxu0 %v86
  %v199 = vpop.f32.mrb[0].mxu0
  %v200 = vadd.f32 0.0, %v199
  %v201 = vpop.f32.mrb[0].mxu0
  %v202 = vpop.f32.mrb[0].mxu0
  %v203 = vadd.f32 0.0, %v202
  %v204 = vpop.f32.mrb[0].mxu0
  %205 = vmatprep.mubr.bf16.mxu0 0
  %206 = vmatmul.mubr.bf16.gmra.mrb[0].mxu0 %v87
  %v207 = vpop.f32.mrb[0].mxu0
  %v208 = vadd.f32 0.0, %v207
  %v209 = vpop.f32.mrb[0].mxu0
  %v210 = vpop.f32.mrb[0].mxu0
  %v211 = vpop.f32.mrb[0].mxu0
  %212 = vdwg.mxu0
  %v213 = vadd.f32 %v31, %v176
  %v214 = vadd.f32 %v32, %v179
  %v215 = vadd.f32 %v33, %v184
  %v216 = vadd.f32 %v34, %v187
  %v217 = vadd.f32 %v35, %v192
  %v218 = vadd.f32 %v36, %v195
  %v219 = vadd.f32 %v37, %v200
  %v220 = vadd.f32 %v38, %v203
  %v221 = vadd.f32 %v39, %v208
  %222 = vst [vmem:[#allocation2] sm:$0xff] %v213
  %223 = vst [vmem:[#allocation2 + $0x8] sm:$0xff] %v214
  %224 = vst [vmem:[#allocation2 + $0x10] sm:$0xff] %v215
  %225 = vst [vmem:[#allocation2 + $0x18] sm:$0xff] %v216
  %226 = vst [vmem:[#allocation2 + $0x20] sm:$0xff] %v217
  %227 = vst [vmem:[#allocation2 + $0x28] sm:$0xff] %v218
  %228 = vst [vmem:[#allocation2 + $0x30] sm:$0xff] %v219
  %229 = vst [vmem:[#allocation2 + $0x38] sm:$0xff] %v220
  %230 = vst [vmem:[#allocation2 + $0x40] sm:$0xff] %v221
  // Predicated region
  $region22: #{_lambda_.20} parent=0 // pred_check
    %p231 = pneg %p18
  $region23: #{_lambda_.20} parent=0 // pred_check_branch
    %233 = sbr.rel (%p231) target = $region25
  $region24: #{_lambda_.20} parent=0 // pred_region
    %v234 = vld [vmem:[#allocation2] sm:$0xff]
    %v235 = vld [vmem:[#allocation2 + $0x8] sm:$0xff]
    %v236 = vld [vmem:[#allocation2 + $0x10] sm:$0xff]
    %v237 = vld [vmem:[#allocation2 + $0x18] sm:$0xff]
    %v238 = vld [vmem:[#allocation2 + $0x20] sm:$0xff]
    %v239 = vld [vmem:[#allocation2 + $0x28] sm:$0xff]
    %v240 = vld [vmem:[#allocation2 + $0x30] sm:$0xff]
    %v241 = vld [vmem:[#allocation2 + $0x38] sm:$0xff]
    %v242 = vld [vmem:[#allocation2 + $0x40] sm:$0xff]
    %v243 = vld [vmem:[%s2] sm:$0x1]
    %v245 = vlaneseq
    %v246 = vshrl.u32 %v245, 7
    %v247 = vsub.s32 0, %v246
    %v248 = vrot.slane %v243, %v247
    %v250 = vmul.f32 %v234, %v248
    %v251 = vmul.f32 %v235, %v248
    %v252 = vmul.f32 %v236, %v248
    %v253 = vmul.f32 %v237, %v248
    %v254 = vmul.f32 %v238, %v248
    %v255 = vmul.f32 %v239, %v248
    %v256 = vmul.f32 %v240, %v248
    %v257 = vmul.f32 %v241, %v248
    %v258 = vmul.f32 %v242, %v248
    %v259 = vld [vmem:[%s3] sm:$0x1]
    %v261 = vlaneseq
    %v262 = vshrl.u32 %v261, 7
    %v263 = vsub.s32 0, %v262
    %v264 = vrot.slane %v259, %v263
    %v266 = vadd.f32 %v250, %v264
    %v267 = vadd.f32 %v251, %v264
    %v268 = vadd.f32 %v252, %v264
    %v269 = vadd.f32 %v253, %v264
    %v270 = vadd.f32 %v254, %v264
    %v271 = vadd.f32 %v255, %v264
    %v272 = vadd.f32 %v256, %v264
    %v273 = vadd.f32 %v257, %v264
    %v274 = vadd.f32 %v258, %v264
    %v275 = vmax.f32 %v266, 0.0
    %v276 = vmax.f32 %v267, 0.0
    %v277 = vmax.f32 %v268, 0.0
    %v278 = vmax.f32 %v269, 0.0
    %v279 = vmax.f32 %v270, 0.0
    %v280 = vmax.f32 %v271, 0.0
    %v281 = vmax.f32 %v272, 0.0
    %v282 = vmax.f32 %v273, 0.0
    %v283 = vmax.f32 %v274, 0.0
    %284 = vst [vmem:[%s4] sm:$0xff] %v275
    %285 = vst [vmem:[%s4 + $0x8] sm:$0xff] %v276
    %286 = vst [vmem:[%s4 + $0x10] sm:$0xff] %v277
    %287 = vst [vmem:[%s4 + $0x18] sm:$0xff] %v278
    %288 = vst [vmem:[%s4 + $0x20] sm:$0xff] %v279
    %289 = vst [vmem:[%s4 + $0x28] sm:$0xff] %v280
    %290 = vst [vmem:[%s4 + $0x30] sm:$0xff] %v281
    %291 = vst [vmem:[%s4 + $0x38] sm:$0xff] %v282
    %292 = vst [vmem:[%s4 + $0x40] sm:$0xff] %v283
  $region25: #{_lambda_.20} parent=0 // pred_fallthru
    _
  // Predicated region
  $region26: #{_lambda_.20} parent=0 // pred_check
    _
  $region27: #{_lambda_.20} parent=0 // pred_check_branch
    %294 = sbr.rel (0) target = $region29
  $region28: #{_lambda_.20} parent=0 // pred_region
    _
  $region29: #{_lambda_.20} parent=0 // pred_fallthru
    _
  // Predicated region
  $region30: #{_lambda_.20} parent=0 // pred_check
    _
  $region31: #{_lambda_.20} parent=0 // pred_check_branch
    %296 = sbr.rel (0) target = $region33
  $region32: #{_lambda_.20} parent=0 // pred_region
    _
  $region33: #{_lambda_.20} parent=0 // pred_fallthru
    _

// kernel: _lambda_.21
$region0: #{_lambda_.21}
  #allocation0 [shape = 'u32[]', space=smem, size = 0x4, offset = 0x4, fixed_abs, tag = 'smem constant byte address 0x4 - core index']
  #allocation1 [shape = 'u32[144,128]{1,0:T(1,128)}', space=vmem, size = 0x12000, scoped, tag = 'internal scratch']
  #allocation2 [shape = 'f32[72,128]{1,0:T(8,128)}', space=vmem, size = 0x9000, scoped, tag = 'scratch operand']
  %s0 = inlined_call_operand.vmem [shape: bf16[72,256], index: 0, kind: input, shape index: {}]
  %s1 = inlined_call_operand.vmem [shape: bf16[256,128], index: 1, kind: input, shape index: {}]
  %s2 = inlined_call_operand.vmem [shape: f32[1,128], index: 2, kind: input, shape index: {}]
  %s3 = inlined_call_operand.vmem [shape: f32[1,128], index: 3, kind: input, shape index: {}]
  %s4 = inlined_call_operand.vmem [shape: f32[72,128], index: 4, kind: output, shape index: {}]
  %s5 = sld [smem:[#allocation0]]
  $region34: #{_lambda_.21} parent=0
    _
  %s7 = ssub.s32 1, %s5
  %s8 = scalar_select 0, %s7, %s5
  // Predicated region
  $region2: #{_lambda_.21} parent=0 // pred_check
    _
  $region3: #{_lambda_.21} parent=0 // pred_check_branch
    %10 = sbr.rel (0) target = $region5
  $region4: #{_lambda_.21} parent=0 // pred_region
    _
  $region5: #{_lambda_.21} parent=0 // pred_fallthru
    _
  // Predicated region
  $region6: #{_lambda_.21} parent=0 // pred_check
    _
  $region7: #{_lambda_.21} parent=0 // pred_check_branch
    %12 = sbr.rel (0) target = $region9
  $region8: #{_lambda_.21} parent=0 // pred_region
    _
  $region9: #{_lambda_.21} parent=0 // pred_fallthru
    _
  // Predicated region
  $region10: #{_lambda_.21} parent=0 // pred_check
    _
  $region11: #{_lambda_.21} parent=0 // pred_check_branch
    %14 = sbr.rel (0) target = $region13
  $region12: #{_lambda_.21} parent=0 // pred_region
    _
  $region13: #{_lambda_.21} parent=0 // pred_fallthru
    _
  // Predicated region
  $region14: #{_lambda_.21} parent=0 // pred_check
    _
  $region15: #{_lambda_.21} parent=0 // pred_check_branch
    %16 = sbr.rel (0) target = $region17
  $region16: #{_lambda_.21} parent=0 // pred_region
    _
  $region17: #{_lambda_.21} parent=0 // pred_fallthru
    _
  %p18 = scmp.eq.s32.totalorder 0, 0
  // Predicated region
  $region18: #{_lambda_.21} parent=0 // pred_check
    %p19 = pneg %p18
  $region19: #{_lambda_.21} parent=0 // pred_check_branch
    %21 = sbr.rel (%p19) target = $region21
  $region20: #{_lambda_.21} parent=0 // pred_region
    %22 = vst [vmem:[#allocation2] sm:$0xff] 0.0
    %23 = vst [vmem:[#allocation2 + $0x8] sm:$0xff] 0.0
    %24 = vst [vmem:[#allocation2 + $0x10] sm:$0xff] 0.0
    %25 = vst [vmem:[#allocation2 + $0x18] sm:$0xff] 0.0
    %26 = vst [vmem:[#allocation2 + $0x20] sm:$0xff] 0.0
    %27 = vst [vmem:[#allocation2 + $0x28] sm:$0xff] 0.0
    %28 = vst [vmem:[#allocation2 + $0x30] sm:$0xff] 0.0
    %29 = vst [vmem:[#allocation2 + $0x38] sm:$0xff] 0.0
    %30 = vst [vmem:[#allocation2 + $0x40] sm:$0xff] 0.0
  $region21: #{_lambda_.21} parent=0 // pred_fallthru
    _
  %v31 = vld [vmem:[#allocation2] sm:$0xff]
  %v32 = vld [vmem:[#allocation2 + $0x8] sm:$0xff]
  %v33 = vld [vmem:[#allocation2 + $0x10] sm:$0xff]
  %v34 = vld [vmem:[#allocation2 + $0x18] sm:$0xff]
  %v35 = vld [vmem:[#allocation2 + $0x20] sm:$0xff]
  %v36 = vld [vmem:[#allocation2 + $0x28] sm:$0xff]
  %v37 = vld [vmem:[#allocation2 + $0x30] sm:$0xff]
  %v38 = vld [vmem:[#allocation2 + $0x38] sm:$0xff]
  %v39 = vld [vmem:[#allocation2 + $0x40] sm:$0xff]
  %v40 = vld [vmem:[%s0] sm:$0xff]
  %v41 = vld [vmem:[%s0 + $0x8] sm:$0xff]
  %v42 = vld [vmem:[%s0 + $0x10] sm:$0xff]
  %v43 = vld [vmem:[%s0 + $0x18] sm:$0xff]
  %v44 = vld [vmem:[%s0 + $0x20] sm:$0xff]
  %v45 = vld [vmem:[%s0 + $0x28] sm:$0xff]
  %v46 = vld [vmem:[%s0 + $0x30] sm:$0xff]
  %v47 = vld [vmem:[%s0 + $0x38] sm:$0xff]
  %v48 = vld [vmem:[%s0 + $0x40] sm:$0xff]
  %v49 = vld [vmem:[%s1] sm:$0xf]
  %v50 = vld [vmem:[%s1 + $0x4] sm:$0xf]
  %v51 = vld [vmem:[%s1 + $0x8] sm:$0xf]
  %v52 = vld [vmem:[%s1 + $0xc] sm:$0xf]
  %v53 = vld [vmem:[%s1 + $0x10] sm:$0xf]
  %v54 = vld [vmem:[%s1 + $0x14] sm:$0xf]
  %v55 = vld [vmem:[%s1 + $0x18] sm:$0xf]
  %v56 = vld [vmem:[%s1 + $0x1c] sm:$0xf]
  %v57 = vld [vmem:[%s1 + $0x20] sm:$0xf]
  %v58 = vld [vmem:[%s1 + $0x24] sm:$0xf]
  %v59 = vld [vmem:[%s1 + $0x28] sm:$0xf]
  %v60 = vld [vmem:[%s1 + $0x2c] sm:$0xf]
  %v61 = vld [vmem:[%s1 + $0x30] sm:$0xf]
  %v62 = vld [vmem:[%s1 + $0x34] sm:$0xf]
  %v63 = vld [vmem:[%s1 + $0x38] sm:$0xf]
  %v64 = vld [vmem:[%s1 + $0x3c] sm:$0xf]
  %v65 = vld [vmem:[%s1 + $0x40] sm:$0xf]
  %v66 = vld [vmem:[%s1 + $0x44] sm:$0xf]
  %v67 = vld [vmem:[%s1 + $0x48] sm:$0xf]
  %v68 = vld [vmem:[%s1 + $0x4c] sm:$0xf]
  %v69 = vld [vmem:[%s1 + $0x50] sm:$0xf]
  %v70 = vld [vmem:[%s1 + $0x54] sm:$0xf]
  %v71 = vld [vmem:[%s1 + $0x58] sm:$0xf]
  %v72 = vld [vmem:[%s1 + $0x5c] sm:$0xf]
  %v73 = vld [vmem:[%s1 + $0x60] sm:$0xf]
  %v74 = vld [vmem:[%s1 + $0x64] sm:$0xf]
  %v75 = vld [vmem:[%s1 + $0x68] sm:$0xf]
  %v76 = vld [vmem:[%s1 + $0x6c] sm:$0xf]
  %v77 = vld [vmem:[%s1 + $0x70] sm:$0xf]
  %v78 = vld [vmem:[%s1 + $0x74] sm:$0xf]
  %v79 = vld [vmem:[%s1 + $0x78] sm:$0xf]
  %v80 = vld [vmem:[%s1 + $0x7c] sm:$0xf]
  %v90 = vunpack.c.l.b16 %v40
  %v91 = vunpack.c.h.b16 %v40
  %v92 = vunpack.c.l.b16 %v41
  %v93 = vunpack.c.h.b16 %v41
  %v94 = vunpack.c.l.b16 %v42
  %v95 = vunpack.c.h.b16 %v42
  %v96 = vunpack.c.l.b16 %v43
  %v97 = vunpack.c.h.b16 %v43
  %v98 = vunpack.c.l.b16 %v44
  %v99 = vunpack.c.h.b16 %v44
  %v100 = vunpack.c.l.b16 %v45
  %v101 = vunpack.c.h.b16 %v45
  %v102 = vunpack.c.l.b16 %v46
  %v103 = vunpack.c.h.b16 %v46
  %v104 = vunpack.c.l.b16 %v47
  %v105 = vunpack.c.h.b16 %v47
  %v106 = vunpack.c.l.b16 %v48
  %v107 = vunpack.c.h.b16 %v48
  %v108 = vpack.c.b16 %v92, %v90
  %v109 = vpack.c.b16 %v93, %v91
  %v110 = vpack.c.b16 %v96, %v94
  %v111 = vpack.c.b16 %v97, %v95
  %v112 = vpack.c.b16 %v100, %v98
  %v113 = vpack.c.b16 %v101, %v99
  %v114 = vpack.c.b16 %v104, %v102
  %v115 = vpack.c.b16 %v105, %v103
  %v116 = vpack.c.b16 %v106, %v106
  %v117 = vpack.c.b16 %v107, %v107
  %v160 = vunpack.c.l.b16 %v49
  %v161 = vunpack.c.l.b16 %v50
  %v162 = vunpack.c.l.b16 %v51
  %v163 = vunpack.c.l.b16 %v52
  %v164 = vunpack.c.l.b16 %v53
  %v165 = vunpack.c.l.b16 %v54
  %v166 = vunpack.c.l.b16 %v55
  %v167 = vunpack.c.l.b16 %v56
  %v168 = vunpack.c.l.b16 %v57
  %v169 = vunpack.c.l.b16 %v58
  %v170 = vunpack.c.l.b16 %v59
  %v171 = vunpack.c.l.b16 %v60
  %v172 = vunpack.c.l.b16 %v61
  %v173 = vunpack.c.l.b16 %v62
  %v174 = vunpack.c.l.b16 %v63
  %v175 = vunpack.c.l.b16 %v64
  %v176 = vunpack.c.l.b16 %v65
  %v177 = vunpack.c.l.b16 %v66
  %v178 = vunpack.c.l.b16 %v67
  %v179 = vunpack.c.l.b16 %v68
  %v180 = vunpack.c.l.b16 %v69
  %v181 = vunpack.c.l.b16 %v70
  %v182 = vunpack.c.l.b16 %v71
  %v183 = vunpack.c.l.b16 %v72
  %v184 = vunpack.c.l.b16 %v73
  %v185 = vunpack.c.l.b16 %v74
  %v186 = vunpack.c.l.b16 %v75
  %v187 = vunpack.c.l.b16 %v76
  %v188 = vunpack.c.l.b16 %v77
  %v189 = vunpack.c.l.b16 %v78
  %v190 = vunpack.c.l.b16 %v79
  %v191 = vunpack.c.l.b16 %v80
  %v192 = vpack.c.b16 %v161, %v160
  %v193 = vpack.c.b16 %v163, %v162
  %v194 = vpack.c.b16 %v165, %v164
  %v195 = vpack.c.b16 %v167, %v166
  %v196 = vpack.c.b16 %v169, %v168
  %v197 = vpack.c.b16 %v171, %v170
  %v198 = vpack.c.b16 %v173, %v172
  %v199 = vpack.c.b16 %v175, %v174
  %v200 = vpack.c.b16 %v177, %v176
  %v201 = vpack.c.b16 %v179, %v178
  %v202 = vpack.c.b16 %v181, %v180
  %v203 = vpack.c.b16 %v183, %v182
  %v204 = vpack.c.b16 %v185, %v184
  %v205 = vpack.c.b16 %v187, %v186
  %v206 = vpack.c.b16 %v189, %v188
  %v207 = vpack.c.b16 %v191, %v190
  %224 = vmatprep.subr.bf16.mxu0 0
  %225 = vmatpush1.bf16.msra.mxu0 %v192
  %226 = vmatprep.subr.bf16.mxu0 0
  %227 = vmatpush1.bf16.msra.mxu0 %v193
  %228 = vmatprep.subr.bf16.mxu0 0
  %229 = vmatpush1.bf16.msra.mxu0 %v194
  %230 = vmatprep.subr.bf16.mxu0 0
  %231 = vmatpush1.bf16.msra.mxu0 %v195
  %232 = vmatprep.subr.bf16.mxu0 0
  %233 = vmatpush1.bf16.msra.mxu0 %v196
  %234 = vmatprep.subr.bf16.mxu0 0
  %235 = vmatpush1.bf16.msra.mxu0 %v197
  %236 = vmatprep.subr.bf16.mxu0 0
  %237 = vmatpush1.bf16.msra.mxu0 %v198
  %238 = vmatprep.subr.bf16.mxu0 0
  %239 = vmatpush1.bf16.msra.mxu0 %v199
  %240 = vmatprep.subr.bf16.mxu0 0
  %241 = vmatpush1.bf16.msra.mxu0 %v200
  %242 = vmatprep.subr.bf16.mxu0 0
  %243 = vmatpush1.bf16.msra.mxu0 %v201
  %244 = vmatprep.subr.bf16.mxu0 0
  %245 = vmatpush1.bf16.msra.mxu0 %v202
  %246 = vmatprep.subr.bf16.mxu0 0
  %247 = vmatpush1.bf16.msra.mxu0 %v203
  %248 = vmatprep.subr.bf16.mxu0 0
  %249 = vmatpush1.bf16.msra.mxu0 %v204
  %250 = vmatprep.subr.bf16.mxu0 0
  %251 = vmatpush1.bf16.msra.mxu0 %v205
  %252 = vmatprep.subr.bf16.mxu0 0
  %253 = vmatpush1.bf16.msra.mxu0 %v206
  %254 = vmatprep.subr.bf16.mxu0 0
  %255 = vmatpush1.bf16.msra.mxu0 %v207
  %256 = vmatprep.mubr.bf16.mxu0 %v109
  %257 = vmatmul.mubr.bf16.gmra.mrb[0].mxu0 %v108
  %v258 = vpop.f32.mrb[0].mxu0
  %v259 = vadd.f32 0.0, %v258
  %v260 = vpop.f32.mrb[0].mxu0
  %v261 = vpop.f32.mrb[0].mxu0
  %v262 = vadd.f32 0.0, %v261
  %v263 = vpop.f32.mrb[0].mxu0
  %264 = vmatprep.mubr.bf16.mxu0 %v111
  %265 = vmatmul.mubr.bf16.gmra.mrb[0].mxu0 %v110
  %v266 = vpop.f32.mrb[0].mxu0
  %v267 = vadd.f32 0.0, %v266
  %v268 = vpop.f32.mrb[0].mxu0
  %v269 = vpop.f32.mrb[0].mxu0
  %v270 = vadd.f32 0.0, %v269
  %v271 = vpop.f32.mrb[0].mxu0
  %272 = vmatprep.mubr.bf16.mxu0 %v113
  %273 = vmatmul.mubr.bf16.gmra.mrb[0].mxu0 %v112
  %v274 = vpop.f32.mrb[0].mxu0
  %v275 = vadd.f32 0.0, %v274
  %v276 = vpop.f32.mrb[0].mxu0
  %v277 = vpop.f32.mrb[0].mxu0
  %v278 = vadd.f32 0.0, %v277
  %v279 = vpop.f32.mrb[0].mxu0
  %280 = vmatprep.mubr.bf16.mxu0 %v115
  %281 = vmatmul.mubr.bf16.gmra.mrb[0].mxu0 %v114
  %v282 = vpop.f32.mrb[0].mxu0
  %v283 = vadd.f32 0.0, %v282
  %v284 = vpop.f32.mrb[0].mxu0
  %v285 = vpop.f32.mrb[0].mxu0
  %v286 = vadd.f32 0.0, %v285
  %v287 = vpop.f32.mrb[0].mxu0
  %288 = vmatprep.mubr.bf16.mxu0 %v117
  %289 = vmatmul.mubr.bf16.gmra.mrb[0].mxu0 %v116
  %v290 = vpop.f32.mrb[0].mxu0
  %v291 = vadd.f32 0.0, %v290
  %v292 = vpop.f32.mrb[0].mxu0
  %v293 = vpop.f32.mrb[0].mxu0
  %v294 = vpop.f32.mrb[0].mxu0
  %295 = vdwg.mxu0
  %v296 = vadd.f32 %v31, %v259
  %v297 = vadd.f32 %v32, %v262
  %v298 = vadd.f32 %v33, %v267
  %v299 = vadd.f32 %v34, %v270
  %v300 = vadd.f32 %v35, %v275
  %v301 = vadd.f32 %v36, %v278
  %v302 = vadd.f32 %v37, %v283
  %v303 = vadd.f32 %v38, %v286
  %v304 = vadd.f32 %v39, %v291
  %305 = vst [vmem:[#allocation2] sm:$0xff] %v296
  %306 = vst [vmem:[#allocation2 + $0x8] sm:$0xff] %v297
  %307 = vst [vmem:[#allocation2 + $0x10] sm:$0xff] %v298
  %308 = vst [vmem:[#allocation2 + $0x18] sm:$0xff] %v299
  %309 = vst [vmem:[#allocation2 + $0x20] sm:$0xff] %v300
  %310 = vst [vmem:[#allocation2 + $0x28] sm:$0xff] %v301
  %311 = vst [vmem:[#allocation2 + $0x30] sm:$0xff] %v302
  %312 = vst [vmem:[#allocation2 + $0x38] sm:$0xff] %v303
  %313 = vst [vmem:[#allocation2 + $0x40] sm:$0xff] %v304
  // Predicated region
  $region22: #{_lambda_.21} parent=0 // pred_check
    %p314 = pneg %p18
  $region23: #{_lambda_.21} parent=0 // pred_check_branch
    %316 = sbr.rel (%p314) target = $region25
  $region24: #{_lambda_.21} parent=0 // pred_region
    %v317 = vld [vmem:[#allocation2] sm:$0xff]
    %v318 = vld [vmem:[#allocation2 + $0x8] sm:$0xff]
    %v319 = vld [vmem:[#allocation2 + $0x10] sm:$0xff]
    %v320 = vld [vmem:[#allocation2 + $0x18] sm:$0xff]
    %v321 = vld [vmem:[#allocation2 + $0x20] sm:$0xff]
    %v322 = vld [vmem:[#allocation2 + $0x28] sm:$0xff]
    %v323 = vld [vmem:[#allocation2 + $0x30] sm:$0xff]
    %v324 = vld [vmem:[#allocation2 + $0x38] sm:$0xff]
    %v325 = vld [vmem:[#allocation2 + $0x40] sm:$0xff]
    %v326 = vld [vmem:[%s2] sm:$0x1]
    %v328 = vlaneseq
    %v329 = vshrl.u32 %v328, 7
    %v330 = vsub.s32 0, %v329
    %v331 = vrot.slane %v326, %v330
    %v333 = vmul.f32 %v317, %v331
    %v334 = vmul.f32 %v318, %v331
    %v335 = vmul.f32 %v319, %v331
    %v336 = vmul.f32 %v320, %v331
    %v337 = vmul.f32 %v321, %v331
    %v338 = vmul.f32 %v322, %v331
    %v339 = vmul.f32 %v323, %v331
    %v340 = vmul.f32 %v324, %v331
    %v341 = vmul.f32 %v325, %v331
    %v342 = vld [vmem:[%s3] sm:$0x1]
    %v344 = vlaneseq
    %v345 = vshrl.u32 %v344, 7
    %v346 = vsub.s32 0, %v345
    %v347 = vrot.slane %v342, %v346
    %v349 = vadd.f32 %v333, %v347
    %v350 = vadd.f32 %v334, %v347
    %v351 = vadd.f32 %v335, %v347
    %v352 = vadd.f32 %v336, %v347
    %v353 = vadd.f32 %v337, %v347
    %v354 = vadd.f32 %v338, %v347
    %v355 = vadd.f32 %v339, %v347
    %v356 = vadd.f32 %v340, %v347
    %v357 = vadd.f32 %v341, %v347
    %v358 = vmax.f32 %v349, 0.0
    %v359 = vmax.f32 %v350, 0.0
    %v360 = vmax.f32 %v351, 0.0
    %v361 = vmax.f32 %v352, 0.0
    %v362 = vmax.f32 %v353, 0.0
    %v363 = vmax.f32 %v354, 0.0
    %v364 = vmax.f32 %v355, 0.0
    %v365 = vmax.f32 %v356, 0.0
    %v366 = vmax.f32 %v357, 0.0
    %367 = vst [vmem:[%s4] sm:$0xff] %v358
    %368 = vst [vmem:[%s4 + $0x8] sm:$0xff] %v359
    %369 = vst [vmem:[%s4 + $0x10] sm:$0xff] %v360
    %370 = vst [vmem:[%s4 + $0x18] sm:$0xff] %v361
    %371 = vst [vmem:[%s4 + $0x20] sm:$0xff] %v362
    %372 = vst [vmem:[%s4 + $0x28] sm:$0xff] %v363
    %373 = vst [vmem:[%s4 + $0x30] sm:$0xff] %v364
    %374 = vst [vmem:[%s4 + $0x38] sm:$0xff] %v365
    %375 = vst [vmem:[%s4 + $0x40] sm:$0xff] %v366
  $region25: #{_lambda_.21} parent=0 // pred_fallthru
    _
  // Predicated region
  $region26: #{_lambda_.21} parent=0 // pred_check
    _
  $region27: #{_lambda_.21} parent=0 // pred_check_branch
    %377 = sbr.rel (0) target = $region29
  $region28: #{_lambda_.21} parent=0 // pred_region
    _
  $region29: #{_lambda_.21} parent=0 // pred_fallthru
    _
  // Predicated region
  $region30: #{_lambda_.21} parent=0 // pred_check
    _
  $region31: #{_lambda_.21} parent=0 // pred_check_branch
    %379 = sbr.rel (0) target = $region33
  $region32: #{_lambda_.21} parent=0 // pred_region
    _
  $region33: #{_lambda_.21} parent=0 // pred_fallthru
    _

// kernel: _lambda_.22
$region0: #{_lambda_.22}
  #allocation0 [shape = 'u32[]', space=smem, size = 0x4, offset = 0x4, fixed_abs, tag = 'smem constant byte address 0x4 - core index']
  #allocation1 [shape = 'u32[144,128]{1,0:T(1,128)}', space=vmem, size = 0x12000, scoped, tag = 'internal scratch']
  #allocation2 [shape = 'f32[72,128]{1,0:T(8,128)}', space=vmem, size = 0x9000, scoped, tag = 'scratch operand']
  %s0 = inlined_call_operand.vmem [shape: bf16[72,128], index: 0, kind: input, shape index: {}]
  %s1 = inlined_call_operand.vmem [shape: bf16[128,128], index: 1, kind: input, shape index: {}]
  %s2 = inlined_call_operand.vmem [shape: f32[1,128], index: 2, kind: input, shape index: {}]
  %s3 = inlined_call_operand.vmem [shape: f32[1,128], index: 3, kind: input, shape index: {}]
  %s4 = inlined_call_operand.vmem [shape: f32[72,128], index: 4, kind: input, shape index: {}]
  %s5 = inlined_call_operand.vmem [shape: f32[72,128], index: 5, kind: output, shape index: {}]
  %s6 = sld [smem:[#allocation0]]
  $region38: #{_lambda_.22} parent=0
    _
  %s8 = ssub.s32 1, %s6
  %s9 = scalar_select 0, %s8, %s6
  // Predicated region
  $region2: #{_lambda_.22} parent=0 // pred_check
    _
  $region3: #{_lambda_.22} parent=0 // pred_check_branch
    %11 = sbr.rel (0) target = $region5
  $region4: #{_lambda_.22} parent=0 // pred_region
    _
  $region5: #{_lambda_.22} parent=0 // pred_fallthru
    _
  // Predicated region
  $region6: #{_lambda_.22} parent=0 // pred_check
    _
  $region7: #{_lambda_.22} parent=0 // pred_check_branch
    %13 = sbr.rel (0) target = $region9
  $region8: #{_lambda_.22} parent=0 // pred_region
    _
  $region9: #{_lambda_.22} parent=0 // pred_fallthru
    _
  // Predicated region
  $region10: #{_lambda_.22} parent=0 // pred_check
    _
  $region11: #{_lambda_.22} parent=0 // pred_check_branch
    %15 = sbr.rel (0) target = $region13
  $region12: #{_lambda_.22} parent=0 // pred_region
    _
  $region13: #{_lambda_.22} parent=0 // pred_fallthru
    _
  // Predicated region
  $region14: #{_lambda_.22} parent=0 // pred_check
    _
  $region15: #{_lambda_.22} parent=0 // pred_check_branch
    %17 = sbr.rel (0) target = $region17
  $region16: #{_lambda_.22} parent=0 // pred_region
    _
  $region17: #{_lambda_.22} parent=0 // pred_fallthru
    _
  // Predicated region
  $region18: #{_lambda_.22} parent=0 // pred_check
    _
  $region19: #{_lambda_.22} parent=0 // pred_check_branch
    %19 = sbr.rel (0) target = $region21
  $region20: #{_lambda_.22} parent=0 // pred_region
    _
  $region21: #{_lambda_.22} parent=0 // pred_fallthru
    _
  %p21 = scmp.eq.s32.totalorder 0, 0
  // Predicated region
  $region22: #{_lambda_.22} parent=0 // pred_check
    %p22 = pneg %p21
  $region23: #{_lambda_.22} parent=0 // pred_check_branch
    %24 = sbr.rel (%p22) target = $region25
  $region24: #{_lambda_.22} parent=0 // pred_region
    %25 = vst [vmem:[#allocation2] sm:$0xff] 0.0
    %26 = vst [vmem:[#allocation2 + $0x8] sm:$0xff] 0.0
    %27 = vst [vmem:[#allocation2 + $0x10] sm:$0xff] 0.0
    %28 = vst [vmem:[#allocation2 + $0x18] sm:$0xff] 0.0
    %29 = vst [vmem:[#allocation2 + $0x20] sm:$0xff] 0.0
    %30 = vst [vmem:[#allocation2 + $0x28] sm:$0xff] 0.0
    %31 = vst [vmem:[#allocation2 + $0x30] sm:$0xff] 0.0
    %32 = vst [vmem:[#allocation2 + $0x38] sm:$0xff] 0.0
    %33 = vst [vmem:[#allocation2 + $0x40] sm:$0xff] 0.0
  $region25: #{_lambda_.22} parent=0 // pred_fallthru
    _
  %v34 = vld [vmem:[#allocation2] sm:$0xff]
  %v35 = vld [vmem:[#allocation2 + $0x8] sm:$0xff]
  %v36 = vld [vmem:[#allocation2 + $0x10] sm:$0xff]
  %v37 = vld [vmem:[#allocation2 + $0x18] sm:$0xff]
  %v38 = vld [vmem:[#allocation2 + $0x20] sm:$0xff]
  %v39 = vld [vmem:[#allocation2 + $0x28] sm:$0xff]
  %v40 = vld [vmem:[#allocation2 + $0x30] sm:$0xff]
  %v41 = vld [vmem:[#allocation2 + $0x38] sm:$0xff]
  %v42 = vld [vmem:[#allocation2 + $0x40] sm:$0xff]
  %v43 = vld [vmem:[%s0] sm:$0xf]
  %v44 = vld [vmem:[%s0 + $0x4] sm:$0xf]
  %v45 = vld [vmem:[%s0 + $0x8] sm:$0xf]
  %v46 = vld [vmem:[%s0 + $0xc] sm:$0xf]
  %v47 = vld [vmem:[%s0 + $0x10] sm:$0xf]
  %v48 = vld [vmem:[%s0 + $0x14] sm:$0xf]
  %v49 = vld [vmem:[%s0 + $0x18] sm:$0xf]
  %v50 = vld [vmem:[%s0 + $0x1c] sm:$0xf]
  %v51 = vld [vmem:[%s0 + $0x20] sm:$0xf]
  %v52 = vld [vmem:[%s1] sm:$0xf]
  %v53 = vld [vmem:[%s1 + $0x4] sm:$0xf]
  %v54 = vld [vmem:[%s1 + $0x8] sm:$0xf]
  %v55 = vld [vmem:[%s1 + $0xc] sm:$0xf]
  %v56 = vld [vmem:[%s1 + $0x10] sm:$0xf]
  %v57 = vld [vmem:[%s1 + $0x14] sm:$0xf]
  %v58 = vld [vmem:[%s1 + $0x18] sm:$0xf]
  %v59 = vld [vmem:[%s1 + $0x1c] sm:$0xf]
  %v60 = vld [vmem:[%s1 + $0x20] sm:$0xf]
  %v61 = vld [vmem:[%s1 + $0x24] sm:$0xf]
  %v62 = vld [vmem:[%s1 + $0x28] sm:$0xf]
  %v63 = vld [vmem:[%s1 + $0x2c] sm:$0xf]
  %v64 = vld [vmem:[%s1 + $0x30] sm:$0xf]
  %v65 = vld [vmem:[%s1 + $0x34] sm:$0xf]
  %v66 = vld [vmem:[%s1 + $0x38] sm:$0xf]
  %v67 = vld [vmem:[%s1 + $0x3c] sm:$0xf]
  %v77 = vunpack.c.l.b16 %v43
  %v78 = vunpack.c.l.b16 %v44
  %v79 = vunpack.c.l.b16 %v45
  %v80 = vunpack.c.l.b16 %v46
  %v81 = vunpack.c.l.b16 %v47
  %v82 = vunpack.c.l.b16 %v48
  %v83 = vunpack.c.l.b16 %v49
  %v84 = vunpack.c.l.b16 %v50
  %v85 = vunpack.c.l.b16 %v51
  %v86 = vpack.c.b16 %v78, %v77
  %v87 = vpack.c.b16 %v80, %v79
  %v88 = vpack.c.b16 %v82, %v81
  %v89 = vpack.c.b16 %v84, %v83
  %v90 = vpack.c.b16 %v85, %v85
  %v112 = vunpack.c.l.b16 %v52
  %v113 = vunpack.c.l.b16 %v53
  %v114 = vunpack.c.l.b16 %v54
  %v115 = vunpack.c.l.b16 %v55
  %v116 = vunpack.c.l.b16 %v56
  %v117 = vunpack.c.l.b16 %v57
  %v118 = vunpack.c.l.b16 %v58
  %v119 = vunpack.c.l.b16 %v59
  %v120 = vunpack.c.l.b16 %v60
  %v121 = vunpack.c.l.b16 %v61
  %v122 = vunpack.c.l.b16 %v62
  %v123 = vunpack.c.l.b16 %v63
  %v124 = vunpack.c.l.b16 %v64
  %v125 = vunpack.c.l.b16 %v65
  %v126 = vunpack.c.l.b16 %v66
  %v127 = vunpack.c.l.b16 %v67
  %v128 = vpack.c.b16 %v113, %v112
  %v129 = vpack.c.b16 %v115, %v114
  %v130 = vpack.c.b16 %v117, %v116
  %v131 = vpack.c.b16 %v119, %v118
  %v132 = vpack.c.b16 %v121, %v120
  %v133 = vpack.c.b16 %v123, %v122
  %v134 = vpack.c.b16 %v125, %v124
  %v135 = vpack.c.b16 %v127, %v126
  %144 = vmatprep.subr.bf16.mxu0 0
  %145 = vmatpush1.bf16.msra.mxu0 %v128
  %146 = vmatprep.subr.bf16.mxu0 0
  %147 = vmatpush1.bf16.msra.mxu0 %v129
  %148 = vmatprep.subr.bf16.mxu0 0
  %149 = vmatpush1.bf16.msra.mxu0 %v130
  %150 = vmatprep.subr.bf16.mxu0 0
  %151 = vmatpush1.bf16.msra.mxu0 %v131
  %152 = vmatprep.subr.bf16.mxu0 0
  %153 = vmatpush1.bf16.msra.mxu0 %v132
  %154 = vmatprep.subr.bf16.mxu0 0
  %155 = vmatpush1.bf16.msra.mxu0 %v133
  %156 = vmatprep.subr.bf16.mxu0 0
  %157 = vmatpush1.bf16.msra.mxu0 %v134
  %158 = vmatprep.subr.bf16.mxu0 0
  %159 = vmatpush1.bf16.msra.mxu0 %v135
  %160 = vmatprep.subr.bf16.mxu0 0
  %161 = vmatpush1.bf16.msra.mxu0 0
  %162 = vmatprep.subr.bf16.mxu0 0
  %163 = vmatpush1.bf16.msra.mxu0 0
  %164 = vmatprep.subr.bf16.mxu0 0
  %165 = vmatpush1.bf16.msra.mxu0 0
  %166 = vmatprep.subr.bf16.mxu0 0
  %167 = vmatpush1.bf16.msra.mxu0 0
  %168 = vmatprep.subr.bf16.mxu0 0
  %169 = vmatpush1.bf16.msra.mxu0 0
  %170 = vmatprep.subr.bf16.mxu0 0
  %171 = vmatpush1.bf16.msra.mxu0 0
  %172 = vmatprep.subr.bf16.mxu0 0
  %173 = vmatpush1.bf16.msra.mxu0 0
  %174 = vmatprep.subr.bf16.mxu0 0
  %175 = vmatpush1.bf16.msra.mxu0 0
  %176 = vmatprep.mubr.bf16.mxu0 0
  %177 = vmatmul.mubr.bf16.gmra.mrb[0].mxu0 %v86
  %v178 = vpop.f32.mrb[0].mxu0
  %v179 = vadd.f32 0.0, %v178
  %v180 = vpop.f32.mrb[0].mxu0
  %v181 = vpop.f32.mrb[0].mxu0
  %v182 = vadd.f32 0.0, %v181
  %v183 = vpop.f32.mrb[0].mxu0
  %184 = vmatprep.mubr.bf16.mxu0 0
  %185 = vmatmul.mubr.bf16.gmra.mrb[0].mxu0 %v87
  %v186 = vpop.f32.mrb[0].mxu0
  %v187 = vadd.f32 0.0, %v186
  %v188 = vpop.f32.mrb[0].mxu0
  %v189 = vpop.f32.mrb[0].mxu0
  %v190 = vadd.f32 0.0, %v189
  %v191 = vpop.f32.mrb[0].mxu0
  %192 = vmatprep.mubr.bf16.mxu0 0
  %193 = vmatmul.mubr.bf16.gmra.mrb[0].mxu0 %v88
  %v194 = vpop.f32.mrb[0].mxu0
  %v195 = vadd.f32 0.0, %v194
  %v196 = vpop.f32.mrb[0].mxu0
  %v197 = vpop.f32.mrb[0].mxu0
  %v198 = vadd.f32 0.0, %v197
  %v199 = vpop.f32.mrb[0].mxu0
  %200 = vmatprep.mubr.bf16.mxu0 0
  %201 = vmatmul.mubr.bf16.gmra.mrb[0].mxu0 %v89
  %v202 = vpop.f32.mrb[0].mxu0
  %v203 = vadd.f32 0.0, %v202
  %v204 = vpop.f32.mrb[0].mxu0
  %v205 = vpop.f32.mrb[0].mxu0
  %v206 = vadd.f32 0.0, %v205
  %v207 = vpop.f32.mrb[0].mxu0
  %208 = vmatprep.mubr.bf16.mxu0 0
  %209 = vmatmul.mubr.bf16.gmra.mrb[0].mxu0 %v90
  %v210 = vpop.f32.mrb[0].mxu0
  %v211 = vadd.f32 0.0, %v210
  %v212 = vpop.f32.mrb[0].mxu0
  %v213 = vpop.f32.mrb[0].mxu0
  %v214 = vpop.f32.mrb[0].mxu0
  %215 = vdwg.mxu0
  %v216 = vadd.f32 %v34, %v179
  %v217 = vadd.f32 %v35, %v182
  %v218 = vadd.f32 %v36, %v187
  %v219 = vadd.f32 %v37, %v190
  %v220 = vadd.f32 %v38, %v195
  %v221 = vadd.f32 %v39, %v198
  %v222 = vadd.f32 %v40, %v203
  %v223 = vadd.f32 %v41, %v206
  %v224 = vadd.f32 %v42, %v211
  %225 = vst [vmem:[#allocation2] sm:$0xff] %v216
  %226 = vst [vmem:[#allocation2 + $0x8] sm:$0xff] %v217
  %227 = vst [vmem:[#allocation2 + $0x10] sm:$0xff] %v218
  %228 = vst [vmem:[#allocation2 + $0x18] sm:$0xff] %v219
  %229 = vst [vmem:[#allocation2 + $0x20] sm:$0xff] %v220
  %230 = vst [vmem:[#allocation2 + $0x28] sm:$0xff] %v221
  %231 = vst [vmem:[#allocation2 + $0x30] sm:$0xff] %v222
  %232 = vst [vmem:[#allocation2 + $0x38] sm:$0xff] %v223
  %233 = vst [vmem:[#allocation2 + $0x40] sm:$0xff] %v224
  // Predicated region
  $region26: #{_lambda_.22} parent=0 // pred_check
    %p234 = pneg %p21
  $region27: #{_lambda_.22} parent=0 // pred_check_branch
    %236 = sbr.rel (%p234) target = $region29
  $region28: #{_lambda_.22} parent=0 // pred_region
    %v237 = vld [vmem:[#allocation2] sm:$0xff]
    %v238 = vld [vmem:[#allocation2 + $0x8] sm:$0xff]
    %v239 = vld [vmem:[#allocation2 + $0x10] sm:$0xff]
    %v240 = vld [vmem:[#allocation2 + $0x18] sm:$0xff]
    %v241 = vld [vmem:[#allocation2 + $0x20] sm:$0xff]
    %v242 = vld [vmem:[#allocation2 + $0x28] sm:$0xff]
    %v243 = vld [vmem:[#allocation2 + $0x30] sm:$0xff]
    %v244 = vld [vmem:[#allocation2 + $0x38] sm:$0xff]
    %v245 = vld [vmem:[#allocation2 + $0x40] sm:$0xff]
    %v246 = vld [vmem:[%s2] sm:$0x1]
    %v248 = vlaneseq
    %v249 = vshrl.u32 %v248, 7
    %v250 = vsub.s32 0, %v249
    %v251 = vrot.slane %v246, %v250
    %v253 = vmul.f32 %v237, %v251
    %v254 = vmul.f32 %v238, %v251
    %v255 = vmul.f32 %v239, %v251
    %v256 = vmul.f32 %v240, %v251
    %v257 = vmul.f32 %v241, %v251
    %v258 = vmul.f32 %v242, %v251
    %v259 = vmul.f32 %v243, %v251
    %v260 = vmul.f32 %v244, %v251
    %v261 = vmul.f32 %v245, %v251
    %v262 = vld [vmem:[%s3] sm:$0x1]
    %v264 = vlaneseq
    %v265 = vshrl.u32 %v264, 7
    %v266 = vsub.s32 0, %v265
    %v267 = vrot.slane %v262, %v266
    %v269 = vadd.f32 %v253, %v267
    %v270 = vadd.f32 %v254, %v267
    %v271 = vadd.f32 %v255, %v267
    %v272 = vadd.f32 %v256, %v267
    %v273 = vadd.f32 %v257, %v267
    %v274 = vadd.f32 %v258, %v267
    %v275 = vadd.f32 %v259, %v267
    %v276 = vadd.f32 %v260, %v267
    %v277 = vadd.f32 %v261, %v267
    %v278 = vld [vmem:[%s4] sm:$0xff]
    %v279 = vld [vmem:[%s4 + $0x8] sm:$0xff]
    %v280 = vld [vmem:[%s4 + $0x10] sm:$0xff]
    %v281 = vld [vmem:[%s4 + $0x18] sm:$0xff]
    %v282 = vld [vmem:[%s4 + $0x20] sm:$0xff]
    %v283 = vld [vmem:[%s4 + $0x28] sm:$0xff]
    %v284 = vld [vmem:[%s4 + $0x30] sm:$0xff]
    %v285 = vld [vmem:[%s4 + $0x38] sm:$0xff]
    %v286 = vld [vmem:[%s4 + $0x40] sm:$0xff]
    %v287 = vadd.f32 %v269, %v278
    %v288 = vadd.f32 %v270, %v279
    %v289 = vadd.f32 %v271, %v280
    %v290 = vadd.f32 %v272, %v281
    %v291 = vadd.f32 %v273, %v282
    %v292 = vadd.f32 %v274, %v283
    %v293 = vadd.f32 %v275, %v284
    %v294 = vadd.f32 %v276, %v285
    %v295 = vadd.f32 %v277, %v286
    %v296 = vmax.f32 %v287, 0.0
    %v297 = vmax.f32 %v288, 0.0
    %v298 = vmax.f32 %v289, 0.0
    %v299 = vmax.f32 %v290, 0.0
    %v300 = vmax.f32 %v291, 0.0
    %v301 = vmax.f32 %v292, 0.0
    %v302 = vmax.f32 %v293, 0.0
    %v303 = vmax.f32 %v294, 0.0
    %v304 = vmax.f32 %v295, 0.0
    %305 = vst [vmem:[%s5] sm:$0xff] %v296
    %306 = vst [vmem:[%s5 + $0x8] sm:$0xff] %v297
    %307 = vst [vmem:[%s5 + $0x10] sm:$0xff] %v298
    %308 = vst [vmem:[%s5 + $0x18] sm:$0xff] %v299
    %309 = vst [vmem:[%s5 + $0x20] sm:$0xff] %v300
    %310 = vst [vmem:[%s5 + $0x28] sm:$0xff] %v301
    %311 = vst [vmem:[%s5 + $0x30] sm:$0xff] %v302
    %312 = vst [vmem:[%s5 + $0x38] sm:$0xff] %v303
    %313 = vst [vmem:[%s5 + $0x40] sm:$0xff] %v304
  $region29: #{_lambda_.22} parent=0 // pred_fallthru
    _
  // Predicated region
  $region30: #{_lambda_.22} parent=0 // pred_check
    _
  $region31: #{_lambda_.22} parent=0 // pred_check_branch
    %315 = sbr.rel (0) target = $region33
  $region32: #{_lambda_.22} parent=0 // pred_region
    _
  $region33: #{_lambda_.22} parent=0 // pred_fallthru
    _
  // Predicated region
  $region34: #{_lambda_.22} parent=0 // pred_check
    _
  $region35: #{_lambda_.22} parent=0 // pred_check_branch
    %317 = sbr.rel (0) target = $region37
  $region36: #{_lambda_.22} parent=0 // pred_region
    _
  $region37: #{_lambda_.22} parent=0 // pred_fallthru
    _

// kernel: _lambda_.24
$region0: #{_lambda_.24}
  #allocation0 [shape = 'u32[]', space=smem, size = 0x4, offset = 0x4, fixed_abs, tag = 'smem constant byte address 0x4 - core index']
  #allocation1 [shape = 'u32[144,128]{1,0:T(1,128)}', space=vmem, size = 0x12000, scoped, tag = 'internal scratch']
  #allocation2 [shape = 'f32[24,128]{1,0:T(8,128)}', space=vmem, size = 0x3000, scoped, tag = 'scratch operand']
  %s0 = inlined_call_operand.vmem [shape: bf16[24,384], index: 0, kind: input, shape index: {}]
  %s1 = inlined_call_operand.vmem [shape: bf16[384,128], index: 1, kind: input, shape index: {}]
  %s2 = inlined_call_operand.vmem [shape: f32[1,128], index: 2, kind: input, shape index: {}]
  %s3 = inlined_call_operand.vmem [shape: f32[1,128], index: 3, kind: input, shape index: {}]
  %s4 = inlined_call_operand.vmem [shape: f32[24,128], index: 4, kind: output, shape index: {}]
  %s5 = sld [smem:[#allocation0]]
  $region34: #{_lambda_.24} parent=0
    _
  %s7 = ssub.s32 1, %s5
  %s8 = scalar_select 0, %s7, %s5
  // Predicated region
  $region2: #{_lambda_.24} parent=0 // pred_check
    _
  $region3: #{_lambda_.24} parent=0 // pred_check_branch
    %10 = sbr.rel (0) target = $region5
  $region4: #{_lambda_.24} parent=0 // pred_region
    _
  $region5: #{_lambda_.24} parent=0 // pred_fallthru
    _
  // Predicated region
  $region6: #{_lambda_.24} parent=0 // pred_check
    _
  $region7: #{_lambda_.24} parent=0 // pred_check_branch
    %12 = sbr.rel (0) target = $region9
  $region8: #{_lambda_.24} parent=0 // pred_region
    _
  $region9: #{_lambda_.24} parent=0 // pred_fallthru
    _
  // Predicated region
  $region10: #{_lambda_.24} parent=0 // pred_check
    _
  $region11: #{_lambda_.24} parent=0 // pred_check_branch
    %14 = sbr.rel (0) target = $region13
  $region12: #{_lambda_.24} parent=0 // pred_region
    _
  $region13: #{_lambda_.24} parent=0 // pred_fallthru
    _
  // Predicated region
  $region14: #{_lambda_.24} parent=0 // pred_check
    _
  $region15: #{_lambda_.24} parent=0 // pred_check_branch
    %16 = sbr.rel (0) target = $region17
  $region16: #{_lambda_.24} parent=0 // pred_region
    _
  $region17: #{_lambda_.24} parent=0 // pred_fallthru
    _
  %p18 = scmp.eq.s32.totalorder 0, 0
  // Predicated region
  $region18: #{_lambda_.24} parent=0 // pred_check
    %p19 = pneg %p18
  $region19: #{_lambda_.24} parent=0 // pred_check_branch
    %21 = sbr.rel (%p19) target = $region21
  $region20: #{_lambda_.24} parent=0 // pred_region
    %22 = vst [vmem:[#allocation2] sm:$0xff] 0.0
    %23 = vst [vmem:[#allocation2 + $0x8] sm:$0xff] 0.0
    %24 = vst [vmem:[#allocation2 + $0x10] sm:$0xff] 0.0
  $region21: #{_lambda_.24} parent=0 // pred_fallthru
    _
  %v25 = vld [vmem:[#allocation2] sm:$0xff]
  %v26 = vld [vmem:[#allocation2 + $0x8] sm:$0xff]
  %v27 = vld [vmem:[#allocation2 + $0x10] sm:$0xff]
  %v28 = vld [vmem:[%s0] sm:$0xff]
  %v29 = vld [vmem:[%s0 + $0x8] sm:$0xf]
  %v30 = vld [vmem:[%s0 + $0xc] sm:$0xff]
  %v31 = vld [vmem:[%s0 + $0x14] sm:$0xf]
  %v32 = vld [vmem:[%s0 + $0x18] sm:$0xff]
  %v33 = vld [vmem:[%s0 + $0x20] sm:$0xf]
  %v34 = vld [vmem:[%s1] sm:$0xf]
  %v35 = vld [vmem:[%s1 + $0x4] sm:$0xf]
  %v36 = vld [vmem:[%s1 + $0x8] sm:$0xf]
  %v37 = vld [vmem:[%s1 + $0xc] sm:$0xf]
  %v38 = vld [vmem:[%s1 + $0x10] sm:$0xf]
  %v39 = vld [vmem:[%s1 + $0x14] sm:$0xf]
  %v40 = vld [vmem:[%s1 + $0x18] sm:$0xf]
  %v41 = vld [vmem:[%s1 + $0x1c] sm:$0xf]
  %v42 = vld [vmem:[%s1 + $0x20] sm:$0xf]
  %v43 = vld [vmem:[%s1 + $0x24] sm:$0xf]
  %v44 = vld [vmem:[%s1 + $0x28] sm:$0xf]
  %v45 = vld [vmem:[%s1 + $0x2c] sm:$0xf]
  %v46 = vld [vmem:[%s1 + $0x30] sm:$0xf]
  %v47 = vld [vmem:[%s1 + $0x34] sm:$0xf]
  %v48 = vld [vmem:[%s1 + $0x38] sm:$0xf]
  %v49 = vld [vmem:[%s1 + $0x3c] sm:$0xf]
  %v50 = vld [vmem:[%s1 + $0x40] sm:$0xf]
  %v51 = vld [vmem:[%s1 + $0x44] sm:$0xf]
  %v52 = vld [vmem:[%s1 + $0x48] sm:$0xf]
  %v53 = vld [vmem:[%s1 + $0x4c] sm:$0xf]
  %v54 = vld [vmem:[%s1 + $0x50] sm:$0xf]
  %v55 = vld [vmem:[%s1 + $0x54] sm:$0xf]
  %v56 = vld [vmem:[%s1 + $0x58] sm:$0xf]
  %v57 = vld [vmem:[%s1 + $0x5c] sm:$0xf]
  %v58 = vld [vmem:[%s1 + $0x60] sm:$0xf]
  %v59 = vld [vmem:[%s1 + $0x64] sm:$0xf]
  %v60 = vld [vmem:[%s1 + $0x68] sm:$0xf]
  %v61 = vld [vmem:[%s1 + $0x6c] sm:$0xf]
  %v62 = vld [vmem:[%s1 + $0x70] sm:$0xf]
  %v63 = vld [vmem:[%s1 + $0x74] sm:$0xf]
  %v64 = vld [vmem:[%s1 + $0x78] sm:$0xf]
  %v65 = vld [vmem:[%s1 + $0x7c] sm:$0xf]
  %v66 = vld [vmem:[%s1 + $0x80] sm:$0xf]
  %v67 = vld [vmem:[%s1 + $0x84] sm:$0xf]
  %v68 = vld [vmem:[%s1 + $0x88] sm:$0xf]
  %v69 = vld [vmem:[%s1 + $0x8c] sm:$0xf]
  %v70 = vld [vmem:[%s1 + $0x90] sm:$0xf]
  %v71 = vld [vmem:[%s1 + $0x94] sm:$0xf]
  %v72 = vld [vmem:[%s1 + $0x98] sm:$0xf]
  %v73 = vld [vmem:[%s1 + $0x9c] sm:$0xf]
  %v74 = vld [vmem:[%s1 + $0xa0] sm:$0xf]
  %v75 = vld [vmem:[%s1 + $0xa4] sm:$0xf]
  %v76 = vld [vmem:[%s1 + $0xa8] sm:$0xf]
  %v77 = vld [vmem:[%s1 + $0xac] sm:$0xf]
  %v78 = vld [vmem:[%s1 + $0xb0] sm:$0xf]
  %v79 = vld [vmem:[%s1 + $0xb4] sm:$0xf]
  %v80 = vld [vmem:[%s1 + $0xb8] sm:$0xf]
  %v81 = vld [vmem:[%s1 + $0xbc] sm:$0xf]
  %v88 = vunpack.c.l.b16 %v28
  %v89 = vunpack.c.h.b16 %v28
  %v90 = vunpack.c.l.b16 %v29
  %v91 = vunpack.c.l.b16 %v30
  %v92 = vunpack.c.h.b16 %v30
  %v93 = vunpack.c.l.b16 %v31
  %v94 = vunpack.c.l.b16 %v32
  %v95 = vunpack.c.h.b16 %v32
  %v96 = vunpack.c.l.b16 %v33
  %v97 = vpack.c.b16 %v91, %v88
  %v98 = vpack.c.b16 %v92, %v89
  %v99 = vpack.c.b16 %v93, %v90
  %v100 = vpack.c.b16 %v94, %v94
  %v101 = vpack.c.b16 %v95, %v95
  %v102 = vpack.c.b16 %v96, %v96
  %v157 = vunpack.c.l.b16 %v34
  %v158 = vunpack.c.l.b16 %v35
  %v159 = vunpack.c.l.b16 %v36
  %v160 = vunpack.c.l.b16 %v37
  %v161 = vunpack.c.l.b16 %v38
  %v162 = vunpack.c.l.b16 %v39
  %v163 = vunpack.c.l.b16 %v40
  %v164 = vunpack.c.l.b16 %v41
  %v165 = vunpack.c.l.b16 %v42
  %v166 = vunpack.c.l.b16 %v43
  %v167 = vunpack.c.l.b16 %v44
  %v168 = vunpack.c.l.b16 %v45
  %v169 = vunpack.c.l.b16 %v46
  %v170 = vunpack.c.l.b16 %v47
  %v171 = vunpack.c.l.b16 %v48
  %v172 = vunpack.c.l.b16 %v49
  %v173 = vunpack.c.l.b16 %v50
  %v174 = vunpack.c.l.b16 %v51
  %v175 = vunpack.c.l.b16 %v52
  %v176 = vunpack.c.l.b16 %v53
  %v177 = vunpack.c.l.b16 %v54
  %v178 = vunpack.c.l.b16 %v55
  %v179 = vunpack.c.l.b16 %v56
  %v180 = vunpack.c.l.b16 %v57
  %v181 = vunpack.c.l.b16 %v58
  %v182 = vunpack.c.l.b16 %v59
  %v183 = vunpack.c.l.b16 %v60
  %v184 = vunpack.c.l.b16 %v61
  %v185 = vunpack.c.l.b16 %v62
  %v186 = vunpack.c.l.b16 %v63
  %v187 = vunpack.c.l.b16 %v64
  %v188 = vunpack.c.l.b16 %v65
  %v189 = vunpack.c.l.b16 %v66
  %v190 = vunpack.c.l.b16 %v67
  %v191 = vunpack.c.l.b16 %v68
  %v192 = vunpack.c.l.b16 %v69
  %v193 = vunpack.c.l.b16 %v70
  %v194 = vunpack.c.l.b16 %v71
  %v195 = vunpack.c.l.b16 %v72
  %v196 = vunpack.c.l.b16 %v73
  %v197 = vunpack.c.l.b16 %v74
  %v198 = vunpack.c.l.b16 %v75
  %v199 = vunpack.c.l.b16 %v76
  %v200 = vunpack.c.l.b16 %v77
  %v201 = vunpack.c.l.b16 %v78
  %v202 = vunpack.c.l.b16 %v79
  %v203 = vunpack.c.l.b16 %v80
  %v204 = vunpack.c.l.b16 %v81
  %v205 = vpack.c.b16 %v158, %v157
  %v206 = vpack.c.b16 %v160, %v159
  %v207 = vpack.c.b16 %v162, %v161
  %v208 = vpack.c.b16 %v164, %v163
  %v209 = vpack.c.b16 %v166, %v165
  %v210 = vpack.c.b16 %v168, %v167
  %v211 = vpack.c.b16 %v170, %v169
  %v212 = vpack.c.b16 %v172, %v171
  %v213 = vpack.c.b16 %v174, %v173
  %v214 = vpack.c.b16 %v176, %v175
  %v215 = vpack.c.b16 %v178, %v177
  %v216 = vpack.c.b16 %v180, %v179
  %v217 = vpack.c.b16 %v182, %v181
  %v218 = vpack.c.b16 %v184, %v183
  %v219 = vpack.c.b16 %v186, %v185
  %v220 = vpack.c.b16 %v188, %v187
  %v221 = vpack.c.b16 %v190, %v189
  %v222 = vpack.c.b16 %v192, %v191
  %v223 = vpack.c.b16 %v194, %v193
  %v224 = vpack.c.b16 %v196, %v195
  %v225 = vpack.c.b16 %v198, %v197
  %v226 = vpack.c.b16 %v200, %v199
  %v227 = vpack.c.b16 %v202, %v201
  %v228 = vpack.c.b16 %v204, %v203
  %253 = vmatprep.subr.bf16.mxu0 0
  %254 = vmatpush1.bf16.msra.mxu0 %v205
  %255 = vmatprep.subr.bf16.mxu0 0
  %256 = vmatpush1.bf16.msra.mxu0 %v206
  %257 = vmatprep.subr.bf16.mxu0 0
  %258 = vmatpush1.bf16.msra.mxu0 %v207
  %259 = vmatprep.subr.bf16.mxu0 0
  %260 = vmatpush1.bf16.msra.mxu0 %v208
  %261 = vmatprep.subr.bf16.mxu0 0
  %262 = vmatpush1.bf16.msra.mxu0 %v209
  %263 = vmatprep.subr.bf16.mxu0 0
  %264 = vmatpush1.bf16.msra.mxu0 %v210
  %265 = vmatprep.subr.bf16.mxu0 0
  %266 = vmatpush1.bf16.msra.mxu0 %v211
  %267 = vmatprep.subr.bf16.mxu0 0
  %268 = vmatpush1.bf16.msra.mxu0 %v212
  %269 = vmatprep.subr.bf16.mxu0 0
  %270 = vmatpush1.bf16.msra.mxu0 %v213
  %271 = vmatprep.subr.bf16.mxu0 0
  %272 = vmatpush1.bf16.msra.mxu0 %v214
  %273 = vmatprep.subr.bf16.mxu0 0
  %274 = vmatpush1.bf16.msra.mxu0 %v215
  %275 = vmatprep.subr.bf16.mxu0 0
  %276 = vmatpush1.bf16.msra.mxu0 %v216
  %277 = vmatprep.subr.bf16.mxu0 0
  %278 = vmatpush1.bf16.msra.mxu0 %v217
  %279 = vmatprep.subr.bf16.mxu0 0
  %280 = vmatpush1.bf16.msra.mxu0 %v218
  %281 = vmatprep.subr.bf16.mxu0 0
  %282 = vmatpush1.bf16.msra.mxu0 %v219
  %283 = vmatprep.subr.bf16.mxu0 0
  %284 = vmatpush1.bf16.msra.mxu0 %v220
  %285 = vmatprep.mubr.bf16.mxu0 %v98
  %286 = vmatmul.mubr.bf16.gmra.mrb[0].mxu0 %v97
  %v287 = vpop.f32.mrb[0].mxu0
  %v288 = vadd.f32 0.0, %v287
  %v289 = vpop.f32.mrb[0].mxu0
  %v290 = vpop.f32.mrb[0].mxu0
  %v291 = vadd.f32 0.0, %v290
  %v292 = vpop.f32.mrb[0].mxu0
  %293 = vmatprep.mubr.bf16.mxu0 %v101
  %294 = vmatmul.mubr.bf16.gmra.mrb[0].mxu0 %v100
  %v295 = vpop.f32.mrb[0].mxu0
  %v296 = vadd.f32 0.0, %v295
  %v297 = vpop.f32.mrb[0].mxu0
  %v298 = vpop.f32.mrb[0].mxu0
  %v299 = vpop.f32.mrb[0].mxu0
  %300 = vdwg.mxu0
  %301 = vmatprep.subr.bf16.mxu0 0
  %302 = vmatpush1.bf16.msra.mxu0 %v221
  %303 = vmatprep.subr.bf16.mxu0 0
  %304 = vmatpush1.bf16.msra.mxu0 %v222
  %305 = vmatprep.subr.bf16.mxu0 0
  %306 = vmatpush1.bf16.msra.mxu0 %v223
  %307 = vmatprep.subr.bf16.mxu0 0
  %308 = vmatpush1.bf16.msra.mxu0 %v224
  %309 = vmatprep.subr.bf16.mxu0 0
  %310 = vmatpush1.bf16.msra.mxu0 %v225
  %311 = vmatprep.subr.bf16.mxu0 0
  %312 = vmatpush1.bf16.msra.mxu0 %v226
  %313 = vmatprep.subr.bf16.mxu0 0
  %314 = vmatpush1.bf16.msra.mxu0 %v227
  %315 = vmatprep.subr.bf16.mxu0 0
  %316 = vmatpush1.bf16.msra.mxu0 %v228
  %317 = vmatprep.subr.bf16.mxu0 0
  %318 = vmatpush1.bf16.msra.mxu0 0
  %319 = vmatprep.subr.bf16.mxu0 0
  %320 = vmatpush1.bf16.msra.mxu0 0
  %321 = vmatprep.subr.bf16.mxu0 0
  %322 = vmatpush1.bf16.msra.mxu0 0
  %323 = vmatprep.subr.bf16.mxu0 0
  %324 = vmatpush1.bf16.msra.mxu0 0
  %325 = vmatprep.subr.bf16.mxu0 0
  %326 = vmatpush1.bf16.msra.mxu0 0
  %327 = vmatprep.subr.bf16.mxu0 0
  %328 = vmatpush1.bf16.msra.mxu0 0
  %329 = vmatprep.subr.bf16.mxu0 0
  %330 = vmatpush1.bf16.msra.mxu0 0
  %331 = vmatprep.subr.bf16.mxu0 0
  %332 = vmatpush1.bf16.msra.mxu0 0
  %333 = vmatprep.mubr.bf16.mxu0 0
  %334 = vmatmul.mubr.bf16.gmra.mrb[0].mxu0 %v99
  %v335 = vpop.f32.mrb[0].mxu0
  %v336 = vadd.f32 %v288, %v335
  %v337 = vpop.f32.mrb[0].mxu0
  %v338 = vpop.f32.mrb[0].mxu0
  %v339 = vadd.f32 %v291, %v338
  %v340 = vpop.f32.mrb[0].mxu0
  %341 = vmatprep.mubr.bf16.mxu0 0
  %342 = vmatmul.mubr.bf16.gmra.mrb[0].mxu0 %v102
  %v343 = vpop.f32.mrb[0].mxu0
  %v344 = vadd.f32 %v296, %v343
  %v345 = vpop.f32.mrb[0].mxu0
  %v346 = vpop.f32.mrb[0].mxu0
  %v347 = vpop.f32.mrb[0].mxu0
  %348 = vdwg.mxu0
  %v349 = vadd.f32 %v25, %v336
  %v350 = vadd.f32 %v26, %v339
  %v351 = vadd.f32 %v27, %v344
  %352 = vst [vmem:[#allocation2] sm:$0xff] %v349
  %353 = vst [vmem:[#allocation2 + $0x8] sm:$0xff] %v350
  %354 = vst [vmem:[#allocation2 + $0x10] sm:$0xff] %v351
  // Predicated region
  $region22: #{_lambda_.24} parent=0 // pred_check
    %p355 = pneg %p18
  $region23: #{_lambda_.24} parent=0 // pred_check_branch
    %357 = sbr.rel (%p355) target = $region25
  $region24: #{_lambda_.24} parent=0 // pred_region
    %v358 = vld [vmem:[#allocation2] sm:$0xff]
    %v359 = vld [vmem:[#allocation2 + $0x8] sm:$0xff]
    %v360 = vld [vmem:[#allocation2 + $0x10] sm:$0xff]
    %v361 = vld [vmem:[%s2] sm:$0x1]
    %v363 = vlaneseq
    %v364 = vshrl.u32 %v363, 7
    %v365 = vsub.s32 0, %v364
    %v366 = vrot.slane %v361, %v365
    %v368 = vmul.f32 %v358, %v366
    %v369 = vmul.f32 %v359, %v366
    %v370 = vmul.f32 %v360, %v366
    %v371 = vld [vmem:[%s3] sm:$0x1]
    %v373 = vlaneseq
    %v374 = vshrl.u32 %v373, 7
    %v375 = vsub.s32 0, %v374
    %v376 = vrot.slane %v371, %v375
    %v378 = vadd.f32 %v368, %v376
    %v379 = vadd.f32 %v369, %v376
    %v380 = vadd.f32 %v370, %v376
    %v381 = vmax.f32 %v378, 0.0
    %v382 = vmax.f32 %v379, 0.0
    %v383 = vmax.f32 %v380, 0.0
    %384 = vst [vmem:[%s4] sm:$0xff] %v381
    %385 = vst [vmem:[%s4 + $0x8] sm:$0xff] %v382
    %386 = vst [vmem:[%s4 + $0x10] sm:$0xff] %v383
  $region25: #{_lambda_.24} parent=0 // pred_fallthru
    _
  // Predicated region
  $region26: #{_lambda_.24} parent=0 // pred_check
    _
  $region27: #{_lambda_.24} parent=0 // pred_check_branch
    %388 = sbr.rel (0) target = $region29
  $region28: #{_lambda_.24} parent=0 // pred_region
    _
  $region29: #{_lambda_.24} parent=0 // pred_fallthru
    _
  // Predicated region
  $region30: #{_lambda_.24} parent=0 // pred_check
    _
  $region31: #{_lambda_.24} parent=0 // pred_check_branch
    %390 = sbr.rel (0) target = $region33
  $region32: #{_lambda_.24} parent=0 // pred_region
    _
  $region33: #{_lambda_.24} parent=0 // pred_fallthru
    _

// kernel: _lambda_.25
$region0: #{_lambda_.25}
  #allocation0 [shape = 'u32[]', space=smem, size = 0x4, offset = 0x4, fixed_abs, tag = 'smem constant byte address 0x4 - core index']
  #allocation1 [shape = 'u32[144,128]{1,0:T(1,128)}', space=vmem, size = 0x12000, scoped, tag = 'internal scratch']
  #allocation2 [shape = 'f32[24,128]{1,0:T(8,128)}', space=vmem, size = 0x3000, scoped, tag = 'scratch operand']
  %s0 = inlined_call_operand.vmem [shape: bf16[24,128], index: 0, kind: input, shape index: {}]
  %s1 = inlined_call_operand.vmem [shape: bf16[128,128], index: 1, kind: input, shape index: {}]
  %s2 = inlined_call_operand.vmem [shape: f32[1,128], index: 2, kind: input, shape index: {}]
  %s3 = inlined_call_operand.vmem [shape: f32[1,128], index: 3, kind: input, shape index: {}]
  %s4 = inlined_call_operand.vmem [shape: f32[24,128], index: 4, kind: output, shape index: {}]
  %s5 = sld [smem:[#allocation0]]
  $region34: #{_lambda_.25} parent=0
    _
  %s7 = ssub.s32 1, %s5
  %s8 = scalar_select 0, %s7, %s5
  // Predicated region
  $region2: #{_lambda_.25} parent=0 // pred_check
    _
  $region3: #{_lambda_.25} parent=0 // pred_check_branch
    %10 = sbr.rel (0) target = $region5
  $region4: #{_lambda_.25} parent=0 // pred_region
    _
  $region5: #{_lambda_.25} parent=0 // pred_fallthru
    _
  // Predicated region
  $region6: #{_lambda_.25} parent=0 // pred_check
    _
  $region7: #{_lambda_.25} parent=0 // pred_check_branch
    %12 = sbr.rel (0) target = $region9
  $region8: #{_lambda_.25} parent=0 // pred_region
    _
  $region9: #{_lambda_.25} parent=0 // pred_fallthru
    _
  // Predicated region
  $region10: #{_lambda_.25} parent=0 // pred_check
    _
  $region11: #{_lambda_.25} parent=0 // pred_check_branch
    %14 = sbr.rel (0) target = $region13
  $region12: #{_lambda_.25} parent=0 // pred_region
    _
  $region13: #{_lambda_.25} parent=0 // pred_fallthru
    _
  // Predicated region
  $region14: #{_lambda_.25} parent=0 // pred_check
    _
  $region15: #{_lambda_.25} parent=0 // pred_check_branch
    %16 = sbr.rel (0) target = $region17
  $region16: #{_lambda_.25} parent=0 // pred_region
    _
  $region17: #{_lambda_.25} parent=0 // pred_fallthru
    _
  %p18 = scmp.eq.s32.totalorder 0, 0
  // Predicated region
  $region18: #{_lambda_.25} parent=0 // pred_check
    %p19 = pneg %p18
  $region19: #{_lambda_.25} parent=0 // pred_check_branch
    %21 = sbr.rel (%p19) target = $region21
  $region20: #{_lambda_.25} parent=0 // pred_region
    %22 = vst [vmem:[#allocation2] sm:$0xff] 0.0
    %23 = vst [vmem:[#allocation2 + $0x8] sm:$0xff] 0.0
    %24 = vst [vmem:[#allocation2 + $0x10] sm:$0xff] 0.0
  $region21: #{_lambda_.25} parent=0 // pred_fallthru
    _
  %v25 = vld [vmem:[#allocation2] sm:$0xff]
  %v26 = vld [vmem:[#allocation2 + $0x8] sm:$0xff]
  %v27 = vld [vmem:[#allocation2 + $0x10] sm:$0xff]
  %v28 = vld [vmem:[%s0] sm:$0xf]
  %v29 = vld [vmem:[%s0 + $0x4] sm:$0xf]
  %v30 = vld [vmem:[%s0 + $0x8] sm:$0xf]
  %v31 = vld [vmem:[%s1] sm:$0xf]
  %v32 = vld [vmem:[%s1 + $0x4] sm:$0xf]
  %v33 = vld [vmem:[%s1 + $0x8] sm:$0xf]
  %v34 = vld [vmem:[%s1 + $0xc] sm:$0xf]
  %v35 = vld [vmem:[%s1 + $0x10] sm:$0xf]
  %v36 = vld [vmem:[%s1 + $0x14] sm:$0xf]
  %v37 = vld [vmem:[%s1 + $0x18] sm:$0xf]
  %v38 = vld [vmem:[%s1 + $0x1c] sm:$0xf]
  %v39 = vld [vmem:[%s1 + $0x20] sm:$0xf]
  %v40 = vld [vmem:[%s1 + $0x24] sm:$0xf]
  %v41 = vld [vmem:[%s1 + $0x28] sm:$0xf]
  %v42 = vld [vmem:[%s1 + $0x2c] sm:$0xf]
  %v43 = vld [vmem:[%s1 + $0x30] sm:$0xf]
  %v44 = vld [vmem:[%s1 + $0x34] sm:$0xf]
  %v45 = vld [vmem:[%s1 + $0x38] sm:$0xf]
  %v46 = vld [vmem:[%s1 + $0x3c] sm:$0xf]
  %v50 = vunpack.c.l.b16 %v28
  %v51 = vunpack.c.l.b16 %v29
  %v52 = vunpack.c.l.b16 %v30
  %v53 = vpack.c.b16 %v51, %v50
  %v54 = vpack.c.b16 %v52, %v52
  %v73 = vunpack.c.l.b16 %v31
  %v74 = vunpack.c.l.b16 %v32
  %v75 = vunpack.c.l.b16 %v33
  %v76 = vunpack.c.l.b16 %v34
  %v77 = vunpack.c.l.b16 %v35
  %v78 = vunpack.c.l.b16 %v36
  %v79 = vunpack.c.l.b16 %v37
  %v80 = vunpack.c.l.b16 %v38
  %v81 = vunpack.c.l.b16 %v39
  %v82 = vunpack.c.l.b16 %v40
  %v83 = vunpack.c.l.b16 %v41
  %v84 = vunpack.c.l.b16 %v42
  %v85 = vunpack.c.l.b16 %v43
  %v86 = vunpack.c.l.b16 %v44
  %v87 = vunpack.c.l.b16 %v45
  %v88 = vunpack.c.l.b16 %v46
  %v89 = vpack.c.b16 %v74, %v73
  %v90 = vpack.c.b16 %v76, %v75
  %v91 = vpack.c.b16 %v78, %v77
  %v92 = vpack.c.b16 %v80, %v79
  %v93 = vpack.c.b16 %v82, %v81
  %v94 = vpack.c.b16 %v84, %v83
  %v95 = vpack.c.b16 %v86, %v85
  %v96 = vpack.c.b16 %v88, %v87
  %105 = vmatprep.subr.bf16.mxu0 0
  %106 = vmatpush1.bf16.msra.mxu0 %v89
  %107 = vmatprep.subr.bf16.mxu0 0
  %108 = vmatpush1.bf16.msra.mxu0 %v90
  %109 = vmatprep.subr.bf16.mxu0 0
  %110 = vmatpush1.bf16.msra.mxu0 %v91
  %111 = vmatprep.subr.bf16.mxu0 0
  %112 = vmatpush1.bf16.msra.mxu0 %v92
  %113 = vmatprep.subr.bf16.mxu0 0
  %114 = vmatpush1.bf16.msra.mxu0 %v93
  %115 = vmatprep.subr.bf16.mxu0 0
  %116 = vmatpush1.bf16.msra.mxu0 %v94
  %117 = vmatprep.subr.bf16.mxu0 0
  %118 = vmatpush1.bf16.msra.mxu0 %v95
  %119 = vmatprep.subr.bf16.mxu0 0
  %120 = vmatpush1.bf16.msra.mxu0 %v96
  %121 = vmatprep.subr.bf16.mxu0 0
  %122 = vmatpush1.bf16.msra.mxu0 0
  %123 = vmatprep.subr.bf16.mxu0 0
  %124 = vmatpush1.bf16.msra.mxu0 0
  %125 = vmatprep.subr.bf16.mxu0 0
  %126 = vmatpush1.bf16.msra.mxu0 0
  %127 = vmatprep.subr.bf16.mxu0 0
  %128 = vmatpush1.bf16.msra.mxu0 0
  %129 = vmatprep.subr.bf16.mxu0 0
  %130 = vmatpush1.bf16.msra.mxu0 0
  %131 = vmatprep.subr.bf16.mxu0 0
  %132 = vmatpush1.bf16.msra.mxu0 0
  %133 = vmatprep.subr.bf16.mxu0 0
  %134 = vmatpush1.bf16.msra.mxu0 0
  %135 = vmatprep.subr.bf16.mxu0 0
  %136 = vmatpush1.bf16.msra.mxu0 0
  %137 = vmatprep.mubr.bf16.mxu0 0
  %138 = vmatmul.mubr.bf16.gmra.mrb[0].mxu0 %v53
  %v139 = vpop.f32.mrb[0].mxu0
  %v140 = vadd.f32 0.0, %v139
  %v141 = vpop.f32.mrb[0].mxu0
  %v142 = vpop.f32.mrb[0].mxu0
  %v143 = vadd.f32 0.0, %v142
  %v144 = vpop.f32.mrb[0].mxu0
  %145 = vmatprep.mubr.bf16.mxu0 0
  %146 = vmatmul.mubr.bf16.gmra.mrb[0].mxu0 %v54
  %v147 = vpop.f32.mrb[0].mxu0
  %v148 = vadd.f32 0.0, %v147
  %v149 = vpop.f32.mrb[0].mxu0
  %v150 = vpop.f32.mrb[0].mxu0
  %v151 = vpop.f32.mrb[0].mxu0
  %152 = vdwg.mxu0
  %v153 = vadd.f32 %v25, %v140
  %v154 = vadd.f32 %v26, %v143
  %v155 = vadd.f32 %v27, %v148
  %156 = vst [vmem:[#allocation2] sm:$0xff] %v153
  %157 = vst [vmem:[#allocation2 + $0x8] sm:$0xff] %v154
  %158 = vst [vmem:[#allocation2 + $0x10] sm:$0xff] %v155
  // Predicated region
  $region22: #{_lambda_.25} parent=0 // pred_check
    %p159 = pneg %p18
  $region23: #{_lambda_.25} parent=0 // pred_check_branch
    %161 = sbr.rel (%p159) target = $region25
  $region24: #{_lambda_.25} parent=0 // pred_region
    %v162 = vld [vmem:[#allocation2] sm:$0xff]
    %v163 = vld [vmem:[#allocation2 + $0x8] sm:$0xff]
    %v164 = vld [vmem:[#allocation2 + $0x10] sm:$0xff]
    %v165 = vld [vmem:[%s2] sm:$0x1]
    %v167 = vlaneseq
    %v168 = vshrl.u32 %v167, 7
    %v169 = vsub.s32 0, %v168
    %v170 = vrot.slane %v165, %v169
    %v172 = vmul.f32 %v162, %v170
    %v173 = vmul.f32 %v163, %v170
    %v174 = vmul.f32 %v164, %v170
    %v175 = vld [vmem:[%s3] sm:$0x1]
    %v177 = vlaneseq
    %v178 = vshrl.u32 %v177, 7
    %v179 = vsub.s32 0, %v178
    %v180 = vrot.slane %v175, %v179
    %v182 = vadd.f32 %v172, %v180
    %v183 = vadd.f32 %v173, %v180
    %v184 = vadd.f32 %v174, %v180
    %185 = vst [vmem:[%s4] sm:$0xff] %v182
    %186 = vst [vmem:[%s4 + $0x8] sm:$0xff] %v183
    %187 = vst [vmem:[%s4 + $0x10] sm:$0xff] %v184
  $region25: #{_lambda_.25} parent=0 // pred_fallthru
    _
  // Predicated region
  $region26: #{_lambda_.25} parent=0 // pred_check
    _
  $region27: #{_lambda_.25} parent=0 // pred_check_branch
    %189 = sbr.rel (0) target = $region29
  $region28: #{_lambda_.25} parent=0 // pred_region
    _
  $region29: #{_lambda_.25} parent=0 // pred_fallthru
    _
  // Predicated region
  $region30: #{_lambda_.25} parent=0 // pred_check
    _
  $region31: #{_lambda_.25} parent=0 // pred_check_branch
    %191 = sbr.rel (0) target = $region33
  $region32: #{_lambda_.25} parent=0 // pred_region
    _
  $region33: #{_lambda_.25} parent=0 // pred_fallthru
    _

// kernel: _lambda_.26
$region0: #{_lambda_.26}
  #allocation0 [shape = 'u32[]', space=smem, size = 0x4, offset = 0x4, fixed_abs, tag = 'smem constant byte address 0x4 - core index']
  #allocation1 [shape = 'u32[144,128]{1,0:T(1,128)}', space=vmem, size = 0x12000, scoped, tag = 'internal scratch']
  #allocation2 [shape = 'f32[24,128]{1,0:T(8,128)}', space=vmem, size = 0x3000, scoped, tag = 'scratch operand']
  %s0 = inlined_call_operand.vmem [shape: bf16[24,128], index: 0, kind: input, shape index: {}]
  %s1 = inlined_call_operand.vmem [shape: bf16[128,128], index: 1, kind: input, shape index: {}]
  %s2 = inlined_call_operand.vmem [shape: f32[1,128], index: 2, kind: input, shape index: {}]
  %s3 = inlined_call_operand.vmem [shape: f32[1,128], index: 3, kind: input, shape index: {}]
  %s4 = inlined_call_operand.vmem [shape: f32[24,128], index: 4, kind: input, shape index: {}]
  %s5 = inlined_call_operand.vmem [shape: f32[24,128], index: 5, kind: output, shape index: {}]
  %s6 = sld [smem:[#allocation0]]
  $region38: #{_lambda_.26} parent=0
    _
  %s8 = ssub.s32 1, %s6
  %s9 = scalar_select 0, %s8, %s6
  // Predicated region
  $region2: #{_lambda_.26} parent=0 // pred_check
    _
  $region3: #{_lambda_.26} parent=0 // pred_check_branch
    %11 = sbr.rel (0) target = $region5
  $region4: #{_lambda_.26} parent=0 // pred_region
    _
  $region5: #{_lambda_.26} parent=0 // pred_fallthru
    _
  // Predicated region
  $region6: #{_lambda_.26} parent=0 // pred_check
    _
  $region7: #{_lambda_.26} parent=0 // pred_check_branch
    %13 = sbr.rel (0) target = $region9
  $region8: #{_lambda_.26} parent=0 // pred_region
    _
  $region9: #{_lambda_.26} parent=0 // pred_fallthru
    _
  // Predicated region
  $region10: #{_lambda_.26} parent=0 // pred_check
    _
  $region11: #{_lambda_.26} parent=0 // pred_check_branch
    %15 = sbr.rel (0) target = $region13
  $region12: #{_lambda_.26} parent=0 // pred_region
    _
  $region13: #{_lambda_.26} parent=0 // pred_fallthru
    _
  // Predicated region
  $region14: #{_lambda_.26} parent=0 // pred_check
    _
  $region15: #{_lambda_.26} parent=0 // pred_check_branch
    %17 = sbr.rel (0) target = $region17
  $region16: #{_lambda_.26} parent=0 // pred_region
    _
  $region17: #{_lambda_.26} parent=0 // pred_fallthru
    _
  // Predicated region
  $region18: #{_lambda_.26} parent=0 // pred_check
    _
  $region19: #{_lambda_.26} parent=0 // pred_check_branch
    %19 = sbr.rel (0) target = $region21
  $region20: #{_lambda_.26} parent=0 // pred_region
    _
  $region21: #{_lambda_.26} parent=0 // pred_fallthru
    _
  %p21 = scmp.eq.s32.totalorder 0, 0
  // Predicated region
  $region22: #{_lambda_.26} parent=0 // pred_check
    %p22 = pneg %p21
  $region23: #{_lambda_.26} parent=0 // pred_check_branch
    %24 = sbr.rel (%p22) target = $region25
  $region24: #{_lambda_.26} parent=0 // pred_region
    %25 = vst [vmem:[#allocation2] sm:$0xff] 0.0
    %26 = vst [vmem:[#allocation2 + $0x8] sm:$0xff] 0.0
    %27 = vst [vmem:[#allocation2 + $0x10] sm:$0xff] 0.0
  $region25: #{_lambda_.26} parent=0 // pred_fallthru
    _
  %v28 = vld [vmem:[#allocation2] sm:$0xff]
  %v29 = vld [vmem:[#allocation2 + $0x8] sm:$0xff]
  %v30 = vld [vmem:[#allocation2 + $0x10] sm:$0xff]
  %v31 = vld [vmem:[%s0] sm:$0xf]
  %v32 = vld [vmem:[%s0 + $0x4] sm:$0xf]
  %v33 = vld [vmem:[%s0 + $0x8] sm:$0xf]
  %v34 = vld [vmem:[%s1] sm:$0xf]
  %v35 = vld [vmem:[%s1 + $0x4] sm:$0xf]
  %v36 = vld [vmem:[%s1 + $0x8] sm:$0xf]
  %v37 = vld [vmem:[%s1 + $0xc] sm:$0xf]
  %v38 = vld [vmem:[%s1 + $0x10] sm:$0xf]
  %v39 = vld [vmem:[%s1 + $0x14] sm:$0xf]
  %v40 = vld [vmem:[%s1 + $0x18] sm:$0xf]
  %v41 = vld [vmem:[%s1 + $0x1c] sm:$0xf]
  %v42 = vld [vmem:[%s1 + $0x20] sm:$0xf]
  %v43 = vld [vmem:[%s1 + $0x24] sm:$0xf]
  %v44 = vld [vmem:[%s1 + $0x28] sm:$0xf]
  %v45 = vld [vmem:[%s1 + $0x2c] sm:$0xf]
  %v46 = vld [vmem:[%s1 + $0x30] sm:$0xf]
  %v47 = vld [vmem:[%s1 + $0x34] sm:$0xf]
  %v48 = vld [vmem:[%s1 + $0x38] sm:$0xf]
  %v49 = vld [vmem:[%s1 + $0x3c] sm:$0xf]
  %v53 = vunpack.c.l.b16 %v31
  %v54 = vunpack.c.l.b16 %v32
  %v55 = vunpack.c.l.b16 %v33
  %v56 = vpack.c.b16 %v54, %v53
  %v57 = vpack.c.b16 %v55, %v55
  %v76 = vunpack.c.l.b16 %v34
  %v77 = vunpack.c.l.b16 %v35
  %v78 = vunpack.c.l.b16 %v36
  %v79 = vunpack.c.l.b16 %v37
  %v80 = vunpack.c.l.b16 %v38
  %v81 = vunpack.c.l.b16 %v39
  %v82 = vunpack.c.l.b16 %v40
  %v83 = vunpack.c.l.b16 %v41
  %v84 = vunpack.c.l.b16 %v42
  %v85 = vunpack.c.l.b16 %v43
  %v86 = vunpack.c.l.b16 %v44
  %v87 = vunpack.c.l.b16 %v45
  %v88 = vunpack.c.l.b16 %v46
  %v89 = vunpack.c.l.b16 %v47
  %v90 = vunpack.c.l.b16 %v48
  %v91 = vunpack.c.l.b16 %v49
  %v92 = vpack.c.b16 %v77, %v76
  %v93 = vpack.c.b16 %v79, %v78
  %v94 = vpack.c.b16 %v81, %v80
  %v95 = vpack.c.b16 %v83, %v82
  %v96 = vpack.c.b16 %v85, %v84
  %v97 = vpack.c.b16 %v87, %v86
  %v98 = vpack.c.b16 %v89, %v88
  %v99 = vpack.c.b16 %v91, %v90
  %108 = vmatprep.subr.bf16.mxu0 0
  %109 = vmatpush1.bf16.msra.mxu0 %v92
  %110 = vmatprep.subr.bf16.mxu0 0
  %111 = vmatpush1.bf16.msra.mxu0 %v93
  %112 = vmatprep.subr.bf16.mxu0 0
  %113 = vmatpush1.bf16.msra.mxu0 %v94
  %114 = vmatprep.subr.bf16.mxu0 0
  %115 = vmatpush1.bf16.msra.mxu0 %v95
  %116 = vmatprep.subr.bf16.mxu0 0
  %117 = vmatpush1.bf16.msra.mxu0 %v96
  %118 = vmatprep.subr.bf16.mxu0 0
  %119 = vmatpush1.bf16.msra.mxu0 %v97
  %120 = vmatprep.subr.bf16.mxu0 0
  %121 = vmatpush1.bf16.msra.mxu0 %v98
  %122 = vmatprep.subr.bf16.mxu0 0
  %123 = vmatpush1.bf16.msra.mxu0 %v99
  %124 = vmatprep.subr.bf16.mxu0 0
  %125 = vmatpush1.bf16.msra.mxu0 0
  %126 = vmatprep.subr.bf16.mxu0 0
  %127 = vmatpush1.bf16.msra.mxu0 0
  %128 = vmatprep.subr.bf16.mxu0 0
  %129 = vmatpush1.bf16.msra.mxu0 0
  %130 = vmatprep.subr.bf16.mxu0 0
  %131 = vmatpush1.bf16.msra.mxu0 0
  %132 = vmatprep.subr.bf16.mxu0 0
  %133 = vmatpush1.bf16.msra.mxu0 0
  %134 = vmatprep.subr.bf16.mxu0 0
  %135 = vmatpush1.bf16.msra.mxu0 0
  %136 = vmatprep.subr.bf16.mxu0 0
  %137 = vmatpush1.bf16.msra.mxu0 0
  %138 = vmatprep.subr.bf16.mxu0 0
  %139 = vmatpush1.bf16.msra.mxu0 0
  %140 = vmatprep.mubr.bf16.mxu0 0
  %141 = vmatmul.mubr.bf16.gmra.mrb[0].mxu0 %v56
  %v142 = vpop.f32.mrb[0].mxu0
  %v143 = vadd.f32 0.0, %v142
  %v144 = vpop.f32.mrb[0].mxu0
  %v145 = vpop.f32.mrb[0].mxu0
  %v146 = vadd.f32 0.0, %v145
  %v147 = vpop.f32.mrb[0].mxu0
  %148 = vmatprep.mubr.bf16.mxu0 0
  %149 = vmatmul.mubr.bf16.gmra.mrb[0].mxu0 %v57
  %v150 = vpop.f32.mrb[0].mxu0
  %v151 = vadd.f32 0.0, %v150
  %v152 = vpop.f32.mrb[0].mxu0
  %v153 = vpop.f32.mrb[0].mxu0
  %v154 = vpop.f32.mrb[0].mxu0
  %155 = vdwg.mxu0
  %v156 = vadd.f32 %v28, %v143
  %v157 = vadd.f32 %v29, %v146
  %v158 = vadd.f32 %v30, %v151
  %159 = vst [vmem:[#allocation2] sm:$0xff] %v156
  %160 = vst [vmem:[#allocation2 + $0x8] sm:$0xff] %v157
  %161 = vst [vmem:[#allocation2 + $0x10] sm:$0xff] %v158
  // Predicated region
  $region26: #{_lambda_.26} parent=0 // pred_check
    %p162 = pneg %p21
  $region27: #{_lambda_.26} parent=0 // pred_check_branch
    %164 = sbr.rel (%p162) target = $region29
  $region28: #{_lambda_.26} parent=0 // pred_region
    %v165 = vld [vmem:[#allocation2] sm:$0xff]
    %v166 = vld [vmem:[#allocation2 + $0x8] sm:$0xff]
    %v167 = vld [vmem:[#allocation2 + $0x10] sm:$0xff]
    %v168 = vld [vmem:[%s2] sm:$0x1]
    %v170 = vlaneseq
    %v171 = vshrl.u32 %v170, 7
    %v172 = vsub.s32 0, %v171
    %v173 = vrot.slane %v168, %v172
    %v175 = vmul.f32 %v165, %v173
    %v176 = vmul.f32 %v166, %v173
    %v177 = vmul.f32 %v167, %v173
    %v178 = vld [vmem:[%s3] sm:$0x1]
    %v180 = vlaneseq
    %v181 = vshrl.u32 %v180, 7
    %v182 = vsub.s32 0, %v181
    %v183 = vrot.slane %v178, %v182
    %v185 = vadd.f32 %v175, %v183
    %v186 = vadd.f32 %v176, %v183
    %v187 = vadd.f32 %v177, %v183
    %v188 = vld [vmem:[%s4] sm:$0xff]
    %v189 = vld [vmem:[%s4 + $0x8] sm:$0xff]
    %v190 = vld [vmem:[%s4 + $0x10] sm:$0xff]
    %v191 = vadd.f32 %v185, %v188
    %v192 = vadd.f32 %v186, %v189
    %v193 = vadd.f32 %v187, %v190
    %v194 = vmax.f32 %v191, 0.0
    %v195 = vmax.f32 %v192, 0.0
    %v196 = vmax.f32 %v193, 0.0
    %197 = vst [vmem:[%s5] sm:$0xff] %v194
    %198 = vst [vmem:[%s5 + $0x8] sm:$0xff] %v195
    %199 = vst [vmem:[%s5 + $0x10] sm:$0xff] %v196
  $region29: #{_lambda_.26} parent=0 // pred_fallthru
    _
  // Predicated region
  $region30: #{_lambda_.26} parent=0 // pred_check
    _
  $region31: #{_lambda_.26} parent=0 // pred_check_branch
    %201 = sbr.rel (0) target = $region33
  $region32: #{_lambda_.26} parent=0 // pred_region
    _
  $region33: #{_lambda_.26} parent=0 // pred_fallthru
    _
  // Predicated region
  $region34: #{_lambda_.26} parent=0 // pred_check
    _
  $region35: #{_lambda_.26} parent=0 // pred_check_branch
    %203 = sbr.rel (0) target = $region37
  $region36: #{_lambda_.26} parent=0 // pred_region
    _
  $region37: #{_lambda_.26} parent=0 // pred_fallthru
    _

// kernel: _lambda_.27
$region0: #{_lambda_.27}
  #allocation0 [shape = 'u32[]', space=smem, size = 0x4, offset = 0x4, fixed_abs, tag = 'smem constant byte address 0x4 - core index']
  #allocation1 [shape = 'u32[144,128]{1,0:T(1,128)}', space=vmem, size = 0x12000, scoped, tag = 'internal scratch']
  #allocation2 [shape = 'f32[24,128]{1,0:T(8,128)}', space=vmem, size = 0x3000, scoped, tag = 'scratch operand']
  %s0 = inlined_call_operand.vmem [shape: bf16[24,128], index: 0, kind: input, shape index: {}]
  %s1 = inlined_call_operand.vmem [shape: bf16[128,128], index: 1, kind: input, shape index: {}]
  %s2 = inlined_call_operand.vmem [shape: f32[1,128], index: 2, kind: input, shape index: {}]
  %s3 = inlined_call_operand.vmem [shape: f32[1,128], index: 3, kind: input, shape index: {}]
  %s4 = inlined_call_operand.vmem [shape: f32[24,128], index: 4, kind: output, shape index: {}]
  %s5 = sld [smem:[#allocation0]]
  $region34: #{_lambda_.27} parent=0
    _
  %s7 = ssub.s32 1, %s5
  %s8 = scalar_select 0, %s7, %s5
  // Predicated region
  $region2: #{_lambda_.27} parent=0 // pred_check
    _
  $region3: #{_lambda_.27} parent=0 // pred_check_branch
    %10 = sbr.rel (0) target = $region5
  $region4: #{_lambda_.27} parent=0 // pred_region
    _
  $region5: #{_lambda_.27} parent=0 // pred_fallthru
    _
  // Predicated region
  $region6: #{_lambda_.27} parent=0 // pred_check
    _
  $region7: #{_lambda_.27} parent=0 // pred_check_branch
    %12 = sbr.rel (0) target = $region9
  $region8: #{_lambda_.27} parent=0 // pred_region
    _
  $region9: #{_lambda_.27} parent=0 // pred_fallthru
    _
  // Predicated region
  $region10: #{_lambda_.27} parent=0 // pred_check
    _
  $region11: #{_lambda_.27} parent=0 // pred_check_branch
    %14 = sbr.rel (0) target = $region13
  $region12: #{_lambda_.27} parent=0 // pred_region
    _
  $region13: #{_lambda_.27} parent=0 // pred_fallthru
    _
  // Predicated region
  $region14: #{_lambda_.27} parent=0 // pred_check
    _
  $region15: #{_lambda_.27} parent=0 // pred_check_branch
    %16 = sbr.rel (0) target = $region17
  $region16: #{_lambda_.27} parent=0 // pred_region
    _
  $region17: #{_lambda_.27} parent=0 // pred_fallthru
    _
  %p18 = scmp.eq.s32.totalorder 0, 0
  // Predicated region
  $region18: #{_lambda_.27} parent=0 // pred_check
    %p19 = pneg %p18
  $region19: #{_lambda_.27} parent=0 // pred_check_branch
    %21 = sbr.rel (%p19) target = $region21
  $region20: #{_lambda_.27} parent=0 // pred_region
    %22 = vst [vmem:[#allocation2] sm:$0xff] 0.0
    %23 = vst [vmem:[#allocation2 + $0x8] sm:$0xff] 0.0
    %24 = vst [vmem:[#allocation2 + $0x10] sm:$0xff] 0.0
  $region21: #{_lambda_.27} parent=0 // pred_fallthru
    _
  %v25 = vld [vmem:[#allocation2] sm:$0xff]
  %v26 = vld [vmem:[#allocation2 + $0x8] sm:$0xff]
  %v27 = vld [vmem:[#allocation2 + $0x10] sm:$0xff]
  %v28 = vld [vmem:[%s0] sm:$0xf]
  %v29 = vld [vmem:[%s0 + $0x4] sm:$0xf]
  %v30 = vld [vmem:[%s0 + $0x8] sm:$0xf]
  %v31 = vld [vmem:[%s1] sm:$0xf]
  %v32 = vld [vmem:[%s1 + $0x4] sm:$0xf]
  %v33 = vld [vmem:[%s1 + $0x8] sm:$0xf]
  %v34 = vld [vmem:[%s1 + $0xc] sm:$0xf]
  %v35 = vld [vmem:[%s1 + $0x10] sm:$0xf]
  %v36 = vld [vmem:[%s1 + $0x14] sm:$0xf]
  %v37 = vld [vmem:[%s1 + $0x18] sm:$0xf]
  %v38 = vld [vmem:[%s1 + $0x1c] sm:$0xf]
  %v39 = vld [vmem:[%s1 + $0x20] sm:$0xf]
  %v40 = vld [vmem:[%s1 + $0x24] sm:$0xf]
  %v41 = vld [vmem:[%s1 + $0x28] sm:$0xf]
  %v42 = vld [vmem:[%s1 + $0x2c] sm:$0xf]
  %v43 = vld [vmem:[%s1 + $0x30] sm:$0xf]
  %v44 = vld [vmem:[%s1 + $0x34] sm:$0xf]
  %v45 = vld [vmem:[%s1 + $0x38] sm:$0xf]
  %v46 = vld [vmem:[%s1 + $0x3c] sm:$0xf]
  %v50 = vunpack.c.l.b16 %v28
  %v51 = vunpack.c.l.b16 %v29
  %v52 = vunpack.c.l.b16 %v30
  %v53 = vpack.c.b16 %v51, %v50
  %v54 = vpack.c.b16 %v52, %v52
  %v73 = vunpack.c.l.b16 %v31
  %v74 = vunpack.c.l.b16 %v32
  %v75 = vunpack.c.l.b16 %v33
  %v76 = vunpack.c.l.b16 %v34
  %v77 = vunpack.c.l.b16 %v35
  %v78 = vunpack.c.l.b16 %v36
  %v79 = vunpack.c.l.b16 %v37
  %v80 = vunpack.c.l.b16 %v38
  %v81 = vunpack.c.l.b16 %v39
  %v82 = vunpack.c.l.b16 %v40
  %v83 = vunpack.c.l.b16 %v41
  %v84 = vunpack.c.l.b16 %v42
  %v85 = vunpack.c.l.b16 %v43
  %v86 = vunpack.c.l.b16 %v44
  %v87 = vunpack.c.l.b16 %v45
  %v88 = vunpack.c.l.b16 %v46
  %v89 = vpack.c.b16 %v74, %v73
  %v90 = vpack.c.b16 %v76, %v75
  %v91 = vpack.c.b16 %v78, %v77
  %v92 = vpack.c.b16 %v80, %v79
  %v93 = vpack.c.b16 %v82, %v81
  %v94 = vpack.c.b16 %v84, %v83
  %v95 = vpack.c.b16 %v86, %v85
  %v96 = vpack.c.b16 %v88, %v87
  %105 = vmatprep.subr.bf16.mxu0 0
  %106 = vmatpush1.bf16.msra.mxu0 %v89
  %107 = vmatprep.subr.bf16.mxu0 0
  %108 = vmatpush1.bf16.msra.mxu0 %v90
  %109 = vmatprep.subr.bf16.mxu0 0
  %110 = vmatpush1.bf16.msra.mxu0 %v91
  %111 = vmatprep.subr.bf16.mxu0 0
  %112 = vmatpush1.bf16.msra.mxu0 %v92
  %113 = vmatprep.subr.bf16.mxu0 0
  %114 = vmatpush1.bf16.msra.mxu0 %v93
  %115 = vmatprep.subr.bf16.mxu0 0
  %116 = vmatpush1.bf16.msra.mxu0 %v94
  %117 = vmatprep.subr.bf16.mxu0 0
  %118 = vmatpush1.bf16.msra.mxu0 %v95
  %119 = vmatprep.subr.bf16.mxu0 0
  %120 = vmatpush1.bf16.msra.mxu0 %v96
  %121 = vmatprep.subr.bf16.mxu0 0
  %122 = vmatpush1.bf16.msra.mxu0 0
  %123 = vmatprep.subr.bf16.mxu0 0
  %124 = vmatpush1.bf16.msra.mxu0 0
  %125 = vmatprep.subr.bf16.mxu0 0
  %126 = vmatpush1.bf16.msra.mxu0 0
  %127 = vmatprep.subr.bf16.mxu0 0
  %128 = vmatpush1.bf16.msra.mxu0 0
  %129 = vmatprep.subr.bf16.mxu0 0
  %130 = vmatpush1.bf16.msra.mxu0 0
  %131 = vmatprep.subr.bf16.mxu0 0
  %132 = vmatpush1.bf16.msra.mxu0 0
  %133 = vmatprep.subr.bf16.mxu0 0
  %134 = vmatpush1.bf16.msra.mxu0 0
  %135 = vmatprep.subr.bf16.mxu0 0
  %136 = vmatpush1.bf16.msra.mxu0 0
  %137 = vmatprep.mubr.bf16.mxu0 0
  %138 = vmatmul.mubr.bf16.gmra.mrb[0].mxu0 %v53
  %v139 = vpop.f32.mrb[0].mxu0
  %v140 = vadd.f32 0.0, %v139
  %v141 = vpop.f32.mrb[0].mxu0
  %v142 = vpop.f32.mrb[0].mxu0
  %v143 = vadd.f32 0.0, %v142
  %v144 = vpop.f32.mrb[0].mxu0
  %145 = vmatprep.mubr.bf16.mxu0 0
  %146 = vmatmul.mubr.bf16.gmra.mrb[0].mxu0 %v54
  %v147 = vpop.f32.mrb[0].mxu0
  %v148 = vadd.f32 0.0, %v147
  %v149 = vpop.f32.mrb[0].mxu0
  %v150 = vpop.f32.mrb[0].mxu0
  %v151 = vpop.f32.mrb[0].mxu0
  %152 = vdwg.mxu0
  %v153 = vadd.f32 %v25, %v140
  %v154 = vadd.f32 %v26, %v143
  %v155 = vadd.f32 %v27, %v148
  %156 = vst [vmem:[#allocation2] sm:$0xff] %v153
  %157 = vst [vmem:[#allocation2 + $0x8] sm:$0xff] %v154
  %158 = vst [vmem:[#allocation2 + $0x10] sm:$0xff] %v155
  // Predicated region
  $region22: #{_lambda_.27} parent=0 // pred_check
    %p159 = pneg %p18
  $region23: #{_lambda_.27} parent=0 // pred_check_branch
    %161 = sbr.rel (%p159) target = $region25
  $region24: #{_lambda_.27} parent=0 // pred_region
    %v162 = vld [vmem:[#allocation2] sm:$0xff]
    %v163 = vld [vmem:[#allocation2 + $0x8] sm:$0xff]
    %v164 = vld [vmem:[#allocation2 + $0x10] sm:$0xff]
    %v165 = vld [vmem:[%s2] sm:$0x1]
    %v167 = vlaneseq
    %v168 = vshrl.u32 %v167, 7
    %v169 = vsub.s32 0, %v168
    %v170 = vrot.slane %v165, %v169
    %v172 = vmul.f32 %v162, %v170
    %v173 = vmul.f32 %v163, %v170
    %v174 = vmul.f32 %v164, %v170
    %v175 = vld [vmem:[%s3] sm:$0x1]
    %v177 = vlaneseq
    %v178 = vshrl.u32 %v177, 7
    %v179 = vsub.s32 0, %v178
    %v180 = vrot.slane %v175, %v179
    %v182 = vadd.f32 %v172, %v180
    %v183 = vadd.f32 %v173, %v180
    %v184 = vadd.f32 %v174, %v180
    %v185 = vmax.f32 %v182, 0.0
    %v186 = vmax.f32 %v183, 0.0
    %v187 = vmax.f32 %v184, 0.0
    %188 = vst [vmem:[%s4] sm:$0xff] %v185
    %189 = vst [vmem:[%s4 + $0x8] sm:$0xff] %v186
    %190 = vst [vmem:[%s4 + $0x10] sm:$0xff] %v187
  $region25: #{_lambda_.27} parent=0 // pred_fallthru
    _
  // Predicated region
  $region26: #{_lambda_.27} parent=0 // pred_check
    _
  $region27: #{_lambda_.27} parent=0 // pred_check_branch
    %192 = sbr.rel (0) target = $region29
  $region28: #{_lambda_.27} parent=0 // pred_region
    _
  $region29: #{_lambda_.27} parent=0 // pred_fallthru
    _
  // Predicated region
  $region30: #{_lambda_.27} parent=0 // pred_check
    _
  $region31: #{_lambda_.27} parent=0 // pred_check_branch
    %194 = sbr.rel (0) target = $region33
  $region32: #{_lambda_.27} parent=0 // pred_region
    _
  $region33: #{_lambda_.27} parent=0 // pred_fallthru
    _

// kernel: _lambda_.29
$region0: #{_lambda_.29}
  #allocation0 [shape = 'u32[]', space=smem, size = 0x4, offset = 0x4, fixed_abs, tag = 'smem constant byte address 0x4 - core index']
  #allocation1 [shape = 'u32[144,128]{1,0:T(1,128)}', space=vmem, size = 0x12000, scoped, tag = 'internal scratch']
  #allocation2 [shape = 'f32[8,256]{1,0:T(8,128)}', space=vmem, size = 0x2000, scoped, tag = 'scratch operand']
  %s0 = inlined_call_operand.vmem [shape: bf16[8,128], index: 0, kind: input, shape index: {}]
  %s1 = inlined_call_operand.vmem [shape: bf16[128,256], index: 1, kind: input, shape index: {}]
  %s2 = inlined_call_operand.vmem [shape: f32[1,256], index: 2, kind: input, shape index: {}]
  %s3 = inlined_call_operand.vmem [shape: f32[1,256], index: 3, kind: input, shape index: {}]
  %s4 = inlined_call_operand.vmem [shape: f32[8,256], index: 4, kind: output, shape index: {}]
  %s5 = sld [smem:[#allocation0]]
  $region34: #{_lambda_.29} parent=0
    _
  %s7 = ssub.s32 1, %s5
  %s8 = scalar_select 0, %s7, %s5
  // Predicated region
  $region2: #{_lambda_.29} parent=0 // pred_check
    _
  $region3: #{_lambda_.29} parent=0 // pred_check_branch
    %10 = sbr.rel (0) target = $region5
  $region4: #{_lambda_.29} parent=0 // pred_region
    _
  $region5: #{_lambda_.29} parent=0 // pred_fallthru
    _
  // Predicated region
  $region6: #{_lambda_.29} parent=0 // pred_check
    _
  $region7: #{_lambda_.29} parent=0 // pred_check_branch
    %12 = sbr.rel (0) target = $region9
  $region8: #{_lambda_.29} parent=0 // pred_region
    _
  $region9: #{_lambda_.29} parent=0 // pred_fallthru
    _
  // Predicated region
  $region10: #{_lambda_.29} parent=0 // pred_check
    _
  $region11: #{_lambda_.29} parent=0 // pred_check_branch
    %14 = sbr.rel (0) target = $region13
  $region12: #{_lambda_.29} parent=0 // pred_region
    _
  $region13: #{_lambda_.29} parent=0 // pred_fallthru
    _
  // Predicated region
  $region14: #{_lambda_.29} parent=0 // pred_check
    _
  $region15: #{_lambda_.29} parent=0 // pred_check_branch
    %16 = sbr.rel (0) target = $region17
  $region16: #{_lambda_.29} parent=0 // pred_region
    _
  $region17: #{_lambda_.29} parent=0 // pred_fallthru
    _
  %p18 = scmp.eq.s32.totalorder 0, 0
  // Predicated region
  $region18: #{_lambda_.29} parent=0 // pred_check
    %p19 = pneg %p18
  $region19: #{_lambda_.29} parent=0 // pred_check_branch
    %21 = sbr.rel (%p19) target = $region21
  $region20: #{_lambda_.29} parent=0 // pred_region
    %22 = vst [vmem:[#allocation2] sm:$0xff] 0.0
    %23 = vst [vmem:[#allocation2 + $0x8] sm:$0xff] 0.0
  $region21: #{_lambda_.29} parent=0 // pred_fallthru
    _
  %v24 = vld [vmem:[#allocation2] sm:$0xff]
  %v25 = vld [vmem:[#allocation2 + $0x8] sm:$0xff]
  %v26 = vld [vmem:[%s0] sm:$0xf]
  %v27 = vld [vmem:[%s1] sm:$0xff]
  %v28 = vld [vmem:[%s1 + $0x8] sm:$0xff]
  %v29 = vld [vmem:[%s1 + $0x10] sm:$0xff]
  %v30 = vld [vmem:[%s1 + $0x18] sm:$0xff]
  %v31 = vld [vmem:[%s1 + $0x20] sm:$0xff]
  %v32 = vld [vmem:[%s1 + $0x28] sm:$0xff]
  %v33 = vld [vmem:[%s1 + $0x30] sm:$0xff]
  %v34 = vld [vmem:[%s1 + $0x38] sm:$0xff]
  %v35 = vld [vmem:[%s1 + $0x40] sm:$0xff]
  %v36 = vld [vmem:[%s1 + $0x48] sm:$0xff]
  %v37 = vld [vmem:[%s1 + $0x50] sm:$0xff]
  %v38 = vld [vmem:[%s1 + $0x58] sm:$0xff]
  %v39 = vld [vmem:[%s1 + $0x60] sm:$0xff]
  %v40 = vld [vmem:[%s1 + $0x68] sm:$0xff]
  %v41 = vld [vmem:[%s1 + $0x70] sm:$0xff]
  %v42 = vld [vmem:[%s1 + $0x78] sm:$0xff]
  %v59 = vunpack.c.l.b16 %v27
  %v60 = vunpack.c.h.b16 %v27
  %v61 = vunpack.c.l.b16 %v28
  %v62 = vunpack.c.h.b16 %v28
  %v63 = vunpack.c.l.b16 %v29
  %v64 = vunpack.c.h.b16 %v29
  %v65 = vunpack.c.l.b16 %v30
  %v66 = vunpack.c.h.b16 %v30
  %v67 = vunpack.c.l.b16 %v31
  %v68 = vunpack.c.h.b16 %v31
  %v69 = vunpack.c.l.b16 %v32
  %v70 = vunpack.c.h.b16 %v32
  %v71 = vunpack.c.l.b16 %v33
  %v72 = vunpack.c.h.b16 %v33
  %v73 = vunpack.c.l.b16 %v34
  %v74 = vunpack.c.h.b16 %v34
  %v75 = vunpack.c.l.b16 %v35
  %v76 = vunpack.c.h.b16 %v35
  %v77 = vunpack.c.l.b16 %v36
  %v78 = vunpack.c.h.b16 %v36
  %v79 = vunpack.c.l.b16 %v37
  %v80 = vunpack.c.h.b16 %v37
  %v81 = vunpack.c.l.b16 %v38
  %v82 = vunpack.c.h.b16 %v38
  %v83 = vunpack.c.l.b16 %v39
  %v84 = vunpack.c.h.b16 %v39
  %v85 = vunpack.c.l.b16 %v40
  %v86 = vunpack.c.h.b16 %v40
  %v87 = vunpack.c.l.b16 %v41
  %v88 = vunpack.c.h.b16 %v41
  %v89 = vunpack.c.l.b16 %v42
  %v90 = vunpack.c.h.b16 %v42
  %v91 = vpack.c.b16 %v61, %v59
  %v92 = vpack.c.b16 %v62, %v60
  %v93 = vpack.c.b16 %v65, %v63
  %v94 = vpack.c.b16 %v66, %v64
  %v95 = vpack.c.b16 %v69, %v67
  %v96 = vpack.c.b16 %v70, %v68
  %v97 = vpack.c.b16 %v73, %v71
  %v98 = vpack.c.b16 %v74, %v72
  %v99 = vpack.c.b16 %v77, %v75
  %v100 = vpack.c.b16 %v78, %v76
  %v101 = vpack.c.b16 %v81, %v79
  %v102 = vpack.c.b16 %v82, %v80
  %v103 = vpack.c.b16 %v85, %v83
  %v104 = vpack.c.b16 %v86, %v84
  %v105 = vpack.c.b16 %v89, %v87
  %v106 = vpack.c.b16 %v90, %v88
  %123 = vmatprep.subr.bf16.mxu0 %v92
  %124 = vmatpush1.bf16.msra.mxu0 %v91
  %125 = vmatprep.subr.bf16.mxu0 %v94
  %126 = vmatpush1.bf16.msra.mxu0 %v93
  %127 = vmatprep.subr.bf16.mxu0 %v96
  %128 = vmatpush1.bf16.msra.mxu0 %v95
  %129 = vmatprep.subr.bf16.mxu0 %v98
  %130 = vmatpush1.bf16.msra.mxu0 %v97
  %131 = vmatprep.subr.bf16.mxu0 %v100
  %132 = vmatpush1.bf16.msra.mxu0 %v99
  %133 = vmatprep.subr.bf16.mxu0 %v102
  %134 = vmatpush1.bf16.msra.mxu0 %v101
  %135 = vmatprep.subr.bf16.mxu0 %v104
  %136 = vmatpush1.bf16.msra.mxu0 %v103
  %137 = vmatprep.subr.bf16.mxu0 %v106
  %138 = vmatpush1.bf16.msra.mxu0 %v105
  %139 = vmatprep.subr.bf16.mxu0 0
  %140 = vmatpush1.bf16.msra.mxu0 0
  %141 = vmatprep.subr.bf16.mxu0 0
  %142 = vmatpush1.bf16.msra.mxu0 0
  %143 = vmatprep.subr.bf16.mxu0 0
  %144 = vmatpush1.bf16.msra.mxu0 0
  %145 = vmatprep.subr.bf16.mxu0 0
  %146 = vmatpush1.bf16.msra.mxu0 0
  %147 = vmatprep.subr.bf16.mxu0 0
  %148 = vmatpush1.bf16.msra.mxu0 0
  %149 = vmatprep.subr.bf16.mxu0 0
  %150 = vmatpush1.bf16.msra.mxu0 0
  %151 = vmatprep.subr.bf16.mxu0 0
  %152 = vmatpush1.bf16.msra.mxu0 0
  %153 = vmatprep.subr.bf16.mxu0 0
  %154 = vmatpush1.bf16.msra.mxu0 0
  %155 = vmatprep.mubr.bf16.mxu0 0
  %156 = vmatmul.mubr.bf16.gmra.mrb[0].mxu0 %v26
  %v157 = vpop.f32.mrb[0].mxu0
  %v158 = vadd.f32 0.0, %v157
  %v159 = vpop.f32.mrb[0].mxu0
  %v160 = vadd.f32 0.0, %v159
  %v161 = vpop.f32.mrb[0].mxu0
  %v162 = vpop.f32.mrb[0].mxu0
  %163 = vdwg.mxu0
  %v164 = vadd.f32 %v24, %v158
  %v165 = vadd.f32 %v25, %v160
  %166 = vst [vmem:[#allocation2] sm:$0xff] %v164
  %167 = vst [vmem:[#allocation2 + $0x8] sm:$0xff] %v165
  // Predicated region
  $region22: #{_lambda_.29} parent=0 // pred_check
    %p168 = pneg %p18
  $region23: #{_lambda_.29} parent=0 // pred_check_branch
    %170 = sbr.rel (%p168) target = $region25
  $region24: #{_lambda_.29} parent=0 // pred_region
    %v171 = vld [vmem:[#allocation2] sm:$0xff]
    %v172 = vld [vmem:[#allocation2 + $0x8] sm:$0xff]
    %v173 = vld [vmem:[%s2] sm:$0x3]
    %v175 = vlaneseq
    %v176 = vshrl.u32 %v175, 7
    %v177 = vsub.s32 0, %v176
    %v178 = vrot.slane %v173, %v177
    %v179 = vlaneseq
    %v180 = vshrl.u32 %v179, 7
    %v181 = vsub.s32 1, %v180
    %v182 = vrot.slane %v173, %v181
    %v185 = vmul.f32 %v171, %v178
    %v186 = vmul.f32 %v172, %v182
    %v187 = vld [vmem:[%s3] sm:$0x3]
    %v189 = vlaneseq
    %v190 = vshrl.u32 %v189, 7
    %v191 = vsub.s32 0, %v190
    %v192 = vrot.slane %v187, %v191
    %v193 = vlaneseq
    %v194 = vshrl.u32 %v193, 7
    %v195 = vsub.s32 1, %v194
    %v196 = vrot.slane %v187, %v195
    %v199 = vadd.f32 %v185, %v192
    %v200 = vadd.f32 %v186, %v196
    %201 = vst [vmem:[%s4] sm:$0xff] %v199
    %202 = vst [vmem:[%s4 + $0x8] sm:$0xff] %v200
  $region25: #{_lambda_.29} parent=0 // pred_fallthru
    _
  // Predicated region
  $region26: #{_lambda_.29} parent=0 // pred_check
    _
  $region27: #{_lambda_.29} parent=0 // pred_check_branch
    %204 = sbr.rel (0) target = $region29
  $region28: #{_lambda_.29} parent=0 // pred_region
    _
  $region29: #{_lambda_.29} parent=0 // pred_fallthru
    _
  // Predicated region
  $region30: #{_lambda_.29} parent=0 // pred_check
    _
  $region31: #{_lambda_.29} parent=0 // pred_check_branch
    %206 = sbr.rel (0) target = $region33
  $region32: #{_lambda_.29} parent=0 // pred_region
    _
  $region33: #{_lambda_.29} parent=0 // pred_fallthru
    _

// kernel: _lambda_.28
$region0: #{_lambda_.28}
  #allocation0 [shape = 'u32[]', space=smem, size = 0x4, offset = 0x4, fixed_abs, tag = 'smem constant byte address 0x4 - core index']
  #allocation1 [shape = 'u32[144,128]{1,0:T(1,128)}', space=vmem, size = 0x12000, scoped, tag = 'internal scratch']
  #allocation2 [shape = 'f32[8,128]{1,0:T(8,128)}', space=vmem, size = 0x1000, scoped, tag = 'scratch operand']
  %s0 = inlined_call_operand.vmem [shape: bf16[8,640], index: 0, kind: input, shape index: {}]
  %s1 = inlined_call_operand.vmem [shape: bf16[640,128], index: 1, kind: input, shape index: {}]
  %s2 = inlined_call_operand.vmem [shape: f32[1,128], index: 2, kind: input, shape index: {}]
  %s3 = inlined_call_operand.vmem [shape: f32[1,128], index: 3, kind: input, shape index: {}]
  %s4 = inlined_call_operand.vmem [shape: f32[8,128], index: 4, kind: output, shape index: {}]
  %s5 = sld [smem:[#allocation0]]
  $region57: #{_lambda_.28} parent=0
    _
  %s7 = ssub.s32 1, %s5
  %s8 = scalar_select 0, %s7, %s5
  loop: start=0, step=1, limit=7
  $region2: #{_lambda_.28} parent=0 // loop_pre_header
    _
  $region3: #{_lambda_.28} parent=0 // loop_header
    %s10 = sphi 0, %s14
    %p11 = scmp.ge.s32.totalorder %s10, 7
    %s17 = sphi 0, %s36
    %s18 = sphi 0, %s32
    %s19 = sphi 0, %s28
    %s20 = sphi 0, %s17
    %s21 = sphi 0, %s18
    %s22 = sphi 0, %s19
    %s23 = sphi 0, %s20
    %s24 = sphi 0, %s21
    %s25 = sphi 0, %s22
    %s41 = sphi 0, %s43
    %s44 = sphi 0, %s41
    %s45 = sphi 0, %s44
    %s61 = sphi 0, %s45
    %s69 = sphi 0, %s71
    %s72 = sphi 0, %s69
    %s73 = sphi 0, %s72
    %s89 = sphi 0, %s73
    %s95 = sphi 0, %s97
    %s98 = sphi 0, %s95
    %s99 = sphi 0, %s98
    %s115 = sphi 0, %s99
    %s121 = sphi 0, %s123
    %s124 = sphi 0, %s121
    %s125 = sphi 0, %s124
    %s141 = sphi 0, %s125
    %s149 = sphi 0, %s151
    %s152 = sphi 0, %s149
    %s153 = sphi 0, %s152
    %s169 = sphi 0, %s153
  $region4: #{_lambda_.28} parent=0 // loop_header_branch
    %13 = sbr.rel (%p11) target = $region8
  $region5: #{_lambda_.28} parent=0 // loop_body
    %s15 = ssub.s32 %s10, 1
    %s16 = ssub.s32 %s10, 2
    %s26 = sadd.s32 1, %s19
    %p27 = scmp.ge.s32.totalorder %s26, 5
    %s28 = scalar_select %p27, 0, %s26
    %s29 = sadd.s32 1, %s18
    %s30 = scalar_select %p27, %s29, %s18
    %p31 = scmp.ge.s32.totalorder %s30, 1
    %s32 = scalar_select %p31, 0, %s30
    %s33 = sadd.s32 1, %s17
    %s34 = scalar_select %p31, %s33, %s17
    %p35 = scmp.ge.s32.totalorder %s34, 1
    %s36 = scalar_select %p35, 0, %s34
    %s37 = ssub.s32 %s17, %s36
    %s38 = ssub.s32 %s19, %s28
    %s39 = sor.u32 %s37, %s38
    %p40 = scmp.eq.s32.totalorder %s39, 0
    %s42 = sadd.s32 %s41, 1
    %s43 = scalar_select %p40, %s41, %s42
    %p46 = pneg %p40
    %p47 = scmp.eq.s32.totalorder %s10, 4
    %p48 = por %p46, %p47
    %p49 = scmp.ne.s32.totalorder %s41, %s44
    %p50 = scmp.eq.s32.totalorder %s10, 0
    %p51 = por %p49, %p50
    %p52 = scmp.ne.s32.totalorder %s41, %s44
    %p53 = scmp.eq.s32.totalorder %s15, 4
    %p54 = por %p52, %p53
    %p55 = scmp.ne.s32.totalorder %s44, %s45
    %p56 = scmp.eq.s32.totalorder %s15, 0
    %p57 = por %p55, %p56
    %p58 = scmp.ne.s32.totalorder %s44, %s45
    %p59 = scmp.eq.s32.totalorder %s16, 4
    %p60 = por %p58, %p59
    %p62 = scmp.ne.s32.totalorder %s45, %s61
    %p63 = scmp.eq.s32.totalorder %s16, 0
    %p64 = por %p62, %p63
    %s65 = ssub.s32 %s19, %s28
    %s66 = ssub.s32 %s18, %s32
    %s67 = sor.u32 %s65, %s66
    %p68 = scmp.eq.s32.totalorder %s67, 0
    %s70 = sadd.s32 %s69, 1
    %s71 = scalar_select %p68, %s69, %s70
    %p74 = pneg %p68
    %p75 = scmp.eq.s32.totalorder %s10, 4
    %p76 = por %p74, %p75
    %p77 = scmp.ne.s32.totalorder %s69, %s72
    %p78 = scmp.eq.s32.totalorder %s10, 0
    %p79 = por %p77, %p78
    %p80 = scmp.ne.s32.totalorder %s69, %s72
    %p81 = scmp.eq.s32.totalorder %s15, 4
    %p82 = por %p80, %p81
    %p83 = scmp.ne.s32.totalorder %s72, %s73
    %p84 = scmp.eq.s32.totalorder %s15, 0
    %p85 = por %p83, %p84
    %p86 = scmp.ne.s32.totalorder %s72, %s73
    %p87 = scmp.eq.s32.totalorder %s16, 4
    %p88 = por %p86, %p87
    %p90 = scmp.ne.s32.totalorder %s73, %s89
    %p91 = scmp.eq.s32.totalorder %s16, 0
    %p92 = por %p90, %p91
    %s93 = ssub.s32 %s18, %s32
    %p94 = scmp.eq.s32.totalorder %s93, 0
    %s96 = sadd.s32 %s95, 1
    %s97 = scalar_select %p94, %s95, %s96
    %p100 = pneg %p94
    %p101 = scmp.eq.s32.totalorder %s10, 4
    %p102 = por %p100, %p101
    %p103 = scmp.ne.s32.totalorder %s95, %s98
    %p104 = scmp.eq.s32.totalorder %s10, 0
    %p105 = por %p103, %p104
    %p106 = scmp.ne.s32.totalorder %s95, %s98
    %p107 = scmp.eq.s32.totalorder %s15, 4
    %p108 = por %p106, %p107
    %p109 = scmp.ne.s32.totalorder %s98, %s99
    %p110 = scmp.eq.s32.totalorder %s15, 0
    %p111 = por %p109, %p110
    %p112 = scmp.ne.s32.totalorder %s98, %s99
    %p113 = scmp.eq.s32.totalorder %s16, 4
    %p114 = por %p112, %p113
    %p116 = scmp.ne.s32.totalorder %s99, %s115
    %p117 = scmp.eq.s32.totalorder %s16, 0
    %p118 = por %p116, %p117
    %s119 = ssub.s32 %s18, %s32
    %p120 = scmp.eq.s32.totalorder %s119, 0
    %s122 = sadd.s32 %s121, 1
    %s123 = scalar_select %p120, %s121, %s122
    %p126 = pneg %p120
    %p127 = scmp.eq.s32.totalorder %s10, 4
    %p128 = por %p126, %p127
    %p129 = scmp.ne.s32.totalorder %s121, %s124
    %p130 = scmp.eq.s32.totalorder %s10, 0
    %p131 = por %p129, %p130
    %p132 = scmp.ne.s32.totalorder %s121, %s124
    %p133 = scmp.eq.s32.totalorder %s15, 4
    %p134 = por %p132, %p133
    %p135 = scmp.ne.s32.totalorder %s124, %s125
    %p136 = scmp.eq.s32.totalorder %s15, 0
    %p137 = por %p135, %p136
    %p138 = scmp.ne.s32.totalorder %s124, %s125
    %p139 = scmp.eq.s32.totalorder %s16, 4
    %p140 = por %p138, %p139
    %p142 = scmp.ne.s32.totalorder %s125, %s141
    %p143 = scmp.eq.s32.totalorder %s16, 0
    %p144 = por %p142, %p143
    %s145 = ssub.s32 %s17, %s36
    %s146 = ssub.s32 %s18, %s32
    %s147 = sor.u32 %s145, %s146
    %p148 = scmp.eq.s32.totalorder %s147, 0
    %s150 = sadd.s32 %s149, 1
    %s151 = scalar_select %p148, %s149, %s150
    %p154 = pneg %p148
    %p155 = scmp.eq.s32.totalorder %s10, 4
    %p156 = por %p154, %p155
    %p157 = scmp.ne.s32.totalorder %s149, %s152
    %p158 = scmp.eq.s32.totalorder %s10, 0
    %p159 = por %p157, %p158
    %p160 = scmp.ne.s32.totalorder %s149, %s152
    %p161 = scmp.eq.s32.totalorder %s15, 4
    %p162 = por %p160, %p161
    %p163 = scmp.ne.s32.totalorder %s152, %s153
    %p164 = scmp.eq.s32.totalorder %s15, 0
    %p165 = por %p163, %p164
    %p166 = scmp.ne.s32.totalorder %s152, %s153
    %p167 = scmp.eq.s32.totalorder %s16, 4
    %p168 = por %p166, %p167
    %p170 = scmp.ne.s32.totalorder %s153, %s169
    %p171 = scmp.eq.s32.totalorder %s16, 0
    %p172 = por %p170, %p171
    %p173 = scmp.le.s32.totalorder 1, %s10
    %p174 = scmp.lt.s32.totalorder %s10, 6
    %p175 = pnand %p173, %p174
    %p176 = pneg %p175
    // Predicated region
    $region9: #{_lambda_.28} parent=5 // pred_check
      _
    $region10: #{_lambda_.28} parent=5 // pred_check_branch
      %178 = sbr.rel (%p175) target = $region12
    $region11: #{_lambda_.28} parent=5 // pred_region
      %s179 = ssub.s32 %s10, 1
      // Predicated region
      $region13: #{_lambda_.28} parent=11 // pred_check
        %p180 = pneg %p111
      $region14: #{_lambda_.28} parent=11 // pred_check_branch
        %182 = sbr.rel (%p180) target = $region16
      $region15: #{_lambda_.28} parent=11 // pred_region
        %p183 = scmp.lt.s32.totalorder %s21, 0
        %s184 = scalar_select %p183, %s21, 0
        %s185 = scalar_lea.vmem %s2, %s184
      $region16: #{_lambda_.28} parent=11 // pred_fallthru
        _
      // Predicated region
      $region17: #{_lambda_.28} parent=11 // pred_check
        %p186 = pneg %p137
      $region18: #{_lambda_.28} parent=11 // pred_check_branch
        %188 = sbr.rel (%p186) target = $region20
      $region19: #{_lambda_.28} parent=11 // pred_region
        %p189 = scmp.lt.s32.totalorder %s21, 0
        %s190 = scalar_select %p189, %s21, 0
        %s191 = scalar_lea.vmem %s3, %s190
      $region20: #{_lambda_.28} parent=11 // pred_fallthru
        _
    $region12: #{_lambda_.28} parent=5 // pred_fallthru
      _
    %p192 = scmp.lt.s32.totalorder %s10, 5
    // Predicated region
    $region21: #{_lambda_.28} parent=5 // pred_check
      %p193 = pneg %p192
    $region22: #{_lambda_.28} parent=5 // pred_check_branch
      %195 = sbr.rel (%p193) target = $region24
    $region23: #{_lambda_.28} parent=5 // pred_region
      // Predicated region
      $region25: #{_lambda_.28} parent=23 // pred_check
        %p196 = pneg %p51
      $region26: #{_lambda_.28} parent=23 // pred_check_branch
        %198 = sbr.rel (%p196) target = $region28
      $region27: #{_lambda_.28} parent=23 // pred_region
        %p199 = scmp.lt.s32.totalorder %s17, 0
        %s200 = scalar_select %p199, %s17, 0
        %p201 = scmp.lt.s32.totalorder %s19, 4
        %s202 = scalar_select %p201, %s19, 4
        %s203 = smul.addr %s200, 5
        %s204 = sadd.s32 %s202, %s203
        %s205 = smul.addr %s204, 4
        %s206 = scalar_lea.vmem %s0, %s205
      $region28: #{_lambda_.28} parent=23 // pred_fallthru
        _
      // Predicated region
      $region29: #{_lambda_.28} parent=23 // pred_check
        %p207 = pneg %p79
      $region30: #{_lambda_.28} parent=23 // pred_check_branch
        %209 = sbr.rel (%p207) target = $region32
      $region31: #{_lambda_.28} parent=23 // pred_region
        %s210 = smul.u32 16, %s19
        %p211 = scmp.lt.s32.totalorder %s210, 79
        %s212 = scalar_select %p211, %s210, 79
        %p213 = scmp.lt.s32.totalorder %s18, 0
        %s214 = scalar_select %p213, %s18, 0
        %s215 = sadd.s32 %s214, %s212
        %s216 = smul.addr %s215, 4
        %s217 = scalar_lea.vmem %s1, %s216
        %s218 = smul.u32 16, %s19
      $region32: #{_lambda_.28} parent=23 // pred_fallthru
        _
    $region24: #{_lambda_.28} parent=5 // pred_fallthru
      _
    %p219 = scmp.le.s32.totalorder 1, %s10
    %p220 = scmp.lt.s32.totalorder %s10, 6
    %p221 = pnand %p219, %p220
    %p222 = pneg %p221
    // Predicated region
    $region33: #{_lambda_.28} parent=5 // pred_check
      _
    $region34: #{_lambda_.28} parent=5 // pred_check_branch
      %224 = sbr.rel (%p221) target = $region36
    $region35: #{_lambda_.28} parent=5 // pred_region
      %s225 = ssub.s32 %s10, 1
      %p226 = scmp.lt.s32.totalorder %s20, 0
      %s227 = scalar_select %p226, %s20, 0
      %p228 = scmp.lt.s32.totalorder %s22, 4
      %s229 = scalar_select %p228, %s22, 4
      %s230 = smul.addr %s227, 5
      %s231 = sadd.s32 %s229, %s230
      %s232 = smul.addr %s231, 4
      %s233 = scalar_lea.vmem %s0, %s232
      %p234 = pneg %p57
      %p235 = pneg %p54
      %s236 = smul.u32 16, %s22
      %p237 = scmp.lt.s32.totalorder %s236, 79
      %s238 = scalar_select %p237, %s236, 79
      %p239 = scmp.lt.s32.totalorder %s21, 0
      %s240 = scalar_select %p239, %s21, 0
      %s241 = sadd.s32 %s240, %s238
      %s242 = smul.addr %s241, 4
      %s243 = scalar_lea.vmem %s1, %s242
      %p244 = pneg %p85
      %p245 = pneg %p82
      %p246 = scmp.lt.s32.totalorder %s21, 0
      %s247 = scalar_select %p246, %s21, 0
      %s248 = scalar_lea.vmem %s2, %s247
      %p249 = pneg %p111
      %p250 = pneg %p108
      %p251 = scmp.lt.s32.totalorder %s21, 0
      %s252 = scalar_select %p251, %s21, 0
      %s253 = scalar_lea.vmem %s3, %s252
      %p254 = pneg %p137
      %p255 = pneg %p134
      %p256 = pneg %p165
      %p257 = pneg %p162
      %p258 = scmp.lt.s32.totalorder %s20, 0
      %s259 = scalar_select %p258, %s20, 0
      %p260 = scmp.lt.s32.totalorder %s21, 0
      %s261 = scalar_select %p260, %s21, 0
      %s262 = sadd.s32 %s261, %s259
      %s263 = smul.addr %s262, 8
      %s264 = scalar_lea.vmem %s4, %s263
      %p265 = scmp.lt.s32.totalorder %s20, 0
      %s266 = scalar_select %p265, %s20, 0
      %p267 = scmp.lt.s32.totalorder %s22, 4
      %s268 = scalar_select %p267, %s22, 4
      %s269 = smul.addr %s266, 5
      %s270 = sadd.s32 %s268, %s269
      %s271 = smul.addr %s270, 4
      %s272 = scalar_lea.vmem %s0, %s271
      %s273 = smul.u32 16, %s22
      %p274 = scmp.lt.s32.totalorder %s273, 79
      %s275 = scalar_select %p274, %s273, 79
      %p276 = scmp.lt.s32.totalorder %s21, 0
      %s277 = scalar_select %p276, %s21, 0
      %s278 = sadd.s32 %s277, %s275
      %s279 = smul.addr %s278, 4
      %s280 = scalar_lea.vmem %s1, %s279
      %s281 = smul.u32 16, %s22
      %p282 = scmp.lt.s32.totalorder %s21, 0
      %s283 = scalar_select %p282, %s21, 0
      %s284 = scalar_lea.vmem %s2, %s283
      %p285 = scmp.lt.s32.totalorder %s21, 0
      %s286 = scalar_select %p285, %s21, 0
      %s287 = scalar_lea.vmem %s3, %s286
      %p288 = scmp.lt.s32.totalorder %s20, 0
      %s289 = scalar_select %p288, %s20, 0
      %p290 = scmp.lt.s32.totalorder %s21, 0
      %s291 = scalar_select %p290, %s21, 0
      %s292 = sadd.s32 %s291, %s289
      %s293 = smul.addr %s292, 8
      %s294 = scalar_lea.vmem %s4, %s293
      %p296 = scmp.eq.s32.totalorder %s22, 0
      // Predicated region
      $region37: #{_lambda_.28} parent=35 // pred_check
        %p297 = pneg %p296
      $region38: #{_lambda_.28} parent=35 // pred_check_branch
        %299 = sbr.rel (%p297) target = $region40
      $region39: #{_lambda_.28} parent=35 // pred_region
        %300 = vst [vmem:[#allocation2] sm:$0xff] 0.0
      $region40: #{_lambda_.28} parent=35 // pred_fallthru
        _
      %v301 = vld [vmem:[#allocation2] sm:$0xff]
      %v302 = vld [vmem:[%s272] sm:$0xf]
      %v303 = vld [vmem:[%s280] sm:$0xf]
      %v304 = vld [vmem:[%s280 + $0x4] sm:$0xf]
      %v305 = vld [vmem:[%s280 + $0x8] sm:$0xf]
      %v306 = vld [vmem:[%s280 + $0xc] sm:$0xf]
      %v307 = vld [vmem:[%s280 + $0x10] sm:$0xf]
      %v308 = vld [vmem:[%s280 + $0x14] sm:$0xf]
      %v309 = vld [vmem:[%s280 + $0x18] sm:$0xf]
      %v310 = vld [vmem:[%s280 + $0x1c] sm:$0xf]
      %v311 = vld [vmem:[%s280 + $0x20] sm:$0xf]
      %v312 = vld [vmem:[%s280 + $0x24] sm:$0xf]
      %v313 = vld [vmem:[%s280 + $0x28] sm:$0xf]
      %v314 = vld [vmem:[%s280 + $0x2c] sm:$0xf]
      %v315 = vld [vmem:[%s280 + $0x30] sm:$0xf]
      %v316 = vld [vmem:[%s280 + $0x34] sm:$0xf]
      %v317 = vld [vmem:[%s280 + $0x38] sm:$0xf]
      %v318 = vld [vmem:[%s280 + $0x3c] sm:$0xf]
      %v335 = vunpack.c.l.b16 %v303
      %v336 = vunpack.c.l.b16 %v304
      %v337 = vunpack.c.l.b16 %v305
      %v338 = vunpack.c.l.b16 %v306
      %v339 = vunpack.c.l.b16 %v307
      %v340 = vunpack.c.l.b16 %v308
      %v341 = vunpack.c.l.b16 %v309
      %v342 = vunpack.c.l.b16 %v310
      %v343 = vunpack.c.l.b16 %v311
      %v344 = vunpack.c.l.b16 %v312
      %v345 = vunpack.c.l.b16 %v313
      %v346 = vunpack.c.l.b16 %v314
      %v347 = vunpack.c.l.b16 %v315
      %v348 = vunpack.c.l.b16 %v316
      %v349 = vunpack.c.l.b16 %v317
      %v350 = vunpack.c.l.b16 %v318
      %v351 = vpack.c.b16 %v336, %v335
      %v352 = vpack.c.b16 %v338, %v337
      %v353 = vpack.c.b16 %v340, %v339
      %v354 = vpack.c.b16 %v342, %v341
      %v355 = vpack.c.b16 %v344, %v343
      %v356 = vpack.c.b16 %v346, %v345
      %v357 = vpack.c.b16 %v348, %v347
      %v358 = vpack.c.b16 %v350, %v349
      %367 = vmatprep.subr.bf16.mxu0 0
      %368 = vmatpush1.bf16.msra.mxu0 %v351
      %369 = vmatprep.subr.bf16.mxu0 0
      %370 = vmatpush1.bf16.msra.mxu0 %v352
      %371 = vmatprep.subr.bf16.mxu0 0
      %372 = vmatpush1.bf16.msra.mxu0 %v353
      %373 = vmatprep.subr.bf16.mxu0 0
      %374 = vmatpush1.bf16.msra.mxu0 %v354
      %375 = vmatprep.subr.bf16.mxu0 0
      %376 = vmatpush1.bf16.msra.mxu0 %v355
      %377 = vmatprep.subr.bf16.mxu0 0
      %378 = vmatpush1.bf16.msra.mxu0 %v356
      %379 = vmatprep.subr.bf16.mxu0 0
      %380 = vmatpush1.bf16.msra.mxu0 %v357
      %381 = vmatprep.subr.bf16.mxu0 0
      %382 = vmatpush1.bf16.msra.mxu0 %v358
      %383 = vmatprep.subr.bf16.mxu0 0
      %384 = vmatpush1.bf16.msra.mxu0 0
      %385 = vmatprep.subr.bf16.mxu0 0
      %386 = vmatpush1.bf16.msra.mxu0 0
      %387 = vmatprep.subr.bf16.mxu0 0
      %388 = vmatpush1.bf16.msra.mxu0 0
      %389 = vmatprep.subr.bf16.mxu0 0
      %390 = vmatpush1.bf16.msra.mxu0 0
      %391 = vmatprep.subr.bf16.mxu0 0
      %392 = vmatpush1.bf16.msra.mxu0 0
      %393 = vmatprep.subr.bf16.mxu0 0
      %394 = vmatpush1.bf16.msra.mxu0 0
      %395 = vmatprep.subr.bf16.mxu0 0
      %396 = vmatpush1.bf16.msra.mxu0 0
      %397 = vmatprep.subr.bf16.mxu0 0
      %398 = vmatpush1.bf16.msra.mxu0 0
      %399 = vmatprep.mubr.bf16.mxu0 0
      %400 = vmatmul.mubr.bf16.gmra.mrb[0].mxu0 %v302
      %v401 = vpop.f32.mrb[0].mxu0
      %v402 = vadd.f32 0.0, %v401
      %v403 = vpop.f32.mrb[0].mxu0
      %v404 = vpop.f32.mrb[0].mxu0
      %v405 = vpop.f32.mrb[0].mxu0
      %406 = vdwg.mxu0
      %v407 = vadd.f32 %v301, %v402
      %408 = vst [vmem:[#allocation2] sm:$0xff] %v407
      %p409 = scmp.eq.s32.totalorder %s22, 4
      // Predicated region
      $region41: #{_lambda_.28} parent=35 // pred_check
        %p410 = pneg %p409
      $region42: #{_lambda_.28} parent=35 // pred_check_branch
        %412 = sbr.rel (%p410) target = $region44
      $region43: #{_lambda_.28} parent=35 // pred_region
        %v413 = vld [vmem:[#allocation2] sm:$0xff]
        %v414 = vld [vmem:[%s284] sm:$0x1]
        %v416 = vlaneseq
        %v417 = vshrl.u32 %v416, 7
        %v418 = vsub.s32 0, %v417
        %v419 = vrot.slane %v414, %v418
        %v421 = vmul.f32 %v413, %v419
        %v422 = vld [vmem:[%s287] sm:$0x1]
        %v424 = vlaneseq
        %v425 = vshrl.u32 %v424, 7
        %v426 = vsub.s32 0, %v425
        %v427 = vrot.slane %v422, %v426
        %v429 = vadd.f32 %v421, %v427
        %v430 = vmax.f32 %v429, 0.0
        %431 = vst [vmem:[%s294] sm:$0xff] %v430
      $region44: #{_lambda_.28} parent=35 // pred_fallthru
        _
      %p432 = scmp.lt.s32.totalorder %s20, 0
      %s433 = scalar_select %p432, %s20, 0
      %p434 = scmp.lt.s32.totalorder %s21, 0
      %s435 = scalar_select %p434, %s21, 0
      %s436 = sadd.s32 %s435, %s433
      %s437 = smul.addr %s436, 8
      %s438 = scalar_lea.vmem %s4, %s437
      // Predicated region
      $region45: #{_lambda_.28} parent=35 // pred_check
        %p439 = pneg %p162
      $region46: #{_lambda_.28} parent=35 // pred_check_branch
        %441 = sbr.rel (%p439) target = $region48
      $region47: #{_lambda_.28} parent=35 // pred_region
        _
      $region48: #{_lambda_.28} parent=35 // pred_fallthru
        _
      // Predicated region
      $region49: #{_lambda_.28} parent=35 // pred_check
        %p442 = pneg %p162
      $region50: #{_lambda_.28} parent=35 // pred_check_branch
        %444 = sbr.rel (%p442) target = $region52
      $region51: #{_lambda_.28} parent=35 // pred_region
        %p445 = scmp.lt.s32.totalorder %s20, 0
        %s446 = scalar_select %p445, %s20, 0
        %p447 = scmp.lt.s32.totalorder %s21, 0
        %s448 = scalar_select %p447, %s21, 0
        %s449 = sadd.s32 %s448, %s446
        %s450 = smul.addr %s449, 8
        %s451 = scalar_lea.vmem %s4, %s450
      $region52: #{_lambda_.28} parent=35 // pred_fallthru
        _
    $region36: #{_lambda_.28} parent=5 // pred_fallthru
      _
    %p452 = scmp.le.s32.totalorder 2, %s10
    // Predicated region
    $region53: #{_lambda_.28} parent=5 // pred_check
      %p453 = pneg %p452
    $region54: #{_lambda_.28} parent=5 // pred_check_branch
      %455 = sbr.rel (%p453) target = $region56
    $region55: #{_lambda_.28} parent=5 // pred_region
      %s456 = ssub.s32 %s10, 2
    $region56: #{_lambda_.28} parent=5 // pred_fallthru
      _
  $region6: #{_lambda_.28} parent=0 // loop_footer
    %s14 = sadd.s32 1, %s10
  $region7: #{_lambda_.28} parent=0 // loop_footer_branch
    %9 = sbr.rel target = $region3
  $region8: #{_lambda_.28} parent=0 // loop_exit
    _

// kernel: _lambda_.30
$region0: #{_lambda_.30}
  #allocation0 [shape = 'u32[]', space=smem, size = 0x4, offset = 0x4, fixed_abs, tag = 'smem constant byte address 0x4 - core index']
  #allocation1 [shape = 'u32[144,128]{1,0:T(1,128)}', space=vmem, size = 0x12000, scoped, tag = 'internal scratch']
  #allocation2 [shape = 'f32[8,256]{1,0:T(8,128)}', space=vmem, size = 0x2000, scoped, tag = 'scratch operand']
  %s0 = inlined_call_operand.vmem [shape: bf16[8,128], index: 0, kind: input, shape index: {}]
  %s1 = inlined_call_operand.vmem [shape: bf16[128,256], index: 1, kind: input, shape index: {}]
  %s2 = inlined_call_operand.vmem [shape: f32[1,256], index: 2, kind: input, shape index: {}]
  %s3 = inlined_call_operand.vmem [shape: f32[1,256], index: 3, kind: input, shape index: {}]
  %s4 = inlined_call_operand.vmem [shape: f32[8,256], index: 4, kind: input, shape index: {}]
  %s5 = inlined_call_operand.vmem [shape: f32[8,256], index: 5, kind: output, shape index: {}]
  %s6 = sld [smem:[#allocation0]]
  $region38: #{_lambda_.30} parent=0
    _
  %s8 = ssub.s32 1, %s6
  %s9 = scalar_select 0, %s8, %s6
  // Predicated region
  $region2: #{_lambda_.30} parent=0 // pred_check
    _
  $region3: #{_lambda_.30} parent=0 // pred_check_branch
    %11 = sbr.rel (0) target = $region5
  $region4: #{_lambda_.30} parent=0 // pred_region
    _
  $region5: #{_lambda_.30} parent=0 // pred_fallthru
    _
  // Predicated region
  $region6: #{_lambda_.30} parent=0 // pred_check
    _
  $region7: #{_lambda_.30} parent=0 // pred_check_branch
    %13 = sbr.rel (0) target = $region9
  $region8: #{_lambda_.30} parent=0 // pred_region
    _
  $region9: #{_lambda_.30} parent=0 // pred_fallthru
    _
  // Predicated region
  $region10: #{_lambda_.30} parent=0 // pred_check
    _
  $region11: #{_lambda_.30} parent=0 // pred_check_branch
    %15 = sbr.rel (0) target = $region13
  $region12: #{_lambda_.30} parent=0 // pred_region
    _
  $region13: #{_lambda_.30} parent=0 // pred_fallthru
    _
  // Predicated region
  $region14: #{_lambda_.30} parent=0 // pred_check
    _
  $region15: #{_lambda_.30} parent=0 // pred_check_branch
    %17 = sbr.rel (0) target = $region17
  $region16: #{_lambda_.30} parent=0 // pred_region
    _
  $region17: #{_lambda_.30} parent=0 // pred_fallthru
    _
  // Predicated region
  $region18: #{_lambda_.30} parent=0 // pred_check
    _
  $region19: #{_lambda_.30} parent=0 // pred_check_branch
    %19 = sbr.rel (0) target = $region21
  $region20: #{_lambda_.30} parent=0 // pred_region
    _
  $region21: #{_lambda_.30} parent=0 // pred_fallthru
    _
  %p21 = scmp.eq.s32.totalorder 0, 0
  // Predicated region
  $region22: #{_lambda_.30} parent=0 // pred_check
    %p22 = pneg %p21
  $region23: #{_lambda_.30} parent=0 // pred_check_branch
    %24 = sbr.rel (%p22) target = $region25
  $region24: #{_lambda_.30} parent=0 // pred_region
    %25 = vst [vmem:[#allocation2] sm:$0xff] 0.0
    %26 = vst [vmem:[#allocation2 + $0x8] sm:$0xff] 0.0
  $region25: #{_lambda_.30} parent=0 // pred_fallthru
    _
  %v27 = vld [vmem:[#allocation2] sm:$0xff]
  %v28 = vld [vmem:[#allocation2 + $0x8] sm:$0xff]
  %v29 = vld [vmem:[%s0] sm:$0xf]
  %v30 = vld [vmem:[%s1] sm:$0xff]
  %v31 = vld [vmem:[%s1 + $0x8] sm:$0xff]
  %v32 = vld [vmem:[%s1 + $0x10] sm:$0xff]
  %v33 = vld [vmem:[%s1 + $0x18] sm:$0xff]
  %v34 = vld [vmem:[%s1 + $0x20] sm:$0xff]
  %v35 = vld [vmem:[%s1 + $0x28] sm:$0xff]
  %v36 = vld [vmem:[%s1 + $0x30] sm:$0xff]
  %v37 = vld [vmem:[%s1 + $0x38] sm:$0xff]
  %v38 = vld [vmem:[%s1 + $0x40] sm:$0xff]
  %v39 = vld [vmem:[%s1 + $0x48] sm:$0xff]
  %v40 = vld [vmem:[%s1 + $0x50] sm:$0xff]
  %v41 = vld [vmem:[%s1 + $0x58] sm:$0xff]
  %v42 = vld [vmem:[%s1 + $0x60] sm:$0xff]
  %v43 = vld [vmem:[%s1 + $0x68] sm:$0xff]
  %v44 = vld [vmem:[%s1 + $0x70] sm:$0xff]
  %v45 = vld [vmem:[%s1 + $0x78] sm:$0xff]
  %v62 = vunpack.c.l.b16 %v30
  %v63 = vunpack.c.h.b16 %v30
  %v64 = vunpack.c.l.b16 %v31
  %v65 = vunpack.c.h.b16 %v31
  %v66 = vunpack.c.l.b16 %v32
  %v67 = vunpack.c.h.b16 %v32
  %v68 = vunpack.c.l.b16 %v33
  %v69 = vunpack.c.h.b16 %v33
  %v70 = vunpack.c.l.b16 %v34
  %v71 = vunpack.c.h.b16 %v34
  %v72 = vunpack.c.l.b16 %v35
  %v73 = vunpack.c.h.b16 %v35
  %v74 = vunpack.c.l.b16 %v36
  %v75 = vunpack.c.h.b16 %v36
  %v76 = vunpack.c.l.b16 %v37
  %v77 = vunpack.c.h.b16 %v37
  %v78 = vunpack.c.l.b16 %v38
  %v79 = vunpack.c.h.b16 %v38
  %v80 = vunpack.c.l.b16 %v39
  %v81 = vunpack.c.h.b16 %v39
  %v82 = vunpack.c.l.b16 %v40
  %v83 = vunpack.c.h.b16 %v40
  %v84 = vunpack.c.l.b16 %v41
  %v85 = vunpack.c.h.b16 %v41
  %v86 = vunpack.c.l.b16 %v42
  %v87 = vunpack.c.h.b16 %v42
  %v88 = vunpack.c.l.b16 %v43
  %v89 = vunpack.c.h.b16 %v43
  %v90 = vunpack.c.l.b16 %v44
  %v91 = vunpack.c.h.b16 %v44
  %v92 = vunpack.c.l.b16 %v45
  %v93 = vunpack.c.h.b16 %v45
  %v94 = vpack.c.b16 %v64, %v62
  %v95 = vpack.c.b16 %v65, %v63
  %v96 = vpack.c.b16 %v68, %v66
  %v97 = vpack.c.b16 %v69, %v67
  %v98 = vpack.c.b16 %v72, %v70
  %v99 = vpack.c.b16 %v73, %v71
  %v100 = vpack.c.b16 %v76, %v74
  %v101 = vpack.c.b16 %v77, %v75
  %v102 = vpack.c.b16 %v80, %v78
  %v103 = vpack.c.b16 %v81, %v79
  %v104 = vpack.c.b16 %v84, %v82
  %v105 = vpack.c.b16 %v85, %v83
  %v106 = vpack.c.b16 %v88, %v86
  %v107 = vpack.c.b16 %v89, %v87
  %v108 = vpack.c.b16 %v92, %v90
  %v109 = vpack.c.b16 %v93, %v91
  %126 = vmatprep.subr.bf16.mxu0 %v95
  %127 = vmatpush1.bf16.msra.mxu0 %v94
  %128 = vmatprep.subr.bf16.mxu0 %v97
  %129 = vmatpush1.bf16.msra.mxu0 %v96
  %130 = vmatprep.subr.bf16.mxu0 %v99
  %131 = vmatpush1.bf16.msra.mxu0 %v98
  %132 = vmatprep.subr.bf16.mxu0 %v101
  %133 = vmatpush1.bf16.msra.mxu0 %v100
  %134 = vmatprep.subr.bf16.mxu0 %v103
  %135 = vmatpush1.bf16.msra.mxu0 %v102
  %136 = vmatprep.subr.bf16.mxu0 %v105
  %137 = vmatpush1.bf16.msra.mxu0 %v104
  %138 = vmatprep.subr.bf16.mxu0 %v107
  %139 = vmatpush1.bf16.msra.mxu0 %v106
  %140 = vmatprep.subr.bf16.mxu0 %v109
  %141 = vmatpush1.bf16.msra.mxu0 %v108
  %142 = vmatprep.subr.bf16.mxu0 0
  %143 = vmatpush1.bf16.msra.mxu0 0
  %144 = vmatprep.subr.bf16.mxu0 0
  %145 = vmatpush1.bf16.msra.mxu0 0
  %146 = vmatprep.subr.bf16.mxu0 0
  %147 = vmatpush1.bf16.msra.mxu0 0
  %148 = vmatprep.subr.bf16.mxu0 0
  %149 = vmatpush1.bf16.msra.mxu0 0
  %150 = vmatprep.subr.bf16.mxu0 0
  %151 = vmatpush1.bf16.msra.mxu0 0
  %152 = vmatprep.subr.bf16.mxu0 0
  %153 = vmatpush1.bf16.msra.mxu0 0
  %154 = vmatprep.subr.bf16.mxu0 0
  %155 = vmatpush1.bf16.msra.mxu0 0
  %156 = vmatprep.subr.bf16.mxu0 0
  %157 = vmatpush1.bf16.msra.mxu0 0
  %158 = vmatprep.mubr.bf16.mxu0 0
  %159 = vmatmul.mubr.bf16.gmra.mrb[0].mxu0 %v29
  %v160 = vpop.f32.mrb[0].mxu0
  %v161 = vadd.f32 0.0, %v160
  %v162 = vpop.f32.mrb[0].mxu0
  %v163 = vadd.f32 0.0, %v162
  %v164 = vpop.f32.mrb[0].mxu0
  %v165 = vpop.f32.mrb[0].mxu0
  %166 = vdwg.mxu0
  %v167 = vadd.f32 %v27, %v161
  %v168 = vadd.f32 %v28, %v163
  %169 = vst [vmem:[#allocation2] sm:$0xff] %v167
  %170 = vst [vmem:[#allocation2 + $0x8] sm:$0xff] %v168
  // Predicated region
  $region26: #{_lambda_.30} parent=0 // pred_check
    %p171 = pneg %p21
  $region27: #{_lambda_.30} parent=0 // pred_check_branch
    %173 = sbr.rel (%p171) target = $region29
  $region28: #{_lambda_.30} parent=0 // pred_region
    %v174 = vld [vmem:[#allocation2] sm:$0xff]
    %v175 = vld [vmem:[#allocation2 + $0x8] sm:$0xff]
    %v176 = vld [vmem:[%s2] sm:$0x3]
    %v178 = vlaneseq
    %v179 = vshrl.u32 %v178, 7
    %v180 = vsub.s32 0, %v179
    %v181 = vrot.slane %v176, %v180
    %v182 = vlaneseq
    %v183 = vshrl.u32 %v182, 7
    %v184 = vsub.s32 1, %v183
    %v185 = vrot.slane %v176, %v184
    %v188 = vmul.f32 %v174, %v181
    %v189 = vmul.f32 %v175, %v185
    %v190 = vld [vmem:[%s3] sm:$0x3]
    %v192 = vlaneseq
    %v193 = vshrl.u32 %v192, 7
    %v194 = vsub.s32 0, %v193
    %v195 = vrot.slane %v190, %v194
    %v196 = vlaneseq
    %v197 = vshrl.u32 %v196, 7
    %v198 = vsub.s32 1, %v197
    %v199 = vrot.slane %v190, %v198
    %v202 = vadd.f32 %v188, %v195
    %v203 = vadd.f32 %v189, %v199
    %v204 = vld [vmem:[%s4] sm:$0xff]
    %v205 = vld [vmem:[%s4 + $0x8] sm:$0xff]
    %v206 = vadd.f32 %v202, %v204
    %v207 = vadd.f32 %v203, %v205
    %v208 = vmax.f32 %v206, 0.0
    %v209 = vmax.f32 %v207, 0.0
    %210 = vst [vmem:[%s5] sm:$0xff] %v208
    %211 = vst [vmem:[%s5 + $0x8] sm:$0xff] %v209
  $region29: #{_lambda_.30} parent=0 // pred_fallthru
    _
  // Predicated region
  $region30: #{_lambda_.30} parent=0 // pred_check
    _
  $region31: #{_lambda_.30} parent=0 // pred_check_branch
    %213 = sbr.rel (0) target = $region33
  $region32: #{_lambda_.30} parent=0 // pred_region
    _
  $region33: #{_lambda_.30} parent=0 // pred_fallthru
    _
  // Predicated region
  $region34: #{_lambda_.30} parent=0 // pred_check
    _
  $region35: #{_lambda_.30} parent=0 // pred_check_branch
    %215 = sbr.rel (0) target = $region37
  $region36: #{_lambda_.30} parent=0 // pred_region
    _
  $region37: #{_lambda_.30} parent=0 // pred_fallthru
    _

// kernel: _lambda_.31
$region0: #{_lambda_.31}
  #allocation0 [shape = 'u32[]', space=smem, size = 0x4, offset = 0x4, fixed_abs, tag = 'smem constant byte address 0x4 - core index']
  #allocation1 [shape = 'u32[144,128]{1,0:T(1,128)}', space=vmem, size = 0x12000, scoped, tag = 'internal scratch']
  #allocation2 [shape = 'f32[8,128]{1,0:T(8,128)}', space=vmem, size = 0x1000, scoped, tag = 'scratch operand']
  %s0 = inlined_call_operand.vmem [shape: bf16[8,256], index: 0, kind: input, shape index: {}]
  %s1 = inlined_call_operand.vmem [shape: bf16[256,128], index: 1, kind: input, shape index: {}]
  %s2 = inlined_call_operand.vmem [shape: f32[1,128], index: 2, kind: input, shape index: {}]
  %s3 = inlined_call_operand.vmem [shape: f32[1,128], index: 3, kind: input, shape index: {}]
  %s4 = inlined_call_operand.vmem [shape: f32[8,128], index: 4, kind: output, shape index: {}]
  %s5 = sld [smem:[#allocation0]]
  $region34: #{_lambda_.31} parent=0
    _
  %s7 = ssub.s32 1, %s5
  %s8 = scalar_select 0, %s7, %s5
  // Predicated region
  $region2: #{_lambda_.31} parent=0 // pred_check
    _
  $region3: #{_lambda_.31} parent=0 // pred_check_branch
    %10 = sbr.rel (0) target = $region5
  $region4: #{_lambda_.31} parent=0 // pred_region
    _
  $region5: #{_lambda_.31} parent=0 // pred_fallthru
    _
  // Predicated region
  $region6: #{_lambda_.31} parent=0 // pred_check
    _
  $region7: #{_lambda_.31} parent=0 // pred_check_branch
    %12 = sbr.rel (0) target = $region9
  $region8: #{_lambda_.31} parent=0 // pred_region
    _
  $region9: #{_lambda_.31} parent=0 // pred_fallthru
    _
  // Predicated region
  $region10: #{_lambda_.31} parent=0 // pred_check
    _
  $region11: #{_lambda_.31} parent=0 // pred_check_branch
    %14 = sbr.rel (0) target = $region13
  $region12: #{_lambda_.31} parent=0 // pred_region
    _
  $region13: #{_lambda_.31} parent=0 // pred_fallthru
    _
  // Predicated region
  $region14: #{_lambda_.31} parent=0 // pred_check
    _
  $region15: #{_lambda_.31} parent=0 // pred_check_branch
    %16 = sbr.rel (0) target = $region17
  $region16: #{_lambda_.31} parent=0 // pred_region
    _
  $region17: #{_lambda_.31} parent=0 // pred_fallthru
    _
  %p18 = scmp.eq.s32.totalorder 0, 0
  // Predicated region
  $region18: #{_lambda_.31} parent=0 // pred_check
    %p19 = pneg %p18
  $region19: #{_lambda_.31} parent=0 // pred_check_branch
    %21 = sbr.rel (%p19) target = $region21
  $region20: #{_lambda_.31} parent=0 // pred_region
    %22 = vst [vmem:[#allocation2] sm:$0xff] 0.0
  $region21: #{_lambda_.31} parent=0 // pred_fallthru
    _
  %v23 = vld [vmem:[#allocation2] sm:$0xff]
  %v24 = vld [vmem:[%s0] sm:$0xff]
  %v25 = vld [vmem:[%s1] sm:$0xf]
  %v26 = vld [vmem:[%s1 + $0x4] sm:$0xf]
  %v27 = vld [vmem:[%s1 + $0x8] sm:$0xf]
  %v28 = vld [vmem:[%s1 + $0xc] sm:$0xf]
  %v29 = vld [vmem:[%s1 + $0x10] sm:$0xf]
  %v30 = vld [vmem:[%s1 + $0x14] sm:$0xf]
  %v31 = vld [vmem:[%s1 + $0x18] sm:$0xf]
  %v32 = vld [vmem:[%s1 + $0x1c] sm:$0xf]
  %v33 = vld [vmem:[%s1 + $0x20] sm:$0xf]
  %v34 = vld [vmem:[%s1 + $0x24] sm:$0xf]
  %v35 = vld [vmem:[%s1 + $0x28] sm:$0xf]
  %v36 = vld [vmem:[%s1 + $0x2c] sm:$0xf]
  %v37 = vld [vmem:[%s1 + $0x30] sm:$0xf]
  %v38 = vld [vmem:[%s1 + $0x34] sm:$0xf]
  %v39 = vld [vmem:[%s1 + $0x38] sm:$0xf]
  %v40 = vld [vmem:[%s1 + $0x3c] sm:$0xf]
  %v41 = vld [vmem:[%s1 + $0x40] sm:$0xf]
  %v42 = vld [vmem:[%s1 + $0x44] sm:$0xf]
  %v43 = vld [vmem:[%s1 + $0x48] sm:$0xf]
  %v44 = vld [vmem:[%s1 + $0x4c] sm:$0xf]
  %v45 = vld [vmem:[%s1 + $0x50] sm:$0xf]
  %v46 = vld [vmem:[%s1 + $0x54] sm:$0xf]
  %v47 = vld [vmem:[%s1 + $0x58] sm:$0xf]
  %v48 = vld [vmem:[%s1 + $0x5c] sm:$0xf]
  %v49 = vld [vmem:[%s1 + $0x60] sm:$0xf]
  %v50 = vld [vmem:[%s1 + $0x64] sm:$0xf]
  %v51 = vld [vmem:[%s1 + $0x68] sm:$0xf]
  %v52 = vld [vmem:[%s1 + $0x6c] sm:$0xf]
  %v53 = vld [vmem:[%s1 + $0x70] sm:$0xf]
  %v54 = vld [vmem:[%s1 + $0x74] sm:$0xf]
  %v55 = vld [vmem:[%s1 + $0x78] sm:$0xf]
  %v56 = vld [vmem:[%s1 + $0x7c] sm:$0xf]
  %v58 = vunpack.c.l.b16 %v24
  %v59 = vunpack.c.h.b16 %v24
  %v60 = vpack.c.b16 %v58, %v58
  %v61 = vpack.c.b16 %v59, %v59
  %v96 = vunpack.c.l.b16 %v25
  %v97 = vunpack.c.l.b16 %v26
  %v98 = vunpack.c.l.b16 %v27
  %v99 = vunpack.c.l.b16 %v28
  %v100 = vunpack.c.l.b16 %v29
  %v101 = vunpack.c.l.b16 %v30
  %v102 = vunpack.c.l.b16 %v31
  %v103 = vunpack.c.l.b16 %v32
  %v104 = vunpack.c.l.b16 %v33
  %v105 = vunpack.c.l.b16 %v34
  %v106 = vunpack.c.l.b16 %v35
  %v107 = vunpack.c.l.b16 %v36
  %v108 = vunpack.c.l.b16 %v37
  %v109 = vunpack.c.l.b16 %v38
  %v110 = vunpack.c.l.b16 %v39
  %v111 = vunpack.c.l.b16 %v40
  %v112 = vunpack.c.l.b16 %v41
  %v113 = vunpack.c.l.b16 %v42
  %v114 = vunpack.c.l.b16 %v43
  %v115 = vunpack.c.l.b16 %v44
  %v116 = vunpack.c.l.b16 %v45
  %v117 = vunpack.c.l.b16 %v46
  %v118 = vunpack.c.l.b16 %v47
  %v119 = vunpack.c.l.b16 %v48
  %v120 = vunpack.c.l.b16 %v49
  %v121 = vunpack.c.l.b16 %v50
  %v122 = vunpack.c.l.b16 %v51
  %v123 = vunpack.c.l.b16 %v52
  %v124 = vunpack.c.l.b16 %v53
  %v125 = vunpack.c.l.b16 %v54
  %v126 = vunpack.c.l.b16 %v55
  %v127 = vunpack.c.l.b16 %v56
  %v128 = vpack.c.b16 %v97, %v96
  %v129 = vpack.c.b16 %v99, %v98
  %v130 = vpack.c.b16 %v101, %v100
  %v131 = vpack.c.b16 %v103, %v102
  %v132 = vpack.c.b16 %v105, %v104
  %v133 = vpack.c.b16 %v107, %v106
  %v134 = vpack.c.b16 %v109, %v108
  %v135 = vpack.c.b16 %v111, %v110
  %v136 = vpack.c.b16 %v113, %v112
  %v137 = vpack.c.b16 %v115, %v114
  %v138 = vpack.c.b16 %v117, %v116
  %v139 = vpack.c.b16 %v119, %v118
  %v140 = vpack.c.b16 %v121, %v120
  %v141 = vpack.c.b16 %v123, %v122
  %v142 = vpack.c.b16 %v125, %v124
  %v143 = vpack.c.b16 %v127, %v126
  %160 = vmatprep.subr.bf16.mxu0 0
  %161 = vmatpush1.bf16.msra.mxu0 %v128
  %162 = vmatprep.subr.bf16.mxu0 0
  %163 = vmatpush1.bf16.msra.mxu0 %v129
  %164 = vmatprep.subr.bf16.mxu0 0
  %165 = vmatpush1.bf16.msra.mxu0 %v130
  %166 = vmatprep.subr.bf16.mxu0 0
  %167 = vmatpush1.bf16.msra.mxu0 %v131
  %168 = vmatprep.subr.bf16.mxu0 0
  %169 = vmatpush1.bf16.msra.mxu0 %v132
  %170 = vmatprep.subr.bf16.mxu0 0
  %171 = vmatpush1.bf16.msra.mxu0 %v133
  %172 = vmatprep.subr.bf16.mxu0 0
  %173 = vmatpush1.bf16.msra.mxu0 %v134
  %174 = vmatprep.subr.bf16.mxu0 0
  %175 = vmatpush1.bf16.msra.mxu0 %v135
  %176 = vmatprep.subr.bf16.mxu0 0
  %177 = vmatpush1.bf16.msra.mxu0 %v136
  %178 = vmatprep.subr.bf16.mxu0 0
  %179 = vmatpush1.bf16.msra.mxu0 %v137
  %180 = vmatprep.subr.bf16.mxu0 0
  %181 = vmatpush1.bf16.msra.mxu0 %v138
  %182 = vmatprep.subr.bf16.mxu0 0
  %183 = vmatpush1.bf16.msra.mxu0 %v139
  %184 = vmatprep.subr.bf16.mxu0 0
  %185 = vmatpush1.bf16.msra.mxu0 %v140
  %186 = vmatprep.subr.bf16.mxu0 0
  %187 = vmatpush1.bf16.msra.mxu0 %v141
  %188 = vmatprep.subr.bf16.mxu0 0
  %189 = vmatpush1.bf16.msra.mxu0 %v142
  %190 = vmatprep.subr.bf16.mxu0 0
  %191 = vmatpush1.bf16.msra.mxu0 %v143
  %192 = vmatprep.mubr.bf16.mxu0 %v61
  %193 = vmatmul.mubr.bf16.gmra.mrb[0].mxu0 %v60
  %v194 = vpop.f32.mrb[0].mxu0
  %v195 = vadd.f32 0.0, %v194
  %v196 = vpop.f32.mrb[0].mxu0
  %v197 = vpop.f32.mrb[0].mxu0
  %v198 = vpop.f32.mrb[0].mxu0
  %199 = vdwg.mxu0
  %v200 = vadd.f32 %v23, %v195
  %201 = vst [vmem:[#allocation2] sm:$0xff] %v200
  // Predicated region
  $region22: #{_lambda_.31} parent=0 // pred_check
    %p202 = pneg %p18
  $region23: #{_lambda_.31} parent=0 // pred_check_branch
    %204 = sbr.rel (%p202) target = $region25
  $region24: #{_lambda_.31} parent=0 // pred_region
    %v205 = vld [vmem:[#allocation2] sm:$0xff]
    %v206 = vld [vmem:[%s2] sm:$0x1]
    %v208 = vlaneseq
    %v209 = vshrl.u32 %v208, 7
    %v210 = vsub.s32 0, %v209
    %v211 = vrot.slane %v206, %v210
    %v213 = vmul.f32 %v205, %v211
    %v214 = vld [vmem:[%s3] sm:$0x1]
    %v216 = vlaneseq
    %v217 = vshrl.u32 %v216, 7
    %v218 = vsub.s32 0, %v217
    %v219 = vrot.slane %v214, %v218
    %v221 = vadd.f32 %v213, %v219
    %v222 = vmax.f32 %v221, 0.0
    %223 = vst [vmem:[%s4] sm:$0xff] %v222
  $region25: #{_lambda_.31} parent=0 // pred_fallthru
    _
  // Predicated region
  $region26: #{_lambda_.31} parent=0 // pred_check
    _
  $region27: #{_lambda_.31} parent=0 // pred_check_branch
    %225 = sbr.rel (0) target = $region29
  $region28: #{_lambda_.31} parent=0 // pred_region
    _
  $region29: #{_lambda_.31} parent=0 // pred_fallthru
    _
  // Predicated region
  $region30: #{_lambda_.31} parent=0 // pred_check
    _
  $region31: #{_lambda_.31} parent=0 // pred_check_branch
    %227 = sbr.rel (0) target = $region33
  $region32: #{_lambda_.31} parent=0 // pred_region
    _
  $region33: #{_lambda_.31} parent=0 // pred_fallthru
    _

// kernel: _lambda_.33
$region0: #{_lambda_.33}
  #allocation0 [shape = 'u32[]', space=smem, size = 0x4, offset = 0x4, fixed_abs, tag = 'smem constant byte address 0x4 - core index']
  #allocation1 [shape = 'u32[144,128]{1,0:T(1,128)}', space=vmem, size = 0x12000, scoped, tag = 'internal scratch']
  #allocation2 [shape = 'f32[8,256]{1,0:T(8,128)}', space=vmem, size = 0x2000, scoped, tag = 'scratch operand']
  %s0 = inlined_call_operand.vmem [shape: bf16[8,256], index: 0, kind: input, shape index: {}]
  %s1 = inlined_call_operand.vmem [shape: bf16[256,512], index: 1, kind: input, shape index: {}]
  %s2 = inlined_call_operand.vmem [shape: f32[1,512], index: 2, kind: input, shape index: {}]
  %s3 = inlined_call_operand.vmem [shape: f32[1,512], index: 3, kind: input, shape index: {}]
  %s4 = inlined_call_operand.vmem [shape: f32[8,512], index: 4, kind: output, shape index: {}]
  %s5 = sld [smem:[#allocation0]]
  $region95: #{_lambda_.33} parent=0
    _
  %s7 = ssub.s32 1, %s5
  %s8 = scalar_select 0, %s7, %s5
  $region1: #{_lambda_.33} parent=0
    #allocation3 [shape = 'u8[262144]{0}', space=vmem, size = 0x40000, scoped, tag = 'input window, operand 1']
    loop: start=0, step=1, limit=4
    $region2: #{_lambda_.33} parent=1 // loop_pre_header
      _
    $region3: #{_lambda_.33} parent=1 // loop_header
      %s10 = sphi 0, %s14
      %p11 = scmp.ge.s32.totalorder %s10, 4
      %s17 = sphi 0, %s36
      %s18 = sphi 0, %s32
      %s19 = sphi 0, %s28
      %s20 = sphi 0, %s17
      %s21 = sphi 0, %s18
      %s22 = sphi 0, %s19
      %s23 = sphi 0, %s20
      %s24 = sphi 0, %s21
      %s25 = sphi 0, %s22
      %s41 = sphi 0, %s43
      %s44 = sphi 0, %s41
      %s45 = sphi 0, %s44
      %s61 = sphi 0, %s45
      %s69 = sphi 0, %s71
      %s72 = sphi 0, %s69
      %s73 = sphi 0, %s72
      %s89 = sphi 0, %s73
      %s95 = sphi 0, %s97
      %s98 = sphi 0, %s95
      %s99 = sphi 0, %s98
      %s115 = sphi 0, %s99
      %s121 = sphi 0, %s123
      %s124 = sphi 0, %s121
      %s125 = sphi 0, %s124
      %s141 = sphi 0, %s125
      %s149 = sphi 0, %s151
      %s152 = sphi 0, %s149
      %s153 = sphi 0, %s152
      %s169 = sphi 0, %s153
    $region4: #{_lambda_.33} parent=1 // loop_header_branch
      %13 = sbr.rel (%p11) target = $region8
    $region5: #{_lambda_.33} parent=1 // loop_body
      %s15 = ssub.s32 %s10, 1
      %s16 = ssub.s32 %s10, 2
      %s26 = sadd.s32 1, %s19
      %p27 = scmp.ge.s32.totalorder %s26, 1
      %s28 = scalar_select %p27, 0, %s26
      %s29 = sadd.s32 1, %s18
      %s30 = scalar_select %p27, %s29, %s18
      %p31 = scmp.ge.s32.totalorder %s30, 2
      %s32 = scalar_select %p31, 0, %s30
      %s33 = sadd.s32 1, %s17
      %s34 = scalar_select %p31, %s33, %s17
      %p35 = scmp.ge.s32.totalorder %s34, 1
      %s36 = scalar_select %p35, 0, %s34
      %s37 = ssub.s32 %s17, %s36
      %s38 = ssub.s32 %s19, %s28
      %s39 = sor.u32 %s37, %s38
      %p40 = scmp.eq.s32.totalorder %s39, 0
      %s42 = sadd.s32 %s41, 1
      %s43 = scalar_select %p40, %s41, %s42
      %p46 = pneg %p40
      %p47 = scmp.eq.s32.totalorder %s10, 1
      %p48 = por %p46, %p47
      %p49 = scmp.ne.s32.totalorder %s41, %s44
      %p50 = scmp.eq.s32.totalorder %s10, 0
      %p51 = por %p49, %p50
      %p52 = scmp.ne.s32.totalorder %s41, %s44
      %p53 = scmp.eq.s32.totalorder %s15, 1
      %p54 = por %p52, %p53
      %p55 = scmp.ne.s32.totalorder %s44, %s45
      %p56 = scmp.eq.s32.totalorder %s15, 0
      %p57 = por %p55, %p56
      %p58 = scmp.ne.s32.totalorder %s44, %s45
      %p59 = scmp.eq.s32.totalorder %s16, 1
      %p60 = por %p58, %p59
      %p62 = scmp.ne.s32.totalorder %s45, %s61
      %p63 = scmp.eq.s32.totalorder %s16, 0
      %p64 = por %p62, %p63
      %s65 = ssub.s32 %s19, %s28
      %s66 = ssub.s32 %s18, %s32
      %s67 = sor.u32 %s65, %s66
      %p68 = scmp.eq.s32.totalorder %s67, 0
      %s70 = sadd.s32 %s69, 1
      %s71 = scalar_select %p68, %s69, %s70
      %p74 = pneg %p68
      %p75 = scmp.eq.s32.totalorder %s10, 1
      %p76 = por %p74, %p75
      %p77 = scmp.ne.s32.totalorder %s69, %s72
      %p78 = scmp.eq.s32.totalorder %s10, 0
      %p79 = por %p77, %p78
      %p80 = scmp.ne.s32.totalorder %s69, %s72
      %p81 = scmp.eq.s32.totalorder %s15, 1
      %p82 = por %p80, %p81
      %p83 = scmp.ne.s32.totalorder %s72, %s73
      %p84 = scmp.eq.s32.totalorder %s15, 0
      %p85 = por %p83, %p84
      %p86 = scmp.ne.s32.totalorder %s72, %s73
      %p87 = scmp.eq.s32.totalorder %s16, 1
      %p88 = por %p86, %p87
      %p90 = scmp.ne.s32.totalorder %s73, %s89
      %p91 = scmp.eq.s32.totalorder %s16, 0
      %p92 = por %p90, %p91
      %s93 = ssub.s32 %s18, %s32
      %p94 = scmp.eq.s32.totalorder %s93, 0
      %s96 = sadd.s32 %s95, 1
      %s97 = scalar_select %p94, %s95, %s96
      %p100 = pneg %p94
      %p101 = scmp.eq.s32.totalorder %s10, 1
      %p102 = por %p100, %p101
      %p103 = scmp.ne.s32.totalorder %s95, %s98
      %p104 = scmp.eq.s32.totalorder %s10, 0
      %p105 = por %p103, %p104
      %p106 = scmp.ne.s32.totalorder %s95, %s98
      %p107 = scmp.eq.s32.totalorder %s15, 1
      %p108 = por %p106, %p107
      %p109 = scmp.ne.s32.totalorder %s98, %s99
      %p110 = scmp.eq.s32.totalorder %s15, 0
      %p111 = por %p109, %p110
      %p112 = scmp.ne.s32.totalorder %s98, %s99
      %p113 = scmp.eq.s32.totalorder %s16, 1
      %p114 = por %p112, %p113
      %p116 = scmp.ne.s32.totalorder %s99, %s115
      %p117 = scmp.eq.s32.totalorder %s16, 0
      %p118 = por %p116, %p117
      %s119 = ssub.s32 %s18, %s32
      %p120 = scmp.eq.s32.totalorder %s119, 0
      %s122 = sadd.s32 %s121, 1
      %s123 = scalar_select %p120, %s121, %s122
      %p126 = pneg %p120
      %p127 = scmp.eq.s32.totalorder %s10, 1
      %p128 = por %p126, %p127
      %p129 = scmp.ne.s32.totalorder %s121, %s124
      %p130 = scmp.eq.s32.totalorder %s10, 0
      %p131 = por %p129, %p130
      %p132 = scmp.ne.s32.totalorder %s121, %s124
      %p133 = scmp.eq.s32.totalorder %s15, 1
      %p134 = por %p132, %p133
      %p135 = scmp.ne.s32.totalorder %s124, %s125
      %p136 = scmp.eq.s32.totalorder %s15, 0
      %p137 = por %p135, %p136
      %p138 = scmp.ne.s32.totalorder %s124, %s125
      %p139 = scmp.eq.s32.totalorder %s16, 1
      %p140 = por %p138, %p139
      %p142 = scmp.ne.s32.totalorder %s125, %s141
      %p143 = scmp.eq.s32.totalorder %s16, 0
      %p144 = por %p142, %p143
      %s145 = ssub.s32 %s17, %s36
      %s146 = ssub.s32 %s18, %s32
      %s147 = sor.u32 %s145, %s146
      %p148 = scmp.eq.s32.totalorder %s147, 0
      %s150 = sadd.s32 %s149, 1
      %s151 = scalar_select %p148, %s149, %s150
      %p154 = pneg %p148
      %p155 = scmp.eq.s32.totalorder %s10, 1
      %p156 = por %p154, %p155
      %p157 = scmp.ne.s32.totalorder %s149, %s152
      %p158 = scmp.eq.s32.totalorder %s10, 0
      %p159 = por %p157, %p158
      %p160 = scmp.ne.s32.totalorder %s149, %s152
      %p161 = scmp.eq.s32.totalorder %s15, 1
      %p162 = por %p160, %p161
      %p163 = scmp.ne.s32.totalorder %s152, %s153
      %p164 = scmp.eq.s32.totalorder %s15, 0
      %p165 = por %p163, %p164
      %p166 = scmp.ne.s32.totalorder %s152, %s153
      %p167 = scmp.eq.s32.totalorder %s16, 1
      %p168 = por %p166, %p167
      %p170 = scmp.ne.s32.totalorder %s153, %s169
      %p171 = scmp.eq.s32.totalorder %s16, 0
      %p172 = por %p170, %p171
      %p173 = scmp.le.s32.totalorder 1, %s10
      %p174 = scmp.lt.s32.totalorder %s10, 3
      %p175 = pnand %p173, %p174
      %p176 = pneg %p175
      // Predicated region
      $region9: #{_lambda_.33} parent=5 // pred_check
        _
      $region10: #{_lambda_.33} parent=5 // pred_check_branch
        %178 = sbr.rel (%p175) target = $region12
      $region11: #{_lambda_.33} parent=5 // pred_region
        %s179 = ssub.s32 %s10, 1
        // Predicated region
        $region13: #{_lambda_.33} parent=11 // pred_check
          %p180 = pneg %p57
        $region14: #{_lambda_.33} parent=11 // pred_check_branch
          %182 = sbr.rel (%p180) target = $region16
        $region15: #{_lambda_.33} parent=11 // pred_region
          %s183 = smul.u32 2, %s22
          %p184 = scmp.lt.s32.totalorder %s20, 0
          %s185 = scalar_select %p184, %s20, 0
          %p186 = scmp.lt.s32.totalorder %s183, 1
          %s187 = scalar_select %p186, %s183, 1
          %s188 = smul.addr %s185, 2
          %s189 = sadd.s32 %s187, %s188
          %s190 = smul.addr %s189, 4
          %s191 = scalar_lea.vmem %s0, %s190
          %s192 = smul.u32 2, %s22
        $region16: #{_lambda_.33} parent=11 // pred_fallthru
          _
      $region12: #{_lambda_.33} parent=5 // pred_fallthru
        _
      %p193 = scmp.lt.s32.totalorder %s10, 2
      // Predicated region
      $region17: #{_lambda_.33} parent=5 // pred_check
        %p194 = pneg %p193
      $region18: #{_lambda_.33} parent=5 // pred_check_branch
        %196 = sbr.rel (%p194) target = $region20
      $region19: #{_lambda_.33} parent=5 // pred_region
        // Predicated region
        $region21: #{_lambda_.33} parent=19 // pred_check
          %p197 = pneg %p79
        $region22: #{_lambda_.33} parent=19 // pred_check_branch
          %199 = sbr.rel (%p197) target = $region24
        $region23: #{_lambda_.33} parent=19 // pred_region
          %s200 = sand.u32 %s69, 1
          %s201 = sand.u32 %s69, 1
          %s202 = smul.addr %s201, 256
          %s203 = scalar_lea.vmem [#allocation3], %s202
          %s204 = smul.u32 32, %s19
          %s205 = smul.u32 2, %s18
          %s206 = smul.addr %s204, 4
          %s207 = sadd.s32 %s205, %s206
          %s208 = smul.addr %s207, 4
          %s209 = scalar_lea.vmem %s1, %s208
          // Predicated region
          $region25: #{_lambda_.33} parent=23 // pred_check
            _
          $region26: #{_lambda_.33} parent=23 // pred_check_branch
            %211 = sbr.rel (0) target = $region28
          $region27: #{_lambda_.33} parent=23 // pred_region
            // Predicated region
            $region29: #{_lambda_.33} parent=27 // pred_check
              _
            $region30: #{_lambda_.33} parent=27 // pred_check_branch
              %213 = sbr.rel (0) target = $region32
            $region31: #{_lambda_.33} parent=27 // pred_region
              // Predicated region
              $region44: #{_lambda_.33} parent=31 // pred_check
                _
              $region45: #{_lambda_.33} parent=31 // pred_check_branch
                %290 = sbr.rel (0) target = $region47
              $region46: #{_lambda_.33} parent=31 // pred_region
                loop: start=0, step=1, limit=1
                $region48: #{_lambda_.33} parent=46 // loop_pre_header
                  _
                $region49: #{_lambda_.33} parent=46 // loop_header
                  %s292 = sphi 0, %s296
                  %p293 = scmp.ge.s32.totalorder %s292, 1
                  %s297 = sphi %s209, %s209
                  %s298 = sphi %s203, %s203
                $region50: #{_lambda_.33} parent=46 // loop_header_branch
                  %295 = sbr.rel (%p293) target = $region54
                $region51: #{_lambda_.33} parent=46 // loop_body
                  %v299 = vld [vmem:[%s297] sm:$0xff]
                  %300 = vst [vmem:[%s298] sm:$0xff] %v299
                  %v301 = vld [vmem:[%s297 + $0x10] sm:$0xff]
                  %302 = vst [vmem:[%s298 + $0x8] sm:$0xff] %v301
                  %v303 = vld [vmem:[%s297 + $0x20] sm:$0xff]
                  %304 = vst [vmem:[%s298 + $0x10] sm:$0xff] %v303
                  %v305 = vld [vmem:[%s297 + $0x30] sm:$0xff]
                  %306 = vst [vmem:[%s298 + $0x18] sm:$0xff] %v305
                  %v307 = vld [vmem:[%s297 + $0x40] sm:$0xff]
                  %308 = vst [vmem:[%s298 + $0x20] sm:$0xff] %v307
                  %v309 = vld [vmem:[%s297 + $0x50] sm:$0xff]
                  %310 = vst [vmem:[%s298 + $0x28] sm:$0xff] %v309
                  %v311 = vld [vmem:[%s297 + $0x60] sm:$0xff]
                  %312 = vst [vmem:[%s298 + $0x30] sm:$0xff] %v311
                  %v313 = vld [vmem:[%s297 + $0x70] sm:$0xff]
                  %314 = vst [vmem:[%s298 + $0x38] sm:$0xff] %v313
                  %v315 = vld [vmem:[%s297 + $0x80] sm:$0xff]
                  %316 = vst [vmem:[%s298 + $0x40] sm:$0xff] %v315
                  %v317 = vld [vmem:[%s297 + $0x90] sm:$0xff]
                  %318 = vst [vmem:[%s298 + $0x48] sm:$0xff] %v317
                  %v319 = vld [vmem:[%s297 + $0xa0] sm:$0xff]
                  %320 = vst [vmem:[%s298 + $0x50] sm:$0xff] %v319
                  %v321 = vld [vmem:[%s297 + $0xb0] sm:$0xff]
                  %322 = vst [vmem:[%s298 + $0x58] sm:$0xff] %v321
                  %v323 = vld [vmem:[%s297 + $0xc0] sm:$0xff]
                  %324 = vst [vmem:[%s298 + $0x60] sm:$0xff] %v323
                  %v325 = vld [vmem:[%s297 + $0xd0] sm:$0xff]
                  %326 = vst [vmem:[%s298 + $0x68] sm:$0xff] %v325
                  %v327 = vld [vmem:[%s297 + $0xe0] sm:$0xff]
                  %328 = vst [vmem:[%s298 + $0x70] sm:$0xff] %v327
                  %v329 = vld [vmem:[%s297 + $0xf0] sm:$0xff]
                  %330 = vst [vmem:[%s298 + $0x78] sm:$0xff] %v329
                  %v331 = vld [vmem:[%s297 + $0x100] sm:$0xff]
                  %332 = vst [vmem:[%s298 + $0x80] sm:$0xff] %v331
                  %v333 = vld [vmem:[%s297 + $0x110] sm:$0xff]
                  %334 = vst [vmem:[%s298 + $0x88] sm:$0xff] %v333
                  %v335 = vld [vmem:[%s297 + $0x120] sm:$0xff]
                  %336 = vst [vmem:[%s298 + $0x90] sm:$0xff] %v335
                  %v337 = vld [vmem:[%s297 + $0x130] sm:$0xff]
                  %338 = vst [vmem:[%s298 + $0x98] sm:$0xff] %v337
                  %v339 = vld [vmem:[%s297 + $0x140] sm:$0xff]
                  %340 = vst [vmem:[%s298 + $0xa0] sm:$0xff] %v339
                  %v341 = vld [vmem:[%s297 + $0x150] sm:$0xff]
                  %342 = vst [vmem:[%s298 + $0xa8] sm:$0xff] %v341
                  %v343 = vld [vmem:[%s297 + $0x160] sm:$0xff]
                  %344 = vst [vmem:[%s298 + $0xb0] sm:$0xff] %v343
                  %v345 = vld [vmem:[%s297 + $0x170] sm:$0xff]
                  %346 = vst [vmem:[%s298 + $0xb8] sm:$0xff] %v345
                  %v347 = vld [vmem:[%s297 + $0x180] sm:$0xff]
                  %348 = vst [vmem:[%s298 + $0xc0] sm:$0xff] %v347
                  %v349 = vld [vmem:[%s297 + $0x190] sm:$0xff]
                  %350 = vst [vmem:[%s298 + $0xc8] sm:$0xff] %v349
                  %v351 = vld [vmem:[%s297 + $0x1a0] sm:$0xff]
                  %352 = vst [vmem:[%s298 + $0xd0] sm:$0xff] %v351
                  %v353 = vld [vmem:[%s297 + $0x1b0] sm:$0xff]
                  %354 = vst [vmem:[%s298 + $0xd8] sm:$0xff] %v353
                  %v355 = vld [vmem:[%s297 + $0x1c0] sm:$0xff]
                  %356 = vst [vmem:[%s298 + $0xe0] sm:$0xff] %v355
                  %v357 = vld [vmem:[%s297 + $0x1d0] sm:$0xff]
                  %358 = vst [vmem:[%s298 + $0xe8] sm:$0xff] %v357
                  %v359 = vld [vmem:[%s297 + $0x1e0] sm:$0xff]
                  %360 = vst [vmem:[%s298 + $0xf0] sm:$0xff] %v359
                  %v361 = vld [vmem:[%s297 + $0x1f0] sm:$0xff]
                  %362 = vst [vmem:[%s298 + $0xf8] sm:$0xff] %v361
                $region52: #{_lambda_.33} parent=46 // loop_footer
                  %s296 = sadd.s32 1, %s292
                $region53: #{_lambda_.33} parent=46 // loop_footer_branch
                  %291 = sbr.rel target = $region49
                $region54: #{_lambda_.33} parent=46 // loop_exit
                  _
              $region47: #{_lambda_.33} parent=31 // pred_fallthru
                _
              // Predicated region
              $region55: #{_lambda_.33} parent=31 // pred_check
                _
              $region56: #{_lambda_.33} parent=31 // pred_check_branch
                %364 = sbr.rel target = $region58
              $region57: #{_lambda_.33} parent=31 // pred_region
                _
              $region58: #{_lambda_.33} parent=31 // pred_fallthru
                _
            $region32: #{_lambda_.33} parent=27 // pred_fallthru
              _
            // Predicated region
            $region33: #{_lambda_.33} parent=27 // pred_check
              _
            $region34: #{_lambda_.33} parent=27 // pred_check_branch
              %215 = sbr.rel target = $region36
            $region35: #{_lambda_.33} parent=27 // pred_region
              loop: start=0, step=1, limit=1
              $region37: #{_lambda_.33} parent=35 // loop_pre_header
                _
              $region38: #{_lambda_.33} parent=35 // loop_header
                %s218 = sphi 0, %s222
                %p219 = scmp.ge.s32.totalorder %s218, 1
                %s223 = sphi %s209, %s209
                %s224 = sphi %s203, %s203
              $region39: #{_lambda_.33} parent=35 // loop_header_branch
                %221 = sbr.rel (%p219) target = $region43
              $region40: #{_lambda_.33} parent=35 // loop_body
                %v225 = vld [vmem:[%s223] sm:$0xff]
                %226 = vst [vmem:[%s224] sm:$0xff] %v225
                %v227 = vld [vmem:[%s223 + $0x10] sm:$0xff]
                %228 = vst [vmem:[%s224 + $0x8] sm:$0xff] %v227
                %v229 = vld [vmem:[%s223 + $0x20] sm:$0xff]
                %230 = vst [vmem:[%s224 + $0x10] sm:$0xff] %v229
                %v231 = vld [vmem:[%s223 + $0x30] sm:$0xff]
                %232 = vst [vmem:[%s224 + $0x18] sm:$0xff] %v231
                %v233 = vld [vmem:[%s223 + $0x40] sm:$0xff]
                %234 = vst [vmem:[%s224 + $0x20] sm:$0xff] %v233
                %v235 = vld [vmem:[%s223 + $0x50] sm:$0xff]
                %236 = vst [vmem:[%s224 + $0x28] sm:$0xff] %v235
                %v237 = vld [vmem:[%s223 + $0x60] sm:$0xff]
                %238 = vst [vmem:[%s224 + $0x30] sm:$0xff] %v237
                %v239 = vld [vmem:[%s223 + $0x70] sm:$0xff]
                %240 = vst [vmem:[%s224 + $0x38] sm:$0xff] %v239
                %v241 = vld [vmem:[%s223 + $0x80] sm:$0xff]
                %242 = vst [vmem:[%s224 + $0x40] sm:$0xff] %v241
                %v243 = vld [vmem:[%s223 + $0x90] sm:$0xff]
                %244 = vst [vmem:[%s224 + $0x48] sm:$0xff] %v243
                %v245 = vld [vmem:[%s223 + $0xa0] sm:$0xff]
                %246 = vst [vmem:[%s224 + $0x50] sm:$0xff] %v245
                %v247 = vld [vmem:[%s223 + $0xb0] sm:$0xff]
                %248 = vst [vmem:[%s224 + $0x58] sm:$0xff] %v247
                %v249 = vld [vmem:[%s223 + $0xc0] sm:$0xff]
                %250 = vst [vmem:[%s224 + $0x60] sm:$0xff] %v249
                %v251 = vld [vmem:[%s223 + $0xd0] sm:$0xff]
                %252 = vst [vmem:[%s224 + $0x68] sm:$0xff] %v251
                %v253 = vld [vmem:[%s223 + $0xe0] sm:$0xff]
                %254 = vst [vmem:[%s224 + $0x70] sm:$0xff] %v253
                %v255 = vld [vmem:[%s223 + $0xf0] sm:$0xff]
                %256 = vst [vmem:[%s224 + $0x78] sm:$0xff] %v255
                %v257 = vld [vmem:[%s223 + $0x100] sm:$0xff]
                %258 = vst [vmem:[%s224 + $0x80] sm:$0xff] %v257
                %v259 = vld [vmem:[%s223 + $0x110] sm:$0xff]
                %260 = vst [vmem:[%s224 + $0x88] sm:$0xff] %v259
                %v261 = vld [vmem:[%s223 + $0x120] sm:$0xff]
                %262 = vst [vmem:[%s224 + $0x90] sm:$0xff] %v261
                %v263 = vld [vmem:[%s223 + $0x130] sm:$0xff]
                %264 = vst [vmem:[%s224 + $0x98] sm:$0xff] %v263
                %v265 = vld [vmem:[%s223 + $0x140] sm:$0xff]
                %266 = vst [vmem:[%s224 + $0xa0] sm:$0xff] %v265
                %v267 = vld [vmem:[%s223 + $0x150] sm:$0xff]
                %268 = vst [vmem:[%s224 + $0xa8] sm:$0xff] %v267
                %v269 = vld [vmem:[%s223 + $0x160] sm:$0xff]
                %270 = vst [vmem:[%s224 + $0xb0] sm:$0xff] %v269
                %v271 = vld [vmem:[%s223 + $0x170] sm:$0xff]
                %272 = vst [vmem:[%s224 + $0xb8] sm:$0xff] %v271
                %v273 = vld [vmem:[%s223 + $0x180] sm:$0xff]
                %274 = vst [vmem:[%s224 + $0xc0] sm:$0xff] %v273
                %v275 = vld [vmem:[%s223 + $0x190] sm:$0xff]
                %276 = vst [vmem:[%s224 + $0xc8] sm:$0xff] %v275
                %v277 = vld [vmem:[%s223 + $0x1a0] sm:$0xff]
                %278 = vst [vmem:[%s224 + $0xd0] sm:$0xff] %v277
                %v279 = vld [vmem:[%s223 + $0x1b0] sm:$0xff]
                %280 = vst [vmem:[%s224 + $0xd8] sm:$0xff] %v279
                %v281 = vld [vmem:[%s223 + $0x1c0] sm:$0xff]
                %282 = vst [vmem:[%s224 + $0xe0] sm:$0xff] %v281
                %v283 = vld [vmem:[%s223 + $0x1d0] sm:$0xff]
                %284 = vst [vmem:[%s224 + $0xe8] sm:$0xff] %v283
                %v285 = vld [vmem:[%s223 + $0x1e0] sm:$0xff]
                %286 = vst [vmem:[%s224 + $0xf0] sm:$0xff] %v285
                %v287 = vld [vmem:[%s223 + $0x1f0] sm:$0xff]
                %288 = vst [vmem:[%s224 + $0xf8] sm:$0xff] %v287
              $region41: #{_lambda_.33} parent=35 // loop_footer
                %s222 = sadd.s32 1, %s218
              $region42: #{_lambda_.33} parent=35 // loop_footer_branch
                %217 = sbr.rel target = $region38
              $region43: #{_lambda_.33} parent=35 // loop_exit
                _
            $region36: #{_lambda_.33} parent=27 // pred_fallthru
              _
          $region28: #{_lambda_.33} parent=23 // pred_fallthru
            _
          %365 = vnop
        $region24: #{_lambda_.33} parent=19 // pred_fallthru
          _
        // Predicated region
        $region59: #{_lambda_.33} parent=19 // pred_check
          %p366 = pneg %p105
        $region60: #{_lambda_.33} parent=19 // pred_check_branch
          %368 = sbr.rel (%p366) target = $region62
        $region61: #{_lambda_.33} parent=19 // pred_region
          %s369 = smul.u32 2, %s18
          %p370 = scmp.lt.s32.totalorder %s369, 3
          %s371 = scalar_select %p370, %s369, 3
          %s372 = scalar_lea.vmem %s2, %s371
          %s373 = smul.u32 2, %s18
        $region62: #{_lambda_.33} parent=19 // pred_fallthru
          _
        // Predicated region
        $region63: #{_lambda_.33} parent=19 // pred_check
          %p374 = pneg %p131
        $region64: #{_lambda_.33} parent=19 // pred_check_branch
          %376 = sbr.rel (%p374) target = $region66
        $region65: #{_lambda_.33} parent=19 // pred_region
          %s377 = smul.u32 2, %s18
          %p378 = scmp.lt.s32.totalorder %s377, 3
          %s379 = scalar_select %p378, %s377, 3
          %s380 = scalar_lea.vmem %s3, %s379
          %s381 = smul.u32 2, %s18
        $region66: #{_lambda_.33} parent=19 // pred_fallthru
          _
      $region20: #{_lambda_.33} parent=5 // pred_fallthru
        _
      %p382 = scmp.le.s32.totalorder 1, %s10
      %p383 = scmp.lt.s32.totalorder %s10, 3
      %p384 = pnand %p382, %p383
      %p385 = pneg %p384
      // Predicated region
      $region67: #{_lambda_.33} parent=5 // pred_check
        _
      $region68: #{_lambda_.33} parent=5 // pred_check_branch
        %387 = sbr.rel (%p384) target = $region70
      $region69: #{_lambda_.33} parent=5 // pred_region
        %s388 = ssub.s32 %s10, 1
        %s389 = sand.u32 %s72, 1
        %s390 = sand.u32 %s72, 1
        %s391 = smul.addr %s390, 256
        %s392 = scalar_lea.vmem [#allocation3], %s391
        // Predicated region
        $region71: #{_lambda_.33} parent=69 // pred_check
          %p393 = pneg %p85
        $region72: #{_lambda_.33} parent=69 // pred_check_branch
          %395 = sbr.rel (%p393) target = $region74
        $region73: #{_lambda_.33} parent=69 // pred_region
          _
        $region74: #{_lambda_.33} parent=69 // pred_fallthru
          _
        %s396 = smul.u32 2, %s22
        %p397 = scmp.lt.s32.totalorder %s20, 0
        %s398 = scalar_select %p397, %s20, 0
        %p399 = scmp.lt.s32.totalorder %s396, 1
        %s400 = scalar_select %p399, %s396, 1
        %s401 = smul.addr %s398, 2
        %s402 = sadd.s32 %s400, %s401
        %s403 = smul.addr %s402, 4
        %s404 = scalar_lea.vmem %s0, %s403
        %p405 = pneg %p57
        %p406 = pneg %p54
        %s407 = sand.u32 %s72, 1
        %s408 = sand.u32 %s72, 1
        %s409 = smul.addr %s408, 256
        %s410 = scalar_lea.vmem [#allocation3], %s409
        %p411 = pneg %p85
        %p412 = pneg %p82
        %s413 = smul.u32 2, %s21
        %p414 = scmp.lt.s32.totalorder %s413, 3
        %s415 = scalar_select %p414, %s413, 3
        %s416 = scalar_lea.vmem %s2, %s415
        %p417 = pneg %p111
        %p418 = pneg %p108
        %s419 = smul.u32 2, %s21
        %p420 = scmp.lt.s32.totalorder %s419, 3
        %s421 = scalar_select %p420, %s419, 3
        %s422 = scalar_lea.vmem %s3, %s421
        %p423 = pneg %p137
        %p424 = pneg %p134
        %p425 = pneg %p165
        %p426 = pneg %p162
        %s427 = smul.u32 2, %s21
        %p428 = scmp.lt.s32.totalorder %s20, 0
        %s429 = scalar_select %p428, %s20, 0
        %p430 = scmp.lt.s32.totalorder %s427, 3
        %s431 = scalar_select %p430, %s427, 3
        %s432 = smul.addr %s429, 4
        %s433 = sadd.s32 %s431, %s432
        %s434 = smul.addr %s433, 8
        %s435 = scalar_lea.vmem %s4, %s434
        %s436 = smul.u32 2, %s22
        %p437 = scmp.lt.s32.totalorder %s20, 0
        %s438 = scalar_select %p437, %s20, 0
        %p439 = scmp.lt.s32.totalorder %s436, 1
        %s440 = scalar_select %p439, %s436, 1
        %s441 = smul.addr %s438, 2
        %s442 = sadd.s32 %s440, %s441
        %s443 = smul.addr %s442, 4
        %s444 = scalar_lea.vmem %s0, %s443
        %s445 = smul.u32 2, %s22
        %s446 = smul.u32 32, %s22
        %s447 = smul.u32 2, %s21
        %s448 = smul.u32 2, %s21
        %p449 = scmp.lt.s32.totalorder %s448, 3
        %s450 = scalar_select %p449, %s448, 3
        %s451 = scalar_lea.vmem %s2, %s450
        %s452 = smul.u32 2, %s21
        %s453 = smul.u32 2, %s21
        %p454 = scmp.lt.s32.totalorder %s453, 3
        %s455 = scalar_select %p454, %s453, 3
        %s456 = scalar_lea.vmem %s3, %s455
        %s457 = smul.u32 2, %s21
        %s458 = smul.u32 2, %s21
        %p459 = scmp.lt.s32.totalorder %s20, 0
        %s460 = scalar_select %p459, %s20, 0
        %p461 = scmp.lt.s32.totalorder %s458, 3
        %s462 = scalar_select %p461, %s458, 3
        %s463 = smul.addr %s460, 4
        %s464 = sadd.s32 %s462, %s463
        %s465 = smul.addr %s464, 8
        %s466 = scalar_lea.vmem %s4, %s465
        %s467 = smul.u32 2, %s21
        %p468 = scmp.eq.s32.totalorder %s22, 0
        // Predicated region
        $region75: #{_lambda_.33} parent=69 // pred_check
          %p469 = pneg %p468
        $region76: #{_lambda_.33} parent=69 // pred_check_branch
          %471 = sbr.rel (%p469) target = $region78
        $region77: #{_lambda_.33} parent=69 // pred_region
          %472 = vst [vmem:[#allocation2] sm:$0xff] 0.0
          %473 = vst [vmem:[#allocation2 + $0x8] sm:$0xff] 0.0
        $region78: #{_lambda_.33} parent=69 // pred_fallthru
          _
        %v474 = vld [vmem:[#allocation2] sm:$0xff]
        %v475 = vld [vmem:[#allocation2 + $0x8] sm:$0xff]
        %v476 = vld [vmem:[%s444] sm:$0xff]
        %v477 = vld [vmem:[%s392] sm:$0xff]
        %v478 = vld [vmem:[%s392 + $0x8] sm:$0xff]
        %v479 = vld [vmem:[%s392 + $0x10] sm:$0xff]
        %v480 = vld [vmem:[%s392 + $0x18] sm:$0xff]
        %v481 = vld [vmem:[%s392 + $0x20] sm:$0xff]
        %v482 = vld [vmem:[%s392 + $0x28] sm:$0xff]
        %v483 = vld [vmem:[%s392 + $0x30] sm:$0xff]
        %v484 = vld [vmem:[%s392 + $0x38] sm:$0xff]
        %v485 = vld [vmem:[%s392 + $0x40] sm:$0xff]
        %v486 = vld [vmem:[%s392 + $0x48] sm:$0xff]
        %v487 = vld [vmem:[%s392 + $0x50] sm:$0xff]
        %v488 = vld [vmem:[%s392 + $0x58] sm:$0xff]
        %v489 = vld [vmem:[%s392 + $0x60] sm:$0xff]
        %v490 = vld [vmem:[%s392 + $0x68] sm:$0xff]
        %v491 = vld [vmem:[%s392 + $0x70] sm:$0xff]
        %v492 = vld [vmem:[%s392 + $0x78] sm:$0xff]
        %v493 = vld [vmem:[%s392 + $0x80] sm:$0xff]
        %v494 = vld [vmem:[%s392 + $0x88] sm:$0xff]
        %v495 = vld [vmem:[%s392 + $0x90] sm:$0xff]
        %v496 = vld [vmem:[%s392 + $0x98] sm:$0xff]
        %v497 = vld [vmem:[%s392 + $0xa0] sm:$0xff]
        %v498 = vld [vmem:[%s392 + $0xa8] sm:$0xff]
        %v499 = vld [vmem:[%s392 + $0xb0] sm:$0xff]
        %v500 = vld [vmem:[%s392 + $0xb8] sm:$0xff]
        %v501 = vld [vmem:[%s392 + $0xc0] sm:$0xff]
        %v502 = vld [vmem:[%s392 + $0xc8] sm:$0xff]
        %v503 = vld [vmem:[%s392 + $0xd0] sm:$0xff]
        %v504 = vld [vmem:[%s392 + $0xd8] sm:$0xff]
        %v505 = vld [vmem:[%s392 + $0xe0] sm:$0xff]
        %v506 = vld [vmem:[%s392 + $0xe8] sm:$0xff]
        %v507 = vld [vmem:[%s392 + $0xf0] sm:$0xff]
        %v508 = vld [vmem:[%s392 + $0xf8] sm:$0xff]
        %v510 = vunpack.c.l.b16 %v476
        %v511 = vunpack.c.h.b16 %v476
        %v512 = vpack.c.b16 %v510, %v510
        %v513 = vpack.c.b16 %v511, %v511
        %v548 = vunpack.c.l.b16 %v477
        %v549 = vunpack.c.h.b16 %v477
        %v550 = vunpack.c.l.b16 %v478
        %v551 = vunpack.c.h.b16 %v478
        %v552 = vunpack.c.l.b16 %v479
        %v553 = vunpack.c.h.b16 %v479
        %v554 = vunpack.c.l.b16 %v480
        %v555 = vunpack.c.h.b16 %v480
        %v556 = vunpack.c.l.b16 %v481
        %v557 = vunpack.c.h.b16 %v481
        %v558 = vunpack.c.l.b16 %v482
        %v559 = vunpack.c.h.b16 %v482
        %v560 = vunpack.c.l.b16 %v483
        %v561 = vunpack.c.h.b16 %v483
        %v562 = vunpack.c.l.b16 %v484
        %v563 = vunpack.c.h.b16 %v484
        %v564 = vunpack.c.l.b16 %v485
        %v565 = vunpack.c.h.b16 %v485
        %v566 = vunpack.c.l.b16 %v486
        %v567 = vunpack.c.h.b16 %v486
        %v568 = vunpack.c.l.b16 %v487
        %v569 = vunpack.c.h.b16 %v487
        %v570 = vunpack.c.l.b16 %v488
        %v571 = vunpack.c.h.b16 %v488
        %v572 = vunpack.c.l.b16 %v489
        %v573 = vunpack.c.h.b16 %v489
        %v574 = vunpack.c.l.b16 %v490
        %v575 = vunpack.c.h.b16 %v490
        %v576 = vunpack.c.l.b16 %v491
        %v577 = vunpack.c.h.b16 %v491
        %v578 = vunpack.c.l.b16 %v492
        %v579 = vunpack.c.h.b16 %v492
        %v580 = vunpack.c.l.b16 %v493
        %v581 = vunpack.c.h.b16 %v493
        %v582 = vunpack.c.l.b16 %v494
        %v583 = vunpack.c.h.b16 %v494
        %v584 = vunpack.c.l.b16 %v495
        %v585 = vunpack.c.h.b16 %v495
        %v586 = vunpack.c.l.b16 %v496
        %v587 = vunpack.c.h.b16 %v496
        %v588 = vunpack.c.l.b16 %v497
        %v589 = vunpack.c.h.b16 %v497
        %v590 = vunpack.c.l.b16 %v498
        %v591 = vunpack.c.h.b16 %v498
        %v592 = vunpack.c.l.b16 %v499
        %v593 = vunpack.c.h.b16 %v499
        %v594 = vunpack.c.l.b16 %v500
        %v595 = vunpack.c.h.b16 %v500
        %v596 = vunpack.c.l.b16 %v501
        %v597 = vunpack.c.h.b16 %v501
        %v598 = vunpack.c.l.b16 %v502
        %v599 = vunpack.c.h.b16 %v502
        %v600 = vunpack.c.l.b16 %v503
        %v601 = vunpack.c.h.b16 %v503
        %v602 = vunpack.c.l.b16 %v504
        %v603 = vunpack.c.h.b16 %v504
        %v604 = vunpack.c.l.b16 %v505
        %v605 = vunpack.c.h.b16 %v505
        %v606 = vunpack.c.l.b16 %v506
        %v607 = vunpack.c.h.b16 %v506
        %v608 = vunpack.c.l.b16 %v507
        %v609 = vunpack.c.h.b16 %v507
        %v610 = vunpack.c.l.b16 %v508
        %v611 = vunpack.c.h.b16 %v508
        %v612 = vpack.c.b16 %v550, %v548
        %v613 = vpack.c.b16 %v551, %v549
        %v614 = vpack.c.b16 %v554, %v552
        %v615 = vpack.c.b16 %v555, %v553
        %v616 = vpack.c.b16 %v558, %v556
        %v617 = vpack.c.b16 %v559, %v557
        %v618 = vpack.c.b16 %v562, %v560
        %v619 = vpack.c.b16 %v563, %v561
        %v620 = vpack.c.b16 %v566, %v564
        %v621 = vpack.c.b16 %v567, %v565
        %v622 = vpack.c.b16 %v570, %v568
        %v623 = vpack.c.b16 %v571, %v569
        %v624 = vpack.c.b16 %v574, %v572
        %v625 = vpack.c.b16 %v575, %v573
        %v626 = vpack.c.b16 %v578, %v576
        %v627 = vpack.c.b16 %v579, %v577
        %v628 = vpack.c.b16 %v582, %v580
        %v629 = vpack.c.b16 %v583, %v581
        %v630 = vpack.c.b16 %v586, %v584
        %v631 = vpack.c.b16 %v587, %v585
        %v632 = vpack.c.b16 %v590, %v588
        %v633 = vpack.c.b16 %v591, %v589
        %v634 = vpack.c.b16 %v594, %v592
        %v635 = vpack.c.b16 %v595, %v593
        %v636 = vpack.c.b16 %v598, %v596
        %v637 = vpack.c.b16 %v599, %v597
        %v638 = vpack.c.b16 %v602, %v600
        %v639 = vpack.c.b16 %v603, %v601
        %v640 = vpack.c.b16 %v606, %v604
        %v641 = vpack.c.b16 %v607, %v605
        %v642 = vpack.c.b16 %v610, %v608
        %v643 = vpack.c.b16 %v611, %v609
        %676 = vmatprep.subr.bf16.mxu0 %v613
        %677 = vmatpush1.bf16.msra.mxu0 %v612
        %678 = vmatprep.subr.bf16.mxu0 %v615
        %679 = vmatpush1.bf16.msra.mxu0 %v614
        %680 = vmatprep.subr.bf16.mxu0 %v617
        %681 = vmatpush1.bf16.msra.mxu0 %v616
        %682 = vmatprep.subr.bf16.mxu0 %v619
        %683 = vmatpush1.bf16.msra.mxu0 %v618
        %684 = vmatprep.subr.bf16.mxu0 %v621
        %685 = vmatpush1.bf16.msra.mxu0 %v620
        %686 = vmatprep.subr.bf16.mxu0 %v623
        %687 = vmatpush1.bf16.msra.mxu0 %v622
        %688 = vmatprep.subr.bf16.mxu0 %v625
        %689 = vmatpush1.bf16.msra.mxu0 %v624
        %690 = vmatprep.subr.bf16.mxu0 %v627
        %691 = vmatpush1.bf16.msra.mxu0 %v626
        %692 = vmatprep.subr.bf16.mxu0 %v629
        %693 = vmatpush1.bf16.msra.mxu0 %v628
        %694 = vmatprep.subr.bf16.mxu0 %v631
        %695 = vmatpush1.bf16.msra.mxu0 %v630
        %696 = vmatprep.subr.bf16.mxu0 %v633
        %697 = vmatpush1.bf16.msra.mxu0 %v632
        %698 = vmatprep.subr.bf16.mxu0 %v635
        %699 = vmatpush1.bf16.msra.mxu0 %v634
        %700 = vmatprep.subr.bf16.mxu0 %v637
        %701 = vmatpush1.bf16.msra.mxu0 %v636
        %702 = vmatprep.subr.bf16.mxu0 %v639
        %703 = vmatpush1.bf16.msra.mxu0 %v638
        %704 = vmatprep.subr.bf16.mxu0 %v641
        %705 = vmatpush1.bf16.msra.mxu0 %v640
        %706 = vmatprep.subr.bf16.mxu0 %v643
        %707 = vmatpush1.bf16.msra.mxu0 %v642
        %708 = vmatprep.mubr.bf16.mxu0 %v513
        %709 = vmatmul.mubr.bf16.gmra.mrb[0].mxu0 %v512
        %v710 = vpop.f32.mrb[0].mxu0
        %v711 = vadd.f32 0.0, %v710
        %v712 = vpop.f32.mrb[0].mxu0
        %v713 = vadd.f32 0.0, %v712
        %v714 = vpop.f32.mrb[0].mxu0
        %v715 = vpop.f32.mrb[0].mxu0
        %716 = vdwg.mxu0
        %v717 = vadd.f32 %v474, %v711
        %v718 = vadd.f32 %v475, %v713
        %719 = vst [vmem:[#allocation2] sm:$0xff] %v717
        %720 = vst [vmem:[#allocation2 + $0x8] sm:$0xff] %v718
        // Predicated region
        $region79: #{_lambda_.33} parent=69 // pred_check
          %p721 = pneg %p468
        $region80: #{_lambda_.33} parent=69 // pred_check_branch
          %723 = sbr.rel (%p721) target = $region82
        $region81: #{_lambda_.33} parent=69 // pred_region
          %v724 = vld [vmem:[#allocation2] sm:$0xff]
          %v725 = vld [vmem:[#allocation2 + $0x8] sm:$0xff]
          %v726 = vld [vmem:[%s451] sm:$0x3]
          %v728 = vlaneseq
          %v729 = vshrl.u32 %v728, 7
          %v730 = vsub.s32 0, %v729
          %v731 = vrot.slane %v726, %v730
          %v732 = vlaneseq
          %v733 = vshrl.u32 %v732, 7
          %v734 = vsub.s32 1, %v733
          %v735 = vrot.slane %v726, %v734
          %v738 = vmul.f32 %v724, %v731
          %v739 = vmul.f32 %v725, %v735
          %v740 = vld [vmem:[%s456] sm:$0x3]
          %v742 = vlaneseq
          %v743 = vshrl.u32 %v742, 7
          %v744 = vsub.s32 0, %v743
          %v745 = vrot.slane %v740, %v744
          %v746 = vlaneseq
          %v747 = vshrl.u32 %v746, 7
          %v748 = vsub.s32 1, %v747
          %v749 = vrot.slane %v740, %v748
          %v752 = vadd.f32 %v738, %v745
          %v753 = vadd.f32 %v739, %v749
          %754 = vst [vmem:[%s466] sm:$0xff] %v752
          %755 = vst [vmem:[%s466 + $0x8] sm:$0xff] %v753
        $region82: #{_lambda_.33} parent=69 // pred_fallthru
          _
        %s756 = smul.u32 2, %s21
        %p757 = scmp.lt.s32.totalorder %s20, 0
        %s758 = scalar_select %p757, %s20, 0
        %p759 = scmp.lt.s32.totalorder %s756, 3
        %s760 = scalar_select %p759, %s756, 3
        %s761 = smul.addr %s758, 4
        %s762 = sadd.s32 %s760, %s761
        %s763 = smul.addr %s762, 8
        %s764 = scalar_lea.vmem %s4, %s763
        // Predicated region
        $region83: #{_lambda_.33} parent=69 // pred_check
          %p765 = pneg %p162
        $region84: #{_lambda_.33} parent=69 // pred_check_branch
          %767 = sbr.rel (%p765) target = $region86
        $region85: #{_lambda_.33} parent=69 // pred_region
          %s768 = smul.u32 2, %s21
        $region86: #{_lambda_.33} parent=69 // pred_fallthru
          _
      $region70: #{_lambda_.33} parent=5 // pred_fallthru
        _
      %p769 = scmp.le.s32.totalorder 2, %s10
      // Predicated region
      $region87: #{_lambda_.33} parent=5 // pred_check
        %p770 = pneg %p769
      $region88: #{_lambda_.33} parent=5 // pred_check_branch
        %772 = sbr.rel (%p770) target = $region90
      $region89: #{_lambda_.33} parent=5 // pred_region
        %s773 = ssub.s32 %s10, 2
        // Predicated region
        $region91: #{_lambda_.33} parent=89 // pred_check
          %p774 = pneg %p168
        $region92: #{_lambda_.33} parent=89 // pred_check_branch
          %776 = sbr.rel (%p774) target = $region94
        $region93: #{_lambda_.33} parent=89 // pred_region
          %s777 = smul.u32 2, %s24
          %p778 = scmp.lt.s32.totalorder %s23, 0
          %s779 = scalar_select %p778, %s23, 0
          %p780 = scmp.lt.s32.totalorder %s777, 3
          %s781 = scalar_select %p780, %s777, 3
          %s782 = smul.addr %s779, 4
          %s783 = sadd.s32 %s781, %s782
          %s784 = smul.addr %s783, 8
          %s785 = scalar_lea.vmem %s4, %s784
        $region94: #{_lambda_.33} parent=89 // pred_fallthru
          _
      $region90: #{_lambda_.33} parent=5 // pred_fallthru
        _
    $region6: #{_lambda_.33} parent=1 // loop_footer
      %s14 = sadd.s32 1, %s10
    $region7: #{_lambda_.33} parent=1 // loop_footer_branch
      %9 = sbr.rel target = $region3
    $region8: #{_lambda_.33} parent=1 // loop_exit
      _

// kernel: _lambda_.32
$region0: #{_lambda_.32}
  #allocation0 [shape = 'u32[]', space=smem, size = 0x4, offset = 0x4, fixed_abs, tag = 'smem constant byte address 0x4 - core index']
  #allocation1 [shape = 'u32[144,128]{1,0:T(1,128)}', space=vmem, size = 0x12000, scoped, tag = 'internal scratch']
  #allocation2 [shape = 'f32[8,128]{1,0:T(8,128)}', space=vmem, size = 0x1000, scoped, tag = 'scratch operand']
  %s0 = inlined_call_operand.vmem [shape: bf16[8,1152], index: 0, kind: input, shape index: {}]
  %s1 = inlined_call_operand.vmem [shape: bf16[1152,128], index: 1, kind: input, shape index: {}]
  %s2 = inlined_call_operand.vmem [shape: f32[1,128], index: 2, kind: input, shape index: {}]
  %s3 = inlined_call_operand.vmem [shape: f32[1,128], index: 3, kind: input, shape index: {}]
  %s4 = inlined_call_operand.vmem [shape: f32[8,128], index: 4, kind: output, shape index: {}]
  %s5 = sld [smem:[#allocation0]]
  $region57: #{_lambda_.32} parent=0
    _
  %s7 = ssub.s32 1, %s5
  %s8 = scalar_select 0, %s7, %s5
  loop: start=0, step=1, limit=5
  $region2: #{_lambda_.32} parent=0 // loop_pre_header
    _
  $region3: #{_lambda_.32} parent=0 // loop_header
    %s10 = sphi 0, %s14
    %p11 = scmp.ge.s32.totalorder %s10, 5
    %s17 = sphi 0, %s36
    %s18 = sphi 0, %s32
    %s19 = sphi 0, %s28
    %s20 = sphi 0, %s17
    %s21 = sphi 0, %s18
    %s22 = sphi 0, %s19
    %s23 = sphi 0, %s20
    %s24 = sphi 0, %s21
    %s25 = sphi 0, %s22
    %s41 = sphi 0, %s43
    %s44 = sphi 0, %s41
    %s45 = sphi 0, %s44
    %s61 = sphi 0, %s45
    %s69 = sphi 0, %s71
    %s72 = sphi 0, %s69
    %s73 = sphi 0, %s72
    %s89 = sphi 0, %s73
    %s95 = sphi 0, %s97
    %s98 = sphi 0, %s95
    %s99 = sphi 0, %s98
    %s115 = sphi 0, %s99
    %s121 = sphi 0, %s123
    %s124 = sphi 0, %s121
    %s125 = sphi 0, %s124
    %s141 = sphi 0, %s125
    %s149 = sphi 0, %s151
    %s152 = sphi 0, %s149
    %s153 = sphi 0, %s152
    %s169 = sphi 0, %s153
  $region4: #{_lambda_.32} parent=0 // loop_header_branch
    %13 = sbr.rel (%p11) target = $region8
  $region5: #{_lambda_.32} parent=0 // loop_body
    %s15 = ssub.s32 %s10, 1
    %s16 = ssub.s32 %s10, 2
    %s26 = sadd.s32 1, %s19
    %p27 = scmp.ge.s32.totalorder %s26, 3
    %s28 = scalar_select %p27, 0, %s26
    %s29 = sadd.s32 1, %s18
    %s30 = scalar_select %p27, %s29, %s18
    %p31 = scmp.ge.s32.totalorder %s30, 1
    %s32 = scalar_select %p31, 0, %s30
    %s33 = sadd.s32 1, %s17
    %s34 = scalar_select %p31, %s33, %s17
    %p35 = scmp.ge.s32.totalorder %s34, 1
    %s36 = scalar_select %p35, 0, %s34
    %s37 = ssub.s32 %s17, %s36
    %s38 = ssub.s32 %s19, %s28
    %s39 = sor.u32 %s37, %s38
    %p40 = scmp.eq.s32.totalorder %s39, 0
    %s42 = sadd.s32 %s41, 1
    %s43 = scalar_select %p40, %s41, %s42
    %p46 = pneg %p40
    %p47 = scmp.eq.s32.totalorder %s10, 2
    %p48 = por %p46, %p47
    %p49 = scmp.ne.s32.totalorder %s41, %s44
    %p50 = scmp.eq.s32.totalorder %s10, 0
    %p51 = por %p49, %p50
    %p52 = scmp.ne.s32.totalorder %s41, %s44
    %p53 = scmp.eq.s32.totalorder %s15, 2
    %p54 = por %p52, %p53
    %p55 = scmp.ne.s32.totalorder %s44, %s45
    %p56 = scmp.eq.s32.totalorder %s15, 0
    %p57 = por %p55, %p56
    %p58 = scmp.ne.s32.totalorder %s44, %s45
    %p59 = scmp.eq.s32.totalorder %s16, 2
    %p60 = por %p58, %p59
    %p62 = scmp.ne.s32.totalorder %s45, %s61
    %p63 = scmp.eq.s32.totalorder %s16, 0
    %p64 = por %p62, %p63
    %s65 = ssub.s32 %s19, %s28
    %s66 = ssub.s32 %s18, %s32
    %s67 = sor.u32 %s65, %s66
    %p68 = scmp.eq.s32.totalorder %s67, 0
    %s70 = sadd.s32 %s69, 1
    %s71 = scalar_select %p68, %s69, %s70
    %p74 = pneg %p68
    %p75 = scmp.eq.s32.totalorder %s10, 2
    %p76 = por %p74, %p75
    %p77 = scmp.ne.s32.totalorder %s69, %s72
    %p78 = scmp.eq.s32.totalorder %s10, 0
    %p79 = por %p77, %p78
    %p80 = scmp.ne.s32.totalorder %s69, %s72
    %p81 = scmp.eq.s32.totalorder %s15, 2
    %p82 = por %p80, %p81
    %p83 = scmp.ne.s32.totalorder %s72, %s73
    %p84 = scmp.eq.s32.totalorder %s15, 0
    %p85 = por %p83, %p84
    %p86 = scmp.ne.s32.totalorder %s72, %s73
    %p87 = scmp.eq.s32.totalorder %s16, 2
    %p88 = por %p86, %p87
    %p90 = scmp.ne.s32.totalorder %s73, %s89
    %p91 = scmp.eq.s32.totalorder %s16, 0
    %p92 = por %p90, %p91
    %s93 = ssub.s32 %s18, %s32
    %p94 = scmp.eq.s32.totalorder %s93, 0
    %s96 = sadd.s32 %s95, 1
    %s97 = scalar_select %p94, %s95, %s96
    %p100 = pneg %p94
    %p101 = scmp.eq.s32.totalorder %s10, 2
    %p102 = por %p100, %p101
    %p103 = scmp.ne.s32.totalorder %s95, %s98
    %p104 = scmp.eq.s32.totalorder %s10, 0
    %p105 = por %p103, %p104
    %p106 = scmp.ne.s32.totalorder %s95, %s98
    %p107 = scmp.eq.s32.totalorder %s15, 2
    %p108 = por %p106, %p107
    %p109 = scmp.ne.s32.totalorder %s98, %s99
    %p110 = scmp.eq.s32.totalorder %s15, 0
    %p111 = por %p109, %p110
    %p112 = scmp.ne.s32.totalorder %s98, %s99
    %p113 = scmp.eq.s32.totalorder %s16, 2
    %p114 = por %p112, %p113
    %p116 = scmp.ne.s32.totalorder %s99, %s115
    %p117 = scmp.eq.s32.totalorder %s16, 0
    %p118 = por %p116, %p117
    %s119 = ssub.s32 %s18, %s32
    %p120 = scmp.eq.s32.totalorder %s119, 0
    %s122 = sadd.s32 %s121, 1
    %s123 = scalar_select %p120, %s121, %s122
    %p126 = pneg %p120
    %p127 = scmp.eq.s32.totalorder %s10, 2
    %p128 = por %p126, %p127
    %p129 = scmp.ne.s32.totalorder %s121, %s124
    %p130 = scmp.eq.s32.totalorder %s10, 0
    %p131 = por %p129, %p130
    %p132 = scmp.ne.s32.totalorder %s121, %s124
    %p133 = scmp.eq.s32.totalorder %s15, 2
    %p134 = por %p132, %p133
    %p135 = scmp.ne.s32.totalorder %s124, %s125
    %p136 = scmp.eq.s32.totalorder %s15, 0
    %p137 = por %p135, %p136
    %p138 = scmp.ne.s32.totalorder %s124, %s125
    %p139 = scmp.eq.s32.totalorder %s16, 2
    %p140 = por %p138, %p139
    %p142 = scmp.ne.s32.totalorder %s125, %s141
    %p143 = scmp.eq.s32.totalorder %s16, 0
    %p144 = por %p142, %p143
    %s145 = ssub.s32 %s17, %s36
    %s146 = ssub.s32 %s18, %s32
    %s147 = sor.u32 %s145, %s146
    %p148 = scmp.eq.s32.totalorder %s147, 0
    %s150 = sadd.s32 %s149, 1
    %s151 = scalar_select %p148, %s149, %s150
    %p154 = pneg %p148
    %p155 = scmp.eq.s32.totalorder %s10, 2
    %p156 = por %p154, %p155
    %p157 = scmp.ne.s32.totalorder %s149, %s152
    %p158 = scmp.eq.s32.totalorder %s10, 0
    %p159 = por %p157, %p158
    %p160 = scmp.ne.s32.totalorder %s149, %s152
    %p161 = scmp.eq.s32.totalorder %s15, 2
    %p162 = por %p160, %p161
    %p163 = scmp.ne.s32.totalorder %s152, %s153
    %p164 = scmp.eq.s32.totalorder %s15, 0
    %p165 = por %p163, %p164
    %p166 = scmp.ne.s32.totalorder %s152, %s153
    %p167 = scmp.eq.s32.totalorder %s16, 2
    %p168 = por %p166, %p167
    %p170 = scmp.ne.s32.totalorder %s153, %s169
    %p171 = scmp.eq.s32.totalorder %s16, 0
    %p172 = por %p170, %p171
    %p173 = scmp.le.s32.totalorder 1, %s10
    %p174 = scmp.lt.s32.totalorder %s10, 4
    %p175 = pnand %p173, %p174
    %p176 = pneg %p175
    // Predicated region
    $region9: #{_lambda_.32} parent=5 // pred_check
      _
    $region10: #{_lambda_.32} parent=5 // pred_check_branch
      %178 = sbr.rel (%p175) target = $region12
    $region11: #{_lambda_.32} parent=5 // pred_region
      %s179 = ssub.s32 %s10, 1
      // Predicated region
      $region13: #{_lambda_.32} parent=11 // pred_check
        %p180 = pneg %p111
      $region14: #{_lambda_.32} parent=11 // pred_check_branch
        %182 = sbr.rel (%p180) target = $region16
      $region15: #{_lambda_.32} parent=11 // pred_region
        %p183 = scmp.lt.s32.totalorder %s21, 0
        %s184 = scalar_select %p183, %s21, 0
        %s185 = scalar_lea.vmem %s2, %s184
      $region16: #{_lambda_.32} parent=11 // pred_fallthru
        _
      // Predicated region
      $region17: #{_lambda_.32} parent=11 // pred_check
        %p186 = pneg %p137
      $region18: #{_lambda_.32} parent=11 // pred_check_branch
        %188 = sbr.rel (%p186) target = $region20
      $region19: #{_lambda_.32} parent=11 // pred_region
        %p189 = scmp.lt.s32.totalorder %s21, 0
        %s190 = scalar_select %p189, %s21, 0
        %s191 = scalar_lea.vmem %s3, %s190
      $region20: #{_lambda_.32} parent=11 // pred_fallthru
        _
    $region12: #{_lambda_.32} parent=5 // pred_fallthru
      _
    %p192 = scmp.lt.s32.totalorder %s10, 3
    // Predicated region
    $region21: #{_lambda_.32} parent=5 // pred_check
      %p193 = pneg %p192
    $region22: #{_lambda_.32} parent=5 // pred_check_branch
      %195 = sbr.rel (%p193) target = $region24
    $region23: #{_lambda_.32} parent=5 // pred_region
      // Predicated region
      $region25: #{_lambda_.32} parent=23 // pred_check
        %p196 = pneg %p51
      $region26: #{_lambda_.32} parent=23 // pred_check_branch
        %198 = sbr.rel (%p196) target = $region28
      $region27: #{_lambda_.32} parent=23 // pred_region
        %s199 = smul.u32 3, %s19
        %p200 = scmp.lt.s32.totalorder %s17, 0
        %s201 = scalar_select %p200, %s17, 0
        %p202 = scmp.lt.s32.totalorder %s199, 8
        %s203 = scalar_select %p202, %s199, 8
        %s204 = smul.addr %s201, 9
        %s205 = sadd.s32 %s203, %s204
        %s206 = smul.addr %s205, 4
        %s207 = scalar_lea.vmem %s0, %s206
        %s208 = smul.u32 3, %s19
      $region28: #{_lambda_.32} parent=23 // pred_fallthru
        _
      // Predicated region
      $region29: #{_lambda_.32} parent=23 // pred_check
        %p209 = pneg %p79
      $region30: #{_lambda_.32} parent=23 // pred_check_branch
        %211 = sbr.rel (%p209) target = $region32
      $region31: #{_lambda_.32} parent=23 // pred_region
        %s212 = smul.u32 48, %s19
        %p213 = scmp.lt.s32.totalorder %s212, 143
        %s214 = scalar_select %p213, %s212, 143
        %p215 = scmp.lt.s32.totalorder %s18, 0
        %s216 = scalar_select %p215, %s18, 0
        %s217 = sadd.s32 %s216, %s214
        %s218 = smul.addr %s217, 4
        %s219 = scalar_lea.vmem %s1, %s218
        %s220 = smul.u32 48, %s19
      $region32: #{_lambda_.32} parent=23 // pred_fallthru
        _
    $region24: #{_lambda_.32} parent=5 // pred_fallthru
      _
    %p221 = scmp.le.s32.totalorder 1, %s10
    %p222 = scmp.lt.s32.totalorder %s10, 4
    %p223 = pnand %p221, %p222
    %p224 = pneg %p223
    // Predicated region
    $region33: #{_lambda_.32} parent=5 // pred_check
      _
    $region34: #{_lambda_.32} parent=5 // pred_check_branch
      %226 = sbr.rel (%p223) target = $region36
    $region35: #{_lambda_.32} parent=5 // pred_region
      %s227 = ssub.s32 %s10, 1
      %s228 = smul.u32 3, %s22
      %p229 = scmp.lt.s32.totalorder %s20, 0
      %s230 = scalar_select %p229, %s20, 0
      %p231 = scmp.lt.s32.totalorder %s228, 8
      %s232 = scalar_select %p231, %s228, 8
      %s233 = smul.addr %s230, 9
      %s234 = sadd.s32 %s232, %s233
      %s235 = smul.addr %s234, 4
      %s236 = scalar_lea.vmem %s0, %s235
      %p237 = pneg %p57
      %p238 = pneg %p54
      %s239 = smul.u32 48, %s22
      %p240 = scmp.lt.s32.totalorder %s239, 143
      %s241 = scalar_select %p240, %s239, 143
      %p242 = scmp.lt.s32.totalorder %s21, 0
      %s243 = scalar_select %p242, %s21, 0
      %s244 = sadd.s32 %s243, %s241
      %s245 = smul.addr %s244, 4
      %s246 = scalar_lea.vmem %s1, %s245
      %p247 = pneg %p85
      %p248 = pneg %p82
      %p249 = scmp.lt.s32.totalorder %s21, 0
      %s250 = scalar_select %p249, %s21, 0
      %s251 = scalar_lea.vmem %s2, %s250
      %p252 = pneg %p111
      %p253 = pneg %p108
      %p254 = scmp.lt.s32.totalorder %s21, 0
      %s255 = scalar_select %p254, %s21, 0
      %s256 = scalar_lea.vmem %s3, %s255
      %p257 = pneg %p137
      %p258 = pneg %p134
      %p259 = pneg %p165
      %p260 = pneg %p162
      %p261 = scmp.lt.s32.totalorder %s20, 0
      %s262 = scalar_select %p261, %s20, 0
      %p263 = scmp.lt.s32.totalorder %s21, 0
      %s264 = scalar_select %p263, %s21, 0
      %s265 = sadd.s32 %s264, %s262
      %s266 = smul.addr %s265, 8
      %s267 = scalar_lea.vmem %s4, %s266
      %s268 = smul.u32 3, %s22
      %p269 = scmp.lt.s32.totalorder %s20, 0
      %s270 = scalar_select %p269, %s20, 0
      %p271 = scmp.lt.s32.totalorder %s268, 8
      %s272 = scalar_select %p271, %s268, 8
      %s273 = smul.addr %s270, 9
      %s274 = sadd.s32 %s272, %s273
      %s275 = smul.addr %s274, 4
      %s276 = scalar_lea.vmem %s0, %s275
      %s277 = smul.u32 3, %s22
      %s278 = smul.u32 48, %s22
      %p279 = scmp.lt.s32.totalorder %s278, 143
      %s280 = scalar_select %p279, %s278, 143
      %p281 = scmp.lt.s32.totalorder %s21, 0
      %s282 = scalar_select %p281, %s21, 0
      %s283 = sadd.s32 %s282, %s280
      %s284 = smul.addr %s283, 4
      %s285 = scalar_lea.vmem %s1, %s284
      %s286 = smul.u32 48, %s22
      %p287 = scmp.lt.s32.totalorder %s21, 0
      %s288 = scalar_select %p287, %s21, 0
      %s289 = scalar_lea.vmem %s2, %s288
      %p290 = scmp.lt.s32.totalorder %s21, 0
      %s291 = scalar_select %p290, %s21, 0
      %s292 = scalar_lea.vmem %s3, %s291
      %p293 = scmp.lt.s32.totalorder %s20, 0
      %s294 = scalar_select %p293, %s20, 0
      %p295 = scmp.lt.s32.totalorder %s21, 0
      %s296 = scalar_select %p295, %s21, 0
      %s297 = sadd.s32 %s296, %s294
      %s298 = smul.addr %s297, 8
      %s299 = scalar_lea.vmem %s4, %s298
      %p301 = scmp.eq.s32.totalorder %s22, 0
      // Predicated region
      $region37: #{_lambda_.32} parent=35 // pred_check
        %p302 = pneg %p301
      $region38: #{_lambda_.32} parent=35 // pred_check_branch
        %304 = sbr.rel (%p302) target = $region40
      $region39: #{_lambda_.32} parent=35 // pred_region
        %305 = vst [vmem:[#allocation2] sm:$0xff] 0.0
      $region40: #{_lambda_.32} parent=35 // pred_fallthru
        _
      %v306 = vld [vmem:[#allocation2] sm:$0xff]
      %v307 = vld [vmem:[%s276] sm:$0xff]
      %v308 = vld [vmem:[%s276 + $0x8] sm:$0xf]
      %v309 = vld [vmem:[%s285] sm:$0xf]
      %v310 = vld [vmem:[%s285 + $0x4] sm:$0xf]
      %v311 = vld [vmem:[%s285 + $0x8] sm:$0xf]
      %v312 = vld [vmem:[%s285 + $0xc] sm:$0xf]
      %v313 = vld [vmem:[%s285 + $0x10] sm:$0xf]
      %v314 = vld [vmem:[%s285 + $0x14] sm:$0xf]
      %v315 = vld [vmem:[%s285 + $0x18] sm:$0xf]
      %v316 = vld [vmem:[%s285 + $0x1c] sm:$0xf]
      %v317 = vld [vmem:[%s285 + $0x20] sm:$0xf]
      %v318 = vld [vmem:[%s285 + $0x24] sm:$0xf]
      %v319 = vld [vmem:[%s285 + $0x28] sm:$0xf]
      %v320 = vld [vmem:[%s285 + $0x2c] sm:$0xf]
      %v321 = vld [vmem:[%s285 + $0x30] sm:$0xf]
      %v322 = vld [vmem:[%s285 + $0x34] sm:$0xf]
      %v323 = vld [vmem:[%s285 + $0x38] sm:$0xf]
      %v324 = vld [vmem:[%s285 + $0x3c] sm:$0xf]
      %v325 = vld [vmem:[%s285 + $0x40] sm:$0xf]
      %v326 = vld [vmem:[%s285 + $0x44] sm:$0xf]
      %v327 = vld [vmem:[%s285 + $0x48] sm:$0xf]
      %v328 = vld [vmem:[%s285 + $0x4c] sm:$0xf]
      %v329 = vld [vmem:[%s285 + $0x50] sm:$0xf]
      %v330 = vld [vmem:[%s285 + $0x54] sm:$0xf]
      %v331 = vld [vmem:[%s285 + $0x58] sm:$0xf]
      %v332 = vld [vmem:[%s285 + $0x5c] sm:$0xf]
      %v333 = vld [vmem:[%s285 + $0x60] sm:$0xf]
      %v334 = vld [vmem:[%s285 + $0x64] sm:$0xf]
      %v335 = vld [vmem:[%s285 + $0x68] sm:$0xf]
      %v336 = vld [vmem:[%s285 + $0x6c] sm:$0xf]
      %v337 = vld [vmem:[%s285 + $0x70] sm:$0xf]
      %v338 = vld [vmem:[%s285 + $0x74] sm:$0xf]
      %v339 = vld [vmem:[%s285 + $0x78] sm:$0xf]
      %v340 = vld [vmem:[%s285 + $0x7c] sm:$0xf]
      %v341 = vld [vmem:[%s285 + $0x80] sm:$0xf]
      %v342 = vld [vmem:[%s285 + $0x84] sm:$0xf]
      %v343 = vld [vmem:[%s285 + $0x88] sm:$0xf]
      %v344 = vld [vmem:[%s285 + $0x8c] sm:$0xf]
      %v345 = vld [vmem:[%s285 + $0x90] sm:$0xf]
      %v346 = vld [vmem:[%s285 + $0x94] sm:$0xf]
      %v347 = vld [vmem:[%s285 + $0x98] sm:$0xf]
      %v348 = vld [vmem:[%s285 + $0x9c] sm:$0xf]
      %v349 = vld [vmem:[%s285 + $0xa0] sm:$0xf]
      %v350 = vld [vmem:[%s285 + $0xa4] sm:$0xf]
      %v351 = vld [vmem:[%s285 + $0xa8] sm:$0xf]
      %v352 = vld [vmem:[%s285 + $0xac] sm:$0xf]
      %v353 = vld [vmem:[%s285 + $0xb0] sm:$0xf]
      %v354 = vld [vmem:[%s285 + $0xb4] sm:$0xf]
      %v355 = vld [vmem:[%s285 + $0xb8] sm:$0xf]
      %v356 = vld [vmem:[%s285 + $0xbc] sm:$0xf]
      %v359 = vunpack.c.l.b16 %v307
      %v360 = vunpack.c.h.b16 %v307
      %v361 = vunpack.c.l.b16 %v308
      %v362 = vpack.c.b16 %v359, %v359
      %v363 = vpack.c.b16 %v360, %v360
      %v364 = vpack.c.b16 %v361, %v361
      %v416 = vunpack.c.l.b16 %v309
      %v417 = vunpack.c.l.b16 %v310
      %v418 = vunpack.c.l.b16 %v311
      %v419 = vunpack.c.l.b16 %v312
      %v420 = vunpack.c.l.b16 %v313
      %v421 = vunpack.c.l.b16 %v314
      %v422 = vunpack.c.l.b16 %v315
      %v423 = vunpack.c.l.b16 %v316
      %v424 = vunpack.c.l.b16 %v317
      %v425 = vunpack.c.l.b16 %v318
      %v426 = vunpack.c.l.b16 %v319
      %v427 = vunpack.c.l.b16 %v320
      %v428 = vunpack.c.l.b16 %v321
      %v429 = vunpack.c.l.b16 %v322
      %v430 = vunpack.c.l.b16 %v323
      %v431 = vunpack.c.l.b16 %v324
      %v432 = vunpack.c.l.b16 %v325
      %v433 = vunpack.c.l.b16 %v326
      %v434 = vunpack.c.l.b16 %v327
      %v435 = vunpack.c.l.b16 %v328
      %v436 = vunpack.c.l.b16 %v329
      %v437 = vunpack.c.l.b16 %v330
      %v438 = vunpack.c.l.b16 %v331
      %v439 = vunpack.c.l.b16 %v332
      %v440 = vunpack.c.l.b16 %v333
      %v441 = vunpack.c.l.b16 %v334
      %v442 = vunpack.c.l.b16 %v335
      %v443 = vunpack.c.l.b16 %v336
      %v444 = vunpack.c.l.b16 %v337
      %v445 = vunpack.c.l.b16 %v338
      %v446 = vunpack.c.l.b16 %v339
      %v447 = vunpack.c.l.b16 %v340
      %v448 = vunpack.c.l.b16 %v341
      %v449 = vunpack.c.l.b16 %v342
      %v450 = vunpack.c.l.b16 %v343
      %v451 = vunpack.c.l.b16 %v344
      %v452 = vunpack.c.l.b16 %v345
      %v453 = vunpack.c.l.b16 %v346
      %v454 = vunpack.c.l.b16 %v347
      %v455 = vunpack.c.l.b16 %v348
      %v456 = vunpack.c.l.b16 %v349
      %v457 = vunpack.c.l.b16 %v350
      %v458 = vunpack.c.l.b16 %v351
      %v459 = vunpack.c.l.b16 %v352
      %v460 = vunpack.c.l.b16 %v353
      %v461 = vunpack.c.l.b16 %v354
      %v462 = vunpack.c.l.b16 %v355
      %v463 = vunpack.c.l.b16 %v356
      %v464 = vpack.c.b16 %v417, %v416
      %v465 = vpack.c.b16 %v419, %v418
      %v466 = vpack.c.b16 %v421, %v420
      %v467 = vpack.c.b16 %v423, %v422
      %v468 = vpack.c.b16 %v425, %v424
      %v469 = vpack.c.b16 %v427, %v426
      %v470 = vpack.c.b16 %v429, %v428
      %v471 = vpack.c.b16 %v431, %v430
      %v472 = vpack.c.b16 %v433, %v432
      %v473 = vpack.c.b16 %v435, %v434
      %v474 = vpack.c.b16 %v437, %v436
      %v475 = vpack.c.b16 %v439, %v438
      %v476 = vpack.c.b16 %v441, %v440
      %v477 = vpack.c.b16 %v443, %v442
      %v478 = vpack.c.b16 %v445, %v444
      %v479 = vpack.c.b16 %v447, %v446
      %v480 = vpack.c.b16 %v449, %v448
      %v481 = vpack.c.b16 %v451, %v450
      %v482 = vpack.c.b16 %v453, %v452
      %v483 = vpack.c.b16 %v455, %v454
      %v484 = vpack.c.b16 %v457, %v456
      %v485 = vpack.c.b16 %v459, %v458
      %v486 = vpack.c.b16 %v461, %v460
      %v487 = vpack.c.b16 %v463, %v462
      %512 = vmatprep.subr.bf16.mxu0 0
      %513 = vmatpush1.bf16.msra.mxu0 %v464
      %514 = vmatprep.subr.bf16.mxu0 0
      %515 = vmatpush1.bf16.msra.mxu0 %v465
      %516 = vmatprep.subr.bf16.mxu0 0
      %517 = vmatpush1.bf16.msra.mxu0 %v466
      %518 = vmatprep.subr.bf16.mxu0 0
      %519 = vmatpush1.bf16.msra.mxu0 %v467
      %520 = vmatprep.subr.bf16.mxu0 0
      %521 = vmatpush1.bf16.msra.mxu0 %v468
      %522 = vmatprep.subr.bf16.mxu0 0
      %523 = vmatpush1.bf16.msra.mxu0 %v469
      %524 = vmatprep.subr.bf16.mxu0 0
      %525 = vmatpush1.bf16.msra.mxu0 %v470
      %526 = vmatprep.subr.bf16.mxu0 0
      %527 = vmatpush1.bf16.msra.mxu0 %v471
      %528 = vmatprep.subr.bf16.mxu0 0
      %529 = vmatpush1.bf16.msra.mxu0 %v472
      %530 = vmatprep.subr.bf16.mxu0 0
      %531 = vmatpush1.bf16.msra.mxu0 %v473
      %532 = vmatprep.subr.bf16.mxu0 0
      %533 = vmatpush1.bf16.msra.mxu0 %v474
      %534 = vmatprep.subr.bf16.mxu0 0
      %535 = vmatpush1.bf16.msra.mxu0 %v475
      %536 = vmatprep.subr.bf16.mxu0 0
      %537 = vmatpush1.bf16.msra.mxu0 %v476
      %538 = vmatprep.subr.bf16.mxu0 0
      %539 = vmatpush1.bf16.msra.mxu0 %v477
      %540 = vmatprep.subr.bf16.mxu0 0
      %541 = vmatpush1.bf16.msra.mxu0 %v478
      %542 = vmatprep.subr.bf16.mxu0 0
      %543 = vmatpush1.bf16.msra.mxu0 %v479
      %544 = vmatprep.mubr.bf16.mxu0 %v363
      %545 = vmatmul.mubr.bf16.gmra.mrb[0].mxu0 %v362
      %v546 = vpop.f32.mrb[0].mxu0
      %v547 = vadd.f32 0.0, %v546
      %v548 = vpop.f32.mrb[0].mxu0
      %v549 = vpop.f32.mrb[0].mxu0
      %v550 = vpop.f32.mrb[0].mxu0
      %551 = vdwg.mxu0
      %552 = vmatprep.subr.bf16.mxu0 0
      %553 = vmatpush1.bf16.msra.mxu0 %v480
      %554 = vmatprep.subr.bf16.mxu0 0
      %555 = vmatpush1.bf16.msra.mxu0 %v481
      %556 = vmatprep.subr.bf16.mxu0 0
      %557 = vmatpush1.bf16.msra.mxu0 %v482
      %558 = vmatprep.subr.bf16.mxu0 0
      %559 = vmatpush1.bf16.msra.mxu0 %v483
      %560 = vmatprep.subr.bf16.mxu0 0
      %561 = vmatpush1.bf16.msra.mxu0 %v484
      %562 = vmatprep.subr.bf16.mxu0 0
      %563 = vmatpush1.bf16.msra.mxu0 %v485
      %564 = vmatprep.subr.bf16.mxu0 0
      %565 = vmatpush1.bf16.msra.mxu0 %v486
      %566 = vmatprep.subr.bf16.mxu0 0
      %567 = vmatpush1.bf16.msra.mxu0 %v487
      %568 = vmatprep.subr.bf16.mxu0 0
      %569 = vmatpush1.bf16.msra.mxu0 0
      %570 = vmatprep.subr.bf16.mxu0 0
      %571 = vmatpush1.bf16.msra.mxu0 0
      %572 = vmatprep.subr.bf16.mxu0 0
      %573 = vmatpush1.bf16.msra.mxu0 0
      %574 = vmatprep.subr.bf16.mxu0 0
      %575 = vmatpush1.bf16.msra.mxu0 0
      %576 = vmatprep.subr.bf16.mxu0 0
      %577 = vmatpush1.bf16.msra.mxu0 0
      %578 = vmatprep.subr.bf16.mxu0 0
      %579 = vmatpush1.bf16.msra.mxu0 0
      %580 = vmatprep.subr.bf16.mxu0 0
      %581 = vmatpush1.bf16.msra.mxu0 0
      %582 = vmatprep.subr.bf16.mxu0 0
      %583 = vmatpush1.bf16.msra.mxu0 0
      %584 = vmatprep.mubr.bf16.mxu0 0
      %585 = vmatmul.mubr.bf16.gmra.mrb[0].mxu0 %v364
      %v586 = vpop.f32.mrb[0].mxu0
      %v587 = vadd.f32 %v547, %v586
      %v588 = vpop.f32.mrb[0].mxu0
      %v589 = vpop.f32.mrb[0].mxu0
      %v590 = vpop.f32.mrb[0].mxu0
      %591 = vdwg.mxu0
      %v592 = vadd.f32 %v306, %v587
      %593 = vst [vmem:[#allocation2] sm:$0xff] %v592
      %p594 = scmp.eq.s32.totalorder %s22, 2
      // Predicated region
      $region41: #{_lambda_.32} parent=35 // pred_check
        %p595 = pneg %p594
      $region42: #{_lambda_.32} parent=35 // pred_check_branch
        %597 = sbr.rel (%p595) target = $region44
      $region43: #{_lambda_.32} parent=35 // pred_region
        %v598 = vld [vmem:[#allocation2] sm:$0xff]
        %v599 = vld [vmem:[%s289] sm:$0x1]
        %v601 = vlaneseq
        %v602 = vshrl.u32 %v601, 7
        %v603 = vsub.s32 0, %v602
        %v604 = vrot.slane %v599, %v603
        %v606 = vmul.f32 %v598, %v604
        %v607 = vld [vmem:[%s292] sm:$0x1]
        %v609 = vlaneseq
        %v610 = vshrl.u32 %v609, 7
        %v611 = vsub.s32 0, %v610
        %v612 = vrot.slane %v607, %v611
        %v614 = vadd.f32 %v606, %v612
        %v615 = vmax.f32 %v614, 0.0
        %616 = vst [vmem:[%s299] sm:$0xff] %v615
      $region44: #{_lambda_.32} parent=35 // pred_fallthru
        _
      %p617 = scmp.lt.s32.totalorder %s20, 0
      %s618 = scalar_select %p617, %s20, 0
      %p619 = scmp.lt.s32.totalorder %s21, 0
      %s620 = scalar_select %p619, %s21, 0
      %s621 = sadd.s32 %s620, %s618
      %s622 = smul.addr %s621, 8
      %s623 = scalar_lea.vmem %s4, %s622
      // Predicated region
      $region45: #{_lambda_.32} parent=35 // pred_check
        %p624 = pneg %p162
      $region46: #{_lambda_.32} parent=35 // pred_check_branch
        %626 = sbr.rel (%p624) target = $region48
      $region47: #{_lambda_.32} parent=35 // pred_region
        _
      $region48: #{_lambda_.32} parent=35 // pred_fallthru
        _
      // Predicated region
      $region49: #{_lambda_.32} parent=35 // pred_check
        %p627 = pneg %p162
      $region50: #{_lambda_.32} parent=35 // pred_check_branch
        %629 = sbr.rel (%p627) target = $region52
      $region51: #{_lambda_.32} parent=35 // pred_region
        %p630 = scmp.lt.s32.totalorder %s20, 0
        %s631 = scalar_select %p630, %s20, 0
        %p632 = scmp.lt.s32.totalorder %s21, 0
        %s633 = scalar_select %p632, %s21, 0
        %s634 = sadd.s32 %s633, %s631
        %s635 = smul.addr %s634, 8
        %s636 = scalar_lea.vmem %s4, %s635
      $region52: #{_lambda_.32} parent=35 // pred_fallthru
        _
    $region36: #{_lambda_.32} parent=5 // pred_fallthru
      _
    %p637 = scmp.le.s32.totalorder 2, %s10
    // Predicated region
    $region53: #{_lambda_.32} parent=5 // pred_check
      %p638 = pneg %p637
    $region54: #{_lambda_.32} parent=5 // pred_check_branch
      %640 = sbr.rel (%p638) target = $region56
    $region55: #{_lambda_.32} parent=5 // pred_region
      %s641 = ssub.s32 %s10, 2
    $region56: #{_lambda_.32} parent=5 // pred_fallthru
      _
  $region6: #{_lambda_.32} parent=0 // loop_footer
    %s14 = sadd.s32 1, %s10
  $region7: #{_lambda_.32} parent=0 // loop_footer_branch
    %9 = sbr.rel target = $region3
  $region8: #{_lambda_.32} parent=0 // loop_exit
    _

// kernel: _lambda_.34
$region0: #{_lambda_.34}
  #allocation0 [shape = 'u32[]', space=smem, size = 0x4, offset = 0x4, fixed_abs, tag = 'smem constant byte address 0x4 - core index']
  #allocation1 [shape = 'u32[144,128]{1,0:T(1,128)}', space=vmem, size = 0x12000, scoped, tag = 'internal scratch']
  #allocation2 [shape = 'f32[8,256]{1,0:T(8,128)}', space=vmem, size = 0x2000, scoped, tag = 'scratch operand']
  %s0 = inlined_call_operand.vmem [shape: bf16[8,128], index: 0, kind: input, shape index: {}]
  %s1 = inlined_call_operand.vmem [shape: bf16[128,512], index: 1, kind: input, shape index: {}]
  %s2 = inlined_call_operand.vmem [shape: f32[1,512], index: 2, kind: input, shape index: {}]
  %s3 = inlined_call_operand.vmem [shape: f32[1,512], index: 3, kind: input, shape index: {}]
  %s4 = inlined_call_operand.vmem [shape: f32[8,512], index: 4, kind: input, shape index: {}]
  %s5 = inlined_call_operand.vmem [shape: f32[8,512], index: 5, kind: output, shape index: {}]
  %s6 = sld [smem:[#allocation0]]
  $region99: #{_lambda_.34} parent=0
    _
  %s8 = ssub.s32 1, %s6
  %s9 = scalar_select 0, %s8, %s6
  $region1: #{_lambda_.34} parent=0
    #allocation3 [shape = 'u8[131072]{0}', space=vmem, size = 0x20000, scoped, tag = 'input window, operand 1']
    loop: start=0, step=1, limit=4
    $region2: #{_lambda_.34} parent=1 // loop_pre_header
      _
    $region3: #{_lambda_.34} parent=1 // loop_header
      %s11 = sphi 0, %s15
      %p12 = scmp.ge.s32.totalorder %s11, 4
      %s18 = sphi 0, %s37
      %s19 = sphi 0, %s33
      %s20 = sphi 0, %s29
      %s21 = sphi 0, %s18
      %s22 = sphi 0, %s19
      %s23 = sphi 0, %s20
      %s24 = sphi 0, %s21
      %s25 = sphi 0, %s22
      %s26 = sphi 0, %s23
      %s42 = sphi 0, %s44
      %s45 = sphi 0, %s42
      %s46 = sphi 0, %s45
      %s62 = sphi 0, %s46
      %s70 = sphi 0, %s72
      %s73 = sphi 0, %s70
      %s74 = sphi 0, %s73
      %s90 = sphi 0, %s74
      %s96 = sphi 0, %s98
      %s99 = sphi 0, %s96
      %s100 = sphi 0, %s99
      %s116 = sphi 0, %s100
      %s122 = sphi 0, %s124
      %s125 = sphi 0, %s122
      %s126 = sphi 0, %s125
      %s142 = sphi 0, %s126
      %s150 = sphi 0, %s152
      %s153 = sphi 0, %s150
      %s154 = sphi 0, %s153
      %s170 = sphi 0, %s154
      %s178 = sphi 0, %s180
      %s181 = sphi 0, %s178
      %s182 = sphi 0, %s181
      %s198 = sphi 0, %s182
    $region4: #{_lambda_.34} parent=1 // loop_header_branch
      %14 = sbr.rel (%p12) target = $region8
    $region5: #{_lambda_.34} parent=1 // loop_body
      %s16 = ssub.s32 %s11, 1
      %s17 = ssub.s32 %s11, 2
      %s27 = sadd.s32 1, %s20
      %p28 = scmp.ge.s32.totalorder %s27, 1
      %s29 = scalar_select %p28, 0, %s27
      %s30 = sadd.s32 1, %s19
      %s31 = scalar_select %p28, %s30, %s19
      %p32 = scmp.ge.s32.totalorder %s31, 2
      %s33 = scalar_select %p32, 0, %s31
      %s34 = sadd.s32 1, %s18
      %s35 = scalar_select %p32, %s34, %s18
      %p36 = scmp.ge.s32.totalorder %s35, 1
      %s37 = scalar_select %p36, 0, %s35
      %s38 = ssub.s32 %s18, %s37
      %s39 = ssub.s32 %s20, %s29
      %s40 = sor.u32 %s38, %s39
      %p41 = scmp.eq.s32.totalorder %s40, 0
      %s43 = sadd.s32 %s42, 1
      %s44 = scalar_select %p41, %s42, %s43
      %p47 = pneg %p41
      %p48 = scmp.eq.s32.totalorder %s11, 1
      %p49 = por %p47, %p48
      %p50 = scmp.ne.s32.totalorder %s42, %s45
      %p51 = scmp.eq.s32.totalorder %s11, 0
      %p52 = por %p50, %p51
      %p53 = scmp.ne.s32.totalorder %s42, %s45
      %p54 = scmp.eq.s32.totalorder %s16, 1
      %p55 = por %p53, %p54
      %p56 = scmp.ne.s32.totalorder %s45, %s46
      %p57 = scmp.eq.s32.totalorder %s16, 0
      %p58 = por %p56, %p57
      %p59 = scmp.ne.s32.totalorder %s45, %s46
      %p60 = scmp.eq.s32.totalorder %s17, 1
      %p61 = por %p59, %p60
      %p63 = scmp.ne.s32.totalorder %s46, %s62
      %p64 = scmp.eq.s32.totalorder %s17, 0
      %p65 = por %p63, %p64
      %s66 = ssub.s32 %s20, %s29
      %s67 = ssub.s32 %s19, %s33
      %s68 = sor.u32 %s66, %s67
      %p69 = scmp.eq.s32.totalorder %s68, 0
      %s71 = sadd.s32 %s70, 1
      %s72 = scalar_select %p69, %s70, %s71
      %p75 = pneg %p69
      %p76 = scmp.eq.s32.totalorder %s11, 1
      %p77 = por %p75, %p76
      %p78 = scmp.ne.s32.totalorder %s70, %s73
      %p79 = scmp.eq.s32.totalorder %s11, 0
      %p80 = por %p78, %p79
      %p81 = scmp.ne.s32.totalorder %s70, %s73
      %p82 = scmp.eq.s32.totalorder %s16, 1
      %p83 = por %p81, %p82
      %p84 = scmp.ne.s32.totalorder %s73, %s74
      %p85 = scmp.eq.s32.totalorder %s16, 0
      %p86 = por %p84, %p85
      %p87 = scmp.ne.s32.totalorder %s73, %s74
      %p88 = scmp.eq.s32.totalorder %s17, 1
      %p89 = por %p87, %p88
      %p91 = scmp.ne.s32.totalorder %s74, %s90
      %p92 = scmp.eq.s32.totalorder %s17, 0
      %p93 = por %p91, %p92
      %s94 = ssub.s32 %s19, %s33
      %p95 = scmp.eq.s32.totalorder %s94, 0
      %s97 = sadd.s32 %s96, 1
      %s98 = scalar_select %p95, %s96, %s97
      %p101 = pneg %p95
      %p102 = scmp.eq.s32.totalorder %s11, 1
      %p103 = por %p101, %p102
      %p104 = scmp.ne.s32.totalorder %s96, %s99
      %p105 = scmp.eq.s32.totalorder %s11, 0
      %p106 = por %p104, %p105
      %p107 = scmp.ne.s32.totalorder %s96, %s99
      %p108 = scmp.eq.s32.totalorder %s16, 1
      %p109 = por %p107, %p108
      %p110 = scmp.ne.s32.totalorder %s99, %s100
      %p111 = scmp.eq.s32.totalorder %s16, 0
      %p112 = por %p110, %p111
      %p113 = scmp.ne.s32.totalorder %s99, %s100
      %p114 = scmp.eq.s32.totalorder %s17, 1
      %p115 = por %p113, %p114
      %p117 = scmp.ne.s32.totalorder %s100, %s116
      %p118 = scmp.eq.s32.totalorder %s17, 0
      %p119 = por %p117, %p118
      %s120 = ssub.s32 %s19, %s33
      %p121 = scmp.eq.s32.totalorder %s120, 0
      %s123 = sadd.s32 %s122, 1
      %s124 = scalar_select %p121, %s122, %s123
      %p127 = pneg %p121
      %p128 = scmp.eq.s32.totalorder %s11, 1
      %p129 = por %p127, %p128
      %p130 = scmp.ne.s32.totalorder %s122, %s125
      %p131 = scmp.eq.s32.totalorder %s11, 0
      %p132 = por %p130, %p131
      %p133 = scmp.ne.s32.totalorder %s122, %s125
      %p134 = scmp.eq.s32.totalorder %s16, 1
      %p135 = por %p133, %p134
      %p136 = scmp.ne.s32.totalorder %s125, %s126
      %p137 = scmp.eq.s32.totalorder %s16, 0
      %p138 = por %p136, %p137
      %p139 = scmp.ne.s32.totalorder %s125, %s126
      %p140 = scmp.eq.s32.totalorder %s17, 1
      %p141 = por %p139, %p140
      %p143 = scmp.ne.s32.totalorder %s126, %s142
      %p144 = scmp.eq.s32.totalorder %s17, 0
      %p145 = por %p143, %p144
      %s146 = ssub.s32 %s18, %s37
      %s147 = ssub.s32 %s19, %s33
      %s148 = sor.u32 %s146, %s147
      %p149 = scmp.eq.s32.totalorder %s148, 0
      %s151 = sadd.s32 %s150, 1
      %s152 = scalar_select %p149, %s150, %s151
      %p155 = pneg %p149
      %p156 = scmp.eq.s32.totalorder %s11, 1
      %p157 = por %p155, %p156
      %p158 = scmp.ne.s32.totalorder %s150, %s153
      %p159 = scmp.eq.s32.totalorder %s11, 0
      %p160 = por %p158, %p159
      %p161 = scmp.ne.s32.totalorder %s150, %s153
      %p162 = scmp.eq.s32.totalorder %s16, 1
      %p163 = por %p161, %p162
      %p164 = scmp.ne.s32.totalorder %s153, %s154
      %p165 = scmp.eq.s32.totalorder %s16, 0
      %p166 = por %p164, %p165
      %p167 = scmp.ne.s32.totalorder %s153, %s154
      %p168 = scmp.eq.s32.totalorder %s17, 1
      %p169 = por %p167, %p168
      %p171 = scmp.ne.s32.totalorder %s154, %s170
      %p172 = scmp.eq.s32.totalorder %s17, 0
      %p173 = por %p171, %p172
      %s174 = ssub.s32 %s18, %s37
      %s175 = ssub.s32 %s19, %s33
      %s176 = sor.u32 %s174, %s175
      %p177 = scmp.eq.s32.totalorder %s176, 0
      %s179 = sadd.s32 %s178, 1
      %s180 = scalar_select %p177, %s178, %s179
      %p183 = pneg %p177
      %p184 = scmp.eq.s32.totalorder %s11, 1
      %p185 = por %p183, %p184
      %p186 = scmp.ne.s32.totalorder %s178, %s181
      %p187 = scmp.eq.s32.totalorder %s11, 0
      %p188 = por %p186, %p187
      %p189 = scmp.ne.s32.totalorder %s178, %s181
      %p190 = scmp.eq.s32.totalorder %s16, 1
      %p191 = por %p189, %p190
      %p192 = scmp.ne.s32.totalorder %s181, %s182
      %p193 = scmp.eq.s32.totalorder %s16, 0
      %p194 = por %p192, %p193
      %p195 = scmp.ne.s32.totalorder %s181, %s182
      %p196 = scmp.eq.s32.totalorder %s17, 1
      %p197 = por %p195, %p196
      %p199 = scmp.ne.s32.totalorder %s182, %s198
      %p200 = scmp.eq.s32.totalorder %s17, 0
      %p201 = por %p199, %p200
      %p202 = scmp.le.s32.totalorder 1, %s11
      %p203 = scmp.lt.s32.totalorder %s11, 3
      %p204 = pnand %p202, %p203
      %p205 = pneg %p204
      // Predicated region
      $region9: #{_lambda_.34} parent=5 // pred_check
        _
      $region10: #{_lambda_.34} parent=5 // pred_check_branch
        %207 = sbr.rel (%p204) target = $region12
      $region11: #{_lambda_.34} parent=5 // pred_region
        %s208 = ssub.s32 %s11, 1
        // Predicated region
        $region13: #{_lambda_.34} parent=11 // pred_check
          %p209 = pneg %p58
        $region14: #{_lambda_.34} parent=11 // pred_check_branch
          %211 = sbr.rel (%p209) target = $region16
        $region15: #{_lambda_.34} parent=11 // pred_region
          %p212 = scmp.lt.s32.totalorder %s21, 0
          %s213 = scalar_select %p212, %s21, 0
          %p214 = scmp.lt.s32.totalorder %s23, 0
          %s215 = scalar_select %p214, %s23, 0
          %s216 = sadd.s32 %s215, %s213
          %s217 = smul.addr %s216, 4
          %s218 = scalar_lea.vmem %s0, %s217
        $region16: #{_lambda_.34} parent=11 // pred_fallthru
          _
      $region12: #{_lambda_.34} parent=5 // pred_fallthru
        _
      %p219 = scmp.lt.s32.totalorder %s11, 2
      // Predicated region
      $region17: #{_lambda_.34} parent=5 // pred_check
        %p220 = pneg %p219
      $region18: #{_lambda_.34} parent=5 // pred_check_branch
        %222 = sbr.rel (%p220) target = $region20
      $region19: #{_lambda_.34} parent=5 // pred_region
        // Predicated region
        $region21: #{_lambda_.34} parent=19 // pred_check
          %p223 = pneg %p80
        $region22: #{_lambda_.34} parent=19 // pred_check_branch
          %225 = sbr.rel (%p223) target = $region24
        $region23: #{_lambda_.34} parent=19 // pred_region
          %s226 = sand.u32 %s70, 1
          %s227 = sand.u32 %s70, 1
          %s228 = smul.addr %s227, 128
          %s229 = scalar_lea.vmem [#allocation3], %s228
          %s230 = smul.u32 16, %s20
          %s231 = smul.u32 2, %s19
          %s232 = smul.addr %s230, 4
          %s233 = sadd.s32 %s231, %s232
          %s234 = smul.addr %s233, 4
          %s235 = scalar_lea.vmem %s1, %s234
          // Predicated region
          $region25: #{_lambda_.34} parent=23 // pred_check
            _
          $region26: #{_lambda_.34} parent=23 // pred_check_branch
            %237 = sbr.rel (0) target = $region28
          $region27: #{_lambda_.34} parent=23 // pred_region
            // Predicated region
            $region29: #{_lambda_.34} parent=27 // pred_check
              _
            $region30: #{_lambda_.34} parent=27 // pred_check_branch
              %239 = sbr.rel (0) target = $region32
            $region31: #{_lambda_.34} parent=27 // pred_region
              // Predicated region
              $region44: #{_lambda_.34} parent=31 // pred_check
                _
              $region45: #{_lambda_.34} parent=31 // pred_check_branch
                %284 = sbr.rel (0) target = $region47
              $region46: #{_lambda_.34} parent=31 // pred_region
                loop: start=0, step=1, limit=1
                $region48: #{_lambda_.34} parent=46 // loop_pre_header
                  _
                $region49: #{_lambda_.34} parent=46 // loop_header
                  %s286 = sphi 0, %s290
                  %p287 = scmp.ge.s32.totalorder %s286, 1
                  %s291 = sphi %s235, %s235
                  %s292 = sphi %s229, %s229
                $region50: #{_lambda_.34} parent=46 // loop_header_branch
                  %289 = sbr.rel (%p287) target = $region54
                $region51: #{_lambda_.34} parent=46 // loop_body
                  %v293 = vld [vmem:[%s291] sm:$0xff]
                  %294 = vst [vmem:[%s292] sm:$0xff] %v293
                  %v295 = vld [vmem:[%s291 + $0x10] sm:$0xff]
                  %296 = vst [vmem:[%s292 + $0x8] sm:$0xff] %v295
                  %v297 = vld [vmem:[%s291 + $0x20] sm:$0xff]
                  %298 = vst [vmem:[%s292 + $0x10] sm:$0xff] %v297
                  %v299 = vld [vmem:[%s291 + $0x30] sm:$0xff]
                  %300 = vst [vmem:[%s292 + $0x18] sm:$0xff] %v299
                  %v301 = vld [vmem:[%s291 + $0x40] sm:$0xff]
                  %302 = vst [vmem:[%s292 + $0x20] sm:$0xff] %v301
                  %v303 = vld [vmem:[%s291 + $0x50] sm:$0xff]
                  %304 = vst [vmem:[%s292 + $0x28] sm:$0xff] %v303
                  %v305 = vld [vmem:[%s291 + $0x60] sm:$0xff]
                  %306 = vst [vmem:[%s292 + $0x30] sm:$0xff] %v305
                  %v307 = vld [vmem:[%s291 + $0x70] sm:$0xff]
                  %308 = vst [vmem:[%s292 + $0x38] sm:$0xff] %v307
                  %v309 = vld [vmem:[%s291 + $0x80] sm:$0xff]
                  %310 = vst [vmem:[%s292 + $0x40] sm:$0xff] %v309
                  %v311 = vld [vmem:[%s291 + $0x90] sm:$0xff]
                  %312 = vst [vmem:[%s292 + $0x48] sm:$0xff] %v311
                  %v313 = vld [vmem:[%s291 + $0xa0] sm:$0xff]
                  %314 = vst [vmem:[%s292 + $0x50] sm:$0xff] %v313
                  %v315 = vld [vmem:[%s291 + $0xb0] sm:$0xff]
                  %316 = vst [vmem:[%s292 + $0x58] sm:$0xff] %v315
                  %v317 = vld [vmem:[%s291 + $0xc0] sm:$0xff]
                  %318 = vst [vmem:[%s292 + $0x60] sm:$0xff] %v317
                  %v319 = vld [vmem:[%s291 + $0xd0] sm:$0xff]
                  %320 = vst [vmem:[%s292 + $0x68] sm:$0xff] %v319
                  %v321 = vld [vmem:[%s291 + $0xe0] sm:$0xff]
                  %322 = vst [vmem:[%s292 + $0x70] sm:$0xff] %v321
                  %v323 = vld [vmem:[%s291 + $0xf0] sm:$0xff]
                  %324 = vst [vmem:[%s292 + $0x78] sm:$0xff] %v323
                $region52: #{_lambda_.34} parent=46 // loop_footer
                  %s290 = sadd.s32 1, %s286
                $region53: #{_lambda_.34} parent=46 // loop_footer_branch
                  %285 = sbr.rel target = $region49
                $region54: #{_lambda_.34} parent=46 // loop_exit
                  _
              $region47: #{_lambda_.34} parent=31 // pred_fallthru
                _
              // Predicated region
              $region55: #{_lambda_.34} parent=31 // pred_check
                _
              $region56: #{_lambda_.34} parent=31 // pred_check_branch
                %326 = sbr.rel target = $region58
              $region57: #{_lambda_.34} parent=31 // pred_region
                _
              $region58: #{_lambda_.34} parent=31 // pred_fallthru
                _
            $region32: #{_lambda_.34} parent=27 // pred_fallthru
              _
            // Predicated region
            $region33: #{_lambda_.34} parent=27 // pred_check
              _
            $region34: #{_lambda_.34} parent=27 // pred_check_branch
              %241 = sbr.rel target = $region36
            $region35: #{_lambda_.34} parent=27 // pred_region
              loop: start=0, step=1, limit=1
              $region37: #{_lambda_.34} parent=35 // loop_pre_header
                _
              $region38: #{_lambda_.34} parent=35 // loop_header
                %s244 = sphi 0, %s248
                %p245 = scmp.ge.s32.totalorder %s244, 1
                %s249 = sphi %s235, %s235
                %s250 = sphi %s229, %s229
              $region39: #{_lambda_.34} parent=35 // loop_header_branch
                %247 = sbr.rel (%p245) target = $region43
              $region40: #{_lambda_.34} parent=35 // loop_body
                %v251 = vld [vmem:[%s249] sm:$0xff]
                %252 = vst [vmem:[%s250] sm:$0xff] %v251
                %v253 = vld [vmem:[%s249 + $0x10] sm:$0xff]
                %254 = vst [vmem:[%s250 + $0x8] sm:$0xff] %v253
                %v255 = vld [vmem:[%s249 + $0x20] sm:$0xff]
                %256 = vst [vmem:[%s250 + $0x10] sm:$0xff] %v255
                %v257 = vld [vmem:[%s249 + $0x30] sm:$0xff]
                %258 = vst [vmem:[%s250 + $0x18] sm:$0xff] %v257
                %v259 = vld [vmem:[%s249 + $0x40] sm:$0xff]
                %260 = vst [vmem:[%s250 + $0x20] sm:$0xff] %v259
                %v261 = vld [vmem:[%s249 + $0x50] sm:$0xff]
                %262 = vst [vmem:[%s250 + $0x28] sm:$0xff] %v261
                %v263 = vld [vmem:[%s249 + $0x60] sm:$0xff]
                %264 = vst [vmem:[%s250 + $0x30] sm:$0xff] %v263
                %v265 = vld [vmem:[%s249 + $0x70] sm:$0xff]
                %266 = vst [vmem:[%s250 + $0x38] sm:$0xff] %v265
                %v267 = vld [vmem:[%s249 + $0x80] sm:$0xff]
                %268 = vst [vmem:[%s250 + $0x40] sm:$0xff] %v267
                %v269 = vld [vmem:[%s249 + $0x90] sm:$0xff]
                %270 = vst [vmem:[%s250 + $0x48] sm:$0xff] %v269
                %v271 = vld [vmem:[%s249 + $0xa0] sm:$0xff]
                %272 = vst [vmem:[%s250 + $0x50] sm:$0xff] %v271
                %v273 = vld [vmem:[%s249 + $0xb0] sm:$0xff]
                %274 = vst [vmem:[%s250 + $0x58] sm:$0xff] %v273
                %v275 = vld [vmem:[%s249 + $0xc0] sm:$0xff]
                %276 = vst [vmem:[%s250 + $0x60] sm:$0xff] %v275
                %v277 = vld [vmem:[%s249 + $0xd0] sm:$0xff]
                %278 = vst [vmem:[%s250 + $0x68] sm:$0xff] %v277
                %v279 = vld [vmem:[%s249 + $0xe0] sm:$0xff]
                %280 = vst [vmem:[%s250 + $0x70] sm:$0xff] %v279
                %v281 = vld [vmem:[%s249 + $0xf0] sm:$0xff]
                %282 = vst [vmem:[%s250 + $0x78] sm:$0xff] %v281
              $region41: #{_lambda_.34} parent=35 // loop_footer
                %s248 = sadd.s32 1, %s244
              $region42: #{_lambda_.34} parent=35 // loop_footer_branch
                %243 = sbr.rel target = $region38
              $region43: #{_lambda_.34} parent=35 // loop_exit
                _
            $region36: #{_lambda_.34} parent=27 // pred_fallthru
              _
          $region28: #{_lambda_.34} parent=23 // pred_fallthru
            _
          %327 = vnop
        $region24: #{_lambda_.34} parent=19 // pred_fallthru
          _
        // Predicated region
        $region59: #{_lambda_.34} parent=19 // pred_check
          %p328 = pneg %p106
        $region60: #{_lambda_.34} parent=19 // pred_check_branch
          %330 = sbr.rel (%p328) target = $region62
        $region61: #{_lambda_.34} parent=19 // pred_region
          %s331 = smul.u32 2, %s19
          %p332 = scmp.lt.s32.totalorder %s331, 3
          %s333 = scalar_select %p332, %s331, 3
          %s334 = scalar_lea.vmem %s2, %s333
          %s335 = smul.u32 2, %s19
        $region62: #{_lambda_.34} parent=19 // pred_fallthru
          _
        // Predicated region
        $region63: #{_lambda_.34} parent=19 // pred_check
          %p336 = pneg %p132
        $region64: #{_lambda_.34} parent=19 // pred_check_branch
          %338 = sbr.rel (%p336) target = $region66
        $region65: #{_lambda_.34} parent=19 // pred_region
          %s339 = smul.u32 2, %s19
          %p340 = scmp.lt.s32.totalorder %s339, 3
          %s341 = scalar_select %p340, %s339, 3
          %s342 = scalar_lea.vmem %s3, %s341
          %s343 = smul.u32 2, %s19
        $region66: #{_lambda_.34} parent=19 // pred_fallthru
          _
        // Predicated region
        $region67: #{_lambda_.34} parent=19 // pred_check
          %p344 = pneg %p160
        $region68: #{_lambda_.34} parent=19 // pred_check_branch
          %346 = sbr.rel (%p344) target = $region70
        $region69: #{_lambda_.34} parent=19 // pred_region
          %s347 = smul.u32 2, %s19
          %p348 = scmp.lt.s32.totalorder %s18, 0
          %s349 = scalar_select %p348, %s18, 0
          %p350 = scmp.lt.s32.totalorder %s347, 3
          %s351 = scalar_select %p350, %s347, 3
          %s352 = smul.addr %s349, 4
          %s353 = sadd.s32 %s351, %s352
          %s354 = smul.addr %s353, 8
          %s355 = scalar_lea.vmem %s4, %s354
          %s356 = smul.u32 2, %s19
        $region70: #{_lambda_.34} parent=19 // pred_fallthru
          _
      $region20: #{_lambda_.34} parent=5 // pred_fallthru
        _
      %p357 = scmp.le.s32.totalorder 1, %s11
      %p358 = scmp.lt.s32.totalorder %s11, 3
      %p359 = pnand %p357, %p358
      %p360 = pneg %p359
      // Predicated region
      $region71: #{_lambda_.34} parent=5 // pred_check
        _
      $region72: #{_lambda_.34} parent=5 // pred_check_branch
        %362 = sbr.rel (%p359) target = $region74
      $region73: #{_lambda_.34} parent=5 // pred_region
        %s363 = ssub.s32 %s11, 1
        %s364 = sand.u32 %s73, 1
        %s365 = sand.u32 %s73, 1
        %s366 = smul.addr %s365, 128
        %s367 = scalar_lea.vmem [#allocation3], %s366
        // Predicated region
        $region75: #{_lambda_.34} parent=73 // pred_check
          %p368 = pneg %p86
        $region76: #{_lambda_.34} parent=73 // pred_check_branch
          %370 = sbr.rel (%p368) target = $region78
        $region77: #{_lambda_.34} parent=73 // pred_region
          _
        $region78: #{_lambda_.34} parent=73 // pred_fallthru
          _
        %p371 = scmp.lt.s32.totalorder %s21, 0
        %s372 = scalar_select %p371, %s21, 0
        %p373 = scmp.lt.s32.totalorder %s23, 0
        %s374 = scalar_select %p373, %s23, 0
        %s375 = sadd.s32 %s374, %s372
        %s376 = smul.addr %s375, 4
        %s377 = scalar_lea.vmem %s0, %s376
        %p378 = pneg %p58
        %p379 = pneg %p55
        %s380 = sand.u32 %s73, 1
        %s381 = sand.u32 %s73, 1
        %s382 = smul.addr %s381, 128
        %s383 = scalar_lea.vmem [#allocation3], %s382
        %p384 = pneg %p86
        %p385 = pneg %p83
        %s386 = smul.u32 2, %s22
        %p387 = scmp.lt.s32.totalorder %s386, 3
        %s388 = scalar_select %p387, %s386, 3
        %s389 = scalar_lea.vmem %s2, %s388
        %p390 = pneg %p112
        %p391 = pneg %p109
        %s392 = smul.u32 2, %s22
        %p393 = scmp.lt.s32.totalorder %s392, 3
        %s394 = scalar_select %p393, %s392, 3
        %s395 = scalar_lea.vmem %s3, %s394
        %p396 = pneg %p138
        %p397 = pneg %p135
        %s398 = smul.u32 2, %s22
        %p399 = scmp.lt.s32.totalorder %s21, 0
        %s400 = scalar_select %p399, %s21, 0
        %p401 = scmp.lt.s32.totalorder %s398, 3
        %s402 = scalar_select %p401, %s398, 3
        %s403 = smul.addr %s400, 4
        %s404 = sadd.s32 %s402, %s403
        %s405 = smul.addr %s404, 8
        %s406 = scalar_lea.vmem %s4, %s405
        %p407 = pneg %p166
        %p408 = pneg %p163
        %p409 = pneg %p194
        %p410 = pneg %p191
        %s411 = smul.u32 2, %s22
        %p412 = scmp.lt.s32.totalorder %s21, 0
        %s413 = scalar_select %p412, %s21, 0
        %p414 = scmp.lt.s32.totalorder %s411, 3
        %s415 = scalar_select %p414, %s411, 3
        %s416 = smul.addr %s413, 4
        %s417 = sadd.s32 %s415, %s416
        %s418 = smul.addr %s417, 8
        %s419 = scalar_lea.vmem %s5, %s418
        %p420 = scmp.lt.s32.totalorder %s21, 0
        %s421 = scalar_select %p420, %s21, 0
        %p422 = scmp.lt.s32.totalorder %s23, 0
        %s423 = scalar_select %p422, %s23, 0
        %s424 = sadd.s32 %s423, %s421
        %s425 = smul.addr %s424, 4
        %s426 = scalar_lea.vmem %s0, %s425
        %s427 = smul.u32 16, %s23
        %s428 = smul.u32 2, %s22
        %s429 = smul.u32 2, %s22
        %p430 = scmp.lt.s32.totalorder %s429, 3
        %s431 = scalar_select %p430, %s429, 3
        %s432 = scalar_lea.vmem %s2, %s431
        %s433 = smul.u32 2, %s22
        %s434 = smul.u32 2, %s22
        %p435 = scmp.lt.s32.totalorder %s434, 3
        %s436 = scalar_select %p435, %s434, 3
        %s437 = scalar_lea.vmem %s3, %s436
        %s438 = smul.u32 2, %s22
        %s439 = smul.u32 2, %s22
        %p440 = scmp.lt.s32.totalorder %s21, 0
        %s441 = scalar_select %p440, %s21, 0
        %p442 = scmp.lt.s32.totalorder %s439, 3
        %s443 = scalar_select %p442, %s439, 3
        %s444 = smul.addr %s441, 4
        %s445 = sadd.s32 %s443, %s444
        %s446 = smul.addr %s445, 8
        %s447 = scalar_lea.vmem %s4, %s446
        %s448 = smul.u32 2, %s22
        %s449 = smul.u32 2, %s22
        %p450 = scmp.lt.s32.totalorder %s21, 0
        %s451 = scalar_select %p450, %s21, 0
        %p452 = scmp.lt.s32.totalorder %s449, 3
        %s453 = scalar_select %p452, %s449, 3
        %s454 = smul.addr %s451, 4
        %s455 = sadd.s32 %s453, %s454
        %s456 = smul.addr %s455, 8
        %s457 = scalar_lea.vmem %s5, %s456
        %s458 = smul.u32 2, %s22
        %p460 = scmp.eq.s32.totalorder %s23, 0
        // Predicated region
        $region79: #{_lambda_.34} parent=73 // pred_check
          %p461 = pneg %p460
        $region80: #{_lambda_.34} parent=73 // pred_check_branch
          %463 = sbr.rel (%p461) target = $region82
        $region81: #{_lambda_.34} parent=73 // pred_region
          %464 = vst [vmem:[#allocation2] sm:$0xff] 0.0
          %465 = vst [vmem:[#allocation2 + $0x8] sm:$0xff] 0.0
        $region82: #{_lambda_.34} parent=73 // pred_fallthru
          _
        %v466 = vld [vmem:[#allocation2] sm:$0xff]
        %v467 = vld [vmem:[#allocation2 + $0x8] sm:$0xff]
        %v468 = vld [vmem:[%s426] sm:$0xf]
        %v469 = vld [vmem:[%s367] sm:$0xff]
        %v470 = vld [vmem:[%s367 + $0x8] sm:$0xff]
        %v471 = vld [vmem:[%s367 + $0x10] sm:$0xff]
        %v472 = vld [vmem:[%s367 + $0x18] sm:$0xff]
        %v473 = vld [vmem:[%s367 + $0x20] sm:$0xff]
        %v474 = vld [vmem:[%s367 + $0x28] sm:$0xff]
        %v475 = vld [vmem:[%s367 + $0x30] sm:$0xff]
        %v476 = vld [vmem:[%s367 + $0x38] sm:$0xff]
        %v477 = vld [vmem:[%s367 + $0x40] sm:$0xff]
        %v478 = vld [vmem:[%s367 + $0x48] sm:$0xff]
        %v479 = vld [vmem:[%s367 + $0x50] sm:$0xff]
        %v480 = vld [vmem:[%s367 + $0x58] sm:$0xff]
        %v481 = vld [vmem:[%s367 + $0x60] sm:$0xff]
        %v482 = vld [vmem:[%s367 + $0x68] sm:$0xff]
        %v483 = vld [vmem:[%s367 + $0x70] sm:$0xff]
        %v484 = vld [vmem:[%s367 + $0x78] sm:$0xff]
        %v501 = vunpack.c.l.b16 %v469
        %v502 = vunpack.c.h.b16 %v469
        %v503 = vunpack.c.l.b16 %v470
        %v504 = vunpack.c.h.b16 %v470
        %v505 = vunpack.c.l.b16 %v471
        %v506 = vunpack.c.h.b16 %v471
        %v507 = vunpack.c.l.b16 %v472
        %v508 = vunpack.c.h.b16 %v472
        %v509 = vunpack.c.l.b16 %v473
        %v510 = vunpack.c.h.b16 %v473
        %v511 = vunpack.c.l.b16 %v474
        %v512 = vunpack.c.h.b16 %v474
        %v513 = vunpack.c.l.b16 %v475
        %v514 = vunpack.c.h.b16 %v475
        %v515 = vunpack.c.l.b16 %v476
        %v516 = vunpack.c.h.b16 %v476
        %v517 = vunpack.c.l.b16 %v477
        %v518 = vunpack.c.h.b16 %v477
        %v519 = vunpack.c.l.b16 %v478
        %v520 = vunpack.c.h.b16 %v478
        %v521 = vunpack.c.l.b16 %v479
        %v522 = vunpack.c.h.b16 %v479
        %v523 = vunpack.c.l.b16 %v480
        %v524 = vunpack.c.h.b16 %v480
        %v525 = vunpack.c.l.b16 %v481
        %v526 = vunpack.c.h.b16 %v481
        %v527 = vunpack.c.l.b16 %v482
        %v528 = vunpack.c.h.b16 %v482
        %v529 = vunpack.c.l.b16 %v483
        %v530 = vunpack.c.h.b16 %v483
        %v531 = vunpack.c.l.b16 %v484
        %v532 = vunpack.c.h.b16 %v484
        %v533 = vpack.c.b16 %v503, %v501
        %v534 = vpack.c.b16 %v504, %v502
        %v535 = vpack.c.b16 %v507, %v505
        %v536 = vpack.c.b16 %v508, %v506
        %v537 = vpack.c.b16 %v511, %v509
        %v538 = vpack.c.b16 %v512, %v510
        %v539 = vpack.c.b16 %v515, %v513
        %v540 = vpack.c.b16 %v516, %v514
        %v541 = vpack.c.b16 %v519, %v517
        %v542 = vpack.c.b16 %v520, %v518
        %v543 = vpack.c.b16 %v523, %v521
        %v544 = vpack.c.b16 %v524, %v522
        %v545 = vpack.c.b16 %v527, %v525
        %v546 = vpack.c.b16 %v528, %v526
        %v547 = vpack.c.b16 %v531, %v529
        %v548 = vpack.c.b16 %v532, %v530
        %565 = vmatprep.subr.bf16.mxu0 %v534
        %566 = vmatpush1.bf16.msra.mxu0 %v533
        %567 = vmatprep.subr.bf16.mxu0 %v536
        %568 = vmatpush1.bf16.msra.mxu0 %v535
        %569 = vmatprep.subr.bf16.mxu0 %v538
        %570 = vmatpush1.bf16.msra.mxu0 %v537
        %571 = vmatprep.subr.bf16.mxu0 %v540
        %572 = vmatpush1.bf16.msra.mxu0 %v539
        %573 = vmatprep.subr.bf16.mxu0 %v542
        %574 = vmatpush1.bf16.msra.mxu0 %v541
        %575 = vmatprep.subr.bf16.mxu0 %v544
        %576 = vmatpush1.bf16.msra.mxu0 %v543
        %577 = vmatprep.subr.bf16.mxu0 %v546
        %578 = vmatpush1.bf16.msra.mxu0 %v545
        %579 = vmatprep.subr.bf16.mxu0 %v548
        %580 = vmatpush1.bf16.msra.mxu0 %v547
        %581 = vmatprep.subr.bf16.mxu0 0
        %582 = vmatpush1.bf16.msra.mxu0 0
        %583 = vmatprep.subr.bf16.mxu0 0
        %584 = vmatpush1.bf16.msra.mxu0 0
        %585 = vmatprep.subr.bf16.mxu0 0
        %586 = vmatpush1.bf16.msra.mxu0 0
        %587 = vmatprep.subr.bf16.mxu0 0
        %588 = vmatpush1.bf16.msra.mxu0 0
        %589 = vmatprep.subr.bf16.mxu0 0
        %590 = vmatpush1.bf16.msra.mxu0 0
        %591 = vmatprep.subr.bf16.mxu0 0
        %592 = vmatpush1.bf16.msra.mxu0 0
        %593 = vmatprep.subr.bf16.mxu0 0
        %594 = vmatpush1.bf16.msra.mxu0 0
        %595 = vmatprep.subr.bf16.mxu0 0
        %596 = vmatpush1.bf16.msra.mxu0 0
        %597 = vmatprep.mubr.bf16.mxu0 0
        %598 = vmatmul.mubr.bf16.gmra.mrb[0].mxu0 %v468
        %v599 = vpop.f32.mrb[0].mxu0
        %v600 = vadd.f32 0.0, %v599
        %v601 = vpop.f32.mrb[0].mxu0
        %v602 = vadd.f32 0.0, %v601
        %v603 = vpop.f32.mrb[0].mxu0
        %v604 = vpop.f32.mrb[0].mxu0
        %605 = vdwg.mxu0
        %v606 = vadd.f32 %v466, %v600
        %v607 = vadd.f32 %v467, %v602
        %608 = vst [vmem:[#allocation2] sm:$0xff] %v606
        %609 = vst [vmem:[#allocation2 + $0x8] sm:$0xff] %v607
        // Predicated region
        $region83: #{_lambda_.34} parent=73 // pred_check
          %p610 = pneg %p460
        $region84: #{_lambda_.34} parent=73 // pred_check_branch
          %612 = sbr.rel (%p610) target = $region86
        $region85: #{_lambda_.34} parent=73 // pred_region
          %v613 = vld [vmem:[#allocation2] sm:$0xff]
          %v614 = vld [vmem:[#allocation2 + $0x8] sm:$0xff]
          %v615 = vld [vmem:[%s432] sm:$0x3]
          %v617 = vlaneseq
          %v618 = vshrl.u32 %v617, 7
          %v619 = vsub.s32 0, %v618
          %v620 = vrot.slane %v615, %v619
          %v621 = vlaneseq
          %v622 = vshrl.u32 %v621, 7
          %v623 = vsub.s32 1, %v622
          %v624 = vrot.slane %v615, %v623
          %v627 = vmul.f32 %v613, %v620
          %v628 = vmul.f32 %v614, %v624
          %v629 = vld [vmem:[%s437] sm:$0x3]
          %v631 = vlaneseq
          %v632 = vshrl.u32 %v631, 7
          %v633 = vsub.s32 0, %v632
          %v634 = vrot.slane %v629, %v633
          %v635 = vlaneseq
          %v636 = vshrl.u32 %v635, 7
          %v637 = vsub.s32 1, %v636
          %v638 = vrot.slane %v629, %v637
          %v641 = vadd.f32 %v627, %v634
          %v642 = vadd.f32 %v628, %v638
          %v643 = vld [vmem:[%s447] sm:$0xff]
          %v644 = vld [vmem:[%s447 + $0x8] sm:$0xff]
          %v645 = vadd.f32 %v641, %v643
          %v646 = vadd.f32 %v642, %v644
          %v647 = vmax.f32 %v645, 0.0
          %v648 = vmax.f32 %v646, 0.0
          %649 = vst [vmem:[%s457] sm:$0xff] %v647
          %650 = vst [vmem:[%s457 + $0x8] sm:$0xff] %v648
        $region86: #{_lambda_.34} parent=73 // pred_fallthru
          _
        %s651 = smul.u32 2, %s22
        %p652 = scmp.lt.s32.totalorder %s21, 0
        %s653 = scalar_select %p652, %s21, 0
        %p654 = scmp.lt.s32.totalorder %s651, 3
        %s655 = scalar_select %p654, %s651, 3
        %s656 = smul.addr %s653, 4
        %s657 = sadd.s32 %s655, %s656
        %s658 = smul.addr %s657, 8
        %s659 = scalar_lea.vmem %s5, %s658
        // Predicated region
        $region87: #{_lambda_.34} parent=73 // pred_check
          %p660 = pneg %p191
        $region88: #{_lambda_.34} parent=73 // pred_check_branch
          %662 = sbr.rel (%p660) target = $region90
        $region89: #{_lambda_.34} parent=73 // pred_region
          %s663 = smul.u32 2, %s22
        $region90: #{_lambda_.34} parent=73 // pred_fallthru
          _
      $region74: #{_lambda_.34} parent=5 // pred_fallthru
        _
      %p664 = scmp.le.s32.totalorder 2, %s11
      // Predicated region
      $region91: #{_lambda_.34} parent=5 // pred_check
        %p665 = pneg %p664
      $region92: #{_lambda_.34} parent=5 // pred_check_branch
        %667 = sbr.rel (%p665) target = $region94
      $region93: #{_lambda_.34} parent=5 // pred_region
        %s668 = ssub.s32 %s11, 2
        // Predicated region
        $region95: #{_lambda_.34} parent=93 // pred_check
          %p669 = pneg %p197
        $region96: #{_lambda_.34} parent=93 // pred_check_branch
          %671 = sbr.rel (%p669) target = $region98
        $region97: #{_lambda_.34} parent=93 // pred_region
          %s672 = smul.u32 2, %s25
          %p673 = scmp.lt.s32.totalorder %s24, 0
          %s674 = scalar_select %p673, %s24, 0
          %p675 = scmp.lt.s32.totalorder %s672, 3
          %s676 = scalar_select %p675, %s672, 3
          %s677 = smul.addr %s674, 4
          %s678 = sadd.s32 %s676, %s677
          %s679 = smul.addr %s678, 8
          %s680 = scalar_lea.vmem %s5, %s679
        $region98: #{_lambda_.34} parent=93 // pred_fallthru
          _
      $region94: #{_lambda_.34} parent=5 // pred_fallthru
        _
    $region6: #{_lambda_.34} parent=1 // loop_footer
      %s15 = sadd.s32 1, %s11
    $region7: #{_lambda_.34} parent=1 // loop_footer_branch
      %10 = sbr.rel target = $region3
    $region8: #{_lambda_.34} parent=1 // loop_exit
      _

// kernel: _lambda_.35
$region0: #{_lambda_.35}
  #allocation0 [shape = 'u32[]', space=smem, size = 0x4, offset = 0x4, fixed_abs, tag = 'smem constant byte address 0x4 - core index']
  #allocation1 [shape = 'u32[144,128]{1,0:T(1,128)}', space=vmem, size = 0x12000, scoped, tag = 'internal scratch']
  #allocation2 [shape = 'f32[8,128]{1,0:T(8,128)}', space=vmem, size = 0x1000, scoped, tag = 'scratch operand']
  %s0 = inlined_call_operand.vmem [shape: bf16[8,512], index: 0, kind: input, shape index: {}]
  %s1 = inlined_call_operand.vmem [shape: bf16[512,128], index: 1, kind: input, shape index: {}]
  %s2 = inlined_call_operand.vmem [shape: f32[1,128], index: 2, kind: input, shape index: {}]
  %s3 = inlined_call_operand.vmem [shape: f32[1,128], index: 3, kind: input, shape index: {}]
  %s4 = inlined_call_operand.vmem [shape: f32[8,128], index: 4, kind: output, shape index: {}]
  %s5 = sld [smem:[#allocation0]]
  $region34: #{_lambda_.35} parent=0
    _
  %s7 = ssub.s32 1, %s5
  %s8 = scalar_select 0, %s7, %s5
  // Predicated region
  $region2: #{_lambda_.35} parent=0 // pred_check
    _
  $region3: #{_lambda_.35} parent=0 // pred_check_branch
    %10 = sbr.rel (0) target = $region5
  $region4: #{_lambda_.35} parent=0 // pred_region
    _
  $region5: #{_lambda_.35} parent=0 // pred_fallthru
    _
  // Predicated region
  $region6: #{_lambda_.35} parent=0 // pred_check
    _
  $region7: #{_lambda_.35} parent=0 // pred_check_branch
    %12 = sbr.rel (0) target = $region9
  $region8: #{_lambda_.35} parent=0 // pred_region
    _
  $region9: #{_lambda_.35} parent=0 // pred_fallthru
    _
  // Predicated region
  $region10: #{_lambda_.35} parent=0 // pred_check
    _
  $region11: #{_lambda_.35} parent=0 // pred_check_branch
    %14 = sbr.rel (0) target = $region13
  $region12: #{_lambda_.35} parent=0 // pred_region
    _
  $region13: #{_lambda_.35} parent=0 // pred_fallthru
    _
  // Predicated region
  $region14: #{_lambda_.35} parent=0 // pred_check
    _
  $region15: #{_lambda_.35} parent=0 // pred_check_branch
    %16 = sbr.rel (0) target = $region17
  $region16: #{_lambda_.35} parent=0 // pred_region
    _
  $region17: #{_lambda_.35} parent=0 // pred_fallthru
    _
  %p18 = scmp.eq.s32.totalorder 0, 0
  // Predicated region
  $region18: #{_lambda_.35} parent=0 // pred_check
    %p19 = pneg %p18
  $region19: #{_lambda_.35} parent=0 // pred_check_branch
    %21 = sbr.rel (%p19) target = $region21
  $region20: #{_lambda_.35} parent=0 // pred_region
    %22 = vst [vmem:[#allocation2] sm:$0xff] 0.0
  $region21: #{_lambda_.35} parent=0 // pred_fallthru
    _
  %v23 = vld [vmem:[#allocation2] sm:$0xff]
  %v24 = vld [vmem:[%s0] sm:$0xff]
  %v25 = vld [vmem:[%s0 + $0x8] sm:$0xff]
  %v26 = vld [vmem:[%s1] sm:$0xf]
  %v27 = vld [vmem:[%s1 + $0x4] sm:$0xf]
  %v28 = vld [vmem:[%s1 + $0x8] sm:$0xf]
  %v29 = vld [vmem:[%s1 + $0xc] sm:$0xf]
  %v30 = vld [vmem:[%s1 + $0x10] sm:$0xf]
  %v31 = vld [vmem:[%s1 + $0x14] sm:$0xf]
  %v32 = vld [vmem:[%s1 + $0x18] sm:$0xf]
  %v33 = vld [vmem:[%s1 + $0x1c] sm:$0xf]
  %v34 = vld [vmem:[%s1 + $0x20] sm:$0xf]
  %v35 = vld [vmem:[%s1 + $0x24] sm:$0xf]
  %v36 = vld [vmem:[%s1 + $0x28] sm:$0xf]
  %v37 = vld [vmem:[%s1 + $0x2c] sm:$0xf]
  %v38 = vld [vmem:[%s1 + $0x30] sm:$0xf]
  %v39 = vld [vmem:[%s1 + $0x34] sm:$0xf]
  %v40 = vld [vmem:[%s1 + $0x38] sm:$0xf]
  %v41 = vld [vmem:[%s1 + $0x3c] sm:$0xf]
  %v42 = vld [vmem:[%s1 + $0x40] sm:$0xf]
  %v43 = vld [vmem:[%s1 + $0x44] sm:$0xf]
  %v44 = vld [vmem:[%s1 + $0x48] sm:$0xf]
  %v45 = vld [vmem:[%s1 + $0x4c] sm:$0xf]
  %v46 = vld [vmem:[%s1 + $0x50] sm:$0xf]
  %v47 = vld [vmem:[%s1 + $0x54] sm:$0xf]
  %v48 = vld [vmem:[%s1 + $0x58] sm:$0xf]
  %v49 = vld [vmem:[%s1 + $0x5c] sm:$0xf]
  %v50 = vld [vmem:[%s1 + $0x60] sm:$0xf]
  %v51 = vld [vmem:[%s1 + $0x64] sm:$0xf]
  %v52 = vld [vmem:[%s1 + $0x68] sm:$0xf]
  %v53 = vld [vmem:[%s1 + $0x6c] sm:$0xf]
  %v54 = vld [vmem:[%s1 + $0x70] sm:$0xf]
  %v55 = vld [vmem:[%s1 + $0x74] sm:$0xf]
  %v56 = vld [vmem:[%s1 + $0x78] sm:$0xf]
  %v57 = vld [vmem:[%s1 + $0x7c] sm:$0xf]
  %v58 = vld [vmem:[%s1 + $0x80] sm:$0xf]
  %v59 = vld [vmem:[%s1 + $0x84] sm:$0xf]
  %v60 = vld [vmem:[%s1 + $0x88] sm:$0xf]
  %v61 = vld [vmem:[%s1 + $0x8c] sm:$0xf]
  %v62 = vld [vmem:[%s1 + $0x90] sm:$0xf]
  %v63 = vld [vmem:[%s1 + $0x94] sm:$0xf]
  %v64 = vld [vmem:[%s1 + $0x98] sm:$0xf]
  %v65 = vld [vmem:[%s1 + $0x9c] sm:$0xf]
  %v66 = vld [vmem:[%s1 + $0xa0] sm:$0xf]
  %v67 = vld [vmem:[%s1 + $0xa4] sm:$0xf]
  %v68 = vld [vmem:[%s1 + $0xa8] sm:$0xf]
  %v69 = vld [vmem:[%s1 + $0xac] sm:$0xf]
  %v70 = vld [vmem:[%s1 + $0xb0] sm:$0xf]
  %v71 = vld [vmem:[%s1 + $0xb4] sm:$0xf]
  %v72 = vld [vmem:[%s1 + $0xb8] sm:$0xf]
  %v73 = vld [vmem:[%s1 + $0xbc] sm:$0xf]
  %v74 = vld [vmem:[%s1 + $0xc0] sm:$0xf]
  %v75 = vld [vmem:[%s1 + $0xc4] sm:$0xf]
  %v76 = vld [vmem:[%s1 + $0xc8] sm:$0xf]
  %v77 = vld [vmem:[%s1 + $0xcc] sm:$0xf]
  %v78 = vld [vmem:[%s1 + $0xd0] sm:$0xf]
  %v79 = vld [vmem:[%s1 + $0xd4] sm:$0xf]
  %v80 = vld [vmem:[%s1 + $0xd8] sm:$0xf]
  %v81 = vld [vmem:[%s1 + $0xdc] sm:$0xf]
  %v82 = vld [vmem:[%s1 + $0xe0] sm:$0xf]
  %v83 = vld [vmem:[%s1 + $0xe4] sm:$0xf]
  %v84 = vld [vmem:[%s1 + $0xe8] sm:$0xf]
  %v85 = vld [vmem:[%s1 + $0xec] sm:$0xf]
  %v86 = vld [vmem:[%s1 + $0xf0] sm:$0xf]
  %v87 = vld [vmem:[%s1 + $0xf4] sm:$0xf]
  %v88 = vld [vmem:[%s1 + $0xf8] sm:$0xf]
  %v89 = vld [vmem:[%s1 + $0xfc] sm:$0xf]
  %v92 = vunpack.c.l.b16 %v24
  %v93 = vunpack.c.h.b16 %v24
  %v94 = vunpack.c.l.b16 %v25
  %v95 = vunpack.c.h.b16 %v25
  %v96 = vpack.c.b16 %v92, %v92
  %v97 = vpack.c.b16 %v93, %v93
  %v98 = vpack.c.b16 %v94, %v94
  %v99 = vpack.c.b16 %v95, %v95
  %v168 = vunpack.c.l.b16 %v26
  %v169 = vunpack.c.l.b16 %v27
  %v170 = vunpack.c.l.b16 %v28
  %v171 = vunpack.c.l.b16 %v29
  %v172 = vunpack.c.l.b16 %v30
  %v173 = vunpack.c.l.b16 %v31
  %v174 = vunpack.c.l.b16 %v32
  %v175 = vunpack.c.l.b16 %v33
  %v176 = vunpack.c.l.b16 %v34
  %v177 = vunpack.c.l.b16 %v35
  %v178 = vunpack.c.l.b16 %v36
  %v179 = vunpack.c.l.b16 %v37
  %v180 = vunpack.c.l.b16 %v38
  %v181 = vunpack.c.l.b16 %v39
  %v182 = vunpack.c.l.b16 %v40
  %v183 = vunpack.c.l.b16 %v41
  %v184 = vunpack.c.l.b16 %v42
  %v185 = vunpack.c.l.b16 %v43
  %v186 = vunpack.c.l.b16 %v44
  %v187 = vunpack.c.l.b16 %v45
  %v188 = vunpack.c.l.b16 %v46
  %v189 = vunpack.c.l.b16 %v47
  %v190 = vunpack.c.l.b16 %v48
  %v191 = vunpack.c.l.b16 %v49
  %v192 = vunpack.c.l.b16 %v50
  %v193 = vunpack.c.l.b16 %v51
  %v194 = vunpack.c.l.b16 %v52
  %v195 = vunpack.c.l.b16 %v53
  %v196 = vunpack.c.l.b16 %v54
  %v197 = vunpack.c.l.b16 %v55
  %v198 = vunpack.c.l.b16 %v56
  %v199 = vunpack.c.l.b16 %v57
  %v200 = vunpack.c.l.b16 %v58
  %v201 = vunpack.c.l.b16 %v59
  %v202 = vunpack.c.l.b16 %v60
  %v203 = vunpack.c.l.b16 %v61
  %v204 = vunpack.c.l.b16 %v62
  %v205 = vunpack.c.l.b16 %v63
  %v206 = vunpack.c.l.b16 %v64
  %v207 = vunpack.c.l.b16 %v65
  %v208 = vunpack.c.l.b16 %v66
  %v209 = vunpack.c.l.b16 %v67
  %v210 = vunpack.c.l.b16 %v68
  %v211 = vunpack.c.l.b16 %v69
  %v212 = vunpack.c.l.b16 %v70
  %v213 = vunpack.c.l.b16 %v71
  %v214 = vunpack.c.l.b16 %v72
  %v215 = vunpack.c.l.b16 %v73
  %v216 = vunpack.c.l.b16 %v74
  %v217 = vunpack.c.l.b16 %v75
  %v218 = vunpack.c.l.b16 %v76
  %v219 = vunpack.c.l.b16 %v77
  %v220 = vunpack.c.l.b16 %v78
  %v221 = vunpack.c.l.b16 %v79
  %v222 = vunpack.c.l.b16 %v80
  %v223 = vunpack.c.l.b16 %v81
  %v224 = vunpack.c.l.b16 %v82
  %v225 = vunpack.c.l.b16 %v83
  %v226 = vunpack.c.l.b16 %v84
  %v227 = vunpack.c.l.b16 %v85
  %v228 = vunpack.c.l.b16 %v86
  %v229 = vunpack.c.l.b16 %v87
  %v230 = vunpack.c.l.b16 %v88
  %v231 = vunpack.c.l.b16 %v89
  %v232 = vpack.c.b16 %v169, %v168
  %v233 = vpack.c.b16 %v171, %v170
  %v234 = vpack.c.b16 %v173, %v172
  %v235 = vpack.c.b16 %v175, %v174
  %v236 = vpack.c.b16 %v177, %v176
  %v237 = vpack.c.b16 %v179, %v178
  %v238 = vpack.c.b16 %v181, %v180
  %v239 = vpack.c.b16 %v183, %v182
  %v240 = vpack.c.b16 %v185, %v184
  %v241 = vpack.c.b16 %v187, %v186
  %v242 = vpack.c.b16 %v189, %v188
  %v243 = vpack.c.b16 %v191, %v190
  %v244 = vpack.c.b16 %v193, %v192
  %v245 = vpack.c.b16 %v195, %v194
  %v246 = vpack.c.b16 %v197, %v196
  %v247 = vpack.c.b16 %v199, %v198
  %v248 = vpack.c.b16 %v201, %v200
  %v249 = vpack.c.b16 %v203, %v202
  %v250 = vpack.c.b16 %v205, %v204
  %v251 = vpack.c.b16 %v207, %v206
  %v252 = vpack.c.b16 %v209, %v208
  %v253 = vpack.c.b16 %v211, %v210
  %v254 = vpack.c.b16 %v213, %v212
  %v255 = vpack.c.b16 %v215, %v214
  %v256 = vpack.c.b16 %v217, %v216
  %v257 = vpack.c.b16 %v219, %v218
  %v258 = vpack.c.b16 %v221, %v220
  %v259 = vpack.c.b16 %v223, %v222
  %v260 = vpack.c.b16 %v225, %v224
  %v261 = vpack.c.b16 %v227, %v226
  %v262 = vpack.c.b16 %v229, %v228
  %v263 = vpack.c.b16 %v231, %v230
  %296 = vmatprep.subr.bf16.mxu0 0
  %297 = vmatpush1.bf16.msra.mxu0 %v232
  %298 = vmatprep.subr.bf16.mxu0 0
  %299 = vmatpush1.bf16.msra.mxu0 %v233
  %300 = vmatprep.subr.bf16.mxu0 0
  %301 = vmatpush1.bf16.msra.mxu0 %v234
  %302 = vmatprep.subr.bf16.mxu0 0
  %303 = vmatpush1.bf16.msra.mxu0 %v235
  %304 = vmatprep.subr.bf16.mxu0 0
  %305 = vmatpush1.bf16.msra.mxu0 %v236
  %306 = vmatprep.subr.bf16.mxu0 0
  %307 = vmatpush1.bf16.msra.mxu0 %v237
  %308 = vmatprep.subr.bf16.mxu0 0
  %309 = vmatpush1.bf16.msra.mxu0 %v238
  %310 = vmatprep.subr.bf16.mxu0 0
  %311 = vmatpush1.bf16.msra.mxu0 %v239
  %312 = vmatprep.subr.bf16.mxu0 0
  %313 = vmatpush1.bf16.msra.mxu0 %v240
  %314 = vmatprep.subr.bf16.mxu0 0
  %315 = vmatpush1.bf16.msra.mxu0 %v241
  %316 = vmatprep.subr.bf16.mxu0 0
  %317 = vmatpush1.bf16.msra.mxu0 %v242
  %318 = vmatprep.subr.bf16.mxu0 0
  %319 = vmatpush1.bf16.msra.mxu0 %v243
  %320 = vmatprep.subr.bf16.mxu0 0
  %321 = vmatpush1.bf16.msra.mxu0 %v244
  %322 = vmatprep.subr.bf16.mxu0 0
  %323 = vmatpush1.bf16.msra.mxu0 %v245
  %324 = vmatprep.subr.bf16.mxu0 0
  %325 = vmatpush1.bf16.msra.mxu0 %v246
  %326 = vmatprep.subr.bf16.mxu0 0
  %327 = vmatpush1.bf16.msra.mxu0 %v247
  %328 = vmatprep.mubr.bf16.mxu0 %v97
  %329 = vmatmul.mubr.bf16.gmra.mrb[0].mxu0 %v96
  %v330 = vpop.f32.mrb[0].mxu0
  %v331 = vadd.f32 0.0, %v330
  %v332 = vpop.f32.mrb[0].mxu0
  %v333 = vpop.f32.mrb[0].mxu0
  %v334 = vpop.f32.mrb[0].mxu0
  %335 = vdwg.mxu0
  %336 = vmatprep.subr.bf16.mxu0 0
  %337 = vmatpush1.bf16.msra.mxu0 %v248
  %338 = vmatprep.subr.bf16.mxu0 0
  %339 = vmatpush1.bf16.msra.mxu0 %v249
  %340 = vmatprep.subr.bf16.mxu0 0
  %341 = vmatpush1.bf16.msra.mxu0 %v250
  %342 = vmatprep.subr.bf16.mxu0 0
  %343 = vmatpush1.bf16.msra.mxu0 %v251
  %344 = vmatprep.subr.bf16.mxu0 0
  %345 = vmatpush1.bf16.msra.mxu0 %v252
  %346 = vmatprep.subr.bf16.mxu0 0
  %347 = vmatpush1.bf16.msra.mxu0 %v253
  %348 = vmatprep.subr.bf16.mxu0 0
  %349 = vmatpush1.bf16.msra.mxu0 %v254
  %350 = vmatprep.subr.bf16.mxu0 0
  %351 = vmatpush1.bf16.msra.mxu0 %v255
  %352 = vmatprep.subr.bf16.mxu0 0
  %353 = vmatpush1.bf16.msra.mxu0 %v256
  %354 = vmatprep.subr.bf16.mxu0 0
  %355 = vmatpush1.bf16.msra.mxu0 %v257
  %356 = vmatprep.subr.bf16.mxu0 0
  %357 = vmatpush1.bf16.msra.mxu0 %v258
  %358 = vmatprep.subr.bf16.mxu0 0
  %359 = vmatpush1.bf16.msra.mxu0 %v259
  %360 = vmatprep.subr.bf16.mxu0 0
  %361 = vmatpush1.bf16.msra.mxu0 %v260
  %362 = vmatprep.subr.bf16.mxu0 0
  %363 = vmatpush1.bf16.msra.mxu0 %v261
  %364 = vmatprep.subr.bf16.mxu0 0
  %365 = vmatpush1.bf16.msra.mxu0 %v262
  %366 = vmatprep.subr.bf16.mxu0 0
  %367 = vmatpush1.bf16.msra.mxu0 %v263
  %368 = vmatprep.mubr.bf16.mxu0 %v99
  %369 = vmatmul.mubr.bf16.gmra.mrb[0].mxu0 %v98
  %v370 = vpop.f32.mrb[0].mxu0
  %v371 = vadd.f32 %v331, %v370
  %v372 = vpop.f32.mrb[0].mxu0
  %v373 = vpop.f32.mrb[0].mxu0
  %v374 = vpop.f32.mrb[0].mxu0
  %375 = vdwg.mxu0
  %v376 = vadd.f32 %v23, %v371
  %377 = vst [vmem:[#allocation2] sm:$0xff] %v376
  // Predicated region
  $region22: #{_lambda_.35} parent=0 // pred_check
    %p378 = pneg %p18
  $region23: #{_lambda_.35} parent=0 // pred_check_branch
    %380 = sbr.rel (%p378) target = $region25
  $region24: #{_lambda_.35} parent=0 // pred_region
    %v381 = vld [vmem:[#allocation2] sm:$0xff]
    %v382 = vld [vmem:[%s2] sm:$0x1]
    %v384 = vlaneseq
    %v385 = vshrl.u32 %v384, 7
    %v386 = vsub.s32 0, %v385
    %v387 = vrot.slane %v382, %v386
    %v389 = vmul.f32 %v381, %v387
    %v390 = vld [vmem:[%s3] sm:$0x1]
    %v392 = vlaneseq
    %v393 = vshrl.u32 %v392, 7
    %v394 = vsub.s32 0, %v393
    %v395 = vrot.slane %v390, %v394
    %v397 = vadd.f32 %v389, %v395
    %398 = vst [vmem:[%s4] sm:$0xff] %v397
  $region25: #{_lambda_.35} parent=0 // pred_fallthru
    _
  // Predicated region
  $region26: #{_lambda_.35} parent=0 // pred_check
    _
  $region27: #{_lambda_.35} parent=0 // pred_check_branch
    %400 = sbr.rel (0) target = $region29
  $region28: #{_lambda_.35} parent=0 // pred_region
    _
  $region29: #{_lambda_.35} parent=0 // pred_fallthru
    _
  // Predicated region
  $region30: #{_lambda_.35} parent=0 // pred_check
    _
  $region31: #{_lambda_.35} parent=0 // pred_check_branch
    %402 = sbr.rel (0) target = $region33
  $region32: #{_lambda_.35} parent=0 // pred_region
    _
  $region33: #{_lambda_.35} parent=0 // pred_fallthru
    _

</llo_original>
